<compile_context>
chip_gen: v5e
topology: v5e:2x2
jax: 0.10.0
libtpu: 0.0.40
codegen_flags: <defaults>
</compile_context>

<pallas_src>
import functools

import jax
import jax.numpy as jnp
from jax.experimental import pallas as pl
from jax.experimental.pallas import tpu as pltpu

_BF16 = jnp.bfloat16


def _dot(a, w):
    """MXU matmul, bf16 operands, f32 accumulation."""
    return jnp.dot(a, w, preferred_element_type=jnp.float32)


def _sigmoid(x):
    # tanh-form sigmoid: one EUP push instead of exp + reciprocal, and exact
    # (no approximation error compounding through the LSTM recurrence).
    return 0.5 * (jnp.tanh(0.5 * x) + 1.0)


_WEIGHT_ORDER = (
    "oa_w1o", "oa_w1a", "oa_b1", "oa_w2", "oa_b2",   # obs_action_model
    "wih", "whh", "lb",                              # LSTM (gate-stacked along lanes)
    "lg_w1", "lg_b1", "lg_w2", "lg_b2",              # logit_model
    "rw1o", "rw1a", "rb1", "rw2", "rb2",             # ret_obs_action_model
    "vw1c", "vw1r", "vb1", "vw2r", "vb2",            # return_model
    "aw1o", "aw1c", "ab1", "aw2", "ab2",             # action_model
)


# ----------------------------------------------------------------------------
# Fused Pallas kernel (one batch tile of TB trajectories per grid step)
# ----------------------------------------------------------------------------
def _cluster_kernel(
    idx_ref,                                   # scalar prefetch (SMEM): (bsz, t) int32
    obs_ref, act_ref, gum_ref,                 # (t, TB, *) time-major data blocks
    # obs_action_model (w1 split: obs rows | action rows)
    oa_w1o_ref, oa_w1a_ref, oa_b1_ref, oa_w2_ref, oa_b2_ref,
    # LSTM, gate-stacked along lanes: (H, 4H) / (1, 4H)
    wih_ref, whh_ref, lb_ref,
    # logit_model
    lg_w1_ref, lg_b1_ref, lg_w2_ref, lg_b2_ref,
    # ret_obs_action_model (w1 split: obs rows | action rows)
    rw1o_ref, rw1a_ref, rb1_ref, rw2_ref, rb2_ref,
    # return_model (w1 split: cluster rows | ret_reps rows; w2 as (1, H) row)
    vw1c_ref, vw1r_ref, vb1_ref, vw2r_ref, vb2_ref,
    # action_model (w1 split: obs rows | past_cluster rows)
    aw1o_ref, aw1c_ref, ab1_ref, aw2_ref, ab2_ref,
    # outputs
    packed_ref, hn_ref, cn_ref,
    # VMEM scratch
    reps_scr, hout_scr, h_scr, c_scr, clus_scr, past_scr,
    *, tb, t, groups, pad_w):
    n = t * tb
    hsz = oa_w2_ref.shape[1]
    rep = gum_ref.shape[2]
    rpg = rep // groups
    act_size = aw2_ref.shape[1]
    tiny_t = t <= 16

    # Time-major rows: row j*tb + b <-> (time j, local batch b in this tile).
    obs = obs_ref[...].reshape(n, -1)                 # f32 (kept for padding mask)
    obs_b = obs.astype(_BF16)
    act_b = act_ref[...].reshape(n, -1).astype(_BF16)

    # ---- obs_action MLP (row-pointwise; flip-before-MLP == flip-after) ------
    h1 = jnp.maximum(
        _dot(obs_b, oa_w1o_ref[...]) + _dot(act_b, oa_w1a_ref[...]) + oa_b1_ref[...],
        0.0)
    reps = _dot(h1.astype(_BF16), oa_w2_ref[...]) + oa_b2_ref[...]
    reps_scr[...] = reps.astype(reps_scr.dtype)

    # ---- LSTM over the time-reversed sequence (== torch.flip + LSTM) --------
    wih = wih_ref[...]                                 # (H, 4H) bf16, hoisted
    whh = whh_ref[...]
    bias = jnp.broadcast_to(lb_ref[...], (tb, 4 * hsz))  # hoisted once (no per-step bcast)
    h_scr[...] = jnp.zeros_like(h_scr)
    c_scr[...] = jnp.zeros_like(c_scr)

    @pl.loop(0, t, unroll=tiny_t)
    def _lstm_step(k):
        j = t - 1 - k                                  # original time t-1, ..., 0
        off = pl.multiple_of(j * tb, tb)
        x_b = reps_scr[pl.ds(off, tb), :].astype(_BF16)    # contiguous (TB, H)
        h_prev = h_scr[...]
        c_prev = c_scr[...]
        gates = _dot(x_b, wih) + _dot(h_prev.astype(_BF16), whh) + bias   # (TB, 4H)
        i_g = _sigmoid(gates[:, 0 * hsz:1 * hsz])
        f_g = _sigmoid(gates[:, 1 * hsz:2 * hsz])
        g_g = jnp.tanh(gates[:, 2 * hsz:3 * hsz])
        o_g = _sigmoid(gates[:, 3 * hsz:4 * hsz])
        c_new = f_g * c_prev + i_g * g_g
        h_new = o_g * jnp.tanh(c_new)
        h_scr[...] = h_new
        c_scr[...] = c_new
        hout_scr[pl.ds(off, tb), :] = h_new.astype(hout_scr.dtype)

    # Final LSTM state = state after processing original time 0 (reversed end).
    hn_ref[...] = h_scr[...]
    cn_ref[...] = c_scr[...]

    # ---- logit MLP + padding mask + grouped gumbel softmax (tau=1, soft) ----
    hout = hout_scr[...].astype(_BF16)
    l1 = jnp.maximum(_dot(hout, lg_w1_ref[...]) + lg_b1_ref[...], 0.0)
    logits = _dot(l1.astype(_BF16), lg_w2_ref[...]) + lg_b2_ref[...]
    mask = (jnp.sum(obs, axis=-1, keepdims=True) != 0.0).astype(jnp.float32)
    y = logits * mask + gum_ref[...].reshape(n, rep)   # padded rows: logits -> 0
    m = jnp.max(y, axis=-1, keepdims=True)             # per-row max (const per group)
    e = jnp.exp(y - m)
    # Exact per-group sums via static lane slices (VPU/XLU only, no MXU rounding).
    denom_parts = []
    for g in range(groups):
        s = jnp.sum(e[:, g * rpg:(g + 1) * rpg], axis=-1, keepdims=True)
        denom_parts.append(jnp.broadcast_to(s, (n, rpg)))
    denom = jnp.concatenate(denom_parts, axis=-1)
    clusters = e / denom                               # exact per-group softmax, f32
    clus_scr[...] = clusters

    # ---- return predictor ----------------------------------------------------
    r1 = jnp.maximum(
        _dot(obs_b, rw1o_ref[...]) + _dot(act_b, rw1a_ref[...]) + rb1_ref[...], 0.0)
    ret_reps = _dot(r1.astype(_BF16), rw2_ref[...]) + rb2_ref[...]
    v1 = jnp.maximum(
        _dot(clusters.astype(_BF16), vw1c_ref[...])
        + _dot(ret_reps.astype(_BF16), vw1r_ref[...]) + vb1_ref[...], 0.0)
    # Width-1 output head as VPU multiply + row reduce (skip the (H,1) MXU matmul).
    ret = jnp.sum(v1 * vw2r_ref[...], axis=-1, keepdims=True) + vb2_ref[...]

    # ---- past-cluster gather: SMEM-indexed dynamic row copies ----------------
    gb0 = pl.program_id(0) * tb                        # global batch offset of this tile

    @pl.loop(0, t, unroll=tiny_t)
    def _gather(j):
        dst0 = pl.multiple_of(j * tb, tb)
        for b in range(tb):                            # tb is small & static
            src_t = idx_ref[gb0 + b, j]                # past time index (SMEM scalar)
            past_scr[pl.ds(dst0 + b, 1), :] = clus_scr[pl.ds(src_t * tb + b, 1), :]

    # ---- action predictor ----------------------------------------------------
    past_b = past_scr[...].astype(_BF16)
    a1 = jnp.maximum(
        _dot(obs_b, aw1o_ref[...]) + _dot(past_b, aw1c_ref[...]) + ab1_ref[...], 0.0)
    actp = _dot(a1.astype(_BF16), aw2_ref[...]) + ab2_ref[...]

    # ---- one lane-dense packed store: [clusters | ret | act_pred | 0-pad] ----
    used = rep + 1 + act_size
    packed = jnp.concatenate(
        [clusters, ret, actp, jnp.zeros((n, pad_w - used), jnp.float32)], axis=-1)
    packed_ref[...] = packed.reshape(t, tb, pad_w)


# ----------------------------------------------------------------------------
# Wrapper
# ----------------------------------------------------------------------------
def get_past_indices(key, bsz, t, seq_len):
    # TODO(synk): get_past_indices is not defined in the provided snippet; this
    # re-implements the ESPER reference (uniform random valid past index for
    # front-padded sequences) and should be validated against it.
    idxs = jax.random.randint(key, (bsz, t), 0, t).astype(jnp.int32)
    ts = jnp.broadcast_to(jnp.arange(t, dtype=jnp.int32)[None, :], (bsz, t))
    offset = (t - seq_len.astype(jnp.int32))[:, None]
    idxs = idxs % jnp.maximum(ts - offset, 1) + offset
    # Clamp: the in-kernel VMEM gather has no bounds check.
    return jnp.clip(idxs, 0, t - 1).astype(jnp.int32)


def _pick_batch_tile(bsz):
    # Block second-to-last dim must be a multiple of 8 or the full batch dim.
    return 8 if bsz % 8 == 0 else bsz


def cluster_model_forward(kparams, obs, action, seq_len, key, groups):
    bsz, t = obs.shape[:2]
    obs3 = obs.reshape(bsz, t, -1)
    act3 = action.reshape(bsz, t, -1)
    obs_size = obs3.shape[-1]
    act_size_in = act3.shape[-1]
    hsz = kparams["oa_w2"].shape[1]
    rep = kparams["lg_w2"].shape[1]
    act_size = kparams["aw2"].shape[1]
    tb = _pick_batch_tile(bsz)
    n_tiles = bsz // tb
    pad_w = ((rep + 1 + act_size + 127) // 128) * 128
    scr_dt = _BF16 if tb % 8 == 0 else jnp.float32

    key_g, key_i = jax.random.split(key)
    gum_tm = jax.random.gumbel(key_g, (t, bsz, rep), dtype=jnp.float32)
    idxs = get_past_indices(key_i, bsz, t, seq_len)            # (bsz, t) int32

    # Time-major layout for contiguous per-timestep LSTM loads/stores.
    obs_tm = jnp.transpose(obs3, (1, 0, 2))                    # (t, bsz, obs)
    act_tm = jnp.transpose(act3, (1, 0, 2))                    # (t, bsz, act)

    weights = tuple(kparams[name] for name in _WEIGHT_ORDER)

    def _tile3(last):
        return pl.BlockSpec((t, tb, last), lambda i, idx: (0, i, 0))

    def _rep_spec(w):
        nd = w.ndim
        return pl.BlockSpec(w.shape, lambda i, idx, nd=nd: (0,) * nd)

    grid_spec = pltpu.PrefetchScalarGridSpec(
        num_scalar_prefetch=1,
        grid=(n_tiles,),
        in_specs=[_tile3(obs_size), _tile3(act_size_in), _tile3(rep)]
                 + [_rep_spec(w) for w in weights],
        out_specs=(
            pl.BlockSpec((t, tb, pad_w), lambda i, idx: (0, i, 0)),
            pl.BlockSpec((tb, hsz), lambda i, idx: (i, 0)),
            pl.BlockSpec((tb, hsz), lambda i, idx: (i, 0)),
        ),
        scratch_shapes=[
            pltpu.VMEM((t * tb, hsz), scr_dt),        # obs_action reps (time-major)
            pltpu.VMEM((t * tb, hsz), scr_dt),        # LSTM hidden outputs (time-major)
            pltpu.VMEM((tb, hsz), jnp.float32),       # h state (f32 recurrence)
            pltpu.VMEM((tb, hsz), jnp.float32),       # c state (f32 recurrence)
            pltpu.VMEM((t * tb, rep), jnp.float32),   # clusters (gather source)
            pltpu.VMEM((t * tb, rep), jnp.float32),   # gathered past clusters
        ],
    )

    out_shape = (
        jax.ShapeDtypeStruct((t, bsz, pad_w), jnp.float32),    # packed outputs
        jax.ShapeDtypeStruct((bsz, hsz), jnp.float32),         # h_n
        jax.ShapeDtypeStruct((bsz, hsz), jnp.float32),         # c_n
    )

    kern = functools.partial(_cluster_kernel, tb=tb, t=t, groups=groups, pad_w=pad_w)
    packed, hn, cn = pl.pallas_call(
        kern,
        out_shape=out_shape,
        grid_spec=grid_spec,
        compiler_params=pltpu.CompilerParams(
            dimension_semantics=("parallel",),        # batch tiles are independent
            vmem_limit_bytes=48 * 1024 * 1024),
    )(idxs, obs_tm, act_tm, gum_tm, *weights)

    packed = jnp.transpose(packed, (1, 0, 2))                   # (bsz, t, pad_w)
    clusters = packed[..., :rep]
    ret_pred = packed[..., rep:rep + 1]
    act_pred = packed[..., rep + 1:rep + 1 + act_size]
    return clusters, ret_pred, act_pred, (hn[None, ...], cn[None, ...])


# ----------------------------------------------------------------------------
# Deterministic parameter init (PyTorch-style layout) + kernel-layout prep
# ----------------------------------------------------------------------------
def init_mlp(key, din, dh, dout):
    k1, k2 = jax.random.split(key)
    return {
        "w1": 0.1 * jax.random.normal(k1, (din, dh), jnp.float32),
        "b1": jnp.zeros((1, dh), jnp.float32),
        "w2": 0.1 * jax.random.normal(k2, (dh, dout), jnp.float32),
        "b2": jnp.zeros((1, dout), jnp.float32),
    }


def init_lstm(key, hsz):
    k1, k2, k3, k4 = jax.random.split(key, 4)
    # PyTorch layout: weight_ih/hh (4*hsz, hsz), gate order (i, f, g, o).
    return {
        "w_ih": 0.1 * jax.random.normal(k1, (4 * hsz, hsz), jnp.float32),
        "w_hh": 0.1 * jax.random.normal(k2, (4 * hsz, hsz), jnp.float32),
        "b_ih": 0.1 * jax.random.normal(k3, (4 * hsz,), jnp.float32),
        "b_hh": 0.1 * jax.random.normal(k4, (4 * hsz,), jnp.float32),
    }


def init_params(key, obs_size, action_size, rep_size, hidden_size):
    keys = jax.random.split(key, 6)
    return {
        "obs_action_model": init_mlp(keys[0], obs_size + action_size, hidden_size, hidden_size),
        "lstm": init_lstm(keys[1], hidden_size),
        "logit_model": init_mlp(keys[2], hidden_size, hidden_size, rep_size),
        "ret_obs_action_model": init_mlp(keys[3], obs_size + action_size, hidden_size, hidden_size),
        "return_model": init_mlp(keys[4], rep_size + hidden_size, hidden_size, 1),
        "action_model": init_mlp(keys[5], obs_size + rep_size, hidden_size, action_size),
    }


def prepare_kernel_params(params, obs_size, rep_size, hidden_size):
    """Pre-split / gate-stack / bf16-cast the weights into the kernel layout."""
    oa, lg = params["obs_action_model"], params["logit_model"]
    ro, rm = params["ret_obs_action_model"], params["return_model"]
    am, ls = params["action_model"], params["lstm"]
    hsz = hidden_size
    bf = lambda w: w.astype(_BF16)
    return {
        # obs_action_model: input = concat([obs, action])
        "oa_w1o": bf(oa["w1"][:obs_size]), "oa_w1a": bf(oa["w1"][obs_size:]),
        "oa_b1": oa["b1"], "oa_w2": bf(oa["w2"]), "oa_b2": oa["b2"],
        # LSTM: transpose gives (H, 4H) with gate blocks i|f|g|o along lanes.
        "wih": bf(ls["w_ih"].T), "whh": bf(ls["w_hh"].T),
        "lb": (ls["b_ih"] + ls["b_hh"]).reshape(1, 4 * hsz),
        # logit_model
        "lg_w1": bf(lg["w1"]), "lg_b1": lg["b1"],
        "lg_w2": bf(lg["w2"]), "lg_b2": lg["b2"],
        # ret_obs_action_model: input = concat([obs, action])
        "rw1o": bf(ro["w1"][:obs_size]), "rw1a": bf(ro["w1"][obs_size:]),
        "rb1": ro["b1"], "rw2": bf(ro["w2"]), "rb2": ro["b2"],
        # return_model: input = concat([clusters, ret_obs_act_reps]); w2 as (1,H) row
        "vw1c": bf(rm["w1"][:rep_size]), "vw1r": bf(rm["w1"][rep_size:]),
        "vb1": rm["b1"], "vw2r": rm["w2"].T, "vb2": rm["b2"],
        # action_model: input = concat([obs, past_cluster])
        "aw1o": bf(am["w1"][:obs_size]), "aw1c": bf(am["w1"][obs_size:]),
        "ab1": am["b1"], "aw2": bf(am["w2"]), "ab2": am["b2"],
    }


# ----------------------------------------------------------------------------
if __name__ == "__main__":
    OBS_SIZE, ACTION_SIZE, REP_SIZE, HIDDEN_SIZE, GROUPS = 4, 2, 8, 32, 4
    BSZ, T = 16, 8   # 16 trajectories -> 2 batch tiles of 8 -> grid=(2,) "parallel"

    root = jax.random.PRNGKey(0)
    k_param, k_obs, k_act, k_fwd = jax.random.split(root, 4)

    params = init_params(k_param, OBS_SIZE, ACTION_SIZE, REP_SIZE, HIDDEN_SIZE)
    kparams = prepare_kernel_params(params, OBS_SIZE, REP_SIZE, HIDDEN_SIZE)

    # Front-padded trajectories: first (T - seq_len) steps of each row are zeros.
    seq_len = (T - (jnp.arange(BSZ) % 4)).astype(jnp.int32)
    valid = (jnp.arange(T)[None, :] >= (T - seq_len)[:, None]).astype(jnp.float32)
    obs = jax.random.normal(k_obs, (BSZ, T, OBS_SIZE), jnp.float32) * valid[:, :, None]
    action = jax.random.normal(k_act, (BSZ, T, ACTION_SIZE), jnp.float32) * valid[:, :, None]

    fwd = jax.jit(functools.partial(cluster_model_forward, groups=GROUPS))
    clusters, ret_pred, act_pred, hidden = fwd(kparams, obs, action, seq_len, k_fwd)
    jax.block_until_ready((clusters, ret_pred, act_pred, hidden))

    assert clusters.shape == (BSZ, T, REP_SIZE)
    assert ret_pred.shape == (BSZ, T, 1)
    assert act_pred.shape == (BSZ, T, ACTION_SIZE)
    assert hidden[0].shape == (1, BSZ, HIDDEN_SIZE)
    assert hidden[1].shape == (1, BSZ, HIDDEN_SIZE)
    # Each gumbel-softmax group must sum to 1 (exact f32 softmax in-kernel).
    group_sums = clusters.reshape(BSZ, T, GROUPS, REP_SIZE // GROUPS).sum(-1)
    assert bool(jnp.all(jnp.abs(group_sums - 1.0) < 1e-4))
    assert bool(jnp.all((clusters >= 0.0) & (clusters <= 1.0)))
    assert bool(jnp.all(jnp.isfinite(ret_pred)))
    assert bool(jnp.all(jnp.isfinite(act_pred)))
    print("KERNEL_OK")
</pallas_src>

<mosaic_0001>
module attributes {stable_mosaic.version = 11 : i64} {
  func.func @_cluster_kernel(%arg0: i32, %arg1: memref<16x8xi32, #tpu.memory_space<smem>>, %arg2: memref<8x8x4xf32, #tpu.memory_space<vmem>>, %arg3: memref<8x8x2xf32, #tpu.memory_space<vmem>>, %arg4: memref<8x8x8xf32, #tpu.memory_space<vmem>>, %arg5: memref<4x32xbf16, #tpu.memory_space<vmem>>, %arg6: memref<2x32xbf16, #tpu.memory_space<vmem>>, %arg7: memref<1x32xf32, #tpu.memory_space<vmem>>, %arg8: memref<32x32xbf16, #tpu.memory_space<vmem>>, %arg9: memref<1x32xf32, #tpu.memory_space<vmem>>, %arg10: memref<32x128xbf16, #tpu.memory_space<vmem>>, %arg11: memref<32x128xbf16, #tpu.memory_space<vmem>>, %arg12: memref<1x128xf32, #tpu.memory_space<vmem>>, %arg13: memref<32x32xbf16, #tpu.memory_space<vmem>>, %arg14: memref<1x32xf32, #tpu.memory_space<vmem>>, %arg15: memref<32x8xbf16, #tpu.memory_space<vmem>>, %arg16: memref<1x8xf32, #tpu.memory_space<vmem>>, %arg17: memref<4x32xbf16, #tpu.memory_space<vmem>>, %arg18: memref<2x32xbf16, #tpu.memory_space<vmem>>, %arg19: memref<1x32xf32, #tpu.memory_space<vmem>>, %arg20: memref<32x32xbf16, #tpu.memory_space<vmem>>, %arg21: memref<1x32xf32, #tpu.memory_space<vmem>>, %arg22: memref<8x32xbf16, #tpu.memory_space<vmem>>, %arg23: memref<32x32xbf16, #tpu.memory_space<vmem>>, %arg24: memref<1x32xf32, #tpu.memory_space<vmem>>, %arg25: memref<1x32xf32, #tpu.memory_space<vmem>>, %arg26: memref<1x1xf32, #tpu.memory_space<vmem>>, %arg27: memref<4x32xbf16, #tpu.memory_space<vmem>>, %arg28: memref<8x32xbf16, #tpu.memory_space<vmem>>, %arg29: memref<1x32xf32, #tpu.memory_space<vmem>>, %arg30: memref<32x2xbf16, #tpu.memory_space<vmem>>, %arg31: memref<1x2xf32, #tpu.memory_space<vmem>>, %arg32: memref<8x8x128xf32, #tpu.memory_space<vmem>>, %arg33: memref<8x32xf32, #tpu.memory_space<vmem>>, %arg34: memref<8x32xf32, #tpu.memory_space<vmem>>, %arg35: memref<64x32xbf16, #tpu.memory_space<vmem>>, %arg36: memref<64x32xbf16, #tpu.memory_space<vmem>>, %arg37: memref<8x32xf32, #tpu.memory_space<vmem>>, %arg38: memref<8x32xf32, #tpu.memory_space<vmem>>, %arg39: memref<64x8xf32, #tpu.memory_space<vmem>>, %arg40: memref<64x8xf32, #tpu.memory_space<vmem>>) attributes {dimension_semantics = [#tpu.dimension_semantics<parallel>], iteration_bounds = array<i64: 2>, scalar_prefetch = 1 : i64, scratch_operands = 6 : i64, tpu.core_type = #tpu.core_type<tc>, window_params = [{transform_indices = @transform_0, window_bounds = array<i64: 8, 8, 4>}, {transform_indices = @transform_1, window_bounds = array<i64: 8, 8, 2>}, {transform_indices = @transform_2, window_bounds = array<i64: 8, 8, 8>}, {pipeline_mode = #tpu.pipeline_mode<synchronous>, transform_indices = @transform_3, window_bounds = array<i64: 4, 32>}, {pipeline_mode = #tpu.pipeline_mode<synchronous>, transform_indices = @transform_4, window_bounds = array<i64: 2, 32>}, {pipeline_mode = #tpu.pipeline_mode<synchronous>, transform_indices = @transform_5, window_bounds = array<i64: 1, 32>}, {pipeline_mode = #tpu.pipeline_mode<synchronous>, transform_indices = @transform_6, window_bounds = array<i64: 32, 32>}, {pipeline_mode = #tpu.pipeline_mode<synchronous>, transform_indices = @transform_7, window_bounds = array<i64: 1, 32>}, {pipeline_mode = #tpu.pipeline_mode<synchronous>, transform_indices = @transform_8, window_bounds = array<i64: 32, 128>}, {pipeline_mode = #tpu.pipeline_mode<synchronous>, transform_indices = @transform_9, window_bounds = array<i64: 32, 128>}, {pipeline_mode = #tpu.pipeline_mode<synchronous>, transform_indices = @transform_10, window_bounds = array<i64: 1, 128>}, {pipeline_mode = #tpu.pipeline_mode<synchronous>, transform_indices = @transform_11, window_bounds = array<i64: 32, 32>}, {pipeline_mode = #tpu.pipeline_mode<synchronous>, transform_indices = @transform_12, window_bounds = array<i64: 1, 32>}, {pipeline_mode = #tpu.pipeline_mode<synchronous>, transform_indices = @transform_13, window_bounds = array<i64: 32, 8>}, {pipeline_mode = #tpu.pipeline_mode<synchronous>, transform_indices = @transform_14, window_bounds = array<i64: 1, 8>}, {pipeline_mode = #tpu.pipeline_mode<synchronous>, transform_indices = @transform_15, window_bounds = array<i64: 4, 32>}, {pipeline_mode = #tpu.pipeline_mode<synchronous>, transform_indices = @transform_16, window_bounds = array<i64: 2, 32>}, {pipeline_mode = #tpu.pipeline_mode<synchronous>, transform_indices = @transform_17, window_bounds = array<i64: 1, 32>}, {pipeline_mode = #tpu.pipeline_mode<synchronous>, transform_indices = @transform_18, window_bounds = array<i64: 32, 32>}, {pipeline_mode = #tpu.pipeline_mode<synchronous>, transform_indices = @transform_19, window_bounds = array<i64: 1, 32>}, {pipeline_mode = #tpu.pipeline_mode<synchronous>, transform_indices = @transform_20, window_bounds = array<i64: 8, 32>}, {pipeline_mode = #tpu.pipeline_mode<synchronous>, transform_indices = @transform_21, window_bounds = array<i64: 32, 32>}, {pipeline_mode = #tpu.pipeline_mode<synchronous>, transform_indices = @transform_22, window_bounds = array<i64: 1, 32>}, {pipeline_mode = #tpu.pipeline_mode<synchronous>, transform_indices = @transform_23, window_bounds = array<i64: 1, 32>}, {pipeline_mode = #tpu.pipeline_mode<synchronous>, transform_indices = @transform_24, window_bounds = array<i64: 1, 1>}, {pipeline_mode = #tpu.pipeline_mode<synchronous>, transform_indices = @transform_25, window_bounds = array<i64: 4, 32>}, {pipeline_mode = #tpu.pipeline_mode<synchronous>, transform_indices = @transform_26, window_bounds = array<i64: 8, 32>}, {pipeline_mode = #tpu.pipeline_mode<synchronous>, transform_indices = @transform_27, window_bounds = array<i64: 1, 32>}, {pipeline_mode = #tpu.pipeline_mode<synchronous>, transform_indices = @transform_28, window_bounds = array<i64: 32, 2>}, {pipeline_mode = #tpu.pipeline_mode<synchronous>, transform_indices = @transform_29, window_bounds = array<i64: 1, 2>}, {transform_indices = @transform_30, window_bounds = array<i64: 8, 8, 128>}, {transform_indices = @transform_31, window_bounds = array<i64: 8, 32>}, {transform_indices = @transform_32, window_bounds = array<i64: 8, 32>}]} {
    %c0 = arith.constant 0 : index
    %c0_0 = arith.constant 0 : index
    %c0_1 = arith.constant 0 : index
    %0 = vector.load %arg2[%c0, %c0_0, %c0_1] : memref<8x8x4xf32, #tpu.memory_space<vmem>>, vector<8x8x4xf32>
    %1 = vector.shape_cast %0 : vector<8x8x4xf32> to vector<64x4xf32>
    %2 = arith.truncf %1 : vector<64x4xf32> to vector<64x4xbf16>
    %c0_2 = arith.constant 0 : index
    %c0_3 = arith.constant 0 : index
    %c0_4 = arith.constant 0 : index
    %3 = vector.load %arg3[%c0_2, %c0_3, %c0_4] : memref<8x8x2xf32, #tpu.memory_space<vmem>>, vector<8x8x2xf32>
    %4 = vector.shape_cast %3 : vector<8x8x2xf32> to vector<64x2xf32>
    %5 = arith.truncf %4 : vector<64x2xf32> to vector<64x2xbf16>
    %c0_5 = arith.constant 0 : index
    %c0_6 = arith.constant 0 : index
    %6 = vector.load %arg5[%c0_5, %c0_6] : memref<4x32xbf16, #tpu.memory_space<vmem>>, vector<4x32xbf16>
    %cst = arith.constant dense<0.000000e+00> : vector<64x32xf32>
    %7 = tpu.matmul %2, %6, %cst {dimension_numbers = #tpu.dot_dimension_numbers<[1], [0], [0], [1], [0, 0, 1, 1], [], []>} : vector<64x4xbf16>, vector<4x32xbf16>, vector<64x32xf32> -> vector<64x32xf32>
    %c0_7 = arith.constant 0 : index
    %c0_8 = arith.constant 0 : index
    %8 = vector.load %arg6[%c0_7, %c0_8] : memref<2x32xbf16, #tpu.memory_space<vmem>>, vector<2x32xbf16>
    %cst_9 = arith.constant dense<0.000000e+00> : vector<64x32xf32>
    %9 = tpu.matmul %5, %8, %cst_9 {dimension_numbers = #tpu.dot_dimension_numbers<[1], [0], [0], [1], [0, 0, 1, 1], [], []>} : vector<64x2xbf16>, vector<2x32xbf16>, vector<64x32xf32> -> vector<64x32xf32>
    %10 = arith.addf %7, %9 : vector<64x32xf32>
    %c0_10 = arith.constant 0 : index
    %c0_11 = arith.constant 0 : index
    %11 = vector.load %arg7[%c0_10, %c0_11] : memref<1x32xf32, #tpu.memory_space<vmem>>, vector<1x32xf32>
    %12 = vector.broadcast %11 : vector<1x32xf32> to vector<64x32xf32>
    %13 = arith.addf %10, %12 : vector<64x32xf32>
    %cst_12 = arith.constant 0.000000e+00 : f32
    %14 = vector.broadcast %cst_12 : f32 to vector<64x32xf32>
    %15 = arith.maximumf %13, %14 : vector<64x32xf32>
    %16 = arith.truncf %15 : vector<64x32xf32> to vector<64x32xbf16>
    %c0_13 = arith.constant 0 : index
    %c0_14 = arith.constant 0 : index
    %17 = vector.load %arg8[%c0_13, %c0_14] : memref<32x32xbf16, #tpu.memory_space<vmem>>, vector<32x32xbf16>
    %cst_15 = arith.constant dense<0.000000e+00> : vector<64x32xf32>
    %18 = tpu.matmul %16, %17, %cst_15 {dimension_numbers = #tpu.dot_dimension_numbers<[1], [0], [0], [1], [0, 0, 1, 1], [], []>} : vector<64x32xbf16>, vector<32x32xbf16>, vector<64x32xf32> -> vector<64x32xf32>
    %c0_16 = arith.constant 0 : index
    %c0_17 = arith.constant 0 : index
    %19 = vector.load %arg9[%c0_16, %c0_17] : memref<1x32xf32, #tpu.memory_space<vmem>>, vector<1x32xf32>
    %20 = vector.broadcast %19 : vector<1x32xf32> to vector<64x32xf32>
    %21 = arith.addf %18, %20 : vector<64x32xf32>
    %22 = arith.truncf %21 : vector<64x32xf32> to vector<64x32xbf16>
    %c0_18 = arith.constant 0 : index
    %c0_19 = arith.constant 0 : index
    %23 = vector.load %arg35[%c0_18, %c0_19] : memref<64x32xbf16, #tpu.memory_space<vmem>>, vector<64x32xbf16>
    tpu.vector_store %arg35[%c0_18, %c0_19], %22 {strides = array<i32>} : memref<64x32xbf16, #tpu.memory_space<vmem>>, vector<64x32xbf16>,
    %c0_20 = arith.constant 0 : index
    %c0_21 = arith.constant 0 : index
    %24 = vector.load %arg10[%c0_20, %c0_21] : memref<32x128xbf16, #tpu.memory_space<vmem>>, vector<32x128xbf16>
    %c0_22 = arith.constant 0 : index
    %c0_23 = arith.constant 0 : index
    %25 = vector.load %arg11[%c0_22, %c0_23] : memref<32x128xbf16, #tpu.memory_space<vmem>>, vector<32x128xbf16>
    %c0_24 = arith.constant 0 : index
    %c0_25 = arith.constant 0 : index
    %26 = vector.load %arg12[%c0_24, %c0_25] : memref<1x128xf32, #tpu.memory_space<vmem>>, vector<1x128xf32>
    %27 = vector.shape_cast %26 : vector<1x128xf32> to vector<1x128xf32>
    %28 = vector.broadcast %27 : vector<1x128xf32> to vector<8x128xf32>
    %cst_26 = arith.constant 0.000000e+00 : f32
    %29 = vector.broadcast %cst_26 : f32 to vector<8x32xf32>
    %c0_27 = arith.constant 0 : index
    %c0_28 = arith.constant 0 : index
    %30 = vector.load %arg37[%c0_27, %c0_28] : memref<8x32xf32, #tpu.memory_space<vmem>>, vector<8x32xf32>
    tpu.vector_store %arg37[%c0_27, %c0_28], %29 {strides = array<i32>} : memref<8x32xf32, #tpu.memory_space<vmem>>, vector<8x32xf32>,
    %cst_29 = arith.constant 0.000000e+00 : f32
    %31 = vector.broadcast %cst_29 : f32 to vector<8x32xf32>
    %c0_30 = arith.constant 0 : index
    %c0_31 = arith.constant 0 : index
    %32 = vector.load %arg38[%c0_30, %c0_31] : memref<8x32xf32, #tpu.memory_space<vmem>>, vector<8x32xf32>
    tpu.vector_store %arg38[%c0_30, %c0_31], %31 {strides = array<i32>} : memref<8x32xf32, #tpu.memory_space<vmem>>, vector<8x32xf32>,
    %c0_i32 = arith.constant 0 : i32
    %c1_i32 = arith.constant 1 : i32
    %33 = arith.muli %c0_i32, %c1_i32 : i32
    %c0_i32_32 = arith.constant 0 : i32
    %34 = arith.addi %c0_i32_32, %33 : i32
    %c7_i32 = arith.constant 7 : i32
    %35 = arith.subi %c7_i32, %34 : i32
    %c8_i32 = arith.constant 8 : i32
    %36 = arith.muli %35, %c8_i32 : i32
    %37 = tpu.assume_multiple %36, 8 : i32
    %38 = arith.index_cast %37 : i32 to index
    %c0_33 = arith.constant 0 : index
    %39 = vector.load %arg35[%38, %c0_33] : memref<64x32xbf16, #tpu.memory_space<vmem>>, vector<8x32xbf16>
    %c0_34 = arith.constant 0 : index
    %c0_35 = arith.constant 0 : index
    %40 = vector.load %arg37[%c0_34, %c0_35] : memref<8x32xf32, #tpu.memory_space<vmem>>, vector<8x32xf32>
    %c0_36 = arith.constant 0 : index
    %c0_37 = arith.constant 0 : index
    %41 = vector.load %arg38[%c0_36, %c0_37] : memref<8x32xf32, #tpu.memory_space<vmem>>, vector<8x32xf32>
    %cst_38 = arith.constant dense<0.000000e+00> : vector<8x128xf32>
    %42 = tpu.matmul %39, %24, %cst_38 {dimension_numbers = #tpu.dot_dimension_numbers<[1], [0], [0], [1], [0, 0, 1, 1], [], []>} : vector<8x32xbf16>, vector<32x128xbf16>, vector<8x128xf32> -> vector<8x128xf32>
    %43 = arith.truncf %40 : vector<8x32xf32> to vector<8x32xbf16>
    %cst_39 = arith.constant dense<0.000000e+00> : vector<8x128xf32>
    %44 = tpu.matmul %43, %25, %cst_39 {dimension_numbers = #tpu.dot_dimension_numbers<[1], [0], [0], [1], [0, 0, 1, 1], [], []>} : vector<8x32xbf16>, vector<32x128xbf16>, vector<8x128xf32> -> vector<8x128xf32>
    %45 = arith.addf %42, %44 : vector<8x128xf32>
    %46 = arith.addf %45, %28 : vector<8x128xf32>
    %47 = vector.extract_strided_slice %46 {offsets = [0, 0], sizes = [8, 32], strides = [1, 1]} : vector<8x128xf32> to vector<8x32xf32>
    %cst_40 = arith.constant 5.000000e-01 : f32
    %48 = vector.broadcast %cst_40 : f32 to vector<8x32xf32>
    %49 = arith.mulf %48, %47 : vector<8x32xf32>
    %50 = math.tanh %49 : vector<8x32xf32>
    %cst_41 = arith.constant 1.000000e+00 : f32
    %51 = vector.broadcast %cst_41 : f32 to vector<8x32xf32>
    %52 = arith.addf %50, %51 : vector<8x32xf32>
    %cst_42 = arith.constant 5.000000e-01 : f32
    %53 = vector.broadcast %cst_42 : f32 to vector<8x32xf32>
    %54 = arith.mulf %53, %52 : vector<8x32xf32>
    %55 = vector.extract_strided_slice %46 {offsets = [0, 32], sizes = [8, 32], strides = [1, 1]} : vector<8x128xf32> to vector<8x32xf32>
    %cst_43 = arith.constant 5.000000e-01 : f32
    %56 = vector.broadcast %cst_43 : f32 to vector<8x32xf32>
    %57 = arith.mulf %56, %55 : vector<8x32xf32>
    %58 = math.tanh %57 : vector<8x32xf32>
    %cst_44 = arith.constant 1.000000e+00 : f32
    %59 = vector.broadcast %cst_44 : f32 to vector<8x32xf32>
    %60 = arith.addf %58, %59 : vector<8x32xf32>
    %cst_45 = arith.constant 5.000000e-01 : f32
    %61 = vector.broadcast %cst_45 : f32 to vector<8x32xf32>
    %62 = arith.mulf %61, %60 : vector<8x32xf32>
    %63 = vector.extract_strided_slice %46 {offsets = [0, 64], sizes = [8, 32], strides = [1, 1]} : vector<8x128xf32> to vector<8x32xf32>
    %64 = math.tanh %63 : vector<8x32xf32>
    %65 = vector.extract_strided_slice %46 {offsets = [0, 96], sizes = [8, 32], strides = [1, 1]} : vector<8x128xf32> to vector<8x32xf32>
    %cst_46 = arith.constant 5.000000e-01 : f32
    %66 = vector.broadcast %cst_46 : f32 to vector<8x32xf32>
    %67 = arith.mulf %66, %65 : vector<8x32xf32>
    %68 = math.tanh %67 : vector<8x32xf32>
    %cst_47 = arith.constant 1.000000e+00 : f32
    %69 = vector.broadcast %cst_47 : f32 to vector<8x32xf32>
    %70 = arith.addf %68, %69 : vector<8x32xf32>
    %cst_48 = arith.constant 5.000000e-01 : f32
    %71 = vector.broadcast %cst_48 : f32 to vector<8x32xf32>
    %72 = arith.mulf %71, %70 : vector<8x32xf32>
    %73 = arith.mulf %62, %41 : vector<8x32xf32>
    %74 = arith.mulf %54, %64 : vector<8x32xf32>
    %75 = arith.addf %73, %74 : vector<8x32xf32>
    %76 = math.tanh %75 : vector<8x32xf32>
    %77 = arith.mulf %72, %76 : vector<8x32xf32>
    %c0_49 = arith.constant 0 : index
    %c0_50 = arith.constant 0 : index
    %78 = vector.load %arg37[%c0_49, %c0_50] : memref<8x32xf32, #tpu.memory_space<vmem>>, vector<8x32xf32>
    tpu.vector_store %arg37[%c0_49, %c0_50], %77 {strides = array<i32>} : memref<8x32xf32, #tpu.memory_space<vmem>>, vector<8x32xf32>,
    %c0_51 = arith.constant 0 : index
    %c0_52 = arith.constant 0 : index
    %79 = vector.load %arg38[%c0_51, %c0_52] : memref<8x32xf32, #tpu.memory_space<vmem>>, vector<8x32xf32>
    tpu.vector_store %arg38[%c0_51, %c0_52], %75 {strides = array<i32>} : memref<8x32xf32, #tpu.memory_space<vmem>>, vector<8x32xf32>,
    %80 = arith.truncf %77 : vector<8x32xf32> to vector<8x32xbf16>
    %81 = arith.index_cast %37 : i32 to index
    %c0_53 = arith.constant 0 : index
    %82 = vector.load %arg36[%81, %c0_53] : memref<64x32xbf16, #tpu.memory_space<vmem>>, vector<8x32xbf16>
    tpu.vector_store %arg36[%81, %c0_53], %80 {strides = array<i32>} : memref<64x32xbf16, #tpu.memory_space<vmem>>, vector<8x32xbf16>,
    %c1_i32_54 = arith.constant 1 : i32
    %c1_i32_55 = arith.constant 1 : i32
    %83 = arith.muli %c1_i32_54, %c1_i32_55 : i32
    %c0_i32_56 = arith.constant 0 : i32
    %84 = arith.addi %c0_i32_56, %83 : i32
    %c7_i32_57 = arith.constant 7 : i32
    %85 = arith.subi %c7_i32_57, %84 : i32
    %c8_i32_58 = arith.constant 8 : i32
    %86 = arith.muli %85, %c8_i32_58 : i32
    %87 = tpu.assume_multiple %86, 8 : i32
    %88 = arith.index_cast %87 : i32 to index
    %c0_59 = arith.constant 0 : index
    %89 = vector.load %arg35[%88, %c0_59] : memref<64x32xbf16, #tpu.memory_space<vmem>>, vector<8x32xbf16>
    %c0_60 = arith.constant 0 : index
    %c0_61 = arith.constant 0 : index
    %90 = vector.load %arg37[%c0_60, %c0_61] : memref<8x32xf32, #tpu.memory_space<vmem>>, vector<8x32xf32>
    %c0_62 = arith.constant 0 : index
    %c0_63 = arith.constant 0 : index
    %91 = vector.load %arg38[%c0_62, %c0_63] : memref<8x32xf32, #tpu.memory_space<vmem>>, vector<8x32xf32>
    %cst_64 = arith.constant dense<0.000000e+00> : vector<8x128xf32>
    %92 = tpu.matmul %89, %24, %cst_64 {dimension_numbers = #tpu.dot_dimension_numbers<[1], [0], [0], [1], [0, 0, 1, 1], [], []>} : vector<8x32xbf16>, vector<32x128xbf16>, vector<8x128xf32> -> vector<8x128xf32>
    %93 = arith.truncf %90 : vector<8x32xf32> to vector<8x32xbf16>
    %cst_65 = arith.constant dense<0.000000e+00> : vector<8x128xf32>
    %94 = tpu.matmul %93, %25, %cst_65 {dimension_numbers = #tpu.dot_dimension_numbers<[1], [0], [0], [1], [0, 0, 1, 1], [], []>} : vector<8x32xbf16>, vector<32x128xbf16>, vector<8x128xf32> -> vector<8x128xf32>
    %95 = arith.addf %92, %94 : vector<8x128xf32>
    %96 = arith.addf %95, %28 : vector<8x128xf32>
    %97 = vector.extract_strided_slice %96 {offsets = [0, 0], sizes = [8, 32], strides = [1, 1]} : vector<8x128xf32> to vector<8x32xf32>
    %cst_66 = arith.constant 5.000000e-01 : f32
    %98 = vector.broadcast %cst_66 : f32 to vector<8x32xf32>
    %99 = arith.mulf %98, %97 : vector<8x32xf32>
    %100 = math.tanh %99 : vector<8x32xf32>
    %cst_67 = arith.constant 1.000000e+00 : f32
    %101 = vector.broadcast %cst_67 : f32 to vector<8x32xf32>
    %102 = arith.addf %100, %101 : vector<8x32xf32>
    %cst_68 = arith.constant 5.000000e-01 : f32
    %103 = vector.broadcast %cst_68 : f32 to vector<8x32xf32>
    %104 = arith.mulf %103, %102 : vector<8x32xf32>
    %105 = vector.extract_strided_slice %96 {offsets = [0, 32], sizes = [8, 32], strides = [1, 1]} : vector<8x128xf32> to vector<8x32xf32>
    %cst_69 = arith.constant 5.000000e-01 : f32
    %106 = vector.broadcast %cst_69 : f32 to vector<8x32xf32>
    %107 = arith.mulf %106, %105 : vector<8x32xf32>
    %108 = math.tanh %107 : vector<8x32xf32>
    %cst_70 = arith.constant 1.000000e+00 : f32
    %109 = vector.broadcast %cst_70 : f32 to vector<8x32xf32>
    %110 = arith.addf %108, %109 : vector<8x32xf32>
    %cst_71 = arith.constant 5.000000e-01 : f32
    %111 = vector.broadcast %cst_71 : f32 to vector<8x32xf32>
    %112 = arith.mulf %111, %110 : vector<8x32xf32>
    %113 = vector.extract_strided_slice %96 {offsets = [0, 64], sizes = [8, 32], strides = [1, 1]} : vector<8x128xf32> to vector<8x32xf32>
    %114 = math.tanh %113 : vector<8x32xf32>
    %115 = vector.extract_strided_slice %96 {offsets = [0, 96], sizes = [8, 32], strides = [1, 1]} : vector<8x128xf32> to vector<8x32xf32>
    %cst_72 = arith.constant 5.000000e-01 : f32
    %116 = vector.broadcast %cst_72 : f32 to vector<8x32xf32>
    %117 = arith.mulf %116, %115 : vector<8x32xf32>
    %118 = math.tanh %117 : vector<8x32xf32>
    %cst_73 = arith.constant 1.000000e+00 : f32
    %119 = vector.broadcast %cst_73 : f32 to vector<8x32xf32>
    %120 = arith.addf %118, %119 : vector<8x32xf32>
    %cst_74 = arith.constant 5.000000e-01 : f32
    %121 = vector.broadcast %cst_74 : f32 to vector<8x32xf32>
    %122 = arith.mulf %121, %120 : vector<8x32xf32>
    %123 = arith.mulf %112, %91 : vector<8x32xf32>
    %124 = arith.mulf %104, %114 : vector<8x32xf32>
    %125 = arith.addf %123, %124 : vector<8x32xf32>
    %126 = math.tanh %125 : vector<8x32xf32>
    %127 = arith.mulf %122, %126 : vector<8x32xf32>
    %c0_75 = arith.constant 0 : index
    %c0_76 = arith.constant 0 : index
    %128 = vector.load %arg37[%c0_75, %c0_76] : memref<8x32xf32, #tpu.memory_space<vmem>>, vector<8x32xf32>
    tpu.vector_store %arg37[%c0_75, %c0_76], %127 {strides = array<i32>} : memref<8x32xf32, #tpu.memory_space<vmem>>, vector<8x32xf32>,
    %c0_77 = arith.constant 0 : index
    %c0_78 = arith.constant 0 : index
    %129 = vector.load %arg38[%c0_77, %c0_78] : memref<8x32xf32, #tpu.memory_space<vmem>>, vector<8x32xf32>
    tpu.vector_store %arg38[%c0_77, %c0_78], %125 {strides = array<i32>} : memref<8x32xf32, #tpu.memory_space<vmem>>, vector<8x32xf32>,
    %130 = arith.truncf %127 : vector<8x32xf32> to vector<8x32xbf16>
    %131 = arith.index_cast %87 : i32 to index
    %c0_79 = arith.constant 0 : index
    %132 = vector.load %arg36[%131, %c0_79] : memref<64x32xbf16, #tpu.memory_space<vmem>>, vector<8x32xbf16>
    tpu.vector_store %arg36[%131, %c0_79], %130 {strides = array<i32>} : memref<64x32xbf16, #tpu.memory_space<vmem>>, vector<8x32xbf16>,
    %c2_i32 = arith.constant 2 : i32
    %c1_i32_80 = arith.constant 1 : i32
    %133 = arith.muli %c2_i32, %c1_i32_80 : i32
    %c0_i32_81 = arith.constant 0 : i32
    %134 = arith.addi %c0_i32_81, %133 : i32
    %c7_i32_82 = arith.constant 7 : i32
    %135 = arith.subi %c7_i32_82, %134 : i32
    %c8_i32_83 = arith.constant 8 : i32
    %136 = arith.muli %135, %c8_i32_83 : i32
    %137 = tpu.assume_multiple %136, 8 : i32
    %138 = arith.index_cast %137 : i32 to index
    %c0_84 = arith.constant 0 : index
    %139 = vector.load %arg35[%138, %c0_84] : memref<64x32xbf16, #tpu.memory_space<vmem>>, vector<8x32xbf16>
    %c0_85 = arith.constant 0 : index
    %c0_86 = arith.constant 0 : index
    %140 = vector.load %arg37[%c0_85, %c0_86] : memref<8x32xf32, #tpu.memory_space<vmem>>, vector<8x32xf32>
    %c0_87 = arith.constant 0 : index
    %c0_88 = arith.constant 0 : index
    %141 = vector.load %arg38[%c0_87, %c0_88] : memref<8x32xf32, #tpu.memory_space<vmem>>, vector<8x32xf32>
    %cst_89 = arith.constant dense<0.000000e+00> : vector<8x128xf32>
    %142 = tpu.matmul %139, %24, %cst_89 {dimension_numbers = #tpu.dot_dimension_numbers<[1], [0], [0], [1], [0, 0, 1, 1], [], []>} : vector<8x32xbf16>, vector<32x128xbf16>, vector<8x128xf32> -> vector<8x128xf32>
    %143 = arith.truncf %140 : vector<8x32xf32> to vector<8x32xbf16>
    %cst_90 = arith.constant dense<0.000000e+00> : vector<8x128xf32>
    %144 = tpu.matmul %143, %25, %cst_90 {dimension_numbers = #tpu.dot_dimension_numbers<[1], [0], [0], [1], [0, 0, 1, 1], [], []>} : vector<8x32xbf16>, vector<32x128xbf16>, vector<8x128xf32> -> vector<8x128xf32>
    %145 = arith.addf %142, %144 : vector<8x128xf32>
    %146 = arith.addf %145, %28 : vector<8x128xf32>
    %147 = vector.extract_strided_slice %146 {offsets = [0, 0], sizes = [8, 32], strides = [1, 1]} : vector<8x128xf32> to vector<8x32xf32>
    %cst_91 = arith.constant 5.000000e-01 : f32
    %148 = vector.broadcast %cst_91 : f32 to vector<8x32xf32>
    %149 = arith.mulf %148, %147 : vector<8x32xf32>
    %150 = math.tanh %149 : vector<8x32xf32>
    %cst_92 = arith.constant 1.000000e+00 : f32
    %151 = vector.broadcast %cst_92 : f32 to vector<8x32xf32>
    %152 = arith.addf %150, %151 : vector<8x32xf32>
    %cst_93 = arith.constant 5.000000e-01 : f32
    %153 = vector.broadcast %cst_93 : f32 to vector<8x32xf32>
    %154 = arith.mulf %153, %152 : vector<8x32xf32>
    %155 = vector.extract_strided_slice %146 {offsets = [0, 32], sizes = [8, 32], strides = [1, 1]} : vector<8x128xf32> to vector<8x32xf32>
    %cst_94 = arith.constant 5.000000e-01 : f32
    %156 = vector.broadcast %cst_94 : f32 to vector<8x32xf32>
    %157 = arith.mulf %156, %155 : vector<8x32xf32>
    %158 = math.tanh %157 : vector<8x32xf32>
    %cst_95 = arith.constant 1.000000e+00 : f32
    %159 = vector.broadcast %cst_95 : f32 to vector<8x32xf32>
    %160 = arith.addf %158, %159 : vector<8x32xf32>
    %cst_96 = arith.constant 5.000000e-01 : f32
    %161 = vector.broadcast %cst_96 : f32 to vector<8x32xf32>
    %162 = arith.mulf %161, %160 : vector<8x32xf32>
    %163 = vector.extract_strided_slice %146 {offsets = [0, 64], sizes = [8, 32], strides = [1, 1]} : vector<8x128xf32> to vector<8x32xf32>
    %164 = math.tanh %163 : vector<8x32xf32>
    %165 = vector.extract_strided_slice %146 {offsets = [0, 96], sizes = [8, 32], strides = [1, 1]} : vector<8x128xf32> to vector<8x32xf32>
    %cst_97 = arith.constant 5.000000e-01 : f32
    %166 = vector.broadcast %cst_97 : f32 to vector<8x32xf32>
    %167 = arith.mulf %166, %165 : vector<8x32xf32>
    %168 = math.tanh %167 : vector<8x32xf32>
    %cst_98 = arith.constant 1.000000e+00 : f32
    %169 = vector.broadcast %cst_98 : f32 to vector<8x32xf32>
    %170 = arith.addf %168, %169 : vector<8x32xf32>
    %cst_99 = arith.constant 5.000000e-01 : f32
    %171 = vector.broadcast %cst_99 : f32 to vector<8x32xf32>
    %172 = arith.mulf %171, %170 : vector<8x32xf32>
    %173 = arith.mulf %162, %141 : vector<8x32xf32>
    %174 = arith.mulf %154, %164 : vector<8x32xf32>
    %175 = arith.addf %173, %174 : vector<8x32xf32>
    %176 = math.tanh %175 : vector<8x32xf32>
    %177 = arith.mulf %172, %176 : vector<8x32xf32>
    %c0_100 = arith.constant 0 : index
    %c0_101 = arith.constant 0 : index
    %178 = vector.load %arg37[%c0_100, %c0_101] : memref<8x32xf32, #tpu.memory_space<vmem>>, vector<8x32xf32>
    tpu.vector_store %arg37[%c0_100, %c0_101], %177 {strides = array<i32>} : memref<8x32xf32, #tpu.memory_space<vmem>>, vector<8x32xf32>,
    %c0_102 = arith.constant 0 : index
    %c0_103 = arith.constant 0 : index
    %179 = vector.load %arg38[%c0_102, %c0_103] : memref<8x32xf32, #tpu.memory_space<vmem>>, vector<8x32xf32>
    tpu.vector_store %arg38[%c0_102, %c0_103], %175 {strides = array<i32>} : memref<8x32xf32, #tpu.memory_space<vmem>>, vector<8x32xf32>,
    %180 = arith.truncf %177 : vector<8x32xf32> to vector<8x32xbf16>
    %181 = arith.index_cast %137 : i32 to index
    %c0_104 = arith.constant 0 : index
    %182 = vector.load %arg36[%181, %c0_104] : memref<64x32xbf16, #tpu.memory_space<vmem>>, vector<8x32xbf16>
    tpu.vector_store %arg36[%181, %c0_104], %180 {strides = array<i32>} : memref<64x32xbf16, #tpu.memory_space<vmem>>, vector<8x32xbf16>,
    %c3_i32 = arith.constant 3 : i32
    %c1_i32_105 = arith.constant 1 : i32
    %183 = arith.muli %c3_i32, %c1_i32_105 : i32
    %c0_i32_106 = arith.constant 0 : i32
    %184 = arith.addi %c0_i32_106, %183 : i32
    %c7_i32_107 = arith.constant 7 : i32
    %185 = arith.subi %c7_i32_107, %184 : i32
    %c8_i32_108 = arith.constant 8 : i32
    %186 = arith.muli %185, %c8_i32_108 : i32
    %187 = tpu.assume_multiple %186, 8 : i32
    %188 = arith.index_cast %187 : i32 to index
    %c0_109 = arith.constant 0 : index
    %189 = vector.load %arg35[%188, %c0_109] : memref<64x32xbf16, #tpu.memory_space<vmem>>, vector<8x32xbf16>
    %c0_110 = arith.constant 0 : index
    %c0_111 = arith.constant 0 : index
    %190 = vector.load %arg37[%c0_110, %c0_111] : memref<8x32xf32, #tpu.memory_space<vmem>>, vector<8x32xf32>
    %c0_112 = arith.constant 0 : index
    %c0_113 = arith.constant 0 : index
    %191 = vector.load %arg38[%c0_112, %c0_113] : memref<8x32xf32, #tpu.memory_space<vmem>>, vector<8x32xf32>
    %cst_114 = arith.constant dense<0.000000e+00> : vector<8x128xf32>
    %192 = tpu.matmul %189, %24, %cst_114 {dimension_numbers = #tpu.dot_dimension_numbers<[1], [0], [0], [1], [0, 0, 1, 1], [], []>} : vector<8x32xbf16>, vector<32x128xbf16>, vector<8x128xf32> -> vector<8x128xf32>
    %193 = arith.truncf %190 : vector<8x32xf32> to vector<8x32xbf16>
    %cst_115 = arith.constant dense<0.000000e+00> : vector<8x128xf32>
    %194 = tpu.matmul %193, %25, %cst_115 {dimension_numbers = #tpu.dot_dimension_numbers<[1], [0], [0], [1], [0, 0, 1, 1], [], []>} : vector<8x32xbf16>, vector<32x128xbf16>, vector<8x128xf32> -> vector<8x128xf32>
    %195 = arith.addf %192, %194 : vector<8x128xf32>
    %196 = arith.addf %195, %28 : vector<8x128xf32>
    %197 = vector.extract_strided_slice %196 {offsets = [0, 0], sizes = [8, 32], strides = [1, 1]} : vector<8x128xf32> to vector<8x32xf32>
    %cst_116 = arith.constant 5.000000e-01 : f32
    %198 = vector.broadcast %cst_116 : f32 to vector<8x32xf32>
    %199 = arith.mulf %198, %197 : vector<8x32xf32>
    %200 = math.tanh %199 : vector<8x32xf32>
    %cst_117 = arith.constant 1.000000e+00 : f32
    %201 = vector.broadcast %cst_117 : f32 to vector<8x32xf32>
    %202 = arith.addf %200, %201 : vector<8x32xf32>
    %cst_118 = arith.constant 5.000000e-01 : f32
    %203 = vector.broadcast %cst_118 : f32 to vector<8x32xf32>
    %204 = arith.mulf %203, %202 : vector<8x32xf32>
    %205 = vector.extract_strided_slice %196 {offsets = [0, 32], sizes = [8, 32], strides = [1, 1]} : vector<8x128xf32> to vector<8x32xf32>
    %cst_119 = arith.constant 5.000000e-01 : f32
    %206 = vector.broadcast %cst_119 : f32 to vector<8x32xf32>
    %207 = arith.mulf %206, %205 : vector<8x32xf32>
    %208 = math.tanh %207 : vector<8x32xf32>
    %cst_120 = arith.constant 1.000000e+00 : f32
    %209 = vector.broadcast %cst_120 : f32 to vector<8x32xf32>
    %210 = arith.addf %208, %209 : vector<8x32xf32>
    %cst_121 = arith.constant 5.000000e-01 : f32
    %211 = vector.broadcast %cst_121 : f32 to vector<8x32xf32>
    %212 = arith.mulf %211, %210 : vector<8x32xf32>
    %213 = vector.extract_strided_slice %196 {offsets = [0, 64], sizes = [8, 32], strides = [1, 1]} : vector<8x128xf32> to vector<8x32xf32>
    %214 = math.tanh %213 : vector<8x32xf32>
    %215 = vector.extract_strided_slice %196 {offsets = [0, 96], sizes = [8, 32], strides = [1, 1]} : vector<8x128xf32> to vector<8x32xf32>
    %cst_122 = arith.constant 5.000000e-01 : f32
    %216 = vector.broadcast %cst_122 : f32 to vector<8x32xf32>
    %217 = arith.mulf %216, %215 : vector<8x32xf32>
    %218 = math.tanh %217 : vector<8x32xf32>
    %cst_123 = arith.constant 1.000000e+00 : f32
    %219 = vector.broadcast %cst_123 : f32 to vector<8x32xf32>
    %220 = arith.addf %218, %219 : vector<8x32xf32>
    %cst_124 = arith.constant 5.000000e-01 : f32
    %221 = vector.broadcast %cst_124 : f32 to vector<8x32xf32>
    %222 = arith.mulf %221, %220 : vector<8x32xf32>
    %223 = arith.mulf %212, %191 : vector<8x32xf32>
    %224 = arith.mulf %204, %214 : vector<8x32xf32>
    %225 = arith.addf %223, %224 : vector<8x32xf32>
    %226 = math.tanh %225 : vector<8x32xf32>
    %227 = arith.mulf %222, %226 : vector<8x32xf32>
    %c0_125 = arith.constant 0 : index
    %c0_126 = arith.constant 0 : index
    %228 = vector.load %arg37[%c0_125, %c0_126] : memref<8x32xf32, #tpu.memory_space<vmem>>, vector<8x32xf32>
    tpu.vector_store %arg37[%c0_125, %c0_126], %227 {strides = array<i32>} : memref<8x32xf32, #tpu.memory_space<vmem>>, vector<8x32xf32>,
    %c0_127 = arith.constant 0 : index
    %c0_128 = arith.constant 0 : index
    %229 = vector.load %arg38[%c0_127, %c0_128] : memref<8x32xf32, #tpu.memory_space<vmem>>, vector<8x32xf32>
    tpu.vector_store %arg38[%c0_127, %c0_128], %225 {strides = array<i32>} : memref<8x32xf32, #tpu.memory_space<vmem>>, vector<8x32xf32>,
    %230 = arith.truncf %227 : vector<8x32xf32> to vector<8x32xbf16>
    %231 = arith.index_cast %187 : i32 to index
    %c0_129 = arith.constant 0 : index
    %232 = vector.load %arg36[%231, %c0_129] : memref<64x32xbf16, #tpu.memory_space<vmem>>, vector<8x32xbf16>
    tpu.vector_store %arg36[%231, %c0_129], %230 {strides = array<i32>} : memref<64x32xbf16, #tpu.memory_space<vmem>>, vector<8x32xbf16>,
    %c4_i32 = arith.constant 4 : i32
    %c1_i32_130 = arith.constant 1 : i32
    %233 = arith.muli %c4_i32, %c1_i32_130 : i32
    %c0_i32_131 = arith.constant 0 : i32
    %234 = arith.addi %c0_i32_131, %233 : i32
    %c7_i32_132 = arith.constant 7 : i32
    %235 = arith.subi %c7_i32_132, %234 : i32
    %c8_i32_133 = arith.constant 8 : i32
    %236 = arith.muli %235, %c8_i32_133 : i32
    %237 = tpu.assume_multiple %236, 8 : i32
    %238 = arith.index_cast %237 : i32 to index
    %c0_134 = arith.constant 0 : index
    %239 = vector.load %arg35[%238, %c0_134] : memref<64x32xbf16, #tpu.memory_space<vmem>>, vector<8x32xbf16>
    %c0_135 = arith.constant 0 : index
    %c0_136 = arith.constant 0 : index
    %240 = vector.load %arg37[%c0_135, %c0_136] : memref<8x32xf32, #tpu.memory_space<vmem>>, vector<8x32xf32>
    %c0_137 = arith.constant 0 : index
    %c0_138 = arith.constant 0 : index
    %241 = vector.load %arg38[%c0_137, %c0_138] : memref<8x32xf32, #tpu.memory_space<vmem>>, vector<8x32xf32>
    %cst_139 = arith.constant dense<0.000000e+00> : vector<8x128xf32>
    %242 = tpu.matmul %239, %24, %cst_139 {dimension_numbers = #tpu.dot_dimension_numbers<[1], [0], [0], [1], [0, 0, 1, 1], [], []>} : vector<8x32xbf16>, vector<32x128xbf16>, vector<8x128xf32> -> vector<8x128xf32>
    %243 = arith.truncf %240 : vector<8x32xf32> to vector<8x32xbf16>
    %cst_140 = arith.constant dense<0.000000e+00> : vector<8x128xf32>
    %244 = tpu.matmul %243, %25, %cst_140 {dimension_numbers = #tpu.dot_dimension_numbers<[1], [0], [0], [1], [0, 0, 1, 1], [], []>} : vector<8x32xbf16>, vector<32x128xbf16>, vector<8x128xf32> -> vector<8x128xf32>
    %245 = arith.addf %242, %244 : vector<8x128xf32>
    %246 = arith.addf %245, %28 : vector<8x128xf32>
    %247 = vector.extract_strided_slice %246 {offsets = [0, 0], sizes = [8, 32], strides = [1, 1]} : vector<8x128xf32> to vector<8x32xf32>
    %cst_141 = arith.constant 5.000000e-01 : f32
    %248 = vector.broadcast %cst_141 : f32 to vector<8x32xf32>
    %249 = arith.mulf %248, %247 : vector<8x32xf32>
    %250 = math.tanh %249 : vector<8x32xf32>
    %cst_142 = arith.constant 1.000000e+00 : f32
    %251 = vector.broadcast %cst_142 : f32 to vector<8x32xf32>
    %252 = arith.addf %250, %251 : vector<8x32xf32>
    %cst_143 = arith.constant 5.000000e-01 : f32
    %253 = vector.broadcast %cst_143 : f32 to vector<8x32xf32>
    %254 = arith.mulf %253, %252 : vector<8x32xf32>
    %255 = vector.extract_strided_slice %246 {offsets = [0, 32], sizes = [8, 32], strides = [1, 1]} : vector<8x128xf32> to vector<8x32xf32>
    %cst_144 = arith.constant 5.000000e-01 : f32
    %256 = vector.broadcast %cst_144 : f32 to vector<8x32xf32>
    %257 = arith.mulf %256, %255 : vector<8x32xf32>
    %258 = math.tanh %257 : vector<8x32xf32>
    %cst_145 = arith.constant 1.000000e+00 : f32
    %259 = vector.broadcast %cst_145 : f32 to vector<8x32xf32>
    %260 = arith.addf %258, %259 : vector<8x32xf32>
    %cst_146 = arith.constant 5.000000e-01 : f32
    %261 = vector.broadcast %cst_146 : f32 to vector<8x32xf32>
    %262 = arith.mulf %261, %260 : vector<8x32xf32>
    %263 = vector.extract_strided_slice %246 {offsets = [0, 64], sizes = [8, 32], strides = [1, 1]} : vector<8x128xf32> to vector<8x32xf32>
    %264 = math.tanh %263 : vector<8x32xf32>
    %265 = vector.extract_strided_slice %246 {offsets = [0, 96], sizes = [8, 32], strides = [1, 1]} : vector<8x128xf32> to vector<8x32xf32>
    %cst_147 = arith.constant 5.000000e-01 : f32
    %266 = vector.broadcast %cst_147 : f32 to vector<8x32xf32>
    %267 = arith.mulf %266, %265 : vector<8x32xf32>
    %268 = math.tanh %267 : vector<8x32xf32>
    %cst_148 = arith.constant 1.000000e+00 : f32
    %269 = vector.broadcast %cst_148 : f32 to vector<8x32xf32>
    %270 = arith.addf %268, %269 : vector<8x32xf32>
    %cst_149 = arith.constant 5.000000e-01 : f32
    %271 = vector.broadcast %cst_149 : f32 to vector<8x32xf32>
    %272 = arith.mulf %271, %270 : vector<8x32xf32>
    %273 = arith.mulf %262, %241 : vector<8x32xf32>
    %274 = arith.mulf %254, %264 : vector<8x32xf32>
    %275 = arith.addf %273, %274 : vector<8x32xf32>
    %276 = math.tanh %275 : vector<8x32xf32>
    %277 = arith.mulf %272, %276 : vector<8x32xf32>
    %c0_150 = arith.constant 0 : index
    %c0_151 = arith.constant 0 : index
    %278 = vector.load %arg37[%c0_150, %c0_151] : memref<8x32xf32, #tpu.memory_space<vmem>>, vector<8x32xf32>
    tpu.vector_store %arg37[%c0_150, %c0_151], %277 {strides = array<i32>} : memref<8x32xf32, #tpu.memory_space<vmem>>, vector<8x32xf32>,
    %c0_152 = arith.constant 0 : index
    %c0_153 = arith.constant 0 : index
    %279 = vector.load %arg38[%c0_152, %c0_153] : memref<8x32xf32, #tpu.memory_space<vmem>>, vector<8x32xf32>
    tpu.vector_store %arg38[%c0_152, %c0_153], %275 {strides = array<i32>} : memref<8x32xf32, #tpu.memory_space<vmem>>, vector<8x32xf32>,
    %280 = arith.truncf %277 : vector<8x32xf32> to vector<8x32xbf16>
    %281 = arith.index_cast %237 : i32 to index
    %c0_154 = arith.constant 0 : index
    %282 = vector.load %arg36[%281, %c0_154] : memref<64x32xbf16, #tpu.memory_space<vmem>>, vector<8x32xbf16>
    tpu.vector_store %arg36[%281, %c0_154], %280 {strides = array<i32>} : memref<64x32xbf16, #tpu.memory_space<vmem>>, vector<8x32xbf16>,
    %c5_i32 = arith.constant 5 : i32
    %c1_i32_155 = arith.constant 1 : i32
    %283 = arith.muli %c5_i32, %c1_i32_155 : i32
    %c0_i32_156 = arith.constant 0 : i32
    %284 = arith.addi %c0_i32_156, %283 : i32
    %c7_i32_157 = arith.constant 7 : i32
    %285 = arith.subi %c7_i32_157, %284 : i32
    %c8_i32_158 = arith.constant 8 : i32
    %286 = arith.muli %285, %c8_i32_158 : i32
    %287 = tpu.assume_multiple %286, 8 : i32
    %288 = arith.index_cast %287 : i32 to index
    %c0_159 = arith.constant 0 : index
    %289 = vector.load %arg35[%288, %c0_159] : memref<64x32xbf16, #tpu.memory_space<vmem>>, vector<8x32xbf16>
    %c0_160 = arith.constant 0 : index
    %c0_161 = arith.constant 0 : index
    %290 = vector.load %arg37[%c0_160, %c0_161] : memref<8x32xf32, #tpu.memory_space<vmem>>, vector<8x32xf32>
    %c0_162 = arith.constant 0 : index
    %c0_163 = arith.constant 0 : index
    %291 = vector.load %arg38[%c0_162, %c0_163] : memref<8x32xf32, #tpu.memory_space<vmem>>, vector<8x32xf32>
    %cst_164 = arith.constant dense<0.000000e+00> : vector<8x128xf32>
    %292 = tpu.matmul %289, %24, %cst_164 {dimension_numbers = #tpu.dot_dimension_numbers<[1], [0], [0], [1], [0, 0, 1, 1], [], []>} : vector<8x32xbf16>, vector<32x128xbf16>, vector<8x128xf32> -> vector<8x128xf32>
    %293 = arith.truncf %290 : vector<8x32xf32> to vector<8x32xbf16>
    %cst_165 = arith.constant dense<0.000000e+00> : vector<8x128xf32>
    %294 = tpu.matmul %293, %25, %cst_165 {dimension_numbers = #tpu.dot_dimension_numbers<[1], [0], [0], [1], [0, 0, 1, 1], [], []>} : vector<8x32xbf16>, vector<32x128xbf16>, vector<8x128xf32> -> vector<8x128xf32>
    %295 = arith.addf %292, %294 : vector<8x128xf32>
    %296 = arith.addf %295, %28 : vector<8x128xf32>
    %297 = vector.extract_strided_slice %296 {offsets = [0, 0], sizes = [8, 32], strides = [1, 1]} : vector<8x128xf32> to vector<8x32xf32>
    %cst_166 = arith.constant 5.000000e-01 : f32
    %298 = vector.broadcast %cst_166 : f32 to vector<8x32xf32>
    %299 = arith.mulf %298, %297 : vector<8x32xf32>
    %300 = math.tanh %299 : vector<8x32xf32>
    %cst_167 = arith.constant 1.000000e+00 : f32
    %301 = vector.broadcast %cst_167 : f32 to vector<8x32xf32>
    %302 = arith.addf %300, %301 : vector<8x32xf32>
    %cst_168 = arith.constant 5.000000e-01 : f32
    %303 = vector.broadcast %cst_168 : f32 to vector<8x32xf32>
    %304 = arith.mulf %303, %302 : vector<8x32xf32>
    %305 = vector.extract_strided_slice %296 {offsets = [0, 32], sizes = [8, 32], strides = [1, 1]} : vector<8x128xf32> to vector<8x32xf32>
    %cst_169 = arith.constant 5.000000e-01 : f32
    %306 = vector.broadcast %cst_169 : f32 to vector<8x32xf32>
    %307 = arith.mulf %306, %305 : vector<8x32xf32>
    %308 = math.tanh %307 : vector<8x32xf32>
    %cst_170 = arith.constant 1.000000e+00 : f32
    %309 = vector.broadcast %cst_170 : f32 to vector<8x32xf32>
    %310 = arith.addf %308, %309 : vector<8x32xf32>
    %cst_171 = arith.constant 5.000000e-01 : f32
    %311 = vector.broadcast %cst_171 : f32 to vector<8x32xf32>
    %312 = arith.mulf %311, %310 : vector<8x32xf32>
    %313 = vector.extract_strided_slice %296 {offsets = [0, 64], sizes = [8, 32], strides = [1, 1]} : vector<8x128xf32> to vector<8x32xf32>
    %314 = math.tanh %313 : vector<8x32xf32>
    %315 = vector.extract_strided_slice %296 {offsets = [0, 96], sizes = [8, 32], strides = [1, 1]} : vector<8x128xf32> to vector<8x32xf32>
    %cst_172 = arith.constant 5.000000e-01 : f32
    %316 = vector.broadcast %cst_172 : f32 to vector<8x32xf32>
    %317 = arith.mulf %316, %315 : vector<8x32xf32>
    %318 = math.tanh %317 : vector<8x32xf32>
    %cst_173 = arith.constant 1.000000e+00 : f32
    %319 = vector.broadcast %cst_173 : f32 to vector<8x32xf32>
    %320 = arith.addf %318, %319 : vector<8x32xf32>
    %cst_174 = arith.constant 5.000000e-01 : f32
    %321 = vector.broadcast %cst_174 : f32 to vector<8x32xf32>
    %322 = arith.mulf %321, %320 : vector<8x32xf32>
    %323 = arith.mulf %312, %291 : vector<8x32xf32>
    %324 = arith.mulf %304, %314 : vector<8x32xf32>
    %325 = arith.addf %323, %324 : vector<8x32xf32>
    %326 = math.tanh %325 : vector<8x32xf32>
    %327 = arith.mulf %322, %326 : vector<8x32xf32>
    %c0_175 = arith.constant 0 : index
    %c0_176 = arith.constant 0 : index
    %328 = vector.load %arg37[%c0_175, %c0_176] : memref<8x32xf32, #tpu.memory_space<vmem>>, vector<8x32xf32>
    tpu.vector_store %arg37[%c0_175, %c0_176], %327 {strides = array<i32>} : memref<8x32xf32, #tpu.memory_space<vmem>>, vector<8x32xf32>,
    %c0_177 = arith.constant 0 : index
    %c0_178 = arith.constant 0 : index
    %329 = vector.load %arg38[%c0_177, %c0_178] : memref<8x32xf32, #tpu.memory_space<vmem>>, vector<8x32xf32>
    tpu.vector_store %arg38[%c0_177, %c0_178], %325 {strides = array<i32>} : memref<8x32xf32, #tpu.memory_space<vmem>>, vector<8x32xf32>,
    %330 = arith.truncf %327 : vector<8x32xf32> to vector<8x32xbf16>
    %331 = arith.index_cast %287 : i32 to index
    %c0_179 = arith.constant 0 : index
    %332 = vector.load %arg36[%331, %c0_179] : memref<64x32xbf16, #tpu.memory_space<vmem>>, vector<8x32xbf16>
    tpu.vector_store %arg36[%331, %c0_179], %330 {strides = array<i32>} : memref<64x32xbf16, #tpu.memory_space<vmem>>, vector<8x32xbf16>,
    %c6_i32 = arith.constant 6 : i32
    %c1_i32_180 = arith.constant 1 : i32
    %333 = arith.muli %c6_i32, %c1_i32_180 : i32
    %c0_i32_181 = arith.constant 0 : i32
    %334 = arith.addi %c0_i32_181, %333 : i32
    %c7_i32_182 = arith.constant 7 : i32
    %335 = arith.subi %c7_i32_182, %334 : i32
    %c8_i32_183 = arith.constant 8 : i32
    %336 = arith.muli %335, %c8_i32_183 : i32
    %337 = tpu.assume_multiple %336, 8 : i32
    %338 = arith.index_cast %337 : i32 to index
    %c0_184 = arith.constant 0 : index
    %339 = vector.load %arg35[%338, %c0_184] : memref<64x32xbf16, #tpu.memory_space<vmem>>, vector<8x32xbf16>
    %c0_185 = arith.constant 0 : index
    %c0_186 = arith.constant 0 : index
    %340 = vector.load %arg37[%c0_185, %c0_186] : memref<8x32xf32, #tpu.memory_space<vmem>>, vector<8x32xf32>
    %c0_187 = arith.constant 0 : index
    %c0_188 = arith.constant 0 : index
    %341 = vector.load %arg38[%c0_187, %c0_188] : memref<8x32xf32, #tpu.memory_space<vmem>>, vector<8x32xf32>
    %cst_189 = arith.constant dense<0.000000e+00> : vector<8x128xf32>
    %342 = tpu.matmul %339, %24, %cst_189 {dimension_numbers = #tpu.dot_dimension_numbers<[1], [0], [0], [1], [0, 0, 1, 1], [], []>} : vector<8x32xbf16>, vector<32x128xbf16>, vector<8x128xf32> -> vector<8x128xf32>
    %343 = arith.truncf %340 : vector<8x32xf32> to vector<8x32xbf16>
    %cst_190 = arith.constant dense<0.000000e+00> : vector<8x128xf32>
    %344 = tpu.matmul %343, %25, %cst_190 {dimension_numbers = #tpu.dot_dimension_numbers<[1], [0], [0], [1], [0, 0, 1, 1], [], []>} : vector<8x32xbf16>, vector<32x128xbf16>, vector<8x128xf32> -> vector<8x128xf32>
    %345 = arith.addf %342, %344 : vector<8x128xf32>
    %346 = arith.addf %345, %28 : vector<8x128xf32>
    %347 = vector.extract_strided_slice %346 {offsets = [0, 0], sizes = [8, 32], strides = [1, 1]} : vector<8x128xf32> to vector<8x32xf32>
    %cst_191 = arith.constant 5.000000e-01 : f32
    %348 = vector.broadcast %cst_191 : f32 to vector<8x32xf32>
    %349 = arith.mulf %348, %347 : vector<8x32xf32>
    %350 = math.tanh %349 : vector<8x32xf32>
    %cst_192 = arith.constant 1.000000e+00 : f32
    %351 = vector.broadcast %cst_192 : f32 to vector<8x32xf32>
    %352 = arith.addf %350, %351 : vector<8x32xf32>
    %cst_193 = arith.constant 5.000000e-01 : f32
    %353 = vector.broadcast %cst_193 : f32 to vector<8x32xf32>
    %354 = arith.mulf %353, %352 : vector<8x32xf32>
    %355 = vector.extract_strided_slice %346 {offsets = [0, 32], sizes = [8, 32], strides = [1, 1]} : vector<8x128xf32> to vector<8x32xf32>
    %cst_194 = arith.constant 5.000000e-01 : f32
    %356 = vector.broadcast %cst_194 : f32 to vector<8x32xf32>
    %357 = arith.mulf %356, %355 : vector<8x32xf32>
    %358 = math.tanh %357 : vector<8x32xf32>
    %cst_195 = arith.constant 1.000000e+00 : f32
    %359 = vector.broadcast %cst_195 : f32 to vector<8x32xf32>
    %360 = arith.addf %358, %359 : vector<8x32xf32>
    %cst_196 = arith.constant 5.000000e-01 : f32
    %361 = vector.broadcast %cst_196 : f32 to vector<8x32xf32>
    %362 = arith.mulf %361, %360 : vector<8x32xf32>
    %363 = vector.extract_strided_slice %346 {offsets = [0, 64], sizes = [8, 32], strides = [1, 1]} : vector<8x128xf32> to vector<8x32xf32>
    %364 = math.tanh %363 : vector<8x32xf32>
    %365 = vector.extract_strided_slice %346 {offsets = [0, 96], sizes = [8, 32], strides = [1, 1]} : vector<8x128xf32> to vector<8x32xf32>
    %cst_197 = arith.constant 5.000000e-01 : f32
    %366 = vector.broadcast %cst_197 : f32 to vector<8x32xf32>
    %367 = arith.mulf %366, %365 : vector<8x32xf32>
    %368 = math.tanh %367 : vector<8x32xf32>
    %cst_198 = arith.constant 1.000000e+00 : f32
    %369 = vector.broadcast %cst_198 : f32 to vector<8x32xf32>
    %370 = arith.addf %368, %369 : vector<8x32xf32>
    %cst_199 = arith.constant 5.000000e-01 : f32
    %371 = vector.broadcast %cst_199 : f32 to vector<8x32xf32>
    %372 = arith.mulf %371, %370 : vector<8x32xf32>
    %373 = arith.mulf %362, %341 : vector<8x32xf32>
    %374 = arith.mulf %354, %364 : vector<8x32xf32>
    %375 = arith.addf %373, %374 : vector<8x32xf32>
    %376 = math.tanh %375 : vector<8x32xf32>
    %377 = arith.mulf %372, %376 : vector<8x32xf32>
    %c0_200 = arith.constant 0 : index
    %c0_201 = arith.constant 0 : index
    %378 = vector.load %arg37[%c0_200, %c0_201] : memref<8x32xf32, #tpu.memory_space<vmem>>, vector<8x32xf32>
    tpu.vector_store %arg37[%c0_200, %c0_201], %377 {strides = array<i32>} : memref<8x32xf32, #tpu.memory_space<vmem>>, vector<8x32xf32>,
    %c0_202 = arith.constant 0 : index
    %c0_203 = arith.constant 0 : index
    %379 = vector.load %arg38[%c0_202, %c0_203] : memref<8x32xf32, #tpu.memory_space<vmem>>, vector<8x32xf32>
    tpu.vector_store %arg38[%c0_202, %c0_203], %375 {strides = array<i32>} : memref<8x32xf32, #tpu.memory_space<vmem>>, vector<8x32xf32>,
    %380 = arith.truncf %377 : vector<8x32xf32> to vector<8x32xbf16>
    %381 = arith.index_cast %337 : i32 to index
    %c0_204 = arith.constant 0 : index
    %382 = vector.load %arg36[%381, %c0_204] : memref<64x32xbf16, #tpu.memory_space<vmem>>, vector<8x32xbf16>
    tpu.vector_store %arg36[%381, %c0_204], %380 {strides = array<i32>} : memref<64x32xbf16, #tpu.memory_space<vmem>>, vector<8x32xbf16>,
    %c7_i32_205 = arith.constant 7 : i32
    %c1_i32_206 = arith.constant 1 : i32
    %383 = arith.muli %c7_i32_205, %c1_i32_206 : i32
    %c0_i32_207 = arith.constant 0 : i32
    %384 = arith.addi %c0_i32_207, %383 : i32
    %c7_i32_208 = arith.constant 7 : i32
    %385 = arith.subi %c7_i32_208, %384 : i32
    %c8_i32_209 = arith.constant 8 : i32
    %386 = arith.muli %385, %c8_i32_209 : i32
    %387 = tpu.assume_multiple %386, 8 : i32
    %388 = arith.index_cast %387 : i32 to index
    %c0_210 = arith.constant 0 : index
    %389 = vector.load %arg35[%388, %c0_210] : memref<64x32xbf16, #tpu.memory_space<vmem>>, vector<8x32xbf16>
    %c0_211 = arith.constant 0 : index
    %c0_212 = arith.constant 0 : index
    %390 = vector.load %arg37[%c0_211, %c0_212] : memref<8x32xf32, #tpu.memory_space<vmem>>, vector<8x32xf32>
    %c0_213 = arith.constant 0 : index
    %c0_214 = arith.constant 0 : index
    %391 = vector.load %arg38[%c0_213, %c0_214] : memref<8x32xf32, #tpu.memory_space<vmem>>, vector<8x32xf32>
    %cst_215 = arith.constant dense<0.000000e+00> : vector<8x128xf32>
    %392 = tpu.matmul %389, %24, %cst_215 {dimension_numbers = #tpu.dot_dimension_numbers<[1], [0], [0], [1], [0, 0, 1, 1], [], []>} : vector<8x32xbf16>, vector<32x128xbf16>, vector<8x128xf32> -> vector<8x128xf32>
    %393 = arith.truncf %390 : vector<8x32xf32> to vector<8x32xbf16>
    %cst_216 = arith.constant dense<0.000000e+00> : vector<8x128xf32>
    %394 = tpu.matmul %393, %25, %cst_216 {dimension_numbers = #tpu.dot_dimension_numbers<[1], [0], [0], [1], [0, 0, 1, 1], [], []>} : vector<8x32xbf16>, vector<32x128xbf16>, vector<8x128xf32> -> vector<8x128xf32>
    %395 = arith.addf %392, %394 : vector<8x128xf32>
    %396 = arith.addf %395, %28 : vector<8x128xf32>
    %397 = vector.extract_strided_slice %396 {offsets = [0, 0], sizes = [8, 32], strides = [1, 1]} : vector<8x128xf32> to vector<8x32xf32>
    %cst_217 = arith.constant 5.000000e-01 : f32
    %398 = vector.broadcast %cst_217 : f32 to vector<8x32xf32>
    %399 = arith.mulf %398, %397 : vector<8x32xf32>
    %400 = math.tanh %399 : vector<8x32xf32>
    %cst_218 = arith.constant 1.000000e+00 : f32
    %401 = vector.broadcast %cst_218 : f32 to vector<8x32xf32>
    %402 = arith.addf %400, %401 : vector<8x32xf32>
    %cst_219 = arith.constant 5.000000e-01 : f32
    %403 = vector.broadcast %cst_219 : f32 to vector<8x32xf32>
    %404 = arith.mulf %403, %402 : vector<8x32xf32>
    %405 = vector.extract_strided_slice %396 {offsets = [0, 32], sizes = [8, 32], strides = [1, 1]} : vector<8x128xf32> to vector<8x32xf32>
    %cst_220 = arith.constant 5.000000e-01 : f32
    %406 = vector.broadcast %cst_220 : f32 to vector<8x32xf32>
    %407 = arith.mulf %406, %405 : vector<8x32xf32>
    %408 = math.tanh %407 : vector<8x32xf32>
    %cst_221 = arith.constant 1.000000e+00 : f32
    %409 = vector.broadcast %cst_221 : f32 to vector<8x32xf32>
    %410 = arith.addf %408, %409 : vector<8x32xf32>
    %cst_222 = arith.constant 5.000000e-01 : f32
    %411 = vector.broadcast %cst_222 : f32 to vector<8x32xf32>
    %412 = arith.mulf %411, %410 : vector<8x32xf32>
    %413 = vector.extract_strided_slice %396 {offsets = [0, 64], sizes = [8, 32], strides = [1, 1]} : vector<8x128xf32> to vector<8x32xf32>
    %414 = math.tanh %413 : vector<8x32xf32>
    %415 = vector.extract_strided_slice %396 {offsets = [0, 96], sizes = [8, 32], strides = [1, 1]} : vector<8x128xf32> to vector<8x32xf32>
    %cst_223 = arith.constant 5.000000e-01 : f32
    %416 = vector.broadcast %cst_223 : f32 to vector<8x32xf32>
    %417 = arith.mulf %416, %415 : vector<8x32xf32>
    %418 = math.tanh %417 : vector<8x32xf32>
    %cst_224 = arith.constant 1.000000e+00 : f32
    %419 = vector.broadcast %cst_224 : f32 to vector<8x32xf32>
    %420 = arith.addf %418, %419 : vector<8x32xf32>
    %cst_225 = arith.constant 5.000000e-01 : f32
    %421 = vector.broadcast %cst_225 : f32 to vector<8x32xf32>
    %422 = arith.mulf %421, %420 : vector<8x32xf32>
    %423 = arith.mulf %412, %391 : vector<8x32xf32>
    %424 = arith.mulf %404, %414 : vector<8x32xf32>
    %425 = arith.addf %423, %424 : vector<8x32xf32>
    %426 = math.tanh %425 : vector<8x32xf32>
    %427 = arith.mulf %422, %426 : vector<8x32xf32>
    %c0_226 = arith.constant 0 : index
    %c0_227 = arith.constant 0 : index
    %428 = vector.load %arg37[%c0_226, %c0_227] : memref<8x32xf32, #tpu.memory_space<vmem>>, vector<8x32xf32>
    tpu.vector_store %arg37[%c0_226, %c0_227], %427 {strides = array<i32>} : memref<8x32xf32, #tpu.memory_space<vmem>>, vector<8x32xf32>,
    %c0_228 = arith.constant 0 : index
    %c0_229 = arith.constant 0 : index
    %429 = vector.load %arg38[%c0_228, %c0_229] : memref<8x32xf32, #tpu.memory_space<vmem>>, vector<8x32xf32>
    tpu.vector_store %arg38[%c0_228, %c0_229], %425 {strides = array<i32>} : memref<8x32xf32, #tpu.memory_space<vmem>>, vector<8x32xf32>,
    %430 = arith.truncf %427 : vector<8x32xf32> to vector<8x32xbf16>
    %431 = arith.index_cast %387 : i32 to index
    %c0_230 = arith.constant 0 : index
    %432 = vector.load %arg36[%431, %c0_230] : memref<64x32xbf16, #tpu.memory_space<vmem>>, vector<8x32xbf16>
    tpu.vector_store %arg36[%431, %c0_230], %430 {strides = array<i32>} : memref<64x32xbf16, #tpu.memory_space<vmem>>, vector<8x32xbf16>,
    %c8_i32_231 = arith.constant 8 : i32
    %c0_232 = arith.constant 0 : index
    %c0_233 = arith.constant 0 : index
    %433 = vector.load %arg37[%c0_232, %c0_233] : memref<8x32xf32, #tpu.memory_space<vmem>>, vector<8x32xf32>
    %c0_234 = arith.constant 0 : index
    %c0_235 = arith.constant 0 : index
    %434 = vector.load %arg33[%c0_234, %c0_235] : memref<8x32xf32, #tpu.memory_space<vmem>>, vector<8x32xf32>
    tpu.vector_store %arg33[%c0_234, %c0_235], %433 {strides = array<i32>} : memref<8x32xf32, #tpu.memory_space<vmem>>, vector<8x32xf32>,
    %c0_236 = arith.constant 0 : index
    %c0_237 = arith.constant 0 : index
    %435 = vector.load %arg38[%c0_236, %c0_237] : memref<8x32xf32, #tpu.memory_space<vmem>>, vector<8x32xf32>
    %c0_238 = arith.constant 0 : index
    %c0_239 = arith.constant 0 : index
    %436 = vector.load %arg34[%c0_238, %c0_239] : memref<8x32xf32, #tpu.memory_space<vmem>>, vector<8x32xf32>
    tpu.vector_store %arg34[%c0_238, %c0_239], %435 {strides = array<i32>} : memref<8x32xf32, #tpu.memory_space<vmem>>, vector<8x32xf32>,
    %c0_240 = arith.constant 0 : index
    %c0_241 = arith.constant 0 : index
    %437 = vector.load %arg36[%c0_240, %c0_241] : memref<64x32xbf16, #tpu.memory_space<vmem>>, vector<64x32xbf16>
    %c0_242 = arith.constant 0 : index
    %c0_243 = arith.constant 0 : index
    %438 = vector.load %arg13[%c0_242, %c0_243] : memref<32x32xbf16, #tpu.memory_space<vmem>>, vector<32x32xbf16>
    %cst_244 = arith.constant dense<0.000000e+00> : vector<64x32xf32>
    %439 = tpu.matmul %437, %438, %cst_244 {dimension_numbers = #tpu.dot_dimension_numbers<[1], [0], [0], [1], [0, 0, 1, 1], [], []>} : vector<64x32xbf16>, vector<32x32xbf16>, vector<64x32xf32> -> vector<64x32xf32>
    %c0_245 = arith.constant 0 : index
    %c0_246 = arith.constant 0 : index
    %440 = vector.load %arg14[%c0_245, %c0_246] : memref<1x32xf32, #tpu.memory_space<vmem>>, vector<1x32xf32>
    %441 = vector.broadcast %440 : vector<1x32xf32> to vector<64x32xf32>
    %442 = arith.addf %439, %441 : vector<64x32xf32>
    %cst_247 = arith.constant 0.000000e+00 : f32
    %443 = vector.broadcast %cst_247 : f32 to vector<64x32xf32>
    %444 = arith.maximumf %442, %443 : vector<64x32xf32>
    %445 = arith.truncf %444 : vector<64x32xf32> to vector<64x32xbf16>
    %c0_248 = arith.constant 0 : index
    %c0_249 = arith.constant 0 : index
    %446 = vector.load %arg15[%c0_248, %c0_249] : memref<32x8xbf16, #tpu.memory_space<vmem>>, vector<32x8xbf16>
    %cst_250 = arith.constant dense<0.000000e+00> : vector<64x8xf32>
    %447 = tpu.matmul %445, %446, %cst_250 {dimension_numbers = #tpu.dot_dimension_numbers<[1], [0], [0], [1], [0, 0, 1, 1], [], []>} : vector<64x32xbf16>, vector<32x8xbf16>, vector<64x8xf32> -> vector<64x8xf32>
    %c0_251 = arith.constant 0 : index
    %c0_252 = arith.constant 0 : index
    %448 = vector.load %arg16[%c0_251, %c0_252] : memref<1x8xf32, #tpu.memory_space<vmem>>, vector<1x8xf32>
    %449 = vector.broadcast %448 : vector<1x8xf32> to vector<64x8xf32>
    %450 = arith.addf %447, %449 : vector<64x8xf32>
    %cst_253 = arith.constant dense<0.000000e+00> : vector<64xf32>
    %451 = vector.multi_reduction <add>, %1, %cst_253 [1] : vector<64x4xf32> to vector<64xf32>
    %452 = vector.shape_cast %451 : vector<64xf32> to vector<64x1xf32>
    %cst_254 = arith.constant 0.000000e+00 : f32
    %453 = vector.broadcast %cst_254 : f32 to vector<64x1xf32>
    %454 = arith.cmpf one, %452, %453 : vector<64x1xf32>
    %455 = arith.extui %454 : vector<64x1xi1> to vector<64x1xi32>
    %456 = arith.sitofp %455 : vector<64x1xi32> to vector<64x1xf32>
    %457 = vector.broadcast %456 : vector<64x1xf32> to vector<64x8xf32>
    %458 = arith.mulf %450, %457 : vector<64x8xf32>
    %c0_255 = arith.constant 0 : index
    %c0_256 = arith.constant 0 : index
    %c0_257 = arith.constant 0 : index
    %459 = vector.load %arg4[%c0_255, %c0_256, %c0_257] : memref<8x8x8xf32, #tpu.memory_space<vmem>>, vector<8x8x8xf32>
    %460 = vector.shape_cast %459 : vector<8x8x8xf32> to vector<64x8xf32>
    %461 = arith.addf %458, %460 : vector<64x8xf32>
    %cst_258 = arith.constant dense<0xFF800000> : vector<64xf32>
    %462 = vector.multi_reduction <maximumf>, %461, %cst_258 [1] : vector<64x8xf32> to vector<64xf32>
    %463 = vector.shape_cast %462 : vector<64xf32> to vector<64x1xf32>
    %464 = vector.broadcast %463 : vector<64x1xf32> to vector<64x8xf32>
    %465 = arith.subf %461, %464 : vector<64x8xf32>
    %466 = math.exp %465 : vector<64x8xf32>
    %467 = vector.extract_strided_slice %466 {offsets = [0, 0], sizes = [64, 2], strides = [1, 1]} : vector<64x8xf32> to vector<64x2xf32>
    %cst_259 = arith.constant dense<0.000000e+00> : vector<64xf32>
    %468 = vector.multi_reduction <add>, %467, %cst_259 [1] : vector<64x2xf32> to vector<64xf32>
    %469 = vector.shape_cast %468 : vector<64xf32> to vector<64x1xf32>
    %470 = vector.shape_cast %469 : vector<64x1xf32> to vector<64x1xf32>
    %471 = vector.broadcast %470 : vector<64x1xf32> to vector<64x2xf32>
    %472 = vector.extract_strided_slice %466 {offsets = [0, 2], sizes = [64, 2], strides = [1, 1]} : vector<64x8xf32> to vector<64x2xf32>
    %cst_260 = arith.constant dense<0.000000e+00> : vector<64xf32>
    %473 = vector.multi_reduction <add>, %472, %cst_260 [1] : vector<64x2xf32> to vector<64xf32>
    %474 = vector.shape_cast %473 : vector<64xf32> to vector<64x1xf32>
    %475 = vector.shape_cast %474 : vector<64x1xf32> to vector<64x1xf32>
    %476 = vector.broadcast %475 : vector<64x1xf32> to vector<64x2xf32>
    %477 = vector.extract_strided_slice %466 {offsets = [0, 4], sizes = [64, 2], strides = [1, 1]} : vector<64x8xf32> to vector<64x2xf32>
    %cst_261 = arith.constant dense<0.000000e+00> : vector<64xf32>
    %478 = vector.multi_reduction <add>, %477, %cst_261 [1] : vector<64x2xf32> to vector<64xf32>
    %479 = vector.shape_cast %478 : vector<64xf32> to vector<64x1xf32>
    %480 = vector.shape_cast %479 : vector<64x1xf32> to vector<64x1xf32>
    %481 = vector.broadcast %480 : vector<64x1xf32> to vector<64x2xf32>
    %482 = vector.extract_strided_slice %466 {offsets = [0, 6], sizes = [64, 2], strides = [1, 1]} : vector<64x8xf32> to vector<64x2xf32>
    %cst_262 = arith.constant dense<0.000000e+00> : vector<64xf32>
    %483 = vector.multi_reduction <add>, %482, %cst_262 [1] : vector<64x2xf32> to vector<64xf32>
    %484 = vector.shape_cast %483 : vector<64xf32> to vector<64x1xf32>
    %485 = vector.shape_cast %484 : vector<64x1xf32> to vector<64x1xf32>
    %486 = vector.broadcast %485 : vector<64x1xf32> to vector<64x2xf32>
    %487 = tpu.concatenate %471, %476, %481, %486 in 1 : vector<64x2xf32>, vector<64x2xf32>, vector<64x2xf32>, vector<64x2xf32> -> vector<64x8xf32>
    %488 = arith.divf %466, %487 : vector<64x8xf32>
    %c0_263 = arith.constant 0 : index
    %c0_264 = arith.constant 0 : index
    %489 = vector.load %arg39[%c0_263, %c0_264] : memref<64x8xf32, #tpu.memory_space<vmem>>, vector<64x8xf32>
    tpu.vector_store %arg39[%c0_263, %c0_264], %488 {strides = array<i32>} : memref<64x8xf32, #tpu.memory_space<vmem>>, vector<64x8xf32>,
    %c0_265 = arith.constant 0 : index
    %c0_266 = arith.constant 0 : index
    %490 = vector.load %arg17[%c0_265, %c0_266] : memref<4x32xbf16, #tpu.memory_space<vmem>>, vector<4x32xbf16>
    %cst_267 = arith.constant dense<0.000000e+00> : vector<64x32xf32>
    %491 = tpu.matmul %2, %490, %cst_267 {dimension_numbers = #tpu.dot_dimension_numbers<[1], [0], [0], [1], [0, 0, 1, 1], [], []>} : vector<64x4xbf16>, vector<4x32xbf16>, vector<64x32xf32> -> vector<64x32xf32>
    %c0_268 = arith.constant 0 : index
    %c0_269 = arith.constant 0 : index
    %492 = vector.load %arg18[%c0_268, %c0_269] : memref<2x32xbf16, #tpu.memory_space<vmem>>, vector<2x32xbf16>
    %cst_270 = arith.constant dense<0.000000e+00> : vector<64x32xf32>
    %493 = tpu.matmul %5, %492, %cst_270 {dimension_numbers = #tpu.dot_dimension_numbers<[1], [0], [0], [1], [0, 0, 1, 1], [], []>} : vector<64x2xbf16>, vector<2x32xbf16>, vector<64x32xf32> -> vector<64x32xf32>
    %494 = arith.addf %491, %493 : vector<64x32xf32>
    %c0_271 = arith.constant 0 : index
    %c0_272 = arith.constant 0 : index
    %495 = vector.load %arg19[%c0_271, %c0_272] : memref<1x32xf32, #tpu.memory_space<vmem>>, vector<1x32xf32>
    %496 = vector.broadcast %495 : vector<1x32xf32> to vector<64x32xf32>
    %497 = arith.addf %494, %496 : vector<64x32xf32>
    %cst_273 = arith.constant 0.000000e+00 : f32
    %498 = vector.broadcast %cst_273 : f32 to vector<64x32xf32>
    %499 = arith.maximumf %497, %498 : vector<64x32xf32>
    %500 = arith.truncf %499 : vector<64x32xf32> to vector<64x32xbf16>
    %c0_274 = arith.constant 0 : index
    %c0_275 = arith.constant 0 : index
    %501 = vector.load %arg20[%c0_274, %c0_275] : memref<32x32xbf16, #tpu.memory_space<vmem>>, vector<32x32xbf16>
    %cst_276 = arith.constant dense<0.000000e+00> : vector<64x32xf32>
    %502 = tpu.matmul %500, %501, %cst_276 {dimension_numbers = #tpu.dot_dimension_numbers<[1], [0], [0], [1], [0, 0, 1, 1], [], []>} : vector<64x32xbf16>, vector<32x32xbf16>, vector<64x32xf32> -> vector<64x32xf32>
    %c0_277 = arith.constant 0 : index
    %c0_278 = arith.constant 0 : index
    %503 = vector.load %arg21[%c0_277, %c0_278] : memref<1x32xf32, #tpu.memory_space<vmem>>, vector<1x32xf32>
    %504 = vector.broadcast %503 : vector<1x32xf32> to vector<64x32xf32>
    %505 = arith.addf %502, %504 : vector<64x32xf32>
    %506 = arith.truncf %488 : vector<64x8xf32> to vector<64x8xbf16>
    %c0_279 = arith.constant 0 : index
    %c0_280 = arith.constant 0 : index
    %507 = vector.load %arg22[%c0_279, %c0_280] : memref<8x32xbf16, #tpu.memory_space<vmem>>, vector<8x32xbf16>
    %cst_281 = arith.constant dense<0.000000e+00> : vector<64x32xf32>
    %508 = tpu.matmul %506, %507, %cst_281 {dimension_numbers = #tpu.dot_dimension_numbers<[1], [0], [0], [1], [0, 0, 1, 1], [], []>} : vector<64x8xbf16>, vector<8x32xbf16>, vector<64x32xf32> -> vector<64x32xf32>
    %509 = arith.truncf %505 : vector<64x32xf32> to vector<64x32xbf16>
    %c0_282 = arith.constant 0 : index
    %c0_283 = arith.constant 0 : index
    %510 = vector.load %arg23[%c0_282, %c0_283] : memref<32x32xbf16, #tpu.memory_space<vmem>>, vector<32x32xbf16>
    %cst_284 = arith.constant dense<0.000000e+00> : vector<64x32xf32>
    %511 = tpu.matmul %509, %510, %cst_284 {dimension_numbers = #tpu.dot_dimension_numbers<[1], [0], [0], [1], [0, 0, 1, 1], [], []>} : vector<64x32xbf16>, vector<32x32xbf16>, vector<64x32xf32> -> vector<64x32xf32>
    %512 = arith.addf %508, %511 : vector<64x32xf32>
    %c0_285 = arith.constant 0 : index
    %c0_286 = arith.constant 0 : index
    %513 = vector.load %arg24[%c0_285, %c0_286] : memref<1x32xf32, #tpu.memory_space<vmem>>, vector<1x32xf32>
    %514 = vector.broadcast %513 : vector<1x32xf32> to vector<64x32xf32>
    %515 = arith.addf %512, %514 : vector<64x32xf32>
    %cst_287 = arith.constant 0.000000e+00 : f32
    %516 = vector.broadcast %cst_287 : f32 to vector<64x32xf32>
    %517 = arith.maximumf %515, %516 : vector<64x32xf32>
    %c0_288 = arith.constant 0 : index
    %c0_289 = arith.constant 0 : index
    %518 = vector.load %arg25[%c0_288, %c0_289] : memref<1x32xf32, #tpu.memory_space<vmem>>, vector<1x32xf32>
    %519 = vector.broadcast %518 : vector<1x32xf32> to vector<64x32xf32>
    %520 = arith.mulf %517, %519 : vector<64x32xf32>
    %cst_290 = arith.constant dense<0.000000e+00> : vector<64xf32>
    %521 = vector.multi_reduction <add>, %520, %cst_290 [1] : vector<64x32xf32> to vector<64xf32>
    %522 = vector.shape_cast %521 : vector<64xf32> to vector<64x1xf32>
    %c0_291 = arith.constant 0 : index
    %c0_292 = arith.constant 0 : index
    %523 = vector.load %arg26[%c0_291, %c0_292] : memref<1x1xf32, #tpu.memory_space<vmem>>, vector<1x1xf32>
    %524 = vector.broadcast %523 : vector<1x1xf32> to vector<64x1xf32>
    %525 = arith.addf %522, %524 : vector<64x1xf32>
    %c8_i32_293 = arith.constant 8 : i32
    %526 = arith.muli %arg0, %c8_i32_293 : i32
    %c0_i32_294 = arith.constant 0 : i32
    %c1_i32_295 = arith.constant 1 : i32
    %527 = arith.muli %c0_i32_294, %c1_i32_295 : i32
    %c0_i32_296 = arith.constant 0 : i32
    %528 = arith.addi %c0_i32_296, %527 : i32
    %c8_i32_297 = arith.constant 8 : i32
    %529 = arith.muli %528, %c8_i32_297 : i32
    %530 = tpu.assume_multiple %529, 8 : i32
    %c0_i32_298 = arith.constant 0 : i32
    %531 = arith.addi %526, %c0_i32_298 : i32
    %532 = arith.index_cast %531 : i32 to index
    %533 = arith.index_cast %528 : i32 to index
    %534 = memref.load %arg1[%532, %533] : memref<16x8xi32, #tpu.memory_space<smem>>
    %c8_i32_299 = arith.constant 8 : i32
    %535 = arith.muli %534, %c8_i32_299 : i32
    %c0_i32_300 = arith.constant 0 : i32
    %536 = arith.addi %535, %c0_i32_300 : i32
    %537 = arith.index_cast %536 : i32 to index
    %c0_301 = arith.constant 0 : index
    %538 = vector.load %arg39[%537, %c0_301] : memref<64x8xf32, #tpu.memory_space<vmem>>, vector<1x8xf32>
    %c0_i32_302 = arith.constant 0 : i32
    %539 = arith.addi %530, %c0_i32_302 : i32
    %540 = arith.index_cast %539 : i32 to index
    %c0_303 = arith.constant 0 : index
    %541 = vector.load %arg40[%540, %c0_303] : memref<64x8xf32, #tpu.memory_space<vmem>>, vector<1x8xf32>
    tpu.vector_store %arg40[%540, %c0_303], %538 {strides = array<i32>} : memref<64x8xf32, #tpu.memory_space<vmem>>, vector<1x8xf32>,
    %c1_i32_304 = arith.constant 1 : i32
    %542 = arith.addi %526, %c1_i32_304 : i32
    %543 = arith.index_cast %542 : i32 to index
    %544 = arith.index_cast %528 : i32 to index
    %545 = memref.load %arg1[%543, %544] : memref<16x8xi32, #tpu.memory_space<smem>>
    %c8_i32_305 = arith.constant 8 : i32
    %546 = arith.muli %545, %c8_i32_305 : i32
    %c1_i32_306 = arith.constant 1 : i32
    %547 = arith.addi %546, %c1_i32_306 : i32
    %548 = arith.index_cast %547 : i32 to index
    %c0_307 = arith.constant 0 : index
    %549 = vector.load %arg39[%548, %c0_307] : memref<64x8xf32, #tpu.memory_space<vmem>>, vector<1x8xf32>
    %c1_i32_308 = arith.constant 1 : i32
    %550 = arith.addi %530, %c1_i32_308 : i32
    %551 = arith.index_cast %550 : i32 to index
    %c0_309 = arith.constant 0 : index
    %552 = vector.load %arg40[%551, %c0_309] : memref<64x8xf32, #tpu.memory_space<vmem>>, vector<1x8xf32>
    tpu.vector_store %arg40[%551, %c0_309], %549 {strides = array<i32>} : memref<64x8xf32, #tpu.memory_space<vmem>>, vector<1x8xf32>,
    %c2_i32_310 = arith.constant 2 : i32
    %553 = arith.addi %526, %c2_i32_310 : i32
    %554 = arith.index_cast %553 : i32 to index
    %555 = arith.index_cast %528 : i32 to index
    %556 = memref.load %arg1[%554, %555] : memref<16x8xi32, #tpu.memory_space<smem>>
    %c8_i32_311 = arith.constant 8 : i32
    %557 = arith.muli %556, %c8_i32_311 : i32
    %c2_i32_312 = arith.constant 2 : i32
    %558 = arith.addi %557, %c2_i32_312 : i32
    %559 = arith.index_cast %558 : i32 to index
    %c0_313 = arith.constant 0 : index
    %560 = vector.load %arg39[%559, %c0_313] : memref<64x8xf32, #tpu.memory_space<vmem>>, vector<1x8xf32>
    %c2_i32_314 = arith.constant 2 : i32
    %561 = arith.addi %530, %c2_i32_314 : i32
    %562 = arith.index_cast %561 : i32 to index
    %c0_315 = arith.constant 0 : index
    %563 = vector.load %arg40[%562, %c0_315] : memref<64x8xf32, #tpu.memory_space<vmem>>, vector<1x8xf32>
    tpu.vector_store %arg40[%562, %c0_315], %560 {strides = array<i32>} : memref<64x8xf32, #tpu.memory_space<vmem>>, vector<1x8xf32>,
    %c3_i32_316 = arith.constant 3 : i32
    %564 = arith.addi %526, %c3_i32_316 : i32
    %565 = arith.index_cast %564 : i32 to index
    %566 = arith.index_cast %528 : i32 to index
    %567 = memref.load %arg1[%565, %566] : memref<16x8xi32, #tpu.memory_space<smem>>
    %c8_i32_317 = arith.constant 8 : i32
    %568 = arith.muli %567, %c8_i32_317 : i32
    %c3_i32_318 = arith.constant 3 : i32
    %569 = arith.addi %568, %c3_i32_318 : i32
    %570 = arith.index_cast %569 : i32 to index
    %c0_319 = arith.constant 0 : index
    %571 = vector.load %arg39[%570, %c0_319] : memref<64x8xf32, #tpu.memory_space<vmem>>, vector<1x8xf32>
    %c3_i32_320 = arith.constant 3 : i32
    %572 = arith.addi %530, %c3_i32_320 : i32
    %573 = arith.index_cast %572 : i32 to index
    %c0_321 = arith.constant 0 : index
    %574 = vector.load %arg40[%573, %c0_321] : memref<64x8xf32, #tpu.memory_space<vmem>>, vector<1x8xf32>
    tpu.vector_store %arg40[%573, %c0_321], %571 {strides = array<i32>} : memref<64x8xf32, #tpu.memory_space<vmem>>, vector<1x8xf32>,
    %c4_i32_322 = arith.constant 4 : i32
    %575 = arith.addi %526, %c4_i32_322 : i32
    %576 = arith.index_cast %575 : i32 to index
    %577 = arith.index_cast %528 : i32 to index
    %578 = memref.load %arg1[%576, %577] : memref<16x8xi32, #tpu.memory_space<smem>>
    %c8_i32_323 = arith.constant 8 : i32
    %579 = arith.muli %578, %c8_i32_323 : i32
    %c4_i32_324 = arith.constant 4 : i32
    %580 = arith.addi %579, %c4_i32_324 : i32
    %581 = arith.index_cast %580 : i32 to index
    %c0_325 = arith.constant 0 : index
    %582 = vector.load %arg39[%581, %c0_325] : memref<64x8xf32, #tpu.memory_space<vmem>>, vector<1x8xf32>
    %c4_i32_326 = arith.constant 4 : i32
    %583 = arith.addi %530, %c4_i32_326 : i32
    %584 = arith.index_cast %583 : i32 to index
    %c0_327 = arith.constant 0 : index
    %585 = vector.load %arg40[%584, %c0_327] : memref<64x8xf32, #tpu.memory_space<vmem>>, vector<1x8xf32>
    tpu.vector_store %arg40[%584, %c0_327], %582 {strides = array<i32>} : memref<64x8xf32, #tpu.memory_space<vmem>>, vector<1x8xf32>,
    %c5_i32_328 = arith.constant 5 : i32
    %586 = arith.addi %526, %c5_i32_328 : i32
    %587 = arith.index_cast %586 : i32 to index
    %588 = arith.index_cast %528 : i32 to index
    %589 = memref.load %arg1[%587, %588] : memref<16x8xi32, #tpu.memory_space<smem>>
    %c8_i32_329 = arith.constant 8 : i32
    %590 = arith.muli %589, %c8_i32_329 : i32
    %c5_i32_330 = arith.constant 5 : i32
    %591 = arith.addi %590, %c5_i32_330 : i32
    %592 = arith.index_cast %591 : i32 to index
    %c0_331 = arith.constant 0 : index
    %593 = vector.load %arg39[%592, %c0_331] : memref<64x8xf32, #tpu.memory_space<vmem>>, vector<1x8xf32>
    %c5_i32_332 = arith.constant 5 : i32
    %594 = arith.addi %530, %c5_i32_332 : i32
    %595 = arith.index_cast %594 : i32 to index
    %c0_333 = arith.constant 0 : index
    %596 = vector.load %arg40[%595, %c0_333] : memref<64x8xf32, #tpu.memory_space<vmem>>, vector<1x8xf32>
    tpu.vector_store %arg40[%595, %c0_333], %593 {strides = array<i32>} : memref<64x8xf32, #tpu.memory_space<vmem>>, vector<1x8xf32>,
    %c6_i32_334 = arith.constant 6 : i32
    %597 = arith.addi %526, %c6_i32_334 : i32
    %598 = arith.index_cast %597 : i32 to index
    %599 = arith.index_cast %528 : i32 to index
    %600 = memref.load %arg1[%598, %599] : memref<16x8xi32, #tpu.memory_space<smem>>
    %c8_i32_335 = arith.constant 8 : i32
    %601 = arith.muli %600, %c8_i32_335 : i32
    %c6_i32_336 = arith.constant 6 : i32
    %602 = arith.addi %601, %c6_i32_336 : i32
    %603 = arith.index_cast %602 : i32 to index
    %c0_337 = arith.constant 0 : index
    %604 = vector.load %arg39[%603, %c0_337] : memref<64x8xf32, #tpu.memory_space<vmem>>, vector<1x8xf32>
    %c6_i32_338 = arith.constant 6 : i32
    %605 = arith.addi %530, %c6_i32_338 : i32
    %606 = arith.index_cast %605 : i32 to index
    %c0_339 = arith.constant 0 : index
    %607 = vector.load %arg40[%606, %c0_339] : memref<64x8xf32, #tpu.memory_space<vmem>>, vector<1x8xf32>
    tpu.vector_store %arg40[%606, %c0_339], %604 {strides = array<i32>} : memref<64x8xf32, #tpu.memory_space<vmem>>, vector<1x8xf32>,
    %c7_i32_340 = arith.constant 7 : i32
    %608 = arith.addi %526, %c7_i32_340 : i32
    %609 = arith.index_cast %608 : i32 to index
    %610 = arith.index_cast %528 : i32 to index
    %611 = memref.load %arg1[%609, %610] : memref<16x8xi32, #tpu.memory_space<smem>>
    %c8_i32_341 = arith.constant 8 : i32
    %612 = arith.muli %611, %c8_i32_341 : i32
    %c7_i32_342 = arith.constant 7 : i32
    %613 = arith.addi %612, %c7_i32_342 : i32
    %614 = arith.index_cast %613 : i32 to index
    %c0_343 = arith.constant 0 : index
    %615 = vector.load %arg39[%614, %c0_343] : memref<64x8xf32, #tpu.memory_space<vmem>>, vector<1x8xf32>
    %c7_i32_344 = arith.constant 7 : i32
    %616 = arith.addi %530, %c7_i32_344 : i32
    %617 = arith.index_cast %616 : i32 to index
    %c0_345 = arith.constant 0 : index
    %618 = vector.load %arg40[%617, %c0_345] : memref<64x8xf32, #tpu.memory_space<vmem>>, vector<1x8xf32>
    tpu.vector_store %arg40[%617, %c0_345], %615 {strides = array<i32>} : memref<64x8xf32, #tpu.memory_space<vmem>>, vector<1x8xf32>,
    %c1_i32_346 = arith.constant 1 : i32
    %c1_i32_347 = arith.constant 1 : i32
    %619 = arith.muli %c1_i32_346, %c1_i32_347 : i32
    %c0_i32_348 = arith.constant 0 : i32
    %620 = arith.addi %c0_i32_348, %619 : i32
    %c8_i32_349 = arith.constant 8 : i32
    %621 = arith.muli %620, %c8_i32_349 : i32
    %622 = tpu.assume_multiple %621, 8 : i32
    %c0_i32_350 = arith.constant 0 : i32
    %623 = arith.addi %526, %c0_i32_350 : i32
    %624 = arith.index_cast %623 : i32 to index
    %625 = arith.index_cast %620 : i32 to index
    %626 = memref.load %arg1[%624, %625] : memref<16x8xi32, #tpu.memory_space<smem>>
    %c8_i32_351 = arith.constant 8 : i32
    %627 = arith.muli %626, %c8_i32_351 : i32
    %c0_i32_352 = arith.constant 0 : i32
    %628 = arith.addi %627, %c0_i32_352 : i32
    %629 = arith.index_cast %628 : i32 to index
    %c0_353 = arith.constant 0 : index
    %630 = vector.load %arg39[%629, %c0_353] : memref<64x8xf32, #tpu.memory_space<vmem>>, vector<1x8xf32>
    %c0_i32_354 = arith.constant 0 : i32
    %631 = arith.addi %622, %c0_i32_354 : i32
    %632 = arith.index_cast %631 : i32 to index
    %c0_355 = arith.constant 0 : index
    %633 = vector.load %arg40[%632, %c0_355] : memref<64x8xf32, #tpu.memory_space<vmem>>, vector<1x8xf32>
    tpu.vector_store %arg40[%632, %c0_355], %630 {strides = array<i32>} : memref<64x8xf32, #tpu.memory_space<vmem>>, vector<1x8xf32>,
    %c1_i32_356 = arith.constant 1 : i32
    %634 = arith.addi %526, %c1_i32_356 : i32
    %635 = arith.index_cast %634 : i32 to index
    %636 = arith.index_cast %620 : i32 to index
    %637 = memref.load %arg1[%635, %636] : memref<16x8xi32, #tpu.memory_space<smem>>
    %c8_i32_357 = arith.constant 8 : i32
    %638 = arith.muli %637, %c8_i32_357 : i32
    %c1_i32_358 = arith.constant 1 : i32
    %639 = arith.addi %638, %c1_i32_358 : i32
    %640 = arith.index_cast %639 : i32 to index
    %c0_359 = arith.constant 0 : index
    %641 = vector.load %arg39[%640, %c0_359] : memref<64x8xf32, #tpu.memory_space<vmem>>, vector<1x8xf32>
    %c1_i32_360 = arith.constant 1 : i32
    %642 = arith.addi %622, %c1_i32_360 : i32
    %643 = arith.index_cast %642 : i32 to index
    %c0_361 = arith.constant 0 : index
    %644 = vector.load %arg40[%643, %c0_361] : memref<64x8xf32, #tpu.memory_space<vmem>>, vector<1x8xf32>
    tpu.vector_store %arg40[%643, %c0_361], %641 {strides = array<i32>} : memref<64x8xf32, #tpu.memory_space<vmem>>, vector<1x8xf32>,
    %c2_i32_362 = arith.constant 2 : i32
    %645 = arith.addi %526, %c2_i32_362 : i32
    %646 = arith.index_cast %645 : i32 to index
    %647 = arith.index_cast %620 : i32 to index
    %648 = memref.load %arg1[%646, %647] : memref<16x8xi32, #tpu.memory_space<smem>>
    %c8_i32_363 = arith.constant 8 : i32
    %649 = arith.muli %648, %c8_i32_363 : i32
    %c2_i32_364 = arith.constant 2 : i32
    %650 = arith.addi %649, %c2_i32_364 : i32
    %651 = arith.index_cast %650 : i32 to index
    %c0_365 = arith.constant 0 : index
    %652 = vector.load %arg39[%651, %c0_365] : memref<64x8xf32, #tpu.memory_space<vmem>>, vector<1x8xf32>
    %c2_i32_366 = arith.constant 2 : i32
    %653 = arith.addi %622, %c2_i32_366 : i32
    %654 = arith.index_cast %653 : i32 to index
    %c0_367 = arith.constant 0 : index
    %655 = vector.load %arg40[%654, %c0_367] : memref<64x8xf32, #tpu.memory_space<vmem>>, vector<1x8xf32>
    tpu.vector_store %arg40[%654, %c0_367], %652 {strides = array<i32>} : memref<64x8xf32, #tpu.memory_space<vmem>>, vector<1x8xf32>,
    %c3_i32_368 = arith.constant 3 : i32
    %656 = arith.addi %526, %c3_i32_368 : i32
    %657 = arith.index_cast %656 : i32 to index
    %658 = arith.index_cast %620 : i32 to index
    %659 = memref.load %arg1[%657, %658] : memref<16x8xi32, #tpu.memory_space<smem>>
    %c8_i32_369 = arith.constant 8 : i32
    %660 = arith.muli %659, %c8_i32_369 : i32
    %c3_i32_370 = arith.constant 3 : i32
    %661 = arith.addi %660, %c3_i32_370 : i32
    %662 = arith.index_cast %661 : i32 to index
    %c0_371 = arith.constant 0 : index
    %663 = vector.load %arg39[%662, %c0_371] : memref<64x8xf32, #tpu.memory_space<vmem>>, vector<1x8xf32>
    %c3_i32_372 = arith.constant 3 : i32
    %664 = arith.addi %622, %c3_i32_372 : i32
    %665 = arith.index_cast %664 : i32 to index
    %c0_373 = arith.constant 0 : index
    %666 = vector.load %arg40[%665, %c0_373] : memref<64x8xf32, #tpu.memory_space<vmem>>, vector<1x8xf32>
    tpu.vector_store %arg40[%665, %c0_373], %663 {strides = array<i32>} : memref<64x8xf32, #tpu.memory_space<vmem>>, vector<1x8xf32>,
    %c4_i32_374 = arith.constant 4 : i32
    %667 = arith.addi %526, %c4_i32_374 : i32
    %668 = arith.index_cast %667 : i32 to index
    %669 = arith.index_cast %620 : i32 to index
    %670 = memref.load %arg1[%668, %669] : memref<16x8xi32, #tpu.memory_space<smem>>
    %c8_i32_375 = arith.constant 8 : i32
    %671 = arith.muli %670, %c8_i32_375 : i32
    %c4_i32_376 = arith.constant 4 : i32
    %672 = arith.addi %671, %c4_i32_376 : i32
    %673 = arith.index_cast %672 : i32 to index
    %c0_377 = arith.constant 0 : index
    %674 = vector.load %arg39[%673, %c0_377] : memref<64x8xf32, #tpu.memory_space<vmem>>, vector<1x8xf32>
    %c4_i32_378 = arith.constant 4 : i32
    %675 = arith.addi %622, %c4_i32_378 : i32
    %676 = arith.index_cast %675 : i32 to index
    %c0_379 = arith.constant 0 : index
    %677 = vector.load %arg40[%676, %c0_379] : memref<64x8xf32, #tpu.memory_space<vmem>>, vector<1x8xf32>
    tpu.vector_store %arg40[%676, %c0_379], %674 {strides = array<i32>} : memref<64x8xf32, #tpu.memory_space<vmem>>, vector<1x8xf32>,
    %c5_i32_380 = arith.constant 5 : i32
    %678 = arith.addi %526, %c5_i32_380 : i32
    %679 = arith.index_cast %678 : i32 to index
    %680 = arith.index_cast %620 : i32 to index
    %681 = memref.load %arg1[%679, %680] : memref<16x8xi32, #tpu.memory_space<smem>>
    %c8_i32_381 = arith.constant 8 : i32
    %682 = arith.muli %681, %c8_i32_381 : i32
    %c5_i32_382 = arith.constant 5 : i32
    %683 = arith.addi %682, %c5_i32_382 : i32
    %684 = arith.index_cast %683 : i32 to index
    %c0_383 = arith.constant 0 : index
    %685 = vector.load %arg39[%684, %c0_383] : memref<64x8xf32, #tpu.memory_space<vmem>>, vector<1x8xf32>
    %c5_i32_384 = arith.constant 5 : i32
    %686 = arith.addi %622, %c5_i32_384 : i32
    %687 = arith.index_cast %686 : i32 to index
    %c0_385 = arith.constant 0 : index
    %688 = vector.load %arg40[%687, %c0_385] : memref<64x8xf32, #tpu.memory_space<vmem>>, vector<1x8xf32>
    tpu.vector_store %arg40[%687, %c0_385], %685 {strides = array<i32>} : memref<64x8xf32, #tpu.memory_space<vmem>>, vector<1x8xf32>,
    %c6_i32_386 = arith.constant 6 : i32
    %689 = arith.addi %526, %c6_i32_386 : i32
    %690 = arith.index_cast %689 : i32 to index
    %691 = arith.index_cast %620 : i32 to index
    %692 = memref.load %arg1[%690, %691] : memref<16x8xi32, #tpu.memory_space<smem>>
    %c8_i32_387 = arith.constant 8 : i32
    %693 = arith.muli %692, %c8_i32_387 : i32
    %c6_i32_388 = arith.constant 6 : i32
    %694 = arith.addi %693, %c6_i32_388 : i32
    %695 = arith.index_cast %694 : i32 to index
    %c0_389 = arith.constant 0 : index
    %696 = vector.load %arg39[%695, %c0_389] : memref<64x8xf32, #tpu.memory_space<vmem>>, vector<1x8xf32>
    %c6_i32_390 = arith.constant 6 : i32
    %697 = arith.addi %622, %c6_i32_390 : i32
    %698 = arith.index_cast %697 : i32 to index
    %c0_391 = arith.constant 0 : index
    %699 = vector.load %arg40[%698, %c0_391] : memref<64x8xf32, #tpu.memory_space<vmem>>, vector<1x8xf32>
    tpu.vector_store %arg40[%698, %c0_391], %696 {strides = array<i32>} : memref<64x8xf32, #tpu.memory_space<vmem>>, vector<1x8xf32>,
    %c7_i32_392 = arith.constant 7 : i32
    %700 = arith.addi %526, %c7_i32_392 : i32
    %701 = arith.index_cast %700 : i32 to index
    %702 = arith.index_cast %620 : i32 to index
    %703 = memref.load %arg1[%701, %702] : memref<16x8xi32, #tpu.memory_space<smem>>
    %c8_i32_393 = arith.constant 8 : i32
    %704 = arith.muli %703, %c8_i32_393 : i32
    %c7_i32_394 = arith.constant 7 : i32
    %705 = arith.addi %704, %c7_i32_394 : i32
    %706 = arith.index_cast %705 : i32 to index
    %c0_395 = arith.constant 0 : index
    %707 = vector.load %arg39[%706, %c0_395] : memref<64x8xf32, #tpu.memory_space<vmem>>, vector<1x8xf32>
    %c7_i32_396 = arith.constant 7 : i32
    %708 = arith.addi %622, %c7_i32_396 : i32
    %709 = arith.index_cast %708 : i32 to index
    %c0_397 = arith.constant 0 : index
    %710 = vector.load %arg40[%709, %c0_397] : memref<64x8xf32, #tpu.memory_space<vmem>>, vector<1x8xf32>
    tpu.vector_store %arg40[%709, %c0_397], %707 {strides = array<i32>} : memref<64x8xf32, #tpu.memory_space<vmem>>, vector<1x8xf32>,
    %c2_i32_398 = arith.constant 2 : i32
    %c1_i32_399 = arith.constant 1 : i32
    %711 = arith.muli %c2_i32_398, %c1_i32_399 : i32
    %c0_i32_400 = arith.constant 0 : i32
    %712 = arith.addi %c0_i32_400, %711 : i32
    %c8_i32_401 = arith.constant 8 : i32
    %713 = arith.muli %712, %c8_i32_401 : i32
    %714 = tpu.assume_multiple %713, 8 : i32
    %c0_i32_402 = arith.constant 0 : i32
    %715 = arith.addi %526, %c0_i32_402 : i32
    %716 = arith.index_cast %715 : i32 to index
    %717 = arith.index_cast %712 : i32 to index
    %718 = memref.load %arg1[%716, %717] : memref<16x8xi32, #tpu.memory_space<smem>>
    %c8_i32_403 = arith.constant 8 : i32
    %719 = arith.muli %718, %c8_i32_403 : i32
    %c0_i32_404 = arith.constant 0 : i32
    %720 = arith.addi %719, %c0_i32_404 : i32
    %721 = arith.index_cast %720 : i32 to index
    %c0_405 = arith.constant 0 : index
    %722 = vector.load %arg39[%721, %c0_405] : memref<64x8xf32, #tpu.memory_space<vmem>>, vector<1x8xf32>
    %c0_i32_406 = arith.constant 0 : i32
    %723 = arith.addi %714, %c0_i32_406 : i32
    %724 = arith.index_cast %723 : i32 to index
    %c0_407 = arith.constant 0 : index
    %725 = vector.load %arg40[%724, %c0_407] : memref<64x8xf32, #tpu.memory_space<vmem>>, vector<1x8xf32>
    tpu.vector_store %arg40[%724, %c0_407], %722 {strides = array<i32>} : memref<64x8xf32, #tpu.memory_space<vmem>>, vector<1x8xf32>,
    %c1_i32_408 = arith.constant 1 : i32
    %726 = arith.addi %526, %c1_i32_408 : i32
    %727 = arith.index_cast %726 : i32 to index
    %728 = arith.index_cast %712 : i32 to index
    %729 = memref.load %arg1[%727, %728] : memref<16x8xi32, #tpu.memory_space<smem>>
    %c8_i32_409 = arith.constant 8 : i32
    %730 = arith.muli %729, %c8_i32_409 : i32
    %c1_i32_410 = arith.constant 1 : i32
    %731 = arith.addi %730, %c1_i32_410 : i32
    %732 = arith.index_cast %731 : i32 to index
    %c0_411 = arith.constant 0 : index
    %733 = vector.load %arg39[%732, %c0_411] : memref<64x8xf32, #tpu.memory_space<vmem>>, vector<1x8xf32>
    %c1_i32_412 = arith.constant 1 : i32
    %734 = arith.addi %714, %c1_i32_412 : i32
    %735 = arith.index_cast %734 : i32 to index
    %c0_413 = arith.constant 0 : index
    %736 = vector.load %arg40[%735, %c0_413] : memref<64x8xf32, #tpu.memory_space<vmem>>, vector<1x8xf32>
    tpu.vector_store %arg40[%735, %c0_413], %733 {strides = array<i32>} : memref<64x8xf32, #tpu.memory_space<vmem>>, vector<1x8xf32>,
    %c2_i32_414 = arith.constant 2 : i32
    %737 = arith.addi %526, %c2_i32_414 : i32
    %738 = arith.index_cast %737 : i32 to index
    %739 = arith.index_cast %712 : i32 to index
    %740 = memref.load %arg1[%738, %739] : memref<16x8xi32, #tpu.memory_space<smem>>
    %c8_i32_415 = arith.constant 8 : i32
    %741 = arith.muli %740, %c8_i32_415 : i32
    %c2_i32_416 = arith.constant 2 : i32
    %742 = arith.addi %741, %c2_i32_416 : i32
    %743 = arith.index_cast %742 : i32 to index
    %c0_417 = arith.constant 0 : index
    %744 = vector.load %arg39[%743, %c0_417] : memref<64x8xf32, #tpu.memory_space<vmem>>, vector<1x8xf32>
    %c2_i32_418 = arith.constant 2 : i32
    %745 = arith.addi %714, %c2_i32_418 : i32
    %746 = arith.index_cast %745 : i32 to index
    %c0_419 = arith.constant 0 : index
    %747 = vector.load %arg40[%746, %c0_419] : memref<64x8xf32, #tpu.memory_space<vmem>>, vector<1x8xf32>
    tpu.vector_store %arg40[%746, %c0_419], %744 {strides = array<i32>} : memref<64x8xf32, #tpu.memory_space<vmem>>, vector<1x8xf32>,
    %c3_i32_420 = arith.constant 3 : i32
    %748 = arith.addi %526, %c3_i32_420 : i32
    %749 = arith.index_cast %748 : i32 to index
    %750 = arith.index_cast %712 : i32 to index
    %751 = memref.load %arg1[%749, %750] : memref<16x8xi32, #tpu.memory_space<smem>>
    %c8_i32_421 = arith.constant 8 : i32
    %752 = arith.muli %751, %c8_i32_421 : i32
    %c3_i32_422 = arith.constant 3 : i32
    %753 = arith.addi %752, %c3_i32_422 : i32
    %754 = arith.index_cast %753 : i32 to index
    %c0_423 = arith.constant 0 : index
    %755 = vector.load %arg39[%754, %c0_423] : memref<64x8xf32, #tpu.memory_space<vmem>>, vector<1x8xf32>
    %c3_i32_424 = arith.constant 3 : i32
    %756 = arith.addi %714, %c3_i32_424 : i32
    %757 = arith.index_cast %756 : i32 to index
    %c0_425 = arith.constant 0 : index
    %758 = vector.load %arg40[%757, %c0_425] : memref<64x8xf32, #tpu.memory_space<vmem>>, vector<1x8xf32>
    tpu.vector_store %arg40[%757, %c0_425], %755 {strides = array<i32>} : memref<64x8xf32, #tpu.memory_space<vmem>>, vector<1x8xf32>,
    %c4_i32_426 = arith.constant 4 : i32
    %759 = arith.addi %526, %c4_i32_426 : i32
    %760 = arith.index_cast %759 : i32 to index
    %761 = arith.index_cast %712 : i32 to index
    %762 = memref.load %arg1[%760, %761] : memref<16x8xi32, #tpu.memory_space<smem>>
    %c8_i32_427 = arith.constant 8 : i32
    %763 = arith.muli %762, %c8_i32_427 : i32
    %c4_i32_428 = arith.constant 4 : i32
    %764 = arith.addi %763, %c4_i32_428 : i32
    %765 = arith.index_cast %764 : i32 to index
    %c0_429 = arith.constant 0 : index
    %766 = vector.load %arg39[%765, %c0_429] : memref<64x8xf32, #tpu.memory_space<vmem>>, vector<1x8xf32>
    %c4_i32_430 = arith.constant 4 : i32
    %767 = arith.addi %714, %c4_i32_430 : i32
    %768 = arith.index_cast %767 : i32 to index
    %c0_431 = arith.constant 0 : index
    %769 = vector.load %arg40[%768, %c0_431] : memref<64x8xf32, #tpu.memory_space<vmem>>, vector<1x8xf32>
    tpu.vector_store %arg40[%768, %c0_431], %766 {strides = array<i32>} : memref<64x8xf32, #tpu.memory_space<vmem>>, vector<1x8xf32>,
    %c5_i32_432 = arith.constant 5 : i32
    %770 = arith.addi %526, %c5_i32_432 : i32
    %771 = arith.index_cast %770 : i32 to index
    %772 = arith.index_cast %712 : i32 to index
    %773 = memref.load %arg1[%771, %772] : memref<16x8xi32, #tpu.memory_space<smem>>
    %c8_i32_433 = arith.constant 8 : i32
    %774 = arith.muli %773, %c8_i32_433 : i32
    %c5_i32_434 = arith.constant 5 : i32
    %775 = arith.addi %774, %c5_i32_434 : i32
    %776 = arith.index_cast %775 : i32 to index
    %c0_435 = arith.constant 0 : index
    %777 = vector.load %arg39[%776, %c0_435] : memref<64x8xf32, #tpu.memory_space<vmem>>, vector<1x8xf32>
    %c5_i32_436 = arith.constant 5 : i32
    %778 = arith.addi %714, %c5_i32_436 : i32
    %779 = arith.index_cast %778 : i32 to index
    %c0_437 = arith.constant 0 : index
    %780 = vector.load %arg40[%779, %c0_437] : memref<64x8xf32, #tpu.memory_space<vmem>>, vector<1x8xf32>
    tpu.vector_store %arg40[%779, %c0_437], %777 {strides = array<i32>} : memref<64x8xf32, #tpu.memory_space<vmem>>, vector<1x8xf32>,
    %c6_i32_438 = arith.constant 6 : i32
    %781 = arith.addi %526, %c6_i32_438 : i32
    %782 = arith.index_cast %781 : i32 to index
    %783 = arith.index_cast %712 : i32 to index
    %784 = memref.load %arg1[%782, %783] : memref<16x8xi32, #tpu.memory_space<smem>>
    %c8_i32_439 = arith.constant 8 : i32
    %785 = arith.muli %784, %c8_i32_439 : i32
    %c6_i32_440 = arith.constant 6 : i32
    %786 = arith.addi %785, %c6_i32_440 : i32
    %787 = arith.index_cast %786 : i32 to index
    %c0_441 = arith.constant 0 : index
    %788 = vector.load %arg39[%787, %c0_441] : memref<64x8xf32, #tpu.memory_space<vmem>>, vector<1x8xf32>
    %c6_i32_442 = arith.constant 6 : i32
    %789 = arith.addi %714, %c6_i32_442 : i32
    %790 = arith.index_cast %789 : i32 to index
    %c0_443 = arith.constant 0 : index
    %791 = vector.load %arg40[%790, %c0_443] : memref<64x8xf32, #tpu.memory_space<vmem>>, vector<1x8xf32>
    tpu.vector_store %arg40[%790, %c0_443], %788 {strides = array<i32>} : memref<64x8xf32, #tpu.memory_space<vmem>>, vector<1x8xf32>,
    %c7_i32_444 = arith.constant 7 : i32
    %792 = arith.addi %526, %c7_i32_444 : i32
    %793 = arith.index_cast %792 : i32 to index
    %794 = arith.index_cast %712 : i32 to index
    %795 = memref.load %arg1[%793, %794] : memref<16x8xi32, #tpu.memory_space<smem>>
    %c8_i32_445 = arith.constant 8 : i32
    %796 = arith.muli %795, %c8_i32_445 : i32
    %c7_i32_446 = arith.constant 7 : i32
    %797 = arith.addi %796, %c7_i32_446 : i32
    %798 = arith.index_cast %797 : i32 to index
    %c0_447 = arith.constant 0 : index
    %799 = vector.load %arg39[%798, %c0_447] : memref<64x8xf32, #tpu.memory_space<vmem>>, vector<1x8xf32>
    %c7_i32_448 = arith.constant 7 : i32
    %800 = arith.addi %714, %c7_i32_448 : i32
    %801 = arith.index_cast %800 : i32 to index
    %c0_449 = arith.constant 0 : index
    %802 = vector.load %arg40[%801, %c0_449] : memref<64x8xf32, #tpu.memory_space<vmem>>, vector<1x8xf32>
    tpu.vector_store %arg40[%801, %c0_449], %799 {strides = array<i32>} : memref<64x8xf32, #tpu.memory_space<vmem>>, vector<1x8xf32>,
    %c3_i32_450 = arith.constant 3 : i32
    %c1_i32_451 = arith.constant 1 : i32
    %803 = arith.muli %c3_i32_450, %c1_i32_451 : i32
    %c0_i32_452 = arith.constant 0 : i32
    %804 = arith.addi %c0_i32_452, %803 : i32
    %c8_i32_453 = arith.constant 8 : i32
    %805 = arith.muli %804, %c8_i32_453 : i32
    %806 = tpu.assume_multiple %805, 8 : i32
    %c0_i32_454 = arith.constant 0 : i32
    %807 = arith.addi %526, %c0_i32_454 : i32
    %808 = arith.index_cast %807 : i32 to index
    %809 = arith.index_cast %804 : i32 to index
    %810 = memref.load %arg1[%808, %809] : memref<16x8xi32, #tpu.memory_space<smem>>
    %c8_i32_455 = arith.constant 8 : i32
    %811 = arith.muli %810, %c8_i32_455 : i32
    %c0_i32_456 = arith.constant 0 : i32
    %812 = arith.addi %811, %c0_i32_456 : i32
    %813 = arith.index_cast %812 : i32 to index
    %c0_457 = arith.constant 0 : index
    %814 = vector.load %arg39[%813, %c0_457] : memref<64x8xf32, #tpu.memory_space<vmem>>, vector<1x8xf32>
    %c0_i32_458 = arith.constant 0 : i32
    %815 = arith.addi %806, %c0_i32_458 : i32
    %816 = arith.index_cast %815 : i32 to index
    %c0_459 = arith.constant 0 : index
    %817 = vector.load %arg40[%816, %c0_459] : memref<64x8xf32, #tpu.memory_space<vmem>>, vector<1x8xf32>
    tpu.vector_store %arg40[%816, %c0_459], %814 {strides = array<i32>} : memref<64x8xf32, #tpu.memory_space<vmem>>, vector<1x8xf32>,
    %c1_i32_460 = arith.constant 1 : i32
    %818 = arith.addi %526, %c1_i32_460 : i32
    %819 = arith.index_cast %818 : i32 to index
    %820 = arith.index_cast %804 : i32 to index
    %821 = memref.load %arg1[%819, %820] : memref<16x8xi32, #tpu.memory_space<smem>>
    %c8_i32_461 = arith.constant 8 : i32
    %822 = arith.muli %821, %c8_i32_461 : i32
    %c1_i32_462 = arith.constant 1 : i32
    %823 = arith.addi %822, %c1_i32_462 : i32
    %824 = arith.index_cast %823 : i32 to index
    %c0_463 = arith.constant 0 : index
    %825 = vector.load %arg39[%824, %c0_463] : memref<64x8xf32, #tpu.memory_space<vmem>>, vector<1x8xf32>
    %c1_i32_464 = arith.constant 1 : i32
    %826 = arith.addi %806, %c1_i32_464 : i32
    %827 = arith.index_cast %826 : i32 to index
    %c0_465 = arith.constant 0 : index
    %828 = vector.load %arg40[%827, %c0_465] : memref<64x8xf32, #tpu.memory_space<vmem>>, vector<1x8xf32>
    tpu.vector_store %arg40[%827, %c0_465], %825 {strides = array<i32>} : memref<64x8xf32, #tpu.memory_space<vmem>>, vector<1x8xf32>,
    %c2_i32_466 = arith.constant 2 : i32
    %829 = arith.addi %526, %c2_i32_466 : i32
    %830 = arith.index_cast %829 : i32 to index
    %831 = arith.index_cast %804 : i32 to index
    %832 = memref.load %arg1[%830, %831] : memref<16x8xi32, #tpu.memory_space<smem>>
    %c8_i32_467 = arith.constant 8 : i32
    %833 = arith.muli %832, %c8_i32_467 : i32
    %c2_i32_468 = arith.constant 2 : i32
    %834 = arith.addi %833, %c2_i32_468 : i32
    %835 = arith.index_cast %834 : i32 to index
    %c0_469 = arith.constant 0 : index
    %836 = vector.load %arg39[%835, %c0_469] : memref<64x8xf32, #tpu.memory_space<vmem>>, vector<1x8xf32>
    %c2_i32_470 = arith.constant 2 : i32
    %837 = arith.addi %806, %c2_i32_470 : i32
    %838 = arith.index_cast %837 : i32 to index
    %c0_471 = arith.constant 0 : index
    %839 = vector.load %arg40[%838, %c0_471] : memref<64x8xf32, #tpu.memory_space<vmem>>, vector<1x8xf32>
    tpu.vector_store %arg40[%838, %c0_471], %836 {strides = array<i32>} : memref<64x8xf32, #tpu.memory_space<vmem>>, vector<1x8xf32>,
    %c3_i32_472 = arith.constant 3 : i32
    %840 = arith.addi %526, %c3_i32_472 : i32
    %841 = arith.index_cast %840 : i32 to index
    %842 = arith.index_cast %804 : i32 to index
    %843 = memref.load %arg1[%841, %842] : memref<16x8xi32, #tpu.memory_space<smem>>
    %c8_i32_473 = arith.constant 8 : i32
    %844 = arith.muli %843, %c8_i32_473 : i32
    %c3_i32_474 = arith.constant 3 : i32
    %845 = arith.addi %844, %c3_i32_474 : i32
    %846 = arith.index_cast %845 : i32 to index
    %c0_475 = arith.constant 0 : index
    %847 = vector.load %arg39[%846, %c0_475] : memref<64x8xf32, #tpu.memory_space<vmem>>, vector<1x8xf32>
    %c3_i32_476 = arith.constant 3 : i32
    %848 = arith.addi %806, %c3_i32_476 : i32
    %849 = arith.index_cast %848 : i32 to index
    %c0_477 = arith.constant 0 : index
    %850 = vector.load %arg40[%849, %c0_477] : memref<64x8xf32, #tpu.memory_space<vmem>>, vector<1x8xf32>
    tpu.vector_store %arg40[%849, %c0_477], %847 {strides = array<i32>} : memref<64x8xf32, #tpu.memory_space<vmem>>, vector<1x8xf32>,
    %c4_i32_478 = arith.constant 4 : i32
    %851 = arith.addi %526, %c4_i32_478 : i32
    %852 = arith.index_cast %851 : i32 to index
    %853 = arith.index_cast %804 : i32 to index
    %854 = memref.load %arg1[%852, %853] : memref<16x8xi32, #tpu.memory_space<smem>>
    %c8_i32_479 = arith.constant 8 : i32
    %855 = arith.muli %854, %c8_i32_479 : i32
    %c4_i32_480 = arith.constant 4 : i32
    %856 = arith.addi %855, %c4_i32_480 : i32
    %857 = arith.index_cast %856 : i32 to index
    %c0_481 = arith.constant 0 : index
    %858 = vector.load %arg39[%857, %c0_481] : memref<64x8xf32, #tpu.memory_space<vmem>>, vector<1x8xf32>
    %c4_i32_482 = arith.constant 4 : i32
    %859 = arith.addi %806, %c4_i32_482 : i32
    %860 = arith.index_cast %859 : i32 to index
    %c0_483 = arith.constant 0 : index
    %861 = vector.load %arg40[%860, %c0_483] : memref<64x8xf32, #tpu.memory_space<vmem>>, vector<1x8xf32>
    tpu.vector_store %arg40[%860, %c0_483], %858 {strides = array<i32>} : memref<64x8xf32, #tpu.memory_space<vmem>>, vector<1x8xf32>,
    %c5_i32_484 = arith.constant 5 : i32
    %862 = arith.addi %526, %c5_i32_484 : i32
    %863 = arith.index_cast %862 : i32 to index
    %864 = arith.index_cast %804 : i32 to index
    %865 = memref.load %arg1[%863, %864] : memref<16x8xi32, #tpu.memory_space<smem>>
    %c8_i32_485 = arith.constant 8 : i32
    %866 = arith.muli %865, %c8_i32_485 : i32
    %c5_i32_486 = arith.constant 5 : i32
    %867 = arith.addi %866, %c5_i32_486 : i32
    %868 = arith.index_cast %867 : i32 to index
    %c0_487 = arith.constant 0 : index
    %869 = vector.load %arg39[%868, %c0_487] : memref<64x8xf32, #tpu.memory_space<vmem>>, vector<1x8xf32>
    %c5_i32_488 = arith.constant 5 : i32
    %870 = arith.addi %806, %c5_i32_488 : i32
    %871 = arith.index_cast %870 : i32 to index
    %c0_489 = arith.constant 0 : index
    %872 = vector.load %arg40[%871, %c0_489] : memref<64x8xf32, #tpu.memory_space<vmem>>, vector<1x8xf32>
    tpu.vector_store %arg40[%871, %c0_489], %869 {strides = array<i32>} : memref<64x8xf32, #tpu.memory_space<vmem>>, vector<1x8xf32>,
    %c6_i32_490 = arith.constant 6 : i32
    %873 = arith.addi %526, %c6_i32_490 : i32
    %874 = arith.index_cast %873 : i32 to index
    %875 = arith.index_cast %804 : i32 to index
    %876 = memref.load %arg1[%874, %875] : memref<16x8xi32, #tpu.memory_space<smem>>
    %c8_i32_491 = arith.constant 8 : i32
    %877 = arith.muli %876, %c8_i32_491 : i32
    %c6_i32_492 = arith.constant 6 : i32
    %878 = arith.addi %877, %c6_i32_492 : i32
    %879 = arith.index_cast %878 : i32 to index
    %c0_493 = arith.constant 0 : index
    %880 = vector.load %arg39[%879, %c0_493] : memref<64x8xf32, #tpu.memory_space<vmem>>, vector<1x8xf32>
    %c6_i32_494 = arith.constant 6 : i32
    %881 = arith.addi %806, %c6_i32_494 : i32
    %882 = arith.index_cast %881 : i32 to index
    %c0_495 = arith.constant 0 : index
    %883 = vector.load %arg40[%882, %c0_495] : memref<64x8xf32, #tpu.memory_space<vmem>>, vector<1x8xf32>
    tpu.vector_store %arg40[%882, %c0_495], %880 {strides = array<i32>} : memref<64x8xf32, #tpu.memory_space<vmem>>, vector<1x8xf32>,
    %c7_i32_496 = arith.constant 7 : i32
    %884 = arith.addi %526, %c7_i32_496 : i32
    %885 = arith.index_cast %884 : i32 to index
    %886 = arith.index_cast %804 : i32 to index
    %887 = memref.load %arg1[%885, %886] : memref<16x8xi32, #tpu.memory_space<smem>>
    %c8_i32_497 = arith.constant 8 : i32
    %888 = arith.muli %887, %c8_i32_497 : i32
    %c7_i32_498 = arith.constant 7 : i32
    %889 = arith.addi %888, %c7_i32_498 : i32
    %890 = arith.index_cast %889 : i32 to index
    %c0_499 = arith.constant 0 : index
    %891 = vector.load %arg39[%890, %c0_499] : memref<64x8xf32, #tpu.memory_space<vmem>>, vector<1x8xf32>
    %c7_i32_500 = arith.constant 7 : i32
    %892 = arith.addi %806, %c7_i32_500 : i32
    %893 = arith.index_cast %892 : i32 to index
    %c0_501 = arith.constant 0 : index
    %894 = vector.load %arg40[%893, %c0_501] : memref<64x8xf32, #tpu.memory_space<vmem>>, vector<1x8xf32>
    tpu.vector_store %arg40[%893, %c0_501], %891 {strides = array<i32>} : memref<64x8xf32, #tpu.memory_space<vmem>>, vector<1x8xf32>,
    %c4_i32_502 = arith.constant 4 : i32
    %c1_i32_503 = arith.constant 1 : i32
    %895 = arith.muli %c4_i32_502, %c1_i32_503 : i32
    %c0_i32_504 = arith.constant 0 : i32
    %896 = arith.addi %c0_i32_504, %895 : i32
    %c8_i32_505 = arith.constant 8 : i32
    %897 = arith.muli %896, %c8_i32_505 : i32
    %898 = tpu.assume_multiple %897, 8 : i32
    %c0_i32_506 = arith.constant 0 : i32
    %899 = arith.addi %526, %c0_i32_506 : i32
    %900 = arith.index_cast %899 : i32 to index
    %901 = arith.index_cast %896 : i32 to index
    %902 = memref.load %arg1[%900, %901] : memref<16x8xi32, #tpu.memory_space<smem>>
    %c8_i32_507 = arith.constant 8 : i32
    %903 = arith.muli %902, %c8_i32_507 : i32
    %c0_i32_508 = arith.constant 0 : i32
    %904 = arith.addi %903, %c0_i32_508 : i32
    %905 = arith.index_cast %904 : i32 to index
    %c0_509 = arith.constant 0 : index
    %906 = vector.load %arg39[%905, %c0_509] : memref<64x8xf32, #tpu.memory_space<vmem>>, vector<1x8xf32>
    %c0_i32_510 = arith.constant 0 : i32
    %907 = arith.addi %898, %c0_i32_510 : i32
    %908 = arith.index_cast %907 : i32 to index
    %c0_511 = arith.constant 0 : index
    %909 = vector.load %arg40[%908, %c0_511] : memref<64x8xf32, #tpu.memory_space<vmem>>, vector<1x8xf32>
    tpu.vector_store %arg40[%908, %c0_511], %906 {strides = array<i32>} : memref<64x8xf32, #tpu.memory_space<vmem>>, vector<1x8xf32>,
    %c1_i32_512 = arith.constant 1 : i32
    %910 = arith.addi %526, %c1_i32_512 : i32
    %911 = arith.index_cast %910 : i32 to index
    %912 = arith.index_cast %896 : i32 to index
    %913 = memref.load %arg1[%911, %912] : memref<16x8xi32, #tpu.memory_space<smem>>
    %c8_i32_513 = arith.constant 8 : i32
    %914 = arith.muli %913, %c8_i32_513 : i32
    %c1_i32_514 = arith.constant 1 : i32
    %915 = arith.addi %914, %c1_i32_514 : i32
    %916 = arith.index_cast %915 : i32 to index
    %c0_515 = arith.constant 0 : index
    %917 = vector.load %arg39[%916, %c0_515] : memref<64x8xf32, #tpu.memory_space<vmem>>, vector<1x8xf32>
    %c1_i32_516 = arith.constant 1 : i32
    %918 = arith.addi %898, %c1_i32_516 : i32
    %919 = arith.index_cast %918 : i32 to index
    %c0_517 = arith.constant 0 : index
    %920 = vector.load %arg40[%919, %c0_517] : memref<64x8xf32, #tpu.memory_space<vmem>>, vector<1x8xf32>
    tpu.vector_store %arg40[%919, %c0_517], %917 {strides = array<i32>} : memref<64x8xf32, #tpu.memory_space<vmem>>, vector<1x8xf32>,
    %c2_i32_518 = arith.constant 2 : i32
    %921 = arith.addi %526, %c2_i32_518 : i32
    %922 = arith.index_cast %921 : i32 to index
    %923 = arith.index_cast %896 : i32 to index
    %924 = memref.load %arg1[%922, %923] : memref<16x8xi32, #tpu.memory_space<smem>>
    %c8_i32_519 = arith.constant 8 : i32
    %925 = arith.muli %924, %c8_i32_519 : i32
    %c2_i32_520 = arith.constant 2 : i32
    %926 = arith.addi %925, %c2_i32_520 : i32
    %927 = arith.index_cast %926 : i32 to index
    %c0_521 = arith.constant 0 : index
    %928 = vector.load %arg39[%927, %c0_521] : memref<64x8xf32, #tpu.memory_space<vmem>>, vector<1x8xf32>
    %c2_i32_522 = arith.constant 2 : i32
    %929 = arith.addi %898, %c2_i32_522 : i32
    %930 = arith.index_cast %929 : i32 to index
    %c0_523 = arith.constant 0 : index
    %931 = vector.load %arg40[%930, %c0_523] : memref<64x8xf32, #tpu.memory_space<vmem>>, vector<1x8xf32>
    tpu.vector_store %arg40[%930, %c0_523], %928 {strides = array<i32>} : memref<64x8xf32, #tpu.memory_space<vmem>>, vector<1x8xf32>,
    %c3_i32_524 = arith.constant 3 : i32
    %932 = arith.addi %526, %c3_i32_524 : i32
    %933 = arith.index_cast %932 : i32 to index
    %934 = arith.index_cast %896 : i32 to index
    %935 = memref.load %arg1[%933, %934] : memref<16x8xi32, #tpu.memory_space<smem>>
    %c8_i32_525 = arith.constant 8 : i32
    %936 = arith.muli %935, %c8_i32_525 : i32
    %c3_i32_526 = arith.constant 3 : i32
    %937 = arith.addi %936, %c3_i32_526 : i32
    %938 = arith.index_cast %937 : i32 to index
    %c0_527 = arith.constant 0 : index
    %939 = vector.load %arg39[%938, %c0_527] : memref<64x8xf32, #tpu.memory_space<vmem>>, vector<1x8xf32>
    %c3_i32_528 = arith.constant 3 : i32
    %940 = arith.addi %898, %c3_i32_528 : i32
    %941 = arith.index_cast %940 : i32 to index
    %c0_529 = arith.constant 0 : index
    %942 = vector.load %arg40[%941, %c0_529] : memref<64x8xf32, #tpu.memory_space<vmem>>, vector<1x8xf32>
    tpu.vector_store %arg40[%941, %c0_529], %939 {strides = array<i32>} : memref<64x8xf32, #tpu.memory_space<vmem>>, vector<1x8xf32>,
    %c4_i32_530 = arith.constant 4 : i32
    %943 = arith.addi %526, %c4_i32_530 : i32
    %944 = arith.index_cast %943 : i32 to index
    %945 = arith.index_cast %896 : i32 to index
    %946 = memref.load %arg1[%944, %945] : memref<16x8xi32, #tpu.memory_space<smem>>
    %c8_i32_531 = arith.constant 8 : i32
    %947 = arith.muli %946, %c8_i32_531 : i32
    %c4_i32_532 = arith.constant 4 : i32
    %948 = arith.addi %947, %c4_i32_532 : i32
    %949 = arith.index_cast %948 : i32 to index
    %c0_533 = arith.constant 0 : index
    %950 = vector.load %arg39[%949, %c0_533] : memref<64x8xf32, #tpu.memory_space<vmem>>, vector<1x8xf32>
    %c4_i32_534 = arith.constant 4 : i32
    %951 = arith.addi %898, %c4_i32_534 : i32
    %952 = arith.index_cast %951 : i32 to index
    %c0_535 = arith.constant 0 : index
    %953 = vector.load %arg40[%952, %c0_535] : memref<64x8xf32, #tpu.memory_space<vmem>>, vector<1x8xf32>
    tpu.vector_store %arg40[%952, %c0_535], %950 {strides = array<i32>} : memref<64x8xf32, #tpu.memory_space<vmem>>, vector<1x8xf32>,
    %c5_i32_536 = arith.constant 5 : i32
    %954 = arith.addi %526, %c5_i32_536 : i32
    %955 = arith.index_cast %954 : i32 to index
    %956 = arith.index_cast %896 : i32 to index
    %957 = memref.load %arg1[%955, %956] : memref<16x8xi32, #tpu.memory_space<smem>>
    %c8_i32_537 = arith.constant 8 : i32
    %958 = arith.muli %957, %c8_i32_537 : i32
    %c5_i32_538 = arith.constant 5 : i32
    %959 = arith.addi %958, %c5_i32_538 : i32
    %960 = arith.index_cast %959 : i32 to index
    %c0_539 = arith.constant 0 : index
    %961 = vector.load %arg39[%960, %c0_539] : memref<64x8xf32, #tpu.memory_space<vmem>>, vector<1x8xf32>
    %c5_i32_540 = arith.constant 5 : i32
    %962 = arith.addi %898, %c5_i32_540 : i32
    %963 = arith.index_cast %962 : i32 to index
    %c0_541 = arith.constant 0 : index
    %964 = vector.load %arg40[%963, %c0_541] : memref<64x8xf32, #tpu.memory_space<vmem>>, vector<1x8xf32>
    tpu.vector_store %arg40[%963, %c0_541], %961 {strides = array<i32>} : memref<64x8xf32, #tpu.memory_space<vmem>>, vector<1x8xf32>,
    %c6_i32_542 = arith.constant 6 : i32
    %965 = arith.addi %526, %c6_i32_542 : i32
    %966 = arith.index_cast %965 : i32 to index
    %967 = arith.index_cast %896 : i32 to index
    %968 = memref.load %arg1[%966, %967] : memref<16x8xi32, #tpu.memory_space<smem>>
    %c8_i32_543 = arith.constant 8 : i32
    %969 = arith.muli %968, %c8_i32_543 : i32
    %c6_i32_544 = arith.constant 6 : i32
    %970 = arith.addi %969, %c6_i32_544 : i32
    %971 = arith.index_cast %970 : i32 to index
    %c0_545 = arith.constant 0 : index
    %972 = vector.load %arg39[%971, %c0_545] : memref<64x8xf32, #tpu.memory_space<vmem>>, vector<1x8xf32>
    %c6_i32_546 = arith.constant 6 : i32
    %973 = arith.addi %898, %c6_i32_546 : i32
    %974 = arith.index_cast %973 : i32 to index
    %c0_547 = arith.constant 0 : index
    %975 = vector.load %arg40[%974, %c0_547] : memref<64x8xf32, #tpu.memory_space<vmem>>, vector<1x8xf32>
    tpu.vector_store %arg40[%974, %c0_547], %972 {strides = array<i32>} : memref<64x8xf32, #tpu.memory_space<vmem>>, vector<1x8xf32>,
    %c7_i32_548 = arith.constant 7 : i32
    %976 = arith.addi %526, %c7_i32_548 : i32
    %977 = arith.index_cast %976 : i32 to index
    %978 = arith.index_cast %896 : i32 to index
    %979 = memref.load %arg1[%977, %978] : memref<16x8xi32, #tpu.memory_space<smem>>
    %c8_i32_549 = arith.constant 8 : i32
    %980 = arith.muli %979, %c8_i32_549 : i32
    %c7_i32_550 = arith.constant 7 : i32
    %981 = arith.addi %980, %c7_i32_550 : i32
    %982 = arith.index_cast %981 : i32 to index
    %c0_551 = arith.constant 0 : index
    %983 = vector.load %arg39[%982, %c0_551] : memref<64x8xf32, #tpu.memory_space<vmem>>, vector<1x8xf32>
    %c7_i32_552 = arith.constant 7 : i32
    %984 = arith.addi %898, %c7_i32_552 : i32
    %985 = arith.index_cast %984 : i32 to index
    %c0_553 = arith.constant 0 : index
    %986 = vector.load %arg40[%985, %c0_553] : memref<64x8xf32, #tpu.memory_space<vmem>>, vector<1x8xf32>
    tpu.vector_store %arg40[%985, %c0_553], %983 {strides = array<i32>} : memref<64x8xf32, #tpu.memory_space<vmem>>, vector<1x8xf32>,
    %c5_i32_554 = arith.constant 5 : i32
    %c1_i32_555 = arith.constant 1 : i32
    %987 = arith.muli %c5_i32_554, %c1_i32_555 : i32
    %c0_i32_556 = arith.constant 0 : i32
    %988 = arith.addi %c0_i32_556, %987 : i32
    %c8_i32_557 = arith.constant 8 : i32
    %989 = arith.muli %988, %c8_i32_557 : i32
    %990 = tpu.assume_multiple %989, 8 : i32
    %c0_i32_558 = arith.constant 0 : i32
    %991 = arith.addi %526, %c0_i32_558 : i32
    %992 = arith.index_cast %991 : i32 to index
    %993 = arith.index_cast %988 : i32 to index
    %994 = memref.load %arg1[%992, %993] : memref<16x8xi32, #tpu.memory_space<smem>>
    %c8_i32_559 = arith.constant 8 : i32
    %995 = arith.muli %994, %c8_i32_559 : i32
    %c0_i32_560 = arith.constant 0 : i32
    %996 = arith.addi %995, %c0_i32_560 : i32
    %997 = arith.index_cast %996 : i32 to index
    %c0_561 = arith.constant 0 : index
    %998 = vector.load %arg39[%997, %c0_561] : memref<64x8xf32, #tpu.memory_space<vmem>>, vector<1x8xf32>
    %c0_i32_562 = arith.constant 0 : i32
    %999 = arith.addi %990, %c0_i32_562 : i32
    %1000 = arith.index_cast %999 : i32 to index
    %c0_563 = arith.constant 0 : index
    %1001 = vector.load %arg40[%1000, %c0_563] : memref<64x8xf32, #tpu.memory_space<vmem>>, vector<1x8xf32>
    tpu.vector_store %arg40[%1000, %c0_563], %998 {strides = array<i32>} : memref<64x8xf32, #tpu.memory_space<vmem>>, vector<1x8xf32>,
    %c1_i32_564 = arith.constant 1 : i32
    %1002 = arith.addi %526, %c1_i32_564 : i32
    %1003 = arith.index_cast %1002 : i32 to index
    %1004 = arith.index_cast %988 : i32 to index
    %1005 = memref.load %arg1[%1003, %1004] : memref<16x8xi32, #tpu.memory_space<smem>>
    %c8_i32_565 = arith.constant 8 : i32
    %1006 = arith.muli %1005, %c8_i32_565 : i32
    %c1_i32_566 = arith.constant 1 : i32
    %1007 = arith.addi %1006, %c1_i32_566 : i32
    %1008 = arith.index_cast %1007 : i32 to index
    %c0_567 = arith.constant 0 : index
    %1009 = vector.load %arg39[%1008, %c0_567] : memref<64x8xf32, #tpu.memory_space<vmem>>, vector<1x8xf32>
    %c1_i32_568 = arith.constant 1 : i32
    %1010 = arith.addi %990, %c1_i32_568 : i32
    %1011 = arith.index_cast %1010 : i32 to index
    %c0_569 = arith.constant 0 : index
    %1012 = vector.load %arg40[%1011, %c0_569] : memref<64x8xf32, #tpu.memory_space<vmem>>, vector<1x8xf32>
    tpu.vector_store %arg40[%1011, %c0_569], %1009 {strides = array<i32>} : memref<64x8xf32, #tpu.memory_space<vmem>>, vector<1x8xf32>,
    %c2_i32_570 = arith.constant 2 : i32
    %1013 = arith.addi %526, %c2_i32_570 : i32
    %1014 = arith.index_cast %1013 : i32 to index
    %1015 = arith.index_cast %988 : i32 to index
    %1016 = memref.load %arg1[%1014, %1015] : memref<16x8xi32, #tpu.memory_space<smem>>
    %c8_i32_571 = arith.constant 8 : i32
    %1017 = arith.muli %1016, %c8_i32_571 : i32
    %c2_i32_572 = arith.constant 2 : i32
    %1018 = arith.addi %1017, %c2_i32_572 : i32
    %1019 = arith.index_cast %1018 : i32 to index
    %c0_573 = arith.constant 0 : index
    %1020 = vector.load %arg39[%1019, %c0_573] : memref<64x8xf32, #tpu.memory_space<vmem>>, vector<1x8xf32>
    %c2_i32_574 = arith.constant 2 : i32
    %1021 = arith.addi %990, %c2_i32_574 : i32
    %1022 = arith.index_cast %1021 : i32 to index
    %c0_575 = arith.constant 0 : index
    %1023 = vector.load %arg40[%1022, %c0_575] : memref<64x8xf32, #tpu.memory_space<vmem>>, vector<1x8xf32>
    tpu.vector_store %arg40[%1022, %c0_575], %1020 {strides = array<i32>} : memref<64x8xf32, #tpu.memory_space<vmem>>, vector<1x8xf32>,
    %c3_i32_576 = arith.constant 3 : i32
    %1024 = arith.addi %526, %c3_i32_576 : i32
    %1025 = arith.index_cast %1024 : i32 to index
    %1026 = arith.index_cast %988 : i32 to index
    %1027 = memref.load %arg1[%1025, %1026] : memref<16x8xi32, #tpu.memory_space<smem>>
    %c8_i32_577 = arith.constant 8 : i32
    %1028 = arith.muli %1027, %c8_i32_577 : i32
    %c3_i32_578 = arith.constant 3 : i32
    %1029 = arith.addi %1028, %c3_i32_578 : i32
    %1030 = arith.index_cast %1029 : i32 to index
    %c0_579 = arith.constant 0 : index
    %1031 = vector.load %arg39[%1030, %c0_579] : memref<64x8xf32, #tpu.memory_space<vmem>>, vector<1x8xf32>
    %c3_i32_580 = arith.constant 3 : i32
    %1032 = arith.addi %990, %c3_i32_580 : i32
    %1033 = arith.index_cast %1032 : i32 to index
    %c0_581 = arith.constant 0 : index
    %1034 = vector.load %arg40[%1033, %c0_581] : memref<64x8xf32, #tpu.memory_space<vmem>>, vector<1x8xf32>
    tpu.vector_store %arg40[%1033, %c0_581], %1031 {strides = array<i32>} : memref<64x8xf32, #tpu.memory_space<vmem>>, vector<1x8xf32>,
    %c4_i32_582 = arith.constant 4 : i32
    %1035 = arith.addi %526, %c4_i32_582 : i32
    %1036 = arith.index_cast %1035 : i32 to index
    %1037 = arith.index_cast %988 : i32 to index
    %1038 = memref.load %arg1[%1036, %1037] : memref<16x8xi32, #tpu.memory_space<smem>>
    %c8_i32_583 = arith.constant 8 : i32
    %1039 = arith.muli %1038, %c8_i32_583 : i32
    %c4_i32_584 = arith.constant 4 : i32
    %1040 = arith.addi %1039, %c4_i32_584 : i32
    %1041 = arith.index_cast %1040 : i32 to index
    %c0_585 = arith.constant 0 : index
    %1042 = vector.load %arg39[%1041, %c0_585] : memref<64x8xf32, #tpu.memory_space<vmem>>, vector<1x8xf32>
    %c4_i32_586 = arith.constant 4 : i32
    %1043 = arith.addi %990, %c4_i32_586 : i32
    %1044 = arith.index_cast %1043 : i32 to index
    %c0_587 = arith.constant 0 : index
    %1045 = vector.load %arg40[%1044, %c0_587] : memref<64x8xf32, #tpu.memory_space<vmem>>, vector<1x8xf32>
    tpu.vector_store %arg40[%1044, %c0_587], %1042 {strides = array<i32>} : memref<64x8xf32, #tpu.memory_space<vmem>>, vector<1x8xf32>,
    %c5_i32_588 = arith.constant 5 : i32
    %1046 = arith.addi %526, %c5_i32_588 : i32
    %1047 = arith.index_cast %1046 : i32 to index
    %1048 = arith.index_cast %988 : i32 to index
    %1049 = memref.load %arg1[%1047, %1048] : memref<16x8xi32, #tpu.memory_space<smem>>
    %c8_i32_589 = arith.constant 8 : i32
    %1050 = arith.muli %1049, %c8_i32_589 : i32
    %c5_i32_590 = arith.constant 5 : i32
    %1051 = arith.addi %1050, %c5_i32_590 : i32
    %1052 = arith.index_cast %1051 : i32 to index
    %c0_591 = arith.constant 0 : index
    %1053 = vector.load %arg39[%1052, %c0_591] : memref<64x8xf32, #tpu.memory_space<vmem>>, vector<1x8xf32>
    %c5_i32_592 = arith.constant 5 : i32
    %1054 = arith.addi %990, %c5_i32_592 : i32
    %1055 = arith.index_cast %1054 : i32 to index
    %c0_593 = arith.constant 0 : index
    %1056 = vector.load %arg40[%1055, %c0_593] : memref<64x8xf32, #tpu.memory_space<vmem>>, vector<1x8xf32>
    tpu.vector_store %arg40[%1055, %c0_593], %1053 {strides = array<i32>} : memref<64x8xf32, #tpu.memory_space<vmem>>, vector<1x8xf32>,
    %c6_i32_594 = arith.constant 6 : i32
    %1057 = arith.addi %526, %c6_i32_594 : i32
    %1058 = arith.index_cast %1057 : i32 to index
    %1059 = arith.index_cast %988 : i32 to index
    %1060 = memref.load %arg1[%1058, %1059] : memref<16x8xi32, #tpu.memory_space<smem>>
    %c8_i32_595 = arith.constant 8 : i32
    %1061 = arith.muli %1060, %c8_i32_595 : i32
    %c6_i32_596 = arith.constant 6 : i32
    %1062 = arith.addi %1061, %c6_i32_596 : i32
    %1063 = arith.index_cast %1062 : i32 to index
    %c0_597 = arith.constant 0 : index
    %1064 = vector.load %arg39[%1063, %c0_597] : memref<64x8xf32, #tpu.memory_space<vmem>>, vector<1x8xf32>
    %c6_i32_598 = arith.constant 6 : i32
    %1065 = arith.addi %990, %c6_i32_598 : i32
    %1066 = arith.index_cast %1065 : i32 to index
    %c0_599 = arith.constant 0 : index
    %1067 = vector.load %arg40[%1066, %c0_599] : memref<64x8xf32, #tpu.memory_space<vmem>>, vector<1x8xf32>
    tpu.vector_store %arg40[%1066, %c0_599], %1064 {strides = array<i32>} : memref<64x8xf32, #tpu.memory_space<vmem>>, vector<1x8xf32>,
    %c7_i32_600 = arith.constant 7 : i32
    %1068 = arith.addi %526, %c7_i32_600 : i32
    %1069 = arith.index_cast %1068 : i32 to index
    %1070 = arith.index_cast %988 : i32 to index
    %1071 = memref.load %arg1[%1069, %1070] : memref<16x8xi32, #tpu.memory_space<smem>>
    %c8_i32_601 = arith.constant 8 : i32
    %1072 = arith.muli %1071, %c8_i32_601 : i32
    %c7_i32_602 = arith.constant 7 : i32
    %1073 = arith.addi %1072, %c7_i32_602 : i32
    %1074 = arith.index_cast %1073 : i32 to index
    %c0_603 = arith.constant 0 : index
    %1075 = vector.load %arg39[%1074, %c0_603] : memref<64x8xf32, #tpu.memory_space<vmem>>, vector<1x8xf32>
    %c7_i32_604 = arith.constant 7 : i32
    %1076 = arith.addi %990, %c7_i32_604 : i32
    %1077 = arith.index_cast %1076 : i32 to index
    %c0_605 = arith.constant 0 : index
    %1078 = vector.load %arg40[%1077, %c0_605] : memref<64x8xf32, #tpu.memory_space<vmem>>, vector<1x8xf32>
    tpu.vector_store %arg40[%1077, %c0_605], %1075 {strides = array<i32>} : memref<64x8xf32, #tpu.memory_space<vmem>>, vector<1x8xf32>,
    %c6_i32_606 = arith.constant 6 : i32
    %c1_i32_607 = arith.constant 1 : i32
    %1079 = arith.muli %c6_i32_606, %c1_i32_607 : i32
    %c0_i32_608 = arith.constant 0 : i32
    %1080 = arith.addi %c0_i32_608, %1079 : i32
    %c8_i32_609 = arith.constant 8 : i32
    %1081 = arith.muli %1080, %c8_i32_609 : i32
    %1082 = tpu.assume_multiple %1081, 8 : i32
    %c0_i32_610 = arith.constant 0 : i32
    %1083 = arith.addi %526, %c0_i32_610 : i32
    %1084 = arith.index_cast %1083 : i32 to index
    %1085 = arith.index_cast %1080 : i32 to index
    %1086 = memref.load %arg1[%1084, %1085] : memref<16x8xi32, #tpu.memory_space<smem>>
    %c8_i32_611 = arith.constant 8 : i32
    %1087 = arith.muli %1086, %c8_i32_611 : i32
    %c0_i32_612 = arith.constant 0 : i32
    %1088 = arith.addi %1087, %c0_i32_612 : i32
    %1089 = arith.index_cast %1088 : i32 to index
    %c0_613 = arith.constant 0 : index
    %1090 = vector.load %arg39[%1089, %c0_613] : memref<64x8xf32, #tpu.memory_space<vmem>>, vector<1x8xf32>
    %c0_i32_614 = arith.constant 0 : i32
    %1091 = arith.addi %1082, %c0_i32_614 : i32
    %1092 = arith.index_cast %1091 : i32 to index
    %c0_615 = arith.constant 0 : index
    %1093 = vector.load %arg40[%1092, %c0_615] : memref<64x8xf32, #tpu.memory_space<vmem>>, vector<1x8xf32>
    tpu.vector_store %arg40[%1092, %c0_615], %1090 {strides = array<i32>} : memref<64x8xf32, #tpu.memory_space<vmem>>, vector<1x8xf32>,
    %c1_i32_616 = arith.constant 1 : i32
    %1094 = arith.addi %526, %c1_i32_616 : i32
    %1095 = arith.index_cast %1094 : i32 to index
    %1096 = arith.index_cast %1080 : i32 to index
    %1097 = memref.load %arg1[%1095, %1096] : memref<16x8xi32, #tpu.memory_space<smem>>
    %c8_i32_617 = arith.constant 8 : i32
    %1098 = arith.muli %1097, %c8_i32_617 : i32
    %c1_i32_618 = arith.constant 1 : i32
    %1099 = arith.addi %1098, %c1_i32_618 : i32
    %1100 = arith.index_cast %1099 : i32 to index
    %c0_619 = arith.constant 0 : index
    %1101 = vector.load %arg39[%1100, %c0_619] : memref<64x8xf32, #tpu.memory_space<vmem>>, vector<1x8xf32>
    %c1_i32_620 = arith.constant 1 : i32
    %1102 = arith.addi %1082, %c1_i32_620 : i32
    %1103 = arith.index_cast %1102 : i32 to index
    %c0_621 = arith.constant 0 : index
    %1104 = vector.load %arg40[%1103, %c0_621] : memref<64x8xf32, #tpu.memory_space<vmem>>, vector<1x8xf32>
    tpu.vector_store %arg40[%1103, %c0_621], %1101 {strides = array<i32>} : memref<64x8xf32, #tpu.memory_space<vmem>>, vector<1x8xf32>,
    %c2_i32_622 = arith.constant 2 : i32
    %1105 = arith.addi %526, %c2_i32_622 : i32
    %1106 = arith.index_cast %1105 : i32 to index
    %1107 = arith.index_cast %1080 : i32 to index
    %1108 = memref.load %arg1[%1106, %1107] : memref<16x8xi32, #tpu.memory_space<smem>>
    %c8_i32_623 = arith.constant 8 : i32
    %1109 = arith.muli %1108, %c8_i32_623 : i32
    %c2_i32_624 = arith.constant 2 : i32
    %1110 = arith.addi %1109, %c2_i32_624 : i32
    %1111 = arith.index_cast %1110 : i32 to index
    %c0_625 = arith.constant 0 : index
    %1112 = vector.load %arg39[%1111, %c0_625] : memref<64x8xf32, #tpu.memory_space<vmem>>, vector<1x8xf32>
    %c2_i32_626 = arith.constant 2 : i32
    %1113 = arith.addi %1082, %c2_i32_626 : i32
    %1114 = arith.index_cast %1113 : i32 to index
    %c0_627 = arith.constant 0 : index
    %1115 = vector.load %arg40[%1114, %c0_627] : memref<64x8xf32, #tpu.memory_space<vmem>>, vector<1x8xf32>
    tpu.vector_store %arg40[%1114, %c0_627], %1112 {strides = array<i32>} : memref<64x8xf32, #tpu.memory_space<vmem>>, vector<1x8xf32>,
    %c3_i32_628 = arith.constant 3 : i32
    %1116 = arith.addi %526, %c3_i32_628 : i32
    %1117 = arith.index_cast %1116 : i32 to index
    %1118 = arith.index_cast %1080 : i32 to index
    %1119 = memref.load %arg1[%1117, %1118] : memref<16x8xi32, #tpu.memory_space<smem>>
    %c8_i32_629 = arith.constant 8 : i32
    %1120 = arith.muli %1119, %c8_i32_629 : i32
    %c3_i32_630 = arith.constant 3 : i32
    %1121 = arith.addi %1120, %c3_i32_630 : i32
    %1122 = arith.index_cast %1121 : i32 to index
    %c0_631 = arith.constant 0 : index
    %1123 = vector.load %arg39[%1122, %c0_631] : memref<64x8xf32, #tpu.memory_space<vmem>>, vector<1x8xf32>
    %c3_i32_632 = arith.constant 3 : i32
    %1124 = arith.addi %1082, %c3_i32_632 : i32
    %1125 = arith.index_cast %1124 : i32 to index
    %c0_633 = arith.constant 0 : index
    %1126 = vector.load %arg40[%1125, %c0_633] : memref<64x8xf32, #tpu.memory_space<vmem>>, vector<1x8xf32>
    tpu.vector_store %arg40[%1125, %c0_633], %1123 {strides = array<i32>} : memref<64x8xf32, #tpu.memory_space<vmem>>, vector<1x8xf32>,
    %c4_i32_634 = arith.constant 4 : i32
    %1127 = arith.addi %526, %c4_i32_634 : i32
    %1128 = arith.index_cast %1127 : i32 to index
    %1129 = arith.index_cast %1080 : i32 to index
    %1130 = memref.load %arg1[%1128, %1129] : memref<16x8xi32, #tpu.memory_space<smem>>
    %c8_i32_635 = arith.constant 8 : i32
    %1131 = arith.muli %1130, %c8_i32_635 : i32
    %c4_i32_636 = arith.constant 4 : i32
    %1132 = arith.addi %1131, %c4_i32_636 : i32
    %1133 = arith.index_cast %1132 : i32 to index
    %c0_637 = arith.constant 0 : index
    %1134 = vector.load %arg39[%1133, %c0_637] : memref<64x8xf32, #tpu.memory_space<vmem>>, vector<1x8xf32>
    %c4_i32_638 = arith.constant 4 : i32
    %1135 = arith.addi %1082, %c4_i32_638 : i32
    %1136 = arith.index_cast %1135 : i32 to index
    %c0_639 = arith.constant 0 : index
    %1137 = vector.load %arg40[%1136, %c0_639] : memref<64x8xf32, #tpu.memory_space<vmem>>, vector<1x8xf32>
    tpu.vector_store %arg40[%1136, %c0_639], %1134 {strides = array<i32>} : memref<64x8xf32, #tpu.memory_space<vmem>>, vector<1x8xf32>,
    %c5_i32_640 = arith.constant 5 : i32
    %1138 = arith.addi %526, %c5_i32_640 : i32
    %1139 = arith.index_cast %1138 : i32 to index
    %1140 = arith.index_cast %1080 : i32 to index
    %1141 = memref.load %arg1[%1139, %1140] : memref<16x8xi32, #tpu.memory_space<smem>>
    %c8_i32_641 = arith.constant 8 : i32
    %1142 = arith.muli %1141, %c8_i32_641 : i32
    %c5_i32_642 = arith.constant 5 : i32
    %1143 = arith.addi %1142, %c5_i32_642 : i32
    %1144 = arith.index_cast %1143 : i32 to index
    %c0_643 = arith.constant 0 : index
    %1145 = vector.load %arg39[%1144, %c0_643] : memref<64x8xf32, #tpu.memory_space<vmem>>, vector<1x8xf32>
    %c5_i32_644 = arith.constant 5 : i32
    %1146 = arith.addi %1082, %c5_i32_644 : i32
    %1147 = arith.index_cast %1146 : i32 to index
    %c0_645 = arith.constant 0 : index
    %1148 = vector.load %arg40[%1147, %c0_645] : memref<64x8xf32, #tpu.memory_space<vmem>>, vector<1x8xf32>
    tpu.vector_store %arg40[%1147, %c0_645], %1145 {strides = array<i32>} : memref<64x8xf32, #tpu.memory_space<vmem>>, vector<1x8xf32>,
    %c6_i32_646 = arith.constant 6 : i32
    %1149 = arith.addi %526, %c6_i32_646 : i32
    %1150 = arith.index_cast %1149 : i32 to index
    %1151 = arith.index_cast %1080 : i32 to index
    %1152 = memref.load %arg1[%1150, %1151] : memref<16x8xi32, #tpu.memory_space<smem>>
    %c8_i32_647 = arith.constant 8 : i32
    %1153 = arith.muli %1152, %c8_i32_647 : i32
    %c6_i32_648 = arith.constant 6 : i32
    %1154 = arith.addi %1153, %c6_i32_648 : i32
    %1155 = arith.index_cast %1154 : i32 to index
    %c0_649 = arith.constant 0 : index
    %1156 = vector.load %arg39[%1155, %c0_649] : memref<64x8xf32, #tpu.memory_space<vmem>>, vector<1x8xf32>
    %c6_i32_650 = arith.constant 6 : i32
    %1157 = arith.addi %1082, %c6_i32_650 : i32
    %1158 = arith.index_cast %1157 : i32 to index
    %c0_651 = arith.constant 0 : index
    %1159 = vector.load %arg40[%1158, %c0_651] : memref<64x8xf32, #tpu.memory_space<vmem>>, vector<1x8xf32>
    tpu.vector_store %arg40[%1158, %c0_651], %1156 {strides = array<i32>} : memref<64x8xf32, #tpu.memory_space<vmem>>, vector<1x8xf32>,
    %c7_i32_652 = arith.constant 7 : i32
    %1160 = arith.addi %526, %c7_i32_652 : i32
    %1161 = arith.index_cast %1160 : i32 to index
    %1162 = arith.index_cast %1080 : i32 to index
    %1163 = memref.load %arg1[%1161, %1162] : memref<16x8xi32, #tpu.memory_space<smem>>
    %c8_i32_653 = arith.constant 8 : i32
    %1164 = arith.muli %1163, %c8_i32_653 : i32
    %c7_i32_654 = arith.constant 7 : i32
    %1165 = arith.addi %1164, %c7_i32_654 : i32
    %1166 = arith.index_cast %1165 : i32 to index
    %c0_655 = arith.constant 0 : index
    %1167 = vector.load %arg39[%1166, %c0_655] : memref<64x8xf32, #tpu.memory_space<vmem>>, vector<1x8xf32>
    %c7_i32_656 = arith.constant 7 : i32
    %1168 = arith.addi %1082, %c7_i32_656 : i32
    %1169 = arith.index_cast %1168 : i32 to index
    %c0_657 = arith.constant 0 : index
    %1170 = vector.load %arg40[%1169, %c0_657] : memref<64x8xf32, #tpu.memory_space<vmem>>, vector<1x8xf32>
    tpu.vector_store %arg40[%1169, %c0_657], %1167 {strides = array<i32>} : memref<64x8xf32, #tpu.memory_space<vmem>>, vector<1x8xf32>,
    %c7_i32_658 = arith.constant 7 : i32
    %c1_i32_659 = arith.constant 1 : i32
    %1171 = arith.muli %c7_i32_658, %c1_i32_659 : i32
    %c0_i32_660 = arith.constant 0 : i32
    %1172 = arith.addi %c0_i32_660, %1171 : i32
    %c8_i32_661 = arith.constant 8 : i32
    %1173 = arith.muli %1172, %c8_i32_661 : i32
    %1174 = tpu.assume_multiple %1173, 8 : i32
    %c0_i32_662 = arith.constant 0 : i32
    %1175 = arith.addi %526, %c0_i32_662 : i32
    %1176 = arith.index_cast %1175 : i32 to index
    %1177 = arith.index_cast %1172 : i32 to index
    %1178 = memref.load %arg1[%1176, %1177] : memref<16x8xi32, #tpu.memory_space<smem>>
    %c8_i32_663 = arith.constant 8 : i32
    %1179 = arith.muli %1178, %c8_i32_663 : i32
    %c0_i32_664 = arith.constant 0 : i32
    %1180 = arith.addi %1179, %c0_i32_664 : i32
    %1181 = arith.index_cast %1180 : i32 to index
    %c0_665 = arith.constant 0 : index
    %1182 = vector.load %arg39[%1181, %c0_665] : memref<64x8xf32, #tpu.memory_space<vmem>>, vector<1x8xf32>
    %c0_i32_666 = arith.constant 0 : i32
    %1183 = arith.addi %1174, %c0_i32_666 : i32
    %1184 = arith.index_cast %1183 : i32 to index
    %c0_667 = arith.constant 0 : index
    %1185 = vector.load %arg40[%1184, %c0_667] : memref<64x8xf32, #tpu.memory_space<vmem>>, vector<1x8xf32>
    tpu.vector_store %arg40[%1184, %c0_667], %1182 {strides = array<i32>} : memref<64x8xf32, #tpu.memory_space<vmem>>, vector<1x8xf32>,
    %c1_i32_668 = arith.constant 1 : i32
    %1186 = arith.addi %526, %c1_i32_668 : i32
    %1187 = arith.index_cast %1186 : i32 to index
    %1188 = arith.index_cast %1172 : i32 to index
    %1189 = memref.load %arg1[%1187, %1188] : memref<16x8xi32, #tpu.memory_space<smem>>
    %c8_i32_669 = arith.constant 8 : i32
    %1190 = arith.muli %1189, %c8_i32_669 : i32
    %c1_i32_670 = arith.constant 1 : i32
    %1191 = arith.addi %1190, %c1_i32_670 : i32
    %1192 = arith.index_cast %1191 : i32 to index
    %c0_671 = arith.constant 0 : index
    %1193 = vector.load %arg39[%1192, %c0_671] : memref<64x8xf32, #tpu.memory_space<vmem>>, vector<1x8xf32>
    %c1_i32_672 = arith.constant 1 : i32
    %1194 = arith.addi %1174, %c1_i32_672 : i32
    %1195 = arith.index_cast %1194 : i32 to index
    %c0_673 = arith.constant 0 : index
    %1196 = vector.load %arg40[%1195, %c0_673] : memref<64x8xf32, #tpu.memory_space<vmem>>, vector<1x8xf32>
    tpu.vector_store %arg40[%1195, %c0_673], %1193 {strides = array<i32>} : memref<64x8xf32, #tpu.memory_space<vmem>>, vector<1x8xf32>,
    %c2_i32_674 = arith.constant 2 : i32
    %1197 = arith.addi %526, %c2_i32_674 : i32
    %1198 = arith.index_cast %1197 : i32 to index
    %1199 = arith.index_cast %1172 : i32 to index
    %1200 = memref.load %arg1[%1198, %1199] : memref<16x8xi32, #tpu.memory_space<smem>>
    %c8_i32_675 = arith.constant 8 : i32
    %1201 = arith.muli %1200, %c8_i32_675 : i32
    %c2_i32_676 = arith.constant 2 : i32
    %1202 = arith.addi %1201, %c2_i32_676 : i32
    %1203 = arith.index_cast %1202 : i32 to index
    %c0_677 = arith.constant 0 : index
    %1204 = vector.load %arg39[%1203, %c0_677] : memref<64x8xf32, #tpu.memory_space<vmem>>, vector<1x8xf32>
    %c2_i32_678 = arith.constant 2 : i32
    %1205 = arith.addi %1174, %c2_i32_678 : i32
    %1206 = arith.index_cast %1205 : i32 to index
    %c0_679 = arith.constant 0 : index
    %1207 = vector.load %arg40[%1206, %c0_679] : memref<64x8xf32, #tpu.memory_space<vmem>>, vector<1x8xf32>
    tpu.vector_store %arg40[%1206, %c0_679], %1204 {strides = array<i32>} : memref<64x8xf32, #tpu.memory_space<vmem>>, vector<1x8xf32>,
    %c3_i32_680 = arith.constant 3 : i32
    %1208 = arith.addi %526, %c3_i32_680 : i32
    %1209 = arith.index_cast %1208 : i32 to index
    %1210 = arith.index_cast %1172 : i32 to index
    %1211 = memref.load %arg1[%1209, %1210] : memref<16x8xi32, #tpu.memory_space<smem>>
    %c8_i32_681 = arith.constant 8 : i32
    %1212 = arith.muli %1211, %c8_i32_681 : i32
    %c3_i32_682 = arith.constant 3 : i32
    %1213 = arith.addi %1212, %c3_i32_682 : i32
    %1214 = arith.index_cast %1213 : i32 to index
    %c0_683 = arith.constant 0 : index
    %1215 = vector.load %arg39[%1214, %c0_683] : memref<64x8xf32, #tpu.memory_space<vmem>>, vector<1x8xf32>
    %c3_i32_684 = arith.constant 3 : i32
    %1216 = arith.addi %1174, %c3_i32_684 : i32
    %1217 = arith.index_cast %1216 : i32 to index
    %c0_685 = arith.constant 0 : index
    %1218 = vector.load %arg40[%1217, %c0_685] : memref<64x8xf32, #tpu.memory_space<vmem>>, vector<1x8xf32>
    tpu.vector_store %arg40[%1217, %c0_685], %1215 {strides = array<i32>} : memref<64x8xf32, #tpu.memory_space<vmem>>, vector<1x8xf32>,
    %c4_i32_686 = arith.constant 4 : i32
    %1219 = arith.addi %526, %c4_i32_686 : i32
    %1220 = arith.index_cast %1219 : i32 to index
    %1221 = arith.index_cast %1172 : i32 to index
    %1222 = memref.load %arg1[%1220, %1221] : memref<16x8xi32, #tpu.memory_space<smem>>
    %c8_i32_687 = arith.constant 8 : i32
    %1223 = arith.muli %1222, %c8_i32_687 : i32
    %c4_i32_688 = arith.constant 4 : i32
    %1224 = arith.addi %1223, %c4_i32_688 : i32
    %1225 = arith.index_cast %1224 : i32 to index
    %c0_689 = arith.constant 0 : index
    %1226 = vector.load %arg39[%1225, %c0_689] : memref<64x8xf32, #tpu.memory_space<vmem>>, vector<1x8xf32>
    %c4_i32_690 = arith.constant 4 : i32
    %1227 = arith.addi %1174, %c4_i32_690 : i32
    %1228 = arith.index_cast %1227 : i32 to index
    %c0_691 = arith.constant 0 : index
    %1229 = vector.load %arg40[%1228, %c0_691] : memref<64x8xf32, #tpu.memory_space<vmem>>, vector<1x8xf32>
    tpu.vector_store %arg40[%1228, %c0_691], %1226 {strides = array<i32>} : memref<64x8xf32, #tpu.memory_space<vmem>>, vector<1x8xf32>,
    %c5_i32_692 = arith.constant 5 : i32
    %1230 = arith.addi %526, %c5_i32_692 : i32
    %1231 = arith.index_cast %1230 : i32 to index
    %1232 = arith.index_cast %1172 : i32 to index
    %1233 = memref.load %arg1[%1231, %1232] : memref<16x8xi32, #tpu.memory_space<smem>>
    %c8_i32_693 = arith.constant 8 : i32
    %1234 = arith.muli %1233, %c8_i32_693 : i32
    %c5_i32_694 = arith.constant 5 : i32
    %1235 = arith.addi %1234, %c5_i32_694 : i32
    %1236 = arith.index_cast %1235 : i32 to index
    %c0_695 = arith.constant 0 : index
    %1237 = vector.load %arg39[%1236, %c0_695] : memref<64x8xf32, #tpu.memory_space<vmem>>, vector<1x8xf32>
    %c5_i32_696 = arith.constant 5 : i32
    %1238 = arith.addi %1174, %c5_i32_696 : i32
    %1239 = arith.index_cast %1238 : i32 to index
    %c0_697 = arith.constant 0 : index
    %1240 = vector.load %arg40[%1239, %c0_697] : memref<64x8xf32, #tpu.memory_space<vmem>>, vector<1x8xf32>
    tpu.vector_store %arg40[%1239, %c0_697], %1237 {strides = array<i32>} : memref<64x8xf32, #tpu.memory_space<vmem>>, vector<1x8xf32>,
    %c6_i32_698 = arith.constant 6 : i32
    %1241 = arith.addi %526, %c6_i32_698 : i32
    %1242 = arith.index_cast %1241 : i32 to index
    %1243 = arith.index_cast %1172 : i32 to index
    %1244 = memref.load %arg1[%1242, %1243] : memref<16x8xi32, #tpu.memory_space<smem>>
    %c8_i32_699 = arith.constant 8 : i32
    %1245 = arith.muli %1244, %c8_i32_699 : i32
    %c6_i32_700 = arith.constant 6 : i32
    %1246 = arith.addi %1245, %c6_i32_700 : i32
    %1247 = arith.index_cast %1246 : i32 to index
    %c0_701 = arith.constant 0 : index
    %1248 = vector.load %arg39[%1247, %c0_701] : memref<64x8xf32, #tpu.memory_space<vmem>>, vector<1x8xf32>
    %c6_i32_702 = arith.constant 6 : i32
    %1249 = arith.addi %1174, %c6_i32_702 : i32
    %1250 = arith.index_cast %1249 : i32 to index
    %c0_703 = arith.constant 0 : index
    %1251 = vector.load %arg40[%1250, %c0_703] : memref<64x8xf32, #tpu.memory_space<vmem>>, vector<1x8xf32>
    tpu.vector_store %arg40[%1250, %c0_703], %1248 {strides = array<i32>} : memref<64x8xf32, #tpu.memory_space<vmem>>, vector<1x8xf32>,
    %c7_i32_704 = arith.constant 7 : i32
    %1252 = arith.addi %526, %c7_i32_704 : i32
    %1253 = arith.index_cast %1252 : i32 to index
    %1254 = arith.index_cast %1172 : i32 to index
    %1255 = memref.load %arg1[%1253, %1254] : memref<16x8xi32, #tpu.memory_space<smem>>
    %c8_i32_705 = arith.constant 8 : i32
    %1256 = arith.muli %1255, %c8_i32_705 : i32
    %c7_i32_706 = arith.constant 7 : i32
    %1257 = arith.addi %1256, %c7_i32_706 : i32
    %1258 = arith.index_cast %1257 : i32 to index
    %c0_707 = arith.constant 0 : index
    %1259 = vector.load %arg39[%1258, %c0_707] : memref<64x8xf32, #tpu.memory_space<vmem>>, vector<1x8xf32>
    %c7_i32_708 = arith.constant 7 : i32
    %1260 = arith.addi %1174, %c7_i32_708 : i32
    %1261 = arith.index_cast %1260 : i32 to index
    %c0_709 = arith.constant 0 : index
    %1262 = vector.load %arg40[%1261, %c0_709] : memref<64x8xf32, #tpu.memory_space<vmem>>, vector<1x8xf32>
    tpu.vector_store %arg40[%1261, %c0_709], %1259 {strides = array<i32>} : memref<64x8xf32, #tpu.memory_space<vmem>>, vector<1x8xf32>,
    %c8_i32_710 = arith.constant 8 : i32
    %c0_711 = arith.constant 0 : index
    %c0_712 = arith.constant 0 : index
    %1263 = vector.load %arg40[%c0_711, %c0_712] : memref<64x8xf32, #tpu.memory_space<vmem>>, vector<64x8xf32>
    %1264 = arith.truncf %1263 : vector<64x8xf32> to vector<64x8xbf16>
    %c0_713 = arith.constant 0 : index
    %c0_714 = arith.constant 0 : index
    %1265 = vector.load %arg27[%c0_713, %c0_714] : memref<4x32xbf16, #tpu.memory_space<vmem>>, vector<4x32xbf16>
    %cst_715 = arith.constant dense<0.000000e+00> : vector<64x32xf32>
    %1266 = tpu.matmul %2, %1265, %cst_715 {dimension_numbers = #tpu.dot_dimension_numbers<[1], [0], [0], [1], [0, 0, 1, 1], [], []>} : vector<64x4xbf16>, vector<4x32xbf16>, vector<64x32xf32> -> vector<64x32xf32>
    %c0_716 = arith.constant 0 : index
    %c0_717 = arith.constant 0 : index
    %1267 = vector.load %arg28[%c0_716, %c0_717] : memref<8x32xbf16, #tpu.memory_space<vmem>>, vector<8x32xbf16>
    %cst_718 = arith.constant dense<0.000000e+00> : vector<64x32xf32>
    %1268 = tpu.matmul %1264, %1267, %cst_718 {dimension_numbers = #tpu.dot_dimension_numbers<[1], [0], [0], [1], [0, 0, 1, 1], [], []>} : vector<64x8xbf16>, vector<8x32xbf16>, vector<64x32xf32> -> vector<64x32xf32>
    %1269 = arith.addf %1266, %1268 : vector<64x32xf32>
    %c0_719 = arith.constant 0 : index
    %c0_720 = arith.constant 0 : index
    %1270 = vector.load %arg29[%c0_719, %c0_720] : memref<1x32xf32, #tpu.memory_space<vmem>>, vector<1x32xf32>
    %1271 = vector.broadcast %1270 : vector<1x32xf32> to vector<64x32xf32>
    %1272 = arith.addf %1269, %1271 : vector<64x32xf32>
    %cst_721 = arith.constant 0.000000e+00 : f32
    %1273 = vector.broadcast %cst_721 : f32 to vector<64x32xf32>
    %1274 = arith.maximumf %1272, %1273 : vector<64x32xf32>
    %1275 = arith.truncf %1274 : vector<64x32xf32> to vector<64x32xbf16>
    %c0_722 = arith.constant 0 : index
    %c0_723 = arith.constant 0 : index
    %1276 = vector.load %arg30[%c0_722, %c0_723] : memref<32x2xbf16, #tpu.memory_space<vmem>>, vector<32x2xbf16>
    %cst_724 = arith.constant dense<0.000000e+00> : vector<64x2xf32>
    %1277 = tpu.matmul %1275, %1276, %cst_724 {dimension_numbers = #tpu.dot_dimension_numbers<[1], [0], [0], [1], [0, 0, 1, 1], [], []>} : vector<64x32xbf16>, vector<32x2xbf16>, vector<64x2xf32> -> vector<64x2xf32>
    %c0_725 = arith.constant 0 : index
    %c0_726 = arith.constant 0 : index
    %1278 = vector.load %arg31[%c0_725, %c0_726] : memref<1x2xf32, #tpu.memory_space<vmem>>, vector<1x2xf32>
    %1279 = vector.broadcast %1278 : vector<1x2xf32> to vector<64x2xf32>
    %1280 = arith.addf %1277, %1279 : vector<64x2xf32>
    %cst_727 = arith.constant 0.000000e+00 : f32
    %1281 = vector.broadcast %cst_727 : f32 to vector<64x117xf32>
    %1282 = tpu.concatenate %488, %525, %1280, %1281 in 1 : vector<64x8xf32>, vector<64x1xf32>, vector<64x2xf32>, vector<64x117xf32> -> vector<64x128xf32>
    %1283 = vector.shape_cast %1282 : vector<64x128xf32> to vector<8x8x128xf32>
    %c0_728 = arith.constant 0 : index
    %c0_729 = arith.constant 0 : index
    %c0_730 = arith.constant 0 : index
    %1284 = vector.load %arg32[%c0_728, %c0_729, %c0_730] : memref<8x8x128xf32, #tpu.memory_space<vmem>>, vector<8x8x128xf32>
    tpu.vector_store %arg32[%c0_728, %c0_729, %c0_730], %1283 {strides = array<i32>} : memref<8x8x128xf32, #tpu.memory_space<vmem>>, vector<8x8x128xf32>,
    return
  }
  func.func @transform_0(%arg0: i32, %arg1: memref<16x8xi32, #tpu.memory_space<smem>>) -> (i32, i32, i32) {
    %c0_i32 = arith.constant 0 : i32
    %c0_i32_0 = arith.constant 0 : i32
    %c0_i32_1 = arith.constant 0 : i32
    return %c0_i32, %arg0, %c0_i32_0 : i32, i32, i32
  }
  func.func @transform_1(%arg0: i32, %arg1: memref<16x8xi32, #tpu.memory_space<smem>>) -> (i32, i32, i32) {
    %c0_i32 = arith.constant 0 : i32
    %c0_i32_0 = arith.constant 0 : i32
    %c0_i32_1 = arith.constant 0 : i32
    return %c0_i32, %arg0, %c0_i32_0 : i32, i32, i32
  }
  func.func @transform_2(%arg0: i32, %arg1: memref<16x8xi32, #tpu.memory_space<smem>>) -> (i32, i32, i32) {
    %c0_i32 = arith.constant 0 : i32
    %c0_i32_0 = arith.constant 0 : i32
    %c0_i32_1 = arith.constant 0 : i32
    return %c0_i32, %arg0, %c0_i32_0 : i32, i32, i32
  }
  func.func @transform_3(%arg0: i32, %arg1: memref<16x8xi32, #tpu.memory_space<smem>>) -> (i32, i32) {
    %c0_i32 = arith.constant 0 : i32
    %c0_i32_0 = arith.constant 0 : i32
    %c0_i32_1 = arith.constant 0 : i32
    return %c0_i32, %c0_i32_0 : i32, i32
  }
  func.func @transform_4(%arg0: i32, %arg1: memref<16x8xi32, #tpu.memory_space<smem>>) -> (i32, i32) {
    %c0_i32 = arith.constant 0 : i32
    %c0_i32_0 = arith.constant 0 : i32
    %c0_i32_1 = arith.constant 0 : i32
    return %c0_i32, %c0_i32_0 : i32, i32
  }
  func.func @transform_5(%arg0: i32, %arg1: memref<16x8xi32, #tpu.memory_space<smem>>) -> (i32, i32) {
    %c0_i32 = arith.constant 0 : i32
    %c0_i32_0 = arith.constant 0 : i32
    %c0_i32_1 = arith.constant 0 : i32
    return %c0_i32, %c0_i32_0 : i32, i32
  }
  func.func @transform_6(%arg0: i32, %arg1: memref<16x8xi32, #tpu.memory_space<smem>>) -> (i32, i32) {
    %c0_i32 = arith.constant 0 : i32
    %c0_i32_0 = arith.constant 0 : i32
    %c0_i32_1 = arith.constant 0 : i32
    return %c0_i32, %c0_i32_0 : i32, i32
  }
  func.func @transform_7(%arg0: i32, %arg1: memref<16x8xi32, #tpu.memory_space<smem>>) -> (i32, i32) {
    %c0_i32 = arith.constant 0 : i32
    %c0_i32_0 = arith.constant 0 : i32
    %c0_i32_1 = arith.constant 0 : i32
    return %c0_i32, %c0_i32_0 : i32, i32
  }
  func.func @transform_8(%arg0: i32, %arg1: memref<16x8xi32, #tpu.memory_space<smem>>) -> (i32, i32) {
    %c0_i32 = arith.constant 0 : i32
    %c0_i32_0 = arith.constant 0 : i32
    %c0_i32_1 = arith.constant 0 : i32
    return %c0_i32, %c0_i32_0 : i32, i32
  }
  func.func @transform_9(%arg0: i32, %arg1: memref<16x8xi32, #tpu.memory_space<smem>>) -> (i32, i32) {
    %c0_i32 = arith.constant 0 : i32
    %c0_i32_0 = arith.constant 0 : i32
    %c0_i32_1 = arith.constant 0 : i32
    return %c0_i32, %c0_i32_0 : i32, i32
  }
  func.func @transform_10(%arg0: i32, %arg1: memref<16x8xi32, #tpu.memory_space<smem>>) -> (i32, i32) {
    %c0_i32 = arith.constant 0 : i32
    %c0_i32_0 = arith.constant 0 : i32
    %c0_i32_1 = arith.constant 0 : i32
    return %c0_i32, %c0_i32_0 : i32, i32
  }
  func.func @transform_11(%arg0: i32, %arg1: memref<16x8xi32, #tpu.memory_space<smem>>) -> (i32, i32) {
    %c0_i32 = arith.constant 0 : i32
    %c0_i32_0 = arith.constant 0 : i32
    %c0_i32_1 = arith.constant 0 : i32
    return %c0_i32, %c0_i32_0 : i32, i32
  }
  func.func @transform_12(%arg0: i32, %arg1: memref<16x8xi32, #tpu.memory_space<smem>>) -> (i32, i32) {
    %c0_i32 = arith.constant 0 : i32
    %c0_i32_0 = arith.constant 0 : i32
    %c0_i32_1 = arith.constant 0 : i32
    return %c0_i32, %c0_i32_0 : i32, i32
  }
  func.func @transform_13(%arg0: i32, %arg1: memref<16x8xi32, #tpu.memory_space<smem>>) -> (i32, i32) {
    %c0_i32 = arith.constant 0 : i32
    %c0_i32_0 = arith.constant 0 : i32
    %c0_i32_1 = arith.constant 0 : i32
    return %c0_i32, %c0_i32_0 : i32, i32
  }
  func.func @transform_14(%arg0: i32, %arg1: memref<16x8xi32, #tpu.memory_space<smem>>) -> (i32, i32) {
    %c0_i32 = arith.constant 0 : i32
    %c0_i32_0 = arith.constant 0 : i32
    %c0_i32_1 = arith.constant 0 : i32
    return %c0_i32, %c0_i32_0 : i32, i32
  }
  func.func @transform_15(%arg0: i32, %arg1: memref<16x8xi32, #tpu.memory_space<smem>>) -> (i32, i32) {
    %c0_i32 = arith.constant 0 : i32
    %c0_i32_0 = arith.constant 0 : i32
    %c0_i32_1 = arith.constant 0 : i32
    return %c0_i32, %c0_i32_0 : i32, i32
  }
  func.func @transform_16(%arg0: i32, %arg1: memref<16x8xi32, #tpu.memory_space<smem>>) -> (i32, i32) {
    %c0_i32 = arith.constant 0 : i32
    %c0_i32_0 = arith.constant 0 : i32
    %c0_i32_1 = arith.constant 0 : i32
    return %c0_i32, %c0_i32_0 : i32, i32
  }
  func.func @transform_17(%arg0: i32, %arg1: memref<16x8xi32, #tpu.memory_space<smem>>) -> (i32, i32) {
    %c0_i32 = arith.constant 0 : i32
    %c0_i32_0 = arith.constant 0 : i32
    %c0_i32_1 = arith.constant 0 : i32
    return %c0_i32, %c0_i32_0 : i32, i32
  }
  func.func @transform_18(%arg0: i32, %arg1: memref<16x8xi32, #tpu.memory_space<smem>>) -> (i32, i32) {
    %c0_i32 = arith.constant 0 : i32
    %c0_i32_0 = arith.constant 0 : i32
    %c0_i32_1 = arith.constant 0 : i32
    return %c0_i32, %c0_i32_0 : i32, i32
  }
  func.func @transform_19(%arg0: i32, %arg1: memref<16x8xi32, #tpu.memory_space<smem>>) -> (i32, i32) {
    %c0_i32 = arith.constant 0 : i32
    %c0_i32_0 = arith.constant 0 : i32
    %c0_i32_1 = arith.constant 0 : i32
    return %c0_i32, %c0_i32_0 : i32, i32
  }
  func.func @transform_20(%arg0: i32, %arg1: memref<16x8xi32, #tpu.memory_space<smem>>) -> (i32, i32) {
    %c0_i32 = arith.constant 0 : i32
    %c0_i32_0 = arith.constant 0 : i32
    %c0_i32_1 = arith.constant 0 : i32
    return %c0_i32, %c0_i32_0 : i32, i32
  }
  func.func @transform_21(%arg0: i32, %arg1: memref<16x8xi32, #tpu.memory_space<smem>>) -> (i32, i32) {
    %c0_i32 = arith.constant 0 : i32
    %c0_i32_0 = arith.constant 0 : i32
    %c0_i32_1 = arith.constant 0 : i32
    return %c0_i32, %c0_i32_0 : i32, i32
  }
  func.func @transform_22(%arg0: i32, %arg1: memref<16x8xi32, #tpu.memory_space<smem>>) -> (i32, i32) {
    %c0_i32 = arith.constant 0 : i32
    %c0_i32_0 = arith.constant 0 : i32
    %c0_i32_1 = arith.constant 0 : i32
    return %c0_i32, %c0_i32_0 : i32, i32
  }
  func.func @transform_23(%arg0: i32, %arg1: memref<16x8xi32, #tpu.memory_space<smem>>) -> (i32, i32) {
    %c0_i32 = arith.constant 0 : i32
    %c0_i32_0 = arith.constant 0 : i32
    %c0_i32_1 = arith.constant 0 : i32
    return %c0_i32, %c0_i32_0 : i32, i32
  }
  func.func @transform_24(%arg0: i32, %arg1: memref<16x8xi32, #tpu.memory_space<smem>>) -> (i32, i32) {
    %c0_i32 = arith.constant 0 : i32
    %c0_i32_0 = arith.constant 0 : i32
    %c0_i32_1 = arith.constant 0 : i32
    return %c0_i32, %c0_i32_0 : i32, i32
  }
  func.func @transform_25(%arg0: i32, %arg1: memref<16x8xi32, #tpu.memory_space<smem>>) -> (i32, i32) {
    %c0_i32 = arith.constant 0 : i32
    %c0_i32_0 = arith.constant 0 : i32
    %c0_i32_1 = arith.constant 0 : i32
    return %c0_i32, %c0_i32_0 : i32, i32
  }
  func.func @transform_26(%arg0: i32, %arg1: memref<16x8xi32, #tpu.memory_space<smem>>) -> (i32, i32) {
    %c0_i32 = arith.constant 0 : i32
    %c0_i32_0 = arith.constant 0 : i32
    %c0_i32_1 = arith.constant 0 : i32
    return %c0_i32, %c0_i32_0 : i32, i32
  }
  func.func @transform_27(%arg0: i32, %arg1: memref<16x8xi32, #tpu.memory_space<smem>>) -> (i32, i32) {
    %c0_i32 = arith.constant 0 : i32
    %c0_i32_0 = arith.constant 0 : i32
    %c0_i32_1 = arith.constant 0 : i32
    return %c0_i32, %c0_i32_0 : i32, i32
  }
  func.func @transform_28(%arg0: i32, %arg1: memref<16x8xi32, #tpu.memory_space<smem>>) -> (i32, i32) {
    %c0_i32 = arith.constant 0 : i32
    %c0_i32_0 = arith.constant 0 : i32
    %c0_i32_1 = arith.constant 0 : i32
    return %c0_i32, %c0_i32_0 : i32, i32
  }
  func.func @transform_29(%arg0: i32, %arg1: memref<16x8xi32, #tpu.memory_space<smem>>) -> (i32, i32) {
    %c0_i32 = arith.constant 0 : i32
    %c0_i32_0 = arith.constant 0 : i32
    %c0_i32_1 = arith.constant 0 : i32
    return %c0_i32, %c0_i32_0 : i32, i32
  }
  func.func @transform_30(%arg0: i32, %arg1: memref<16x8xi32, #tpu.memory_space<smem>>) -> (i32, i32, i32) {
    %c0_i32 = arith.constant 0 : i32
    %c0_i32_0 = arith.constant 0 : i32
    %c0_i32_1 = arith.constant 0 : i32
    return %c0_i32, %arg0, %c0_i32_0 : i32, i32, i32
  }
  func.func @transform_31(%arg0: i32, %arg1: memref<16x8xi32, #tpu.memory_space<smem>>) -> (i32, i32) {
    %c0_i32 = arith.constant 0 : i32
    %c0_i32_0 = arith.constant 0 : i32
    return %arg0, %c0_i32 : i32, i32
  }
  func.func @transform_32(%arg0: i32, %arg1: memref<16x8xi32, #tpu.memory_space<smem>>) -> (i32, i32) {
    %c0_i32 = arith.constant 0 : i32
    %c0_i32_0 = arith.constant 0 : i32
    return %arg0, %c0_i32 : i32, i32
  }
}

</mosaic_0001>

<llo_original>
// kernel: cluster_model_forward.1
$region0: #{cluster_model_forward.1}
  #allocation0 [shape = 'u32[]', space=smem, size = 0x4, offset = 0x4, fixed_abs, tag = 'smem constant byte address 0x4 - core index']
  #allocation1 [shape = 'u32[72,128]{1,0:T(1,128)}', space=vmem, size = 0x9000, scoped, tag = 'internal scratch']
  #allocation2 [shape = 'bf16[64,32]{1,0:T(8,128)(2,1)}', space=vmem, size = 0x4000, scoped, tag = 'scratch operand']
  #allocation3 [shape = 'bf16[64,32]{1,0:T(8,128)(2,1)}', space=vmem, size = 0x4000, scoped, tag = 'scratch operand']
  #allocation4 [shape = 'f32[8,32]{1,0:T(8,128)}', space=vmem, size = 0x1000, scoped, tag = 'scratch operand']
  #allocation5 [shape = 'f32[8,32]{1,0:T(8,128)}', space=vmem, size = 0x1000, scoped, tag = 'scratch operand']
  #allocation6 [shape = 'f32[64,8]{1,0:T(8,128)}', space=vmem, size = 0x8000, scoped, tag = 'scratch operand']
  #allocation7 [shape = 'f32[64,8]{1,0:T(8,128)}', space=vmem, size = 0x8000, scoped, tag = 'scratch operand']
  #allocation8 [shape = 's32[1]{0}', space=sflag, size = 0x4, scoped, tag = 'scoped memory for cluster_model_forward.1']
  #allocation9 [shape = 'u8[8192]{0}', space=smem, size = 0x2000, scoped, tag = 'prefetched SMEM operand 0']
  #allocation10 [shape = 'f32[1,1]{1,0:T(1,128)S(1)}', space=vmem, size = 0x200, scoped, tag = 'scoped memory for cluster_model_forward.1']
  %s0 = inlined_call_operand.smem [shape: u32[34], index: -1, kind: input, shape index: {}]
  %s1 = sld [smem:[%s0]]
  %s2 = scalar_lea.smem %s0, 1
  %s3 = sld [smem:[%s2]]
  %s4 = scalar_lea.smem %s0, 2
  %s5 = sld [smem:[%s4]]
  %s6 = scalar_lea.smem %s0, 3
  %s7 = sld [smem:[%s6]]
  %s8 = scalar_lea.smem %s0, 4
  %s9 = sld [smem:[%s8]]
  %s10 = scalar_lea.smem %s0, 5
  %s11 = sld [smem:[%s10]]
  %s12 = scalar_lea.smem %s0, 6
  %s13 = sld [smem:[%s12]]
  %s14 = scalar_lea.smem %s0, 7
  %s15 = sld [smem:[%s14]]
  %s16 = scalar_lea.smem %s0, 8
  %s17 = sld [smem:[%s16]]
  %s18 = scalar_lea.smem %s0, 9
  %s19 = sld [smem:[%s18]]
  %s20 = scalar_lea.smem %s0, 10
  %s21 = sld [smem:[%s20]]
  %s22 = scalar_lea.smem %s0, 11
  %s23 = sld [smem:[%s22]]
  %s24 = scalar_lea.smem %s0, 12
  %s25 = sld [smem:[%s24]]
  %s26 = scalar_lea.smem %s0, 13
  %s27 = sld [smem:[%s26]]
  %s28 = scalar_lea.smem %s0, 14
  %s29 = sld [smem:[%s28]]
  %s30 = scalar_lea.smem %s0, 15
  %s31 = sld [smem:[%s30]]
  %s32 = scalar_lea.smem %s0, 16
  %s33 = sld [smem:[%s32]]
  %s34 = scalar_lea.smem %s0, 17
  %s35 = sld [smem:[%s34]]
  %s36 = scalar_lea.smem %s0, 18
  %s37 = sld [smem:[%s36]]
  %s38 = scalar_lea.smem %s0, 19
  %s39 = sld [smem:[%s38]]
  %s40 = scalar_lea.smem %s0, 20
  %s41 = sld [smem:[%s40]]
  %s42 = scalar_lea.smem %s0, 21
  %s43 = sld [smem:[%s42]]
  %s44 = scalar_lea.smem %s0, 22
  %s45 = sld [smem:[%s44]]
  %s46 = scalar_lea.smem %s0, 23
  %s47 = sld [smem:[%s46]]
  %s48 = scalar_lea.smem %s0, 24
  %s49 = sld [smem:[%s48]]
  %s50 = scalar_lea.smem %s0, 25
  %s51 = sld [smem:[%s50]]
  %s52 = scalar_lea.smem %s0, 26
  %s53 = sld [smem:[%s52]]
  %s54 = scalar_lea.smem %s0, 27
  %s55 = sld [smem:[%s54]]
  %s56 = scalar_lea.smem %s0, 28
  %s57 = sld [smem:[%s56]]
  %s58 = scalar_lea.smem %s0, 29
  %s59 = sld [smem:[%s58]]
  %s60 = scalar_lea.smem %s0, 30
  %s61 = sld [smem:[%s60]]
  %s62 = scalar_lea.smem %s0, 31
  %s63 = sld [smem:[%s62]]
  %s64 = scalar_lea.smem %s0, 32
  %s65 = sld [smem:[%s64]]
  %s66 = scalar_lea.smem %s0, 33
  %s67 = sld [smem:[%s66]]
  %68 = xla_tuple %s63, %s65, %s67
  %s69 = sld [smem:[#allocation0]]
  $region317: #{cluster_model_forward.1} parent=0
    _
  %s71 = ssub.s32 1, %s69
  %s72 = scalar_select 0, %s71, %s69
  %s74 = sshll.u32 %s1, 4
  %s75 = int_to_ptr.vmem [resolvable:$true] %s74
  %77 = dma.vmem_to_smem %s75, 256, [#allocation9], [#allocation8]
  %v78 = vstv %s51
  %79 = vst [vmem:[#allocation10] sm:$0x1] %v78
  %81 = dma.done [#allocation8], 256
  %82 = sfence
  $region1: #{cluster_model_forward.1} parent=0
    #allocation11 [shape = 'u8[65536]{0}', space=vmem, size = 0x10000, scoped, tag = 'input window, operand 1']
    #allocation12 [shape = 'u8[65536]{0}', space=vmem, size = 0x10000, scoped, tag = 'input window, operand 2']
    #allocation13 [shape = 'u8[65536]{0}', space=vmem, size = 0x10000, scoped, tag = 'input window, operand 3']
    #allocation14 [shape = 'u8[65536]{0}', space=vmem, size = 0x10000, scoped, tag = 'output window, operand 0']
    #allocation15 [shape = 'u8[8192]{0}', space=vmem, size = 0x2000, scoped, tag = 'output window, operand 1']
    #allocation16 [shape = 's32[2]{0}', space=sflag, size = 0x8, scoped, tag = 'scoped memory for cluster_model_forward.1']
    #allocation17 [shape = 'u8[8192]{0}', space=vmem, size = 0x2000, scoped, tag = 'output window, operand 2']
    #allocation18 [shape = 's32[2]{0}', space=sflag, size = 0x8, scoped, tag = 'scoped memory for cluster_model_forward.1']
    %83 = vsyncpa [#allocation16], 0
    %s84 = scalar_lea.sflag [#allocation16], 1
    %85 = vsyncpa %s84, 0
    %86 = vsyncpa [#allocation18], 0
    %s87 = scalar_lea.sflag [#allocation18], 1
    %88 = vsyncpa %s87, 0
    loop: start=0, step=1, limit=4
    $region2: #{cluster_model_forward.1} parent=1 // loop_pre_header
      _
    $region3: #{cluster_model_forward.1} parent=1 // loop_header
      %s90 = sphi 0, %s94
      %p91 = scmp.ge.s32.totalorder %s90, 4
      %s100 = sphi 0, %s102
      %s103 = sphi 0, %s100
      %s104 = sphi 0, %s103
      %s120 = sphi 0, %s104
      %s126 = sphi 0, %s128
      %s129 = sphi 0, %s126
      %s130 = sphi 0, %s129
      %s146 = sphi 0, %s130
      %s152 = sphi 0, %s154
      %s155 = sphi 0, %s152
      %s156 = sphi 0, %s155
      %s172 = sphi 0, %s156
      %s176 = sphi 0, %s176
      %s178 = sphi 0, %s176
      %s179 = sphi 0, %s178
      %s193 = sphi 0, %s179
      %s197 = sphi 0, %s197
      %s199 = sphi 0, %s197
      %s200 = sphi 0, %s199
      %s214 = sphi 0, %s200
      %s218 = sphi 0, %s218
      %s220 = sphi 0, %s218
      %s221 = sphi 0, %s220
      %s235 = sphi 0, %s221
      %s239 = sphi 0, %s239
      %s241 = sphi 0, %s239
      %s242 = sphi 0, %s241
      %s256 = sphi 0, %s242
      %s260 = sphi 0, %s260
      %s262 = sphi 0, %s260
      %s263 = sphi 0, %s262
      %s277 = sphi 0, %s263
      %s281 = sphi 0, %s281
      %s283 = sphi 0, %s281
      %s284 = sphi 0, %s283
      %s298 = sphi 0, %s284
      %s302 = sphi 0, %s302
      %s304 = sphi 0, %s302
      %s305 = sphi 0, %s304
      %s319 = sphi 0, %s305
      %s323 = sphi 0, %s323
      %s325 = sphi 0, %s323
      %s326 = sphi 0, %s325
      %s340 = sphi 0, %s326
      %s344 = sphi 0, %s344
      %s346 = sphi 0, %s344
      %s347 = sphi 0, %s346
      %s361 = sphi 0, %s347
      %s365 = sphi 0, %s365
      %s367 = sphi 0, %s365
      %s368 = sphi 0, %s367
      %s382 = sphi 0, %s368
      %s386 = sphi 0, %s386
      %s388 = sphi 0, %s386
      %s389 = sphi 0, %s388
      %s403 = sphi 0, %s389
      %s407 = sphi 0, %s407
      %s409 = sphi 0, %s407
      %s410 = sphi 0, %s409
      %s424 = sphi 0, %s410
      %s428 = sphi 0, %s428
      %s430 = sphi 0, %s428
      %s431 = sphi 0, %s430
      %s445 = sphi 0, %s431
      %s449 = sphi 0, %s449
      %s451 = sphi 0, %s449
      %s452 = sphi 0, %s451
      %s466 = sphi 0, %s452
      %s470 = sphi 0, %s470
      %s472 = sphi 0, %s470
      %s473 = sphi 0, %s472
      %s487 = sphi 0, %s473
      %s491 = sphi 0, %s491
      %s493 = sphi 0, %s491
      %s494 = sphi 0, %s493
      %s508 = sphi 0, %s494
      %s512 = sphi 0, %s512
      %s514 = sphi 0, %s512
      %s515 = sphi 0, %s514
      %s529 = sphi 0, %s515
      %s533 = sphi 0, %s533
      %s535 = sphi 0, %s533
      %s536 = sphi 0, %s535
      %s550 = sphi 0, %s536
      %s554 = sphi 0, %s554
      %s556 = sphi 0, %s554
      %s557 = sphi 0, %s556
      %s571 = sphi 0, %s557
      %s575 = sphi 0, %s575
      %s577 = sphi 0, %s575
      %s578 = sphi 0, %s577
      %s592 = sphi 0, %s578
      %s596 = sphi 0, %s596
      %s598 = sphi 0, %s596
      %s599 = sphi 0, %s598
      %s613 = sphi 0, %s599
      %s617 = sphi 0, %s617
      %s619 = sphi 0, %s617
      %s620 = sphi 0, %s619
      %s634 = sphi 0, %s620
      %s638 = sphi 0, %s638
      %s640 = sphi 0, %s638
      %s641 = sphi 0, %s640
      %s655 = sphi 0, %s641
      %s659 = sphi 0, %s659
      %s661 = sphi 0, %s659
      %s662 = sphi 0, %s661
      %s676 = sphi 0, %s662
      %s680 = sphi 0, %s680
      %s682 = sphi 0, %s680
      %s683 = sphi 0, %s682
      %s697 = sphi 0, %s683
      %s701 = sphi 0, %s701
      %s703 = sphi 0, %s701
      %s704 = sphi 0, %s703
      %s718 = sphi 0, %s704
      %s722 = sphi 0, %s722
      %s724 = sphi 0, %s722
      %s725 = sphi 0, %s724
      %s739 = sphi 0, %s725
      %s745 = sphi 0, %s747
      %s748 = sphi 0, %s745
      %s749 = sphi 0, %s748
      %s765 = sphi 0, %s749
      %s771 = sphi 0, %s773
      %s774 = sphi 0, %s771
      %s775 = sphi 0, %s774
      %s791 = sphi 0, %s775
      %s797 = sphi 0, %s799
      %s800 = sphi 0, %s797
      %s801 = sphi 0, %s800
      %s817 = sphi 0, %s801
    $region4: #{cluster_model_forward.1} parent=1 // loop_header_branch
      %93 = sbr.rel (%p91) target = $region8
    $region5: #{cluster_model_forward.1} parent=1 // loop_body
      %s95 = ssub.s32 %s90, 1
      %s96 = ssub.s32 %s90, 2
      %s97 = sadd.s32 %s90, 1
      %s98 = ssub.s32 %s90, %s97
      %p99 = scmp.eq.s32.totalorder %s98, 0
      %s101 = sadd.s32 %s100, 1
      %s102 = scalar_select %p99, %s100, %s101
      %p105 = pneg %p99
      %p106 = scmp.eq.s32.totalorder %s90, 1
      %p107 = por %p105, %p106
      %p108 = scmp.ne.s32.totalorder %s100, %s103
      %p109 = scmp.eq.s32.totalorder %s90, 0
      %p110 = por %p108, %p109
      %p111 = scmp.ne.s32.totalorder %s100, %s103
      %p112 = scmp.eq.s32.totalorder %s95, 1
      %p113 = por %p111, %p112
      %p114 = scmp.ne.s32.totalorder %s103, %s104
      %p115 = scmp.eq.s32.totalorder %s95, 0
      %p116 = por %p114, %p115
      %p117 = scmp.ne.s32.totalorder %s103, %s104
      %p118 = scmp.eq.s32.totalorder %s96, 1
      %p119 = por %p117, %p118
      %p121 = scmp.ne.s32.totalorder %s104, %s120
      %p122 = scmp.eq.s32.totalorder %s96, 0
      %p123 = por %p121, %p122
      %s124 = ssub.s32 %s90, %s97
      %p125 = scmp.eq.s32.totalorder %s124, 0
      %s127 = sadd.s32 %s126, 1
      %s128 = scalar_select %p125, %s126, %s127
      %p131 = pneg %p125
      %p132 = scmp.eq.s32.totalorder %s90, 1
      %p133 = por %p131, %p132
      %p134 = scmp.ne.s32.totalorder %s126, %s129
      %p135 = scmp.eq.s32.totalorder %s90, 0
      %p136 = por %p134, %p135
      %p137 = scmp.ne.s32.totalorder %s126, %s129
      %p138 = scmp.eq.s32.totalorder %s95, 1
      %p139 = por %p137, %p138
      %p140 = scmp.ne.s32.totalorder %s129, %s130
      %p141 = scmp.eq.s32.totalorder %s95, 0
      %p142 = por %p140, %p141
      %p143 = scmp.ne.s32.totalorder %s129, %s130
      %p144 = scmp.eq.s32.totalorder %s96, 1
      %p145 = por %p143, %p144
      %p147 = scmp.ne.s32.totalorder %s130, %s146
      %p148 = scmp.eq.s32.totalorder %s96, 0
      %p149 = por %p147, %p148
      %s150 = ssub.s32 %s90, %s97
      %p151 = scmp.eq.s32.totalorder %s150, 0
      %s153 = sadd.s32 %s152, 1
      %s154 = scalar_select %p151, %s152, %s153
      %p157 = pneg %p151
      %p158 = scmp.eq.s32.totalorder %s90, 1
      %p159 = por %p157, %p158
      %p160 = scmp.ne.s32.totalorder %s152, %s155
      %p161 = scmp.eq.s32.totalorder %s90, 0
      %p162 = por %p160, %p161
      %p163 = scmp.ne.s32.totalorder %s152, %s155
      %p164 = scmp.eq.s32.totalorder %s95, 1
      %p165 = por %p163, %p164
      %p166 = scmp.ne.s32.totalorder %s155, %s156
      %p167 = scmp.eq.s32.totalorder %s95, 0
      %p168 = por %p166, %p167
      %p169 = scmp.ne.s32.totalorder %s155, %s156
      %p170 = scmp.eq.s32.totalorder %s96, 1
      %p171 = por %p169, %p170
      %p173 = scmp.ne.s32.totalorder %s156, %s172
      %p174 = scmp.eq.s32.totalorder %s96, 0
      %p175 = por %p173, %p174
      %s177 = sadd.s32 %s176, 1
      %p180 = scmp.eq.s32.totalorder %s90, 1
      %p181 = scmp.ne.s32.totalorder %s176, %s178
      %p182 = scmp.eq.s32.totalorder %s90, 0
      %p183 = por %p181, %p182
      %p184 = scmp.ne.s32.totalorder %s176, %s178
      %p185 = scmp.eq.s32.totalorder %s95, 1
      %p186 = por %p184, %p185
      %p187 = scmp.ne.s32.totalorder %s178, %s179
      %p188 = scmp.eq.s32.totalorder %s95, 0
      %p189 = por %p187, %p188
      %p190 = scmp.ne.s32.totalorder %s178, %s179
      %p191 = scmp.eq.s32.totalorder %s96, 1
      %p192 = por %p190, %p191
      %p194 = scmp.ne.s32.totalorder %s179, %s193
      %p195 = scmp.eq.s32.totalorder %s96, 0
      %p196 = por %p194, %p195
      %s198 = sadd.s32 %s197, 1
      %p201 = scmp.eq.s32.totalorder %s90, 1
      %p202 = scmp.ne.s32.totalorder %s197, %s199
      %p203 = scmp.eq.s32.totalorder %s90, 0
      %p204 = por %p202, %p203
      %p205 = scmp.ne.s32.totalorder %s197, %s199
      %p206 = scmp.eq.s32.totalorder %s95, 1
      %p207 = por %p205, %p206
      %p208 = scmp.ne.s32.totalorder %s199, %s200
      %p209 = scmp.eq.s32.totalorder %s95, 0
      %p210 = por %p208, %p209
      %p211 = scmp.ne.s32.totalorder %s199, %s200
      %p212 = scmp.eq.s32.totalorder %s96, 1
      %p213 = por %p211, %p212
      %p215 = scmp.ne.s32.totalorder %s200, %s214
      %p216 = scmp.eq.s32.totalorder %s96, 0
      %p217 = por %p215, %p216
      %s219 = sadd.s32 %s218, 1
      %p222 = scmp.eq.s32.totalorder %s90, 1
      %p223 = scmp.ne.s32.totalorder %s218, %s220
      %p224 = scmp.eq.s32.totalorder %s90, 0
      %p225 = por %p223, %p224
      %p226 = scmp.ne.s32.totalorder %s218, %s220
      %p227 = scmp.eq.s32.totalorder %s95, 1
      %p228 = por %p226, %p227
      %p229 = scmp.ne.s32.totalorder %s220, %s221
      %p230 = scmp.eq.s32.totalorder %s95, 0
      %p231 = por %p229, %p230
      %p232 = scmp.ne.s32.totalorder %s220, %s221
      %p233 = scmp.eq.s32.totalorder %s96, 1
      %p234 = por %p232, %p233
      %p236 = scmp.ne.s32.totalorder %s221, %s235
      %p237 = scmp.eq.s32.totalorder %s96, 0
      %p238 = por %p236, %p237
      %s240 = sadd.s32 %s239, 1
      %p243 = scmp.eq.s32.totalorder %s90, 1
      %p244 = scmp.ne.s32.totalorder %s239, %s241
      %p245 = scmp.eq.s32.totalorder %s90, 0
      %p246 = por %p244, %p245
      %p247 = scmp.ne.s32.totalorder %s239, %s241
      %p248 = scmp.eq.s32.totalorder %s95, 1
      %p249 = por %p247, %p248
      %p250 = scmp.ne.s32.totalorder %s241, %s242
      %p251 = scmp.eq.s32.totalorder %s95, 0
      %p252 = por %p250, %p251
      %p253 = scmp.ne.s32.totalorder %s241, %s242
      %p254 = scmp.eq.s32.totalorder %s96, 1
      %p255 = por %p253, %p254
      %p257 = scmp.ne.s32.totalorder %s242, %s256
      %p258 = scmp.eq.s32.totalorder %s96, 0
      %p259 = por %p257, %p258
      %s261 = sadd.s32 %s260, 1
      %p264 = scmp.eq.s32.totalorder %s90, 1
      %p265 = scmp.ne.s32.totalorder %s260, %s262
      %p266 = scmp.eq.s32.totalorder %s90, 0
      %p267 = por %p265, %p266
      %p268 = scmp.ne.s32.totalorder %s260, %s262
      %p269 = scmp.eq.s32.totalorder %s95, 1
      %p270 = por %p268, %p269
      %p271 = scmp.ne.s32.totalorder %s262, %s263
      %p272 = scmp.eq.s32.totalorder %s95, 0
      %p273 = por %p271, %p272
      %p274 = scmp.ne.s32.totalorder %s262, %s263
      %p275 = scmp.eq.s32.totalorder %s96, 1
      %p276 = por %p274, %p275
      %p278 = scmp.ne.s32.totalorder %s263, %s277
      %p279 = scmp.eq.s32.totalorder %s96, 0
      %p280 = por %p278, %p279
      %s282 = sadd.s32 %s281, 1
      %p285 = scmp.eq.s32.totalorder %s90, 1
      %p286 = scmp.ne.s32.totalorder %s281, %s283
      %p287 = scmp.eq.s32.totalorder %s90, 0
      %p288 = por %p286, %p287
      %p289 = scmp.ne.s32.totalorder %s281, %s283
      %p290 = scmp.eq.s32.totalorder %s95, 1
      %p291 = por %p289, %p290
      %p292 = scmp.ne.s32.totalorder %s283, %s284
      %p293 = scmp.eq.s32.totalorder %s95, 0
      %p294 = por %p292, %p293
      %p295 = scmp.ne.s32.totalorder %s283, %s284
      %p296 = scmp.eq.s32.totalorder %s96, 1
      %p297 = por %p295, %p296
      %p299 = scmp.ne.s32.totalorder %s284, %s298
      %p300 = scmp.eq.s32.totalorder %s96, 0
      %p301 = por %p299, %p300
      %s303 = sadd.s32 %s302, 1
      %p306 = scmp.eq.s32.totalorder %s90, 1
      %p307 = scmp.ne.s32.totalorder %s302, %s304
      %p308 = scmp.eq.s32.totalorder %s90, 0
      %p309 = por %p307, %p308
      %p310 = scmp.ne.s32.totalorder %s302, %s304
      %p311 = scmp.eq.s32.totalorder %s95, 1
      %p312 = por %p310, %p311
      %p313 = scmp.ne.s32.totalorder %s304, %s305
      %p314 = scmp.eq.s32.totalorder %s95, 0
      %p315 = por %p313, %p314
      %p316 = scmp.ne.s32.totalorder %s304, %s305
      %p317 = scmp.eq.s32.totalorder %s96, 1
      %p318 = por %p316, %p317
      %p320 = scmp.ne.s32.totalorder %s305, %s319
      %p321 = scmp.eq.s32.totalorder %s96, 0
      %p322 = por %p320, %p321
      %s324 = sadd.s32 %s323, 1
      %p327 = scmp.eq.s32.totalorder %s90, 1
      %p328 = scmp.ne.s32.totalorder %s323, %s325
      %p329 = scmp.eq.s32.totalorder %s90, 0
      %p330 = por %p328, %p329
      %p331 = scmp.ne.s32.totalorder %s323, %s325
      %p332 = scmp.eq.s32.totalorder %s95, 1
      %p333 = por %p331, %p332
      %p334 = scmp.ne.s32.totalorder %s325, %s326
      %p335 = scmp.eq.s32.totalorder %s95, 0
      %p336 = por %p334, %p335
      %p337 = scmp.ne.s32.totalorder %s325, %s326
      %p338 = scmp.eq.s32.totalorder %s96, 1
      %p339 = por %p337, %p338
      %p341 = scmp.ne.s32.totalorder %s326, %s340
      %p342 = scmp.eq.s32.totalorder %s96, 0
      %p343 = por %p341, %p342
      %s345 = sadd.s32 %s344, 1
      %p348 = scmp.eq.s32.totalorder %s90, 1
      %p349 = scmp.ne.s32.totalorder %s344, %s346
      %p350 = scmp.eq.s32.totalorder %s90, 0
      %p351 = por %p349, %p350
      %p352 = scmp.ne.s32.totalorder %s344, %s346
      %p353 = scmp.eq.s32.totalorder %s95, 1
      %p354 = por %p352, %p353
      %p355 = scmp.ne.s32.totalorder %s346, %s347
      %p356 = scmp.eq.s32.totalorder %s95, 0
      %p357 = por %p355, %p356
      %p358 = scmp.ne.s32.totalorder %s346, %s347
      %p359 = scmp.eq.s32.totalorder %s96, 1
      %p360 = por %p358, %p359
      %p362 = scmp.ne.s32.totalorder %s347, %s361
      %p363 = scmp.eq.s32.totalorder %s96, 0
      %p364 = por %p362, %p363
      %s366 = sadd.s32 %s365, 1
      %p369 = scmp.eq.s32.totalorder %s90, 1
      %p370 = scmp.ne.s32.totalorder %s365, %s367
      %p371 = scmp.eq.s32.totalorder %s90, 0
      %p372 = por %p370, %p371
      %p373 = scmp.ne.s32.totalorder %s365, %s367
      %p374 = scmp.eq.s32.totalorder %s95, 1
      %p375 = por %p373, %p374
      %p376 = scmp.ne.s32.totalorder %s367, %s368
      %p377 = scmp.eq.s32.totalorder %s95, 0
      %p378 = por %p376, %p377
      %p379 = scmp.ne.s32.totalorder %s367, %s368
      %p380 = scmp.eq.s32.totalorder %s96, 1
      %p381 = por %p379, %p380
      %p383 = scmp.ne.s32.totalorder %s368, %s382
      %p384 = scmp.eq.s32.totalorder %s96, 0
      %p385 = por %p383, %p384
      %s387 = sadd.s32 %s386, 1
      %p390 = scmp.eq.s32.totalorder %s90, 1
      %p391 = scmp.ne.s32.totalorder %s386, %s388
      %p392 = scmp.eq.s32.totalorder %s90, 0
      %p393 = por %p391, %p392
      %p394 = scmp.ne.s32.totalorder %s386, %s388
      %p395 = scmp.eq.s32.totalorder %s95, 1
      %p396 = por %p394, %p395
      %p397 = scmp.ne.s32.totalorder %s388, %s389
      %p398 = scmp.eq.s32.totalorder %s95, 0
      %p399 = por %p397, %p398
      %p400 = scmp.ne.s32.totalorder %s388, %s389
      %p401 = scmp.eq.s32.totalorder %s96, 1
      %p402 = por %p400, %p401
      %p404 = scmp.ne.s32.totalorder %s389, %s403
      %p405 = scmp.eq.s32.totalorder %s96, 0
      %p406 = por %p404, %p405
      %s408 = sadd.s32 %s407, 1
      %p411 = scmp.eq.s32.totalorder %s90, 1
      %p412 = scmp.ne.s32.totalorder %s407, %s409
      %p413 = scmp.eq.s32.totalorder %s90, 0
      %p414 = por %p412, %p413
      %p415 = scmp.ne.s32.totalorder %s407, %s409
      %p416 = scmp.eq.s32.totalorder %s95, 1
      %p417 = por %p415, %p416
      %p418 = scmp.ne.s32.totalorder %s409, %s410
      %p419 = scmp.eq.s32.totalorder %s95, 0
      %p420 = por %p418, %p419
      %p421 = scmp.ne.s32.totalorder %s409, %s410
      %p422 = scmp.eq.s32.totalorder %s96, 1
      %p423 = por %p421, %p422
      %p425 = scmp.ne.s32.totalorder %s410, %s424
      %p426 = scmp.eq.s32.totalorder %s96, 0
      %p427 = por %p425, %p426
      %s429 = sadd.s32 %s428, 1
      %p432 = scmp.eq.s32.totalorder %s90, 1
      %p433 = scmp.ne.s32.totalorder %s428, %s430
      %p434 = scmp.eq.s32.totalorder %s90, 0
      %p435 = por %p433, %p434
      %p436 = scmp.ne.s32.totalorder %s428, %s430
      %p437 = scmp.eq.s32.totalorder %s95, 1
      %p438 = por %p436, %p437
      %p439 = scmp.ne.s32.totalorder %s430, %s431
      %p440 = scmp.eq.s32.totalorder %s95, 0
      %p441 = por %p439, %p440
      %p442 = scmp.ne.s32.totalorder %s430, %s431
      %p443 = scmp.eq.s32.totalorder %s96, 1
      %p444 = por %p442, %p443
      %p446 = scmp.ne.s32.totalorder %s431, %s445
      %p447 = scmp.eq.s32.totalorder %s96, 0
      %p448 = por %p446, %p447
      %s450 = sadd.s32 %s449, 1
      %p453 = scmp.eq.s32.totalorder %s90, 1
      %p454 = scmp.ne.s32.totalorder %s449, %s451
      %p455 = scmp.eq.s32.totalorder %s90, 0
      %p456 = por %p454, %p455
      %p457 = scmp.ne.s32.totalorder %s449, %s451
      %p458 = scmp.eq.s32.totalorder %s95, 1
      %p459 = por %p457, %p458
      %p460 = scmp.ne.s32.totalorder %s451, %s452
      %p461 = scmp.eq.s32.totalorder %s95, 0
      %p462 = por %p460, %p461
      %p463 = scmp.ne.s32.totalorder %s451, %s452
      %p464 = scmp.eq.s32.totalorder %s96, 1
      %p465 = por %p463, %p464
      %p467 = scmp.ne.s32.totalorder %s452, %s466
      %p468 = scmp.eq.s32.totalorder %s96, 0
      %p469 = por %p467, %p468
      %s471 = sadd.s32 %s470, 1
      %p474 = scmp.eq.s32.totalorder %s90, 1
      %p475 = scmp.ne.s32.totalorder %s470, %s472
      %p476 = scmp.eq.s32.totalorder %s90, 0
      %p477 = por %p475, %p476
      %p478 = scmp.ne.s32.totalorder %s470, %s472
      %p479 = scmp.eq.s32.totalorder %s95, 1
      %p480 = por %p478, %p479
      %p481 = scmp.ne.s32.totalorder %s472, %s473
      %p482 = scmp.eq.s32.totalorder %s95, 0
      %p483 = por %p481, %p482
      %p484 = scmp.ne.s32.totalorder %s472, %s473
      %p485 = scmp.eq.s32.totalorder %s96, 1
      %p486 = por %p484, %p485
      %p488 = scmp.ne.s32.totalorder %s473, %s487
      %p489 = scmp.eq.s32.totalorder %s96, 0
      %p490 = por %p488, %p489
      %s492 = sadd.s32 %s491, 1
      %p495 = scmp.eq.s32.totalorder %s90, 1
      %p496 = scmp.ne.s32.totalorder %s491, %s493
      %p497 = scmp.eq.s32.totalorder %s90, 0
      %p498 = por %p496, %p497
      %p499 = scmp.ne.s32.totalorder %s491, %s493
      %p500 = scmp.eq.s32.totalorder %s95, 1
      %p501 = por %p499, %p500
      %p502 = scmp.ne.s32.totalorder %s493, %s494
      %p503 = scmp.eq.s32.totalorder %s95, 0
      %p504 = por %p502, %p503
      %p505 = scmp.ne.s32.totalorder %s493, %s494
      %p506 = scmp.eq.s32.totalorder %s96, 1
      %p507 = por %p505, %p506
      %p509 = scmp.ne.s32.totalorder %s494, %s508
      %p510 = scmp.eq.s32.totalorder %s96, 0
      %p511 = por %p509, %p510
      %s513 = sadd.s32 %s512, 1
      %p516 = scmp.eq.s32.totalorder %s90, 1
      %p517 = scmp.ne.s32.totalorder %s512, %s514
      %p518 = scmp.eq.s32.totalorder %s90, 0
      %p519 = por %p517, %p518
      %p520 = scmp.ne.s32.totalorder %s512, %s514
      %p521 = scmp.eq.s32.totalorder %s95, 1
      %p522 = por %p520, %p521
      %p523 = scmp.ne.s32.totalorder %s514, %s515
      %p524 = scmp.eq.s32.totalorder %s95, 0
      %p525 = por %p523, %p524
      %p526 = scmp.ne.s32.totalorder %s514, %s515
      %p527 = scmp.eq.s32.totalorder %s96, 1
      %p528 = por %p526, %p527
      %p530 = scmp.ne.s32.totalorder %s515, %s529
      %p531 = scmp.eq.s32.totalorder %s96, 0
      %p532 = por %p530, %p531
      %s534 = sadd.s32 %s533, 1
      %p537 = scmp.eq.s32.totalorder %s90, 1
      %p538 = scmp.ne.s32.totalorder %s533, %s535
      %p539 = scmp.eq.s32.totalorder %s90, 0
      %p540 = por %p538, %p539
      %p541 = scmp.ne.s32.totalorder %s533, %s535
      %p542 = scmp.eq.s32.totalorder %s95, 1
      %p543 = por %p541, %p542
      %p544 = scmp.ne.s32.totalorder %s535, %s536
      %p545 = scmp.eq.s32.totalorder %s95, 0
      %p546 = por %p544, %p545
      %p547 = scmp.ne.s32.totalorder %s535, %s536
      %p548 = scmp.eq.s32.totalorder %s96, 1
      %p549 = por %p547, %p548
      %p551 = scmp.ne.s32.totalorder %s536, %s550
      %p552 = scmp.eq.s32.totalorder %s96, 0
      %p553 = por %p551, %p552
      %s555 = sadd.s32 %s554, 1
      %p558 = scmp.eq.s32.totalorder %s90, 1
      %p559 = scmp.ne.s32.totalorder %s554, %s556
      %p560 = scmp.eq.s32.totalorder %s90, 0
      %p561 = por %p559, %p560
      %p562 = scmp.ne.s32.totalorder %s554, %s556
      %p563 = scmp.eq.s32.totalorder %s95, 1
      %p564 = por %p562, %p563
      %p565 = scmp.ne.s32.totalorder %s556, %s557
      %p566 = scmp.eq.s32.totalorder %s95, 0
      %p567 = por %p565, %p566
      %p568 = scmp.ne.s32.totalorder %s556, %s557
      %p569 = scmp.eq.s32.totalorder %s96, 1
      %p570 = por %p568, %p569
      %p572 = scmp.ne.s32.totalorder %s557, %s571
      %p573 = scmp.eq.s32.totalorder %s96, 0
      %p574 = por %p572, %p573
      %s576 = sadd.s32 %s575, 1
      %p579 = scmp.eq.s32.totalorder %s90, 1
      %p580 = scmp.ne.s32.totalorder %s575, %s577
      %p581 = scmp.eq.s32.totalorder %s90, 0
      %p582 = por %p580, %p581
      %p583 = scmp.ne.s32.totalorder %s575, %s577
      %p584 = scmp.eq.s32.totalorder %s95, 1
      %p585 = por %p583, %p584
      %p586 = scmp.ne.s32.totalorder %s577, %s578
      %p587 = scmp.eq.s32.totalorder %s95, 0
      %p588 = por %p586, %p587
      %p589 = scmp.ne.s32.totalorder %s577, %s578
      %p590 = scmp.eq.s32.totalorder %s96, 1
      %p591 = por %p589, %p590
      %p593 = scmp.ne.s32.totalorder %s578, %s592
      %p594 = scmp.eq.s32.totalorder %s96, 0
      %p595 = por %p593, %p594
      %s597 = sadd.s32 %s596, 1
      %p600 = scmp.eq.s32.totalorder %s90, 1
      %p601 = scmp.ne.s32.totalorder %s596, %s598
      %p602 = scmp.eq.s32.totalorder %s90, 0
      %p603 = por %p601, %p602
      %p604 = scmp.ne.s32.totalorder %s596, %s598
      %p605 = scmp.eq.s32.totalorder %s95, 1
      %p606 = por %p604, %p605
      %p607 = scmp.ne.s32.totalorder %s598, %s599
      %p608 = scmp.eq.s32.totalorder %s95, 0
      %p609 = por %p607, %p608
      %p610 = scmp.ne.s32.totalorder %s598, %s599
      %p611 = scmp.eq.s32.totalorder %s96, 1
      %p612 = por %p610, %p611
      %p614 = scmp.ne.s32.totalorder %s599, %s613
      %p615 = scmp.eq.s32.totalorder %s96, 0
      %p616 = por %p614, %p615
      %s618 = sadd.s32 %s617, 1
      %p621 = scmp.eq.s32.totalorder %s90, 1
      %p622 = scmp.ne.s32.totalorder %s617, %s619
      %p623 = scmp.eq.s32.totalorder %s90, 0
      %p624 = por %p622, %p623
      %p625 = scmp.ne.s32.totalorder %s617, %s619
      %p626 = scmp.eq.s32.totalorder %s95, 1
      %p627 = por %p625, %p626
      %p628 = scmp.ne.s32.totalorder %s619, %s620
      %p629 = scmp.eq.s32.totalorder %s95, 0
      %p630 = por %p628, %p629
      %p631 = scmp.ne.s32.totalorder %s619, %s620
      %p632 = scmp.eq.s32.totalorder %s96, 1
      %p633 = por %p631, %p632
      %p635 = scmp.ne.s32.totalorder %s620, %s634
      %p636 = scmp.eq.s32.totalorder %s96, 0
      %p637 = por %p635, %p636
      %s639 = sadd.s32 %s638, 1
      %p642 = scmp.eq.s32.totalorder %s90, 1
      %p643 = scmp.ne.s32.totalorder %s638, %s640
      %p644 = scmp.eq.s32.totalorder %s90, 0
      %p645 = por %p643, %p644
      %p646 = scmp.ne.s32.totalorder %s638, %s640
      %p647 = scmp.eq.s32.totalorder %s95, 1
      %p648 = por %p646, %p647
      %p649 = scmp.ne.s32.totalorder %s640, %s641
      %p650 = scmp.eq.s32.totalorder %s95, 0
      %p651 = por %p649, %p650
      %p652 = scmp.ne.s32.totalorder %s640, %s641
      %p653 = scmp.eq.s32.totalorder %s96, 1
      %p654 = por %p652, %p653
      %p656 = scmp.ne.s32.totalorder %s641, %s655
      %p657 = scmp.eq.s32.totalorder %s96, 0
      %p658 = por %p656, %p657
      %s660 = sadd.s32 %s659, 1
      %p663 = scmp.eq.s32.totalorder %s90, 1
      %p664 = scmp.ne.s32.totalorder %s659, %s661
      %p665 = scmp.eq.s32.totalorder %s90, 0
      %p666 = por %p664, %p665
      %p667 = scmp.ne.s32.totalorder %s659, %s661
      %p668 = scmp.eq.s32.totalorder %s95, 1
      %p669 = por %p667, %p668
      %p670 = scmp.ne.s32.totalorder %s661, %s662
      %p671 = scmp.eq.s32.totalorder %s95, 0
      %p672 = por %p670, %p671
      %p673 = scmp.ne.s32.totalorder %s661, %s662
      %p674 = scmp.eq.s32.totalorder %s96, 1
      %p675 = por %p673, %p674
      %p677 = scmp.ne.s32.totalorder %s662, %s676
      %p678 = scmp.eq.s32.totalorder %s96, 0
      %p679 = por %p677, %p678
      %s681 = sadd.s32 %s680, 1
      %p684 = scmp.eq.s32.totalorder %s90, 1
      %p685 = scmp.ne.s32.totalorder %s680, %s682
      %p686 = scmp.eq.s32.totalorder %s90, 0
      %p687 = por %p685, %p686
      %p688 = scmp.ne.s32.totalorder %s680, %s682
      %p689 = scmp.eq.s32.totalorder %s95, 1
      %p690 = por %p688, %p689
      %p691 = scmp.ne.s32.totalorder %s682, %s683
      %p692 = scmp.eq.s32.totalorder %s95, 0
      %p693 = por %p691, %p692
      %p694 = scmp.ne.s32.totalorder %s682, %s683
      %p695 = scmp.eq.s32.totalorder %s96, 1
      %p696 = por %p694, %p695
      %p698 = scmp.ne.s32.totalorder %s683, %s697
      %p699 = scmp.eq.s32.totalorder %s96, 0
      %p700 = por %p698, %p699
      %s702 = sadd.s32 %s701, 1
      %p705 = scmp.eq.s32.totalorder %s90, 1
      %p706 = scmp.ne.s32.totalorder %s701, %s703
      %p707 = scmp.eq.s32.totalorder %s90, 0
      %p708 = por %p706, %p707
      %p709 = scmp.ne.s32.totalorder %s701, %s703
      %p710 = scmp.eq.s32.totalorder %s95, 1
      %p711 = por %p709, %p710
      %p712 = scmp.ne.s32.totalorder %s703, %s704
      %p713 = scmp.eq.s32.totalorder %s95, 0
      %p714 = por %p712, %p713
      %p715 = scmp.ne.s32.totalorder %s703, %s704
      %p716 = scmp.eq.s32.totalorder %s96, 1
      %p717 = por %p715, %p716
      %p719 = scmp.ne.s32.totalorder %s704, %s718
      %p720 = scmp.eq.s32.totalorder %s96, 0
      %p721 = por %p719, %p720
      %s723 = sadd.s32 %s722, 1
      %p726 = scmp.eq.s32.totalorder %s90, 1
      %p727 = scmp.ne.s32.totalorder %s722, %s724
      %p728 = scmp.eq.s32.totalorder %s90, 0
      %p729 = por %p727, %p728
      %p730 = scmp.ne.s32.totalorder %s722, %s724
      %p731 = scmp.eq.s32.totalorder %s95, 1
      %p732 = por %p730, %p731
      %p733 = scmp.ne.s32.totalorder %s724, %s725
      %p734 = scmp.eq.s32.totalorder %s95, 0
      %p735 = por %p733, %p734
      %p736 = scmp.ne.s32.totalorder %s724, %s725
      %p737 = scmp.eq.s32.totalorder %s96, 1
      %p738 = por %p736, %p737
      %p740 = scmp.ne.s32.totalorder %s725, %s739
      %p741 = scmp.eq.s32.totalorder %s96, 0
      %p742 = por %p740, %p741
      %s743 = ssub.s32 %s90, %s97
      %p744 = scmp.eq.s32.totalorder %s743, 0
      %s746 = sadd.s32 %s745, 1
      %s747 = scalar_select %p744, %s745, %s746
      %p750 = pneg %p744
      %p751 = scmp.eq.s32.totalorder %s90, 1
      %p752 = por %p750, %p751
      %p753 = scmp.ne.s32.totalorder %s745, %s748
      %p754 = scmp.eq.s32.totalorder %s90, 0
      %p755 = por %p753, %p754
      %p756 = scmp.ne.s32.totalorder %s745, %s748
      %p757 = scmp.eq.s32.totalorder %s95, 1
      %p758 = por %p756, %p757
      %p759 = scmp.ne.s32.totalorder %s748, %s749
      %p760 = scmp.eq.s32.totalorder %s95, 0
      %p761 = por %p759, %p760
      %p762 = scmp.ne.s32.totalorder %s748, %s749
      %p763 = scmp.eq.s32.totalorder %s96, 1
      %p764 = por %p762, %p763
      %p766 = scmp.ne.s32.totalorder %s749, %s765
      %p767 = scmp.eq.s32.totalorder %s96, 0
      %p768 = por %p766, %p767
      %s769 = ssub.s32 %s90, %s97
      %p770 = scmp.eq.s32.totalorder %s769, 0
      %s772 = sadd.s32 %s771, 1
      %s773 = scalar_select %p770, %s771, %s772
      %p776 = pneg %p770
      %p777 = scmp.eq.s32.totalorder %s90, 1
      %p778 = por %p776, %p777
      %p779 = scmp.ne.s32.totalorder %s771, %s774
      %p780 = scmp.eq.s32.totalorder %s90, 0
      %p781 = por %p779, %p780
      %p782 = scmp.ne.s32.totalorder %s771, %s774
      %p783 = scmp.eq.s32.totalorder %s95, 1
      %p784 = por %p782, %p783
      %p785 = scmp.ne.s32.totalorder %s774, %s775
      %p786 = scmp.eq.s32.totalorder %s95, 0
      %p787 = por %p785, %p786
      %p788 = scmp.ne.s32.totalorder %s774, %s775
      %p789 = scmp.eq.s32.totalorder %s96, 1
      %p790 = por %p788, %p789
      %p792 = scmp.ne.s32.totalorder %s775, %s791
      %p793 = scmp.eq.s32.totalorder %s96, 0
      %p794 = por %p792, %p793
      %s795 = ssub.s32 %s90, %s97
      %p796 = scmp.eq.s32.totalorder %s795, 0
      %s798 = sadd.s32 %s797, 1
      %s799 = scalar_select %p796, %s797, %s798
      %p802 = pneg %p796
      %p803 = scmp.eq.s32.totalorder %s90, 1
      %p804 = por %p802, %p803
      %p805 = scmp.ne.s32.totalorder %s797, %s800
      %p806 = scmp.eq.s32.totalorder %s90, 0
      %p807 = por %p805, %p806
      %p808 = scmp.ne.s32.totalorder %s797, %s800
      %p809 = scmp.eq.s32.totalorder %s95, 1
      %p810 = por %p808, %p809
      %p811 = scmp.ne.s32.totalorder %s800, %s801
      %p812 = scmp.eq.s32.totalorder %s95, 0
      %p813 = por %p811, %p812
      %p814 = scmp.ne.s32.totalorder %s800, %s801
      %p815 = scmp.eq.s32.totalorder %s96, 1
      %p816 = por %p814, %p815
      %p818 = scmp.ne.s32.totalorder %s801, %s817
      %p819 = scmp.eq.s32.totalorder %s96, 0
      %p820 = por %p818, %p819
      %p821 = scmp.le.s32.totalorder 1, %s90
      %p822 = scmp.lt.s32.totalorder %s90, 3
      %p823 = pnand %p821, %p822
      %p824 = pneg %p823
      // Predicated region
      $region9: #{cluster_model_forward.1} parent=5 // pred_check
        _
      $region10: #{cluster_model_forward.1} parent=5 // pred_check_branch
        %826 = sbr.rel (%p823) target = $region12
      $region11: #{cluster_model_forward.1} parent=5 // pred_region
        %s827 = ssub.s32 %s90, 1
        // Predicated region
        $region13: #{cluster_model_forward.1} parent=11 // pred_check
          %p828 = pneg %p189
        $region14: #{cluster_model_forward.1} parent=11 // pred_check_branch
          %830 = sbr.rel (%p828) target = $region16
        $region15: #{cluster_model_forward.1} parent=11 // pred_region
          _
        $region16: #{cluster_model_forward.1} parent=11 // pred_fallthru
          _
        // Predicated region
        $region17: #{cluster_model_forward.1} parent=11 // pred_check
          %p831 = pneg %p210
        $region18: #{cluster_model_forward.1} parent=11 // pred_check_branch
          %833 = sbr.rel (%p831) target = $region20
        $region19: #{cluster_model_forward.1} parent=11 // pred_region
          _
        $region20: #{cluster_model_forward.1} parent=11 // pred_fallthru
          _
        // Predicated region
        $region21: #{cluster_model_forward.1} parent=11 // pred_check
          %p834 = pneg %p231
        $region22: #{cluster_model_forward.1} parent=11 // pred_check_branch
          %836 = sbr.rel (%p834) target = $region24
        $region23: #{cluster_model_forward.1} parent=11 // pred_region
          _
        $region24: #{cluster_model_forward.1} parent=11 // pred_fallthru
          _
        // Predicated region
        $region25: #{cluster_model_forward.1} parent=11 // pred_check
          %p837 = pneg %p252
        $region26: #{cluster_model_forward.1} parent=11 // pred_check_branch
          %839 = sbr.rel (%p837) target = $region28
        $region27: #{cluster_model_forward.1} parent=11 // pred_region
          _
        $region28: #{cluster_model_forward.1} parent=11 // pred_fallthru
          _
        // Predicated region
        $region29: #{cluster_model_forward.1} parent=11 // pred_check
          %p840 = pneg %p273
        $region30: #{cluster_model_forward.1} parent=11 // pred_check_branch
          %842 = sbr.rel (%p840) target = $region32
        $region31: #{cluster_model_forward.1} parent=11 // pred_region
          _
        $region32: #{cluster_model_forward.1} parent=11 // pred_fallthru
          _
        // Predicated region
        $region33: #{cluster_model_forward.1} parent=11 // pred_check
          %p843 = pneg %p294
        $region34: #{cluster_model_forward.1} parent=11 // pred_check_branch
          %845 = sbr.rel (%p843) target = $region36
        $region35: #{cluster_model_forward.1} parent=11 // pred_region
          _
        $region36: #{cluster_model_forward.1} parent=11 // pred_fallthru
          _
        // Predicated region
        $region37: #{cluster_model_forward.1} parent=11 // pred_check
          %p846 = pneg %p315
        $region38: #{cluster_model_forward.1} parent=11 // pred_check_branch
          %848 = sbr.rel (%p846) target = $region40
        $region39: #{cluster_model_forward.1} parent=11 // pred_region
          _
        $region40: #{cluster_model_forward.1} parent=11 // pred_fallthru
          _
        // Predicated region
        $region41: #{cluster_model_forward.1} parent=11 // pred_check
          %p849 = pneg %p336
        $region42: #{cluster_model_forward.1} parent=11 // pred_check_branch
          %851 = sbr.rel (%p849) target = $region44
        $region43: #{cluster_model_forward.1} parent=11 // pred_region
          _
        $region44: #{cluster_model_forward.1} parent=11 // pred_fallthru
          _
        // Predicated region
        $region45: #{cluster_model_forward.1} parent=11 // pred_check
          %p852 = pneg %p357
        $region46: #{cluster_model_forward.1} parent=11 // pred_check_branch
          %854 = sbr.rel (%p852) target = $region48
        $region47: #{cluster_model_forward.1} parent=11 // pred_region
          _
        $region48: #{cluster_model_forward.1} parent=11 // pred_fallthru
          _
        // Predicated region
        $region49: #{cluster_model_forward.1} parent=11 // pred_check
          %p855 = pneg %p378
        $region50: #{cluster_model_forward.1} parent=11 // pred_check_branch
          %857 = sbr.rel (%p855) target = $region52
        $region51: #{cluster_model_forward.1} parent=11 // pred_region
          _
        $region52: #{cluster_model_forward.1} parent=11 // pred_fallthru
          _
        // Predicated region
        $region53: #{cluster_model_forward.1} parent=11 // pred_check
          %p858 = pneg %p399
        $region54: #{cluster_model_forward.1} parent=11 // pred_check_branch
          %860 = sbr.rel (%p858) target = $region56
        $region55: #{cluster_model_forward.1} parent=11 // pred_region
          _
        $region56: #{cluster_model_forward.1} parent=11 // pred_fallthru
          _
        // Predicated region
        $region57: #{cluster_model_forward.1} parent=11 // pred_check
          %p861 = pneg %p420
        $region58: #{cluster_model_forward.1} parent=11 // pred_check_branch
          %863 = sbr.rel (%p861) target = $region60
        $region59: #{cluster_model_forward.1} parent=11 // pred_region
          _
        $region60: #{cluster_model_forward.1} parent=11 // pred_fallthru
          _
        // Predicated region
        $region61: #{cluster_model_forward.1} parent=11 // pred_check
          %p864 = pneg %p441
        $region62: #{cluster_model_forward.1} parent=11 // pred_check_branch
          %866 = sbr.rel (%p864) target = $region64
        $region63: #{cluster_model_forward.1} parent=11 // pred_region
          _
        $region64: #{cluster_model_forward.1} parent=11 // pred_fallthru
          _
        // Predicated region
        $region65: #{cluster_model_forward.1} parent=11 // pred_check
          %p867 = pneg %p462
        $region66: #{cluster_model_forward.1} parent=11 // pred_check_branch
          %869 = sbr.rel (%p867) target = $region68
        $region67: #{cluster_model_forward.1} parent=11 // pred_region
          _
        $region68: #{cluster_model_forward.1} parent=11 // pred_fallthru
          _
        // Predicated region
        $region69: #{cluster_model_forward.1} parent=11 // pred_check
          %p870 = pneg %p483
        $region70: #{cluster_model_forward.1} parent=11 // pred_check_branch
          %872 = sbr.rel (%p870) target = $region72
        $region71: #{cluster_model_forward.1} parent=11 // pred_region
          _
        $region72: #{cluster_model_forward.1} parent=11 // pred_fallthru
          _
        // Predicated region
        $region73: #{cluster_model_forward.1} parent=11 // pred_check
          %p873 = pneg %p504
        $region74: #{cluster_model_forward.1} parent=11 // pred_check_branch
          %875 = sbr.rel (%p873) target = $region76
        $region75: #{cluster_model_forward.1} parent=11 // pred_region
          _
        $region76: #{cluster_model_forward.1} parent=11 // pred_fallthru
          _
        // Predicated region
        $region77: #{cluster_model_forward.1} parent=11 // pred_check
          %p876 = pneg %p525
        $region78: #{cluster_model_forward.1} parent=11 // pred_check_branch
          %878 = sbr.rel (%p876) target = $region80
        $region79: #{cluster_model_forward.1} parent=11 // pred_region
          _
        $region80: #{cluster_model_forward.1} parent=11 // pred_fallthru
          _
        // Predicated region
        $region81: #{cluster_model_forward.1} parent=11 // pred_check
          %p879 = pneg %p546
        $region82: #{cluster_model_forward.1} parent=11 // pred_check_branch
          %881 = sbr.rel (%p879) target = $region84
        $region83: #{cluster_model_forward.1} parent=11 // pred_region
          _
        $region84: #{cluster_model_forward.1} parent=11 // pred_fallthru
          _
        // Predicated region
        $region85: #{cluster_model_forward.1} parent=11 // pred_check
          %p882 = pneg %p567
        $region86: #{cluster_model_forward.1} parent=11 // pred_check_branch
          %884 = sbr.rel (%p882) target = $region88
        $region87: #{cluster_model_forward.1} parent=11 // pred_region
          _
        $region88: #{cluster_model_forward.1} parent=11 // pred_fallthru
          _
        // Predicated region
        $region89: #{cluster_model_forward.1} parent=11 // pred_check
          %p885 = pneg %p588
        $region90: #{cluster_model_forward.1} parent=11 // pred_check_branch
          %887 = sbr.rel (%p885) target = $region92
        $region91: #{cluster_model_forward.1} parent=11 // pred_region
          _
        $region92: #{cluster_model_forward.1} parent=11 // pred_fallthru
          _
        // Predicated region
        $region93: #{cluster_model_forward.1} parent=11 // pred_check
          %p888 = pneg %p609
        $region94: #{cluster_model_forward.1} parent=11 // pred_check_branch
          %890 = sbr.rel (%p888) target = $region96
        $region95: #{cluster_model_forward.1} parent=11 // pred_region
          _
        $region96: #{cluster_model_forward.1} parent=11 // pred_fallthru
          _
        // Predicated region
        $region97: #{cluster_model_forward.1} parent=11 // pred_check
          %p891 = pneg %p630
        $region98: #{cluster_model_forward.1} parent=11 // pred_check_branch
          %893 = sbr.rel (%p891) target = $region100
        $region99: #{cluster_model_forward.1} parent=11 // pred_region
          _
        $region100: #{cluster_model_forward.1} parent=11 // pred_fallthru
          _
        // Predicated region
        $region101: #{cluster_model_forward.1} parent=11 // pred_check
          %p894 = pneg %p651
        $region102: #{cluster_model_forward.1} parent=11 // pred_check_branch
          %896 = sbr.rel (%p894) target = $region104
        $region103: #{cluster_model_forward.1} parent=11 // pred_region
          _
        $region104: #{cluster_model_forward.1} parent=11 // pred_fallthru
          _
        // Predicated region
        $region105: #{cluster_model_forward.1} parent=11 // pred_check
          %p897 = pneg %p672
        $region106: #{cluster_model_forward.1} parent=11 // pred_check_branch
          %899 = sbr.rel (%p897) target = $region108
        $region107: #{cluster_model_forward.1} parent=11 // pred_region
          _
        $region108: #{cluster_model_forward.1} parent=11 // pred_fallthru
          _
        // Predicated region
        $region109: #{cluster_model_forward.1} parent=11 // pred_check
          %p900 = pneg %p693
        $region110: #{cluster_model_forward.1} parent=11 // pred_check_branch
          %902 = sbr.rel (%p900) target = $region112
        $region111: #{cluster_model_forward.1} parent=11 // pred_region
          _
        $region112: #{cluster_model_forward.1} parent=11 // pred_fallthru
          _
        // Predicated region
        $region113: #{cluster_model_forward.1} parent=11 // pred_check
          %p903 = pneg %p714
        $region114: #{cluster_model_forward.1} parent=11 // pred_check_branch
          %905 = sbr.rel (%p903) target = $region116
        $region115: #{cluster_model_forward.1} parent=11 // pred_region
          _
        $region116: #{cluster_model_forward.1} parent=11 // pred_fallthru
          _
        // Predicated region
        $region117: #{cluster_model_forward.1} parent=11 // pred_check
          %p906 = pneg %p735
        $region118: #{cluster_model_forward.1} parent=11 // pred_check_branch
          %908 = sbr.rel (%p906) target = $region120
        $region119: #{cluster_model_forward.1} parent=11 // pred_region
          _
        $region120: #{cluster_model_forward.1} parent=11 // pred_fallthru
          _
      $region12: #{cluster_model_forward.1} parent=5 // pred_fallthru
        _
      %p909 = scmp.lt.s32.totalorder %s90, 2
      // Predicated region
      $region121: #{cluster_model_forward.1} parent=5 // pred_check
        %p910 = pneg %p909
      $region122: #{cluster_model_forward.1} parent=5 // pred_check_branch
        %912 = sbr.rel (%p910) target = $region124
      $region123: #{cluster_model_forward.1} parent=5 // pred_region
        // Predicated region
        $region125: #{cluster_model_forward.1} parent=123 // pred_check
          %p913 = pneg %p110
        $region126: #{cluster_model_forward.1} parent=123 // pred_check_branch
          %915 = sbr.rel (%p913) target = $region128
        $region127: #{cluster_model_forward.1} parent=123 // pred_region
          %s916 = sand.u32 %s100, 1
          %s917 = sand.u32 %s100, 1
          %s918 = smul.addr %s917, 64
          %s919 = scalar_lea.vmem [#allocation11], %s918
          %s920 = smul.addr %s90, 8
          %s921 = scalar_lea.vmem %s3, %s920
          // Predicated region
          $region129: #{cluster_model_forward.1} parent=127 // pred_check
            _
          $region130: #{cluster_model_forward.1} parent=127 // pred_check_branch
            %923 = sbr.rel (0) target = $region132
          $region131: #{cluster_model_forward.1} parent=127 // pred_region
            // Predicated region
            $region133: #{cluster_model_forward.1} parent=131 // pred_check
              _
            $region134: #{cluster_model_forward.1} parent=131 // pred_check_branch
              %925 = sbr.rel (0) target = $region136
            $region135: #{cluster_model_forward.1} parent=131 // pred_region
              // Predicated region
              $region148: #{cluster_model_forward.1} parent=135 // pred_check
                _
              $region149: #{cluster_model_forward.1} parent=135 // pred_check_branch
                %955 = sbr.rel (0) target = $region151
              $region150: #{cluster_model_forward.1} parent=135 // pred_region
                loop: start=0, step=1, limit=1
                $region152: #{cluster_model_forward.1} parent=150 // loop_pre_header
                  _
                $region153: #{cluster_model_forward.1} parent=150 // loop_header
                  %s957 = sphi 0, %s961
                  %p958 = scmp.ge.s32.totalorder %s957, 1
                  %s962 = sphi %s921, %s921
                  %s963 = sphi %s919, %s919
                $region154: #{cluster_model_forward.1} parent=150 // loop_header_branch
                  %960 = sbr.rel (%p958) target = $region158
                $region155: #{cluster_model_forward.1} parent=150 // loop_body
                  %v964 = vld [vmem:[%s962] sm:$0xff]
                  %965 = vst [vmem:[%s963] sm:$0xff] %v964
                  %v966 = vld [vmem:[%s962 + $0x10] sm:$0xff]
                  %967 = vst [vmem:[%s963 + $0x8] sm:$0xff] %v966
                  %v968 = vld [vmem:[%s962 + $0x20] sm:$0xff]
                  %969 = vst [vmem:[%s963 + $0x10] sm:$0xff] %v968
                  %v970 = vld [vmem:[%s962 + $0x30] sm:$0xff]
                  %971 = vst [vmem:[%s963 + $0x18] sm:$0xff] %v970
                  %v972 = vld [vmem:[%s962 + $0x40] sm:$0xff]
                  %973 = vst [vmem:[%s963 + $0x20] sm:$0xff] %v972
                  %v974 = vld [vmem:[%s962 + $0x50] sm:$0xff]
                  %975 = vst [vmem:[%s963 + $0x28] sm:$0xff] %v974
                  %v976 = vld [vmem:[%s962 + $0x60] sm:$0xff]
                  %977 = vst [vmem:[%s963 + $0x30] sm:$0xff] %v976
                  %v978 = vld [vmem:[%s962 + $0x70] sm:$0xff]
                  %979 = vst [vmem:[%s963 + $0x38] sm:$0xff] %v978
                $region156: #{cluster_model_forward.1} parent=150 // loop_footer
                  %s961 = sadd.s32 1, %s957
                $region157: #{cluster_model_forward.1} parent=150 // loop_footer_branch
                  %956 = sbr.rel target = $region153
                $region158: #{cluster_model_forward.1} parent=150 // loop_exit
                  _
              $region151: #{cluster_model_forward.1} parent=135 // pred_fallthru
                _
              // Predicated region
              $region159: #{cluster_model_forward.1} parent=135 // pred_check
                _
              $region160: #{cluster_model_forward.1} parent=135 // pred_check_branch
                %981 = sbr.rel target = $region162
              $region161: #{cluster_model_forward.1} parent=135 // pred_region
                _
              $region162: #{cluster_model_forward.1} parent=135 // pred_fallthru
                _
            $region136: #{cluster_model_forward.1} parent=131 // pred_fallthru
              _
            // Predicated region
            $region137: #{cluster_model_forward.1} parent=131 // pred_check
              _
            $region138: #{cluster_model_forward.1} parent=131 // pred_check_branch
              %927 = sbr.rel target = $region140
            $region139: #{cluster_model_forward.1} parent=131 // pred_region
              %s929 = ssub.s32 256, 1
              loop: start=0, step=1, limit=1
              $region141: #{cluster_model_forward.1} parent=139 // loop_pre_header
                _
              $region142: #{cluster_model_forward.1} parent=139 // loop_header
                %s931 = sphi 0, %s935
                %p932 = scmp.ge.s32.totalorder %s931, 1
                %s936 = sphi %s921, %s921
                %s937 = sphi %s919, %s919
              $region143: #{cluster_model_forward.1} parent=139 // loop_header_branch
                %934 = sbr.rel (%p932) target = $region147
              $region144: #{cluster_model_forward.1} parent=139 // loop_body
                %v938 = vld [vmem:[%s936] sm:%s929]
                %939 = vst [vmem:[%s937] sm:%s929] %v938
                %v940 = vld [vmem:[%s936 + $0x10] sm:%s929]
                %941 = vst [vmem:[%s937 + $0x8] sm:%s929] %v940
                %v942 = vld [vmem:[%s936 + $0x20] sm:%s929]
                %943 = vst [vmem:[%s937 + $0x10] sm:%s929] %v942
                %v944 = vld [vmem:[%s936 + $0x30] sm:%s929]
                %945 = vst [vmem:[%s937 + $0x18] sm:%s929] %v944
                %v946 = vld [vmem:[%s936 + $0x40] sm:%s929]
                %947 = vst [vmem:[%s937 + $0x20] sm:%s929] %v946
                %v948 = vld [vmem:[%s936 + $0x50] sm:%s929]
                %949 = vst [vmem:[%s937 + $0x28] sm:%s929] %v948
                %v950 = vld [vmem:[%s936 + $0x60] sm:%s929]
                %951 = vst [vmem:[%s937 + $0x30] sm:%s929] %v950
                %v952 = vld [vmem:[%s936 + $0x70] sm:%s929]
                %953 = vst [vmem:[%s937 + $0x38] sm:%s929] %v952
              $region145: #{cluster_model_forward.1} parent=139 // loop_footer
                %s935 = sadd.s32 1, %s931
              $region146: #{cluster_model_forward.1} parent=139 // loop_footer_branch
                %930 = sbr.rel target = $region142
              $region147: #{cluster_model_forward.1} parent=139 // loop_exit
                _
            $region140: #{cluster_model_forward.1} parent=131 // pred_fallthru
              _
          $region132: #{cluster_model_forward.1} parent=127 // pred_fallthru
            _
          %982 = vnop
        $region128: #{cluster_model_forward.1} parent=123 // pred_fallthru
          _
        // Predicated region
        $region163: #{cluster_model_forward.1} parent=123 // pred_check
          %p983 = pneg %p136
        $region164: #{cluster_model_forward.1} parent=123 // pred_check_branch
          %985 = sbr.rel (%p983) target = $region166
        $region165: #{cluster_model_forward.1} parent=123 // pred_region
          %s986 = sand.u32 %s126, 1
          %s987 = sand.u32 %s126, 1
          %s988 = smul.addr %s987, 64
          %s989 = scalar_lea.vmem [#allocation12], %s988
          %s990 = smul.addr %s90, 8
          %s991 = scalar_lea.vmem %s5, %s990
          // Predicated region
          $region167: #{cluster_model_forward.1} parent=165 // pred_check
            _
          $region168: #{cluster_model_forward.1} parent=165 // pred_check_branch
            %993 = sbr.rel (0) target = $region170
          $region169: #{cluster_model_forward.1} parent=165 // pred_region
            // Predicated region
            $region171: #{cluster_model_forward.1} parent=169 // pred_check
              _
            $region172: #{cluster_model_forward.1} parent=169 // pred_check_branch
              %995 = sbr.rel (0) target = $region174
            $region173: #{cluster_model_forward.1} parent=169 // pred_region
              // Predicated region
              $region186: #{cluster_model_forward.1} parent=173 // pred_check
                _
              $region187: #{cluster_model_forward.1} parent=173 // pred_check_branch
                %1025 = sbr.rel (0) target = $region189
              $region188: #{cluster_model_forward.1} parent=173 // pred_region
                loop: start=0, step=1, limit=1
                $region190: #{cluster_model_forward.1} parent=188 // loop_pre_header
                  _
                $region191: #{cluster_model_forward.1} parent=188 // loop_header
                  %s1027 = sphi 0, %s1031
                  %p1028 = scmp.ge.s32.totalorder %s1027, 1
                  %s1032 = sphi %s991, %s991
                  %s1033 = sphi %s989, %s989
                $region192: #{cluster_model_forward.1} parent=188 // loop_header_branch
                  %1030 = sbr.rel (%p1028) target = $region196
                $region193: #{cluster_model_forward.1} parent=188 // loop_body
                  %v1034 = vld [vmem:[%s1032] sm:$0xff]
                  %1035 = vst [vmem:[%s1033] sm:$0xff] %v1034
                  %v1036 = vld [vmem:[%s1032 + $0x10] sm:$0xff]
                  %1037 = vst [vmem:[%s1033 + $0x8] sm:$0xff] %v1036
                  %v1038 = vld [vmem:[%s1032 + $0x20] sm:$0xff]
                  %1039 = vst [vmem:[%s1033 + $0x10] sm:$0xff] %v1038
                  %v1040 = vld [vmem:[%s1032 + $0x30] sm:$0xff]
                  %1041 = vst [vmem:[%s1033 + $0x18] sm:$0xff] %v1040
                  %v1042 = vld [vmem:[%s1032 + $0x40] sm:$0xff]
                  %1043 = vst [vmem:[%s1033 + $0x20] sm:$0xff] %v1042
                  %v1044 = vld [vmem:[%s1032 + $0x50] sm:$0xff]
                  %1045 = vst [vmem:[%s1033 + $0x28] sm:$0xff] %v1044
                  %v1046 = vld [vmem:[%s1032 + $0x60] sm:$0xff]
                  %1047 = vst [vmem:[%s1033 + $0x30] sm:$0xff] %v1046
                  %v1048 = vld [vmem:[%s1032 + $0x70] sm:$0xff]
                  %1049 = vst [vmem:[%s1033 + $0x38] sm:$0xff] %v1048
                $region194: #{cluster_model_forward.1} parent=188 // loop_footer
                  %s1031 = sadd.s32 1, %s1027
                $region195: #{cluster_model_forward.1} parent=188 // loop_footer_branch
                  %1026 = sbr.rel target = $region191
                $region196: #{cluster_model_forward.1} parent=188 // loop_exit
                  _
              $region189: #{cluster_model_forward.1} parent=173 // pred_fallthru
                _
              // Predicated region
              $region197: #{cluster_model_forward.1} parent=173 // pred_check
                _
              $region198: #{cluster_model_forward.1} parent=173 // pred_check_branch
                %1051 = sbr.rel target = $region200
              $region199: #{cluster_model_forward.1} parent=173 // pred_region
                _
              $region200: #{cluster_model_forward.1} parent=173 // pred_fallthru
                _
            $region174: #{cluster_model_forward.1} parent=169 // pred_fallthru
              _
            // Predicated region
            $region175: #{cluster_model_forward.1} parent=169 // pred_check
              _
            $region176: #{cluster_model_forward.1} parent=169 // pred_check_branch
              %997 = sbr.rel target = $region178
            $region177: #{cluster_model_forward.1} parent=169 // pred_region
              %s999 = ssub.s32 256, 1
              loop: start=0, step=1, limit=1
              $region179: #{cluster_model_forward.1} parent=177 // loop_pre_header
                _
              $region180: #{cluster_model_forward.1} parent=177 // loop_header
                %s1001 = sphi 0, %s1005
                %p1002 = scmp.ge.s32.totalorder %s1001, 1
                %s1006 = sphi %s991, %s991
                %s1007 = sphi %s989, %s989
              $region181: #{cluster_model_forward.1} parent=177 // loop_header_branch
                %1004 = sbr.rel (%p1002) target = $region185
              $region182: #{cluster_model_forward.1} parent=177 // loop_body
                %v1008 = vld [vmem:[%s1006] sm:%s999]
                %1009 = vst [vmem:[%s1007] sm:%s999] %v1008
                %v1010 = vld [vmem:[%s1006 + $0x10] sm:%s999]
                %1011 = vst [vmem:[%s1007 + $0x8] sm:%s999] %v1010
                %v1012 = vld [vmem:[%s1006 + $0x20] sm:%s999]
                %1013 = vst [vmem:[%s1007 + $0x10] sm:%s999] %v1012
                %v1014 = vld [vmem:[%s1006 + $0x30] sm:%s999]
                %1015 = vst [vmem:[%s1007 + $0x18] sm:%s999] %v1014
                %v1016 = vld [vmem:[%s1006 + $0x40] sm:%s999]
                %1017 = vst [vmem:[%s1007 + $0x20] sm:%s999] %v1016
                %v1018 = vld [vmem:[%s1006 + $0x50] sm:%s999]
                %1019 = vst [vmem:[%s1007 + $0x28] sm:%s999] %v1018
                %v1020 = vld [vmem:[%s1006 + $0x60] sm:%s999]
                %1021 = vst [vmem:[%s1007 + $0x30] sm:%s999] %v1020
                %v1022 = vld [vmem:[%s1006 + $0x70] sm:%s999]
                %1023 = vst [vmem:[%s1007 + $0x38] sm:%s999] %v1022
              $region183: #{cluster_model_forward.1} parent=177 // loop_footer
                %s1005 = sadd.s32 1, %s1001
              $region184: #{cluster_model_forward.1} parent=177 // loop_footer_branch
                %1000 = sbr.rel target = $region180
              $region185: #{cluster_model_forward.1} parent=177 // loop_exit
                _
            $region178: #{cluster_model_forward.1} parent=169 // pred_fallthru
              _
          $region170: #{cluster_model_forward.1} parent=165 // pred_fallthru
            _
          %1052 = vnop
        $region166: #{cluster_model_forward.1} parent=123 // pred_fallthru
          _
        // Predicated region
        $region201: #{cluster_model_forward.1} parent=123 // pred_check
          %p1053 = pneg %p162
        $region202: #{cluster_model_forward.1} parent=123 // pred_check_branch
          %1055 = sbr.rel (%p1053) target = $region204
        $region203: #{cluster_model_forward.1} parent=123 // pred_region
          %s1056 = sand.u32 %s152, 1
          %s1057 = sand.u32 %s152, 1
          %s1058 = smul.addr %s1057, 64
          %s1059 = scalar_lea.vmem [#allocation13], %s1058
          %s1060 = smul.addr %s90, 8
          %s1061 = scalar_lea.vmem %s7, %s1060
          // Predicated region
          $region205: #{cluster_model_forward.1} parent=203 // pred_check
            _
          $region206: #{cluster_model_forward.1} parent=203 // pred_check_branch
            %1063 = sbr.rel (0) target = $region208
          $region207: #{cluster_model_forward.1} parent=203 // pred_region
            // Predicated region
            $region209: #{cluster_model_forward.1} parent=207 // pred_check
              _
            $region210: #{cluster_model_forward.1} parent=207 // pred_check_branch
              %1065 = sbr.rel (0) target = $region212
            $region211: #{cluster_model_forward.1} parent=207 // pred_region
              // Predicated region
              $region224: #{cluster_model_forward.1} parent=211 // pred_check
                _
              $region225: #{cluster_model_forward.1} parent=211 // pred_check_branch
                %1095 = sbr.rel (0) target = $region227
              $region226: #{cluster_model_forward.1} parent=211 // pred_region
                loop: start=0, step=1, limit=1
                $region228: #{cluster_model_forward.1} parent=226 // loop_pre_header
                  _
                $region229: #{cluster_model_forward.1} parent=226 // loop_header
                  %s1097 = sphi 0, %s1101
                  %p1098 = scmp.ge.s32.totalorder %s1097, 1
                  %s1102 = sphi %s1061, %s1061
                  %s1103 = sphi %s1059, %s1059
                $region230: #{cluster_model_forward.1} parent=226 // loop_header_branch
                  %1100 = sbr.rel (%p1098) target = $region234
                $region231: #{cluster_model_forward.1} parent=226 // loop_body
                  %v1104 = vld [vmem:[%s1102] sm:$0xff]
                  %1105 = vst [vmem:[%s1103] sm:$0xff] %v1104
                  %v1106 = vld [vmem:[%s1102 + $0x10] sm:$0xff]
                  %1107 = vst [vmem:[%s1103 + $0x8] sm:$0xff] %v1106
                  %v1108 = vld [vmem:[%s1102 + $0x20] sm:$0xff]
                  %1109 = vst [vmem:[%s1103 + $0x10] sm:$0xff] %v1108
                  %v1110 = vld [vmem:[%s1102 + $0x30] sm:$0xff]
                  %1111 = vst [vmem:[%s1103 + $0x18] sm:$0xff] %v1110
                  %v1112 = vld [vmem:[%s1102 + $0x40] sm:$0xff]
                  %1113 = vst [vmem:[%s1103 + $0x20] sm:$0xff] %v1112
                  %v1114 = vld [vmem:[%s1102 + $0x50] sm:$0xff]
                  %1115 = vst [vmem:[%s1103 + $0x28] sm:$0xff] %v1114
                  %v1116 = vld [vmem:[%s1102 + $0x60] sm:$0xff]
                  %1117 = vst [vmem:[%s1103 + $0x30] sm:$0xff] %v1116
                  %v1118 = vld [vmem:[%s1102 + $0x70] sm:$0xff]
                  %1119 = vst [vmem:[%s1103 + $0x38] sm:$0xff] %v1118
                $region232: #{cluster_model_forward.1} parent=226 // loop_footer
                  %s1101 = sadd.s32 1, %s1097
                $region233: #{cluster_model_forward.1} parent=226 // loop_footer_branch
                  %1096 = sbr.rel target = $region229
                $region234: #{cluster_model_forward.1} parent=226 // loop_exit
                  _
              $region227: #{cluster_model_forward.1} parent=211 // pred_fallthru
                _
              // Predicated region
              $region235: #{cluster_model_forward.1} parent=211 // pred_check
                _
              $region236: #{cluster_model_forward.1} parent=211 // pred_check_branch
                %1121 = sbr.rel target = $region238
              $region237: #{cluster_model_forward.1} parent=211 // pred_region
                _
              $region238: #{cluster_model_forward.1} parent=211 // pred_fallthru
                _
            $region212: #{cluster_model_forward.1} parent=207 // pred_fallthru
              _
            // Predicated region
            $region213: #{cluster_model_forward.1} parent=207 // pred_check
              _
            $region214: #{cluster_model_forward.1} parent=207 // pred_check_branch
              %1067 = sbr.rel target = $region216
            $region215: #{cluster_model_forward.1} parent=207 // pred_region
              %s1069 = ssub.s32 256, 1
              loop: start=0, step=1, limit=1
              $region217: #{cluster_model_forward.1} parent=215 // loop_pre_header
                _
              $region218: #{cluster_model_forward.1} parent=215 // loop_header
                %s1071 = sphi 0, %s1075
                %p1072 = scmp.ge.s32.totalorder %s1071, 1
                %s1076 = sphi %s1061, %s1061
                %s1077 = sphi %s1059, %s1059
              $region219: #{cluster_model_forward.1} parent=215 // loop_header_branch
                %1074 = sbr.rel (%p1072) target = $region223
              $region220: #{cluster_model_forward.1} parent=215 // loop_body
                %v1078 = vld [vmem:[%s1076] sm:%s1069]
                %1079 = vst [vmem:[%s1077] sm:%s1069] %v1078
                %v1080 = vld [vmem:[%s1076 + $0x10] sm:%s1069]
                %1081 = vst [vmem:[%s1077 + $0x8] sm:%s1069] %v1080
                %v1082 = vld [vmem:[%s1076 + $0x20] sm:%s1069]
                %1083 = vst [vmem:[%s1077 + $0x10] sm:%s1069] %v1082
                %v1084 = vld [vmem:[%s1076 + $0x30] sm:%s1069]
                %1085 = vst [vmem:[%s1077 + $0x18] sm:%s1069] %v1084
                %v1086 = vld [vmem:[%s1076 + $0x40] sm:%s1069]
                %1087 = vst [vmem:[%s1077 + $0x20] sm:%s1069] %v1086
                %v1088 = vld [vmem:[%s1076 + $0x50] sm:%s1069]
                %1089 = vst [vmem:[%s1077 + $0x28] sm:%s1069] %v1088
                %v1090 = vld [vmem:[%s1076 + $0x60] sm:%s1069]
                %1091 = vst [vmem:[%s1077 + $0x30] sm:%s1069] %v1090
                %v1092 = vld [vmem:[%s1076 + $0x70] sm:%s1069]
                %1093 = vst [vmem:[%s1077 + $0x38] sm:%s1069] %v1092
              $region221: #{cluster_model_forward.1} parent=215 // loop_footer
                %s1075 = sadd.s32 1, %s1071
              $region222: #{cluster_model_forward.1} parent=215 // loop_footer_branch
                %1070 = sbr.rel target = $region218
              $region223: #{cluster_model_forward.1} parent=215 // loop_exit
                _
            $region216: #{cluster_model_forward.1} parent=207 // pred_fallthru
              _
          $region208: #{cluster_model_forward.1} parent=203 // pred_fallthru
            _
          %1122 = vnop
        $region204: #{cluster_model_forward.1} parent=123 // pred_fallthru
          _
      $region124: #{cluster_model_forward.1} parent=5 // pred_fallthru
        _
      %p1123 = scmp.le.s32.totalorder 1, %s90
      %p1124 = scmp.lt.s32.totalorder %s90, 3
      %p1125 = pnand %p1123, %p1124
      %p1126 = pneg %p1125
      // Predicated region
      $region239: #{cluster_model_forward.1} parent=5 // pred_check
        _
      $region240: #{cluster_model_forward.1} parent=5 // pred_check_branch
        %1128 = sbr.rel (%p1125) target = $region242
      $region241: #{cluster_model_forward.1} parent=5 // pred_region
        %s1129 = ssub.s32 %s90, 1
        %s1130 = sand.u32 %s103, 1
        %s1131 = sand.u32 %s103, 1
        %s1132 = smul.addr %s1131, 64
        %s1133 = scalar_lea.vmem [#allocation11], %s1132
        // Predicated region
        $region243: #{cluster_model_forward.1} parent=241 // pred_check
          %p1134 = pneg %p116
        $region244: #{cluster_model_forward.1} parent=241 // pred_check_branch
          %1136 = sbr.rel (%p1134) target = $region246
        $region245: #{cluster_model_forward.1} parent=241 // pred_region
          _
        $region246: #{cluster_model_forward.1} parent=241 // pred_fallthru
          _
        %s1137 = sand.u32 %s129, 1
        %s1138 = sand.u32 %s129, 1
        %s1139 = smul.addr %s1138, 64
        %s1140 = scalar_lea.vmem [#allocation12], %s1139
        // Predicated region
        $region247: #{cluster_model_forward.1} parent=241 // pred_check
          %p1141 = pneg %p142
        $region248: #{cluster_model_forward.1} parent=241 // pred_check_branch
          %1143 = sbr.rel (%p1141) target = $region250
        $region249: #{cluster_model_forward.1} parent=241 // pred_region
          _
        $region250: #{cluster_model_forward.1} parent=241 // pred_fallthru
          _
        %s1144 = sand.u32 %s155, 1
        %s1145 = sand.u32 %s155, 1
        %s1146 = smul.addr %s1145, 64
        %s1147 = scalar_lea.vmem [#allocation13], %s1146
        // Predicated region
        $region251: #{cluster_model_forward.1} parent=241 // pred_check
          %p1148 = pneg %p168
        $region252: #{cluster_model_forward.1} parent=241 // pred_check_branch
          %1150 = sbr.rel (%p1148) target = $region254
        $region253: #{cluster_model_forward.1} parent=241 // pred_region
          _
        $region254: #{cluster_model_forward.1} parent=241 // pred_fallthru
          _
        %s1151 = sand.u32 %s103, 1
        %s1152 = sand.u32 %s103, 1
        %s1153 = smul.addr %s1152, 64
        %s1154 = scalar_lea.vmem [#allocation11], %s1153
        %p1155 = pneg %p116
        %p1156 = pneg %p113
        %s1157 = sand.u32 %s129, 1
        %s1158 = sand.u32 %s129, 1
        %s1159 = smul.addr %s1158, 64
        %s1160 = scalar_lea.vmem [#allocation12], %s1159
        %p1161 = pneg %p142
        %p1162 = pneg %p139
        %s1163 = sand.u32 %s155, 1
        %s1164 = sand.u32 %s155, 1
        %s1165 = smul.addr %s1164, 64
        %s1166 = scalar_lea.vmem [#allocation13], %s1165
        %p1167 = pneg %p168
        %p1168 = pneg %p165
        %p1169 = pneg %p189
        %p1170 = pneg %p186
        %p1171 = pneg %p210
        %p1172 = pneg %p207
        %p1173 = pneg %p231
        %p1174 = pneg %p228
        %p1175 = pneg %p252
        %p1176 = pneg %p249
        %p1177 = pneg %p273
        %p1178 = pneg %p270
        %p1179 = pneg %p294
        %p1180 = pneg %p291
        %p1181 = pneg %p315
        %p1182 = pneg %p312
        %p1183 = pneg %p336
        %p1184 = pneg %p333
        %p1185 = pneg %p357
        %p1186 = pneg %p354
        %p1187 = pneg %p378
        %p1188 = pneg %p375
        %p1189 = pneg %p399
        %p1190 = pneg %p396
        %p1191 = pneg %p420
        %p1192 = pneg %p417
        %p1193 = pneg %p441
        %p1194 = pneg %p438
        %p1195 = pneg %p462
        %p1196 = pneg %p459
        %p1197 = pneg %p483
        %p1198 = pneg %p480
        %p1199 = pneg %p504
        %p1200 = pneg %p501
        %p1201 = pneg %p525
        %p1202 = pneg %p522
        %p1203 = pneg %p546
        %p1204 = pneg %p543
        %p1205 = pneg %p567
        %p1206 = pneg %p564
        %p1207 = pneg %p588
        %p1208 = pneg %p585
        %p1209 = pneg %p609
        %p1210 = pneg %p606
        %p1211 = pneg %p630
        %p1212 = pneg %p627
        %p1213 = pneg %p651
        %p1214 = pneg %p648
        %p1215 = pneg %p672
        %p1216 = pneg %p669
        %p1217 = pneg %p693
        %p1218 = pneg %p690
        %p1219 = pneg %p714
        %p1220 = pneg %p711
        %p1221 = pneg %p735
        %p1222 = pneg %p732
        %p1223 = pneg %p761
        %p1224 = pneg %p758
        %s1225 = sand.u32 %s748, 1
        %s1226 = sand.u32 %s748, 1
        %s1227 = smul.addr %s1226, 64
        %s1228 = scalar_lea.vmem [#allocation14], %s1227
        %p1229 = pneg %p787
        %p1230 = pneg %p784
        %s1231 = sand.u32 %s774, 1
        %s1232 = scalar_lea.sflag [#allocation16], %s1231
        %s1233 = sand.u32 %s774, 1
        %s1234 = smul.addr %s1233, 8
        %s1235 = scalar_lea.vmem [#allocation15], %s1234
        %p1236 = pneg %p813
        %p1237 = pneg %p810
        %s1238 = sand.u32 %s800, 1
        %s1239 = scalar_lea.sflag [#allocation18], %s1238
        %s1240 = sand.u32 %s800, 1
        %s1241 = smul.addr %s1240, 8
        %s1242 = scalar_lea.vmem [#allocation17], %s1241
        %v1244 = vld [vmem:[%s1133] sm:$0xff]
        %v1245 = vld [vmem:[%s1133 + $0x8] sm:$0xff]
        %v1246 = vld [vmem:[%s1133 + $0x10] sm:$0xff]
        %v1247 = vld [vmem:[%s1133 + $0x18] sm:$0xff]
        %v1248 = vld [vmem:[%s1133 + $0x20] sm:$0xff]
        %v1249 = vld [vmem:[%s1133 + $0x28] sm:$0xff]
        %v1250 = vld [vmem:[%s1133 + $0x30] sm:$0xff]
        %v1251 = vld [vmem:[%s1133 + $0x38] sm:$0xff]
        %v1252 = vpack.c.bf16 %v1245, %v1244
        %v1253 = vpack.c.bf16 %v1247, %v1246
        %v1254 = vpack.c.bf16 %v1249, %v1248
        %v1255 = vpack.c.bf16 %v1251, %v1250
        %v1256 = vld [vmem:[%s1140] sm:$0xff]
        %v1257 = vld [vmem:[%s1140 + $0x8] sm:$0xff]
        %v1258 = vld [vmem:[%s1140 + $0x10] sm:$0xff]
        %v1259 = vld [vmem:[%s1140 + $0x18] sm:$0xff]
        %v1260 = vld [vmem:[%s1140 + $0x20] sm:$0xff]
        %v1261 = vld [vmem:[%s1140 + $0x28] sm:$0xff]
        %v1262 = vld [vmem:[%s1140 + $0x30] sm:$0xff]
        %v1263 = vld [vmem:[%s1140 + $0x38] sm:$0xff]
        %v1264 = vpack.c.bf16 %v1257, %v1256
        %v1265 = vpack.c.bf16 %v1259, %v1258
        %v1266 = vpack.c.bf16 %v1261, %v1260
        %v1267 = vpack.c.bf16 %v1263, %v1262
        %v1268 = vld [vmem:[%s9] sm:$0x3]
        %v1269 = vld [vmem:[%s11] sm:$0x1]
        %vm1270 = vcmask 15360
        %v1272 = vsel %vm1270, %v1264, 0
        %v1275 = vsel %vm1270, %v1265, 0
        %v1278 = vsel %vm1270, %v1266, 0
        %v1281 = vsel %vm1270, %v1267, 0
        %vm1283 = vcmask 1040384
        %v1285 = vsel %vm1283, %v1269, 0
        %1287 = vmatpush.bf16.msra.mxu0 0
        %1288 = vmatpush.bf16.msra.mxu0 0
        %1289 = vmatpush.bf16.msra.mxu0 0
        %1290 = vmatpush.bf16.msra.mxu0 0
        %1291 = vmatpush.bf16.msra.mxu0 0
        %1292 = vmatpush.bf16.msra.mxu0 0
        %1293 = vmatpush.bf16.msra.mxu0 0
        %1294 = vmatpush.bf16.msra.mxu0 %v1285
        %1295 = vmatmul.bf16.gmra.mxu0 %v1272
        %v1296 = vpop.f32.mrf.mxu0
        %v1297 = vadd.f32 0.0, %v1296
        %v1298 = vpop.f32.mrf.mxu0
        %v1299 = vadd.f32 0.0, %v1298
        %1300 = vmatmul.bf16.gmra.mxu0 %v1275
        %v1301 = vpop.f32.mrf.mxu0
        %v1302 = vadd.f32 0.0, %v1301
        %v1303 = vpop.f32.mrf.mxu0
        %v1304 = vadd.f32 0.0, %v1303
        %1305 = vmatmul.bf16.gmra.mxu0 %v1278
        %v1306 = vpop.f32.mrf.mxu0
        %v1307 = vadd.f32 0.0, %v1306
        %v1308 = vpop.f32.mrf.mxu0
        %v1309 = vadd.f32 0.0, %v1308
        %1310 = vmatmul.bf16.gmra.mxu0 %v1281
        %v1311 = vpop.f32.mrf.mxu0
        %v1312 = vadd.f32 0.0, %v1311
        %v1313 = vpop.f32.mrf.mxu0
        %v1314 = vadd.f32 0.0, %v1313
        %1315 = vdwg.mxu0
        %vm1316 = vcmask 31744
        %v1318 = vsel %vm1316, %v1252, 0
        %v1321 = vsel %vm1316, %v1253, 0
        %v1324 = vsel %vm1316, %v1254, 0
        %v1327 = vsel %vm1316, %v1255, 0
        %vm1329 = vcmask 1041408
        %v1331 = vsel %vm1329, %v1268, 0
        %1333 = vmatpush.bf16.msra.mxu0 0
        %1334 = vmatpush.bf16.msra.mxu0 0
        %1335 = vmatpush.bf16.msra.mxu0 0
        %1336 = vmatpush.bf16.msra.mxu0 0
        %1337 = vmatpush.bf16.msra.mxu0 0
        %1338 = vmatpush.bf16.msra.mxu0 0
        %1339 = vmatpush.bf16.msra.mxu0 0
        %1340 = vmatpush.bf16.msra.mxu0 %v1331
        %1341 = vmatmul.bf16.gmra.mxu0 %v1318
        %v1342 = vpop.f32.mrf.mxu0
        %v1343 = vadd.f32 %v1297, %v1342
        %v1344 = vpop.f32.mrf.mxu0
        %v1345 = vadd.f32 %v1299, %v1344
        %1346 = vmatmul.bf16.gmra.mxu0 %v1321
        %v1347 = vpop.f32.mrf.mxu0
        %v1348 = vadd.f32 %v1302, %v1347
        %v1349 = vpop.f32.mrf.mxu0
        %v1350 = vadd.f32 %v1304, %v1349
        %1351 = vmatmul.bf16.gmra.mxu0 %v1324
        %v1352 = vpop.f32.mrf.mxu0
        %v1353 = vadd.f32 %v1307, %v1352
        %v1354 = vpop.f32.mrf.mxu0
        %v1355 = vadd.f32 %v1309, %v1354
        %1356 = vmatmul.bf16.gmra.mxu0 %v1327
        %v1357 = vpop.f32.mrf.mxu0
        %v1358 = vadd.f32 %v1312, %v1357
        %v1359 = vpop.f32.mrf.mxu0
        %v1360 = vadd.f32 %v1314, %v1359
        %1361 = vdwg.mxu0
        %v1362 = vld [vmem:[%s13] sm:$0x1]
        %v1364 = vperm.slane %v1362, 0
        %v1366 = vadd.f32 %v1343, %v1364
        %v1367 = vadd.f32 %v1345, %v1364
        %v1368 = vadd.f32 %v1348, %v1364
        %v1369 = vadd.f32 %v1350, %v1364
        %v1370 = vadd.f32 %v1353, %v1364
        %v1371 = vadd.f32 %v1355, %v1364
        %v1372 = vadd.f32 %v1358, %v1364
        %v1373 = vadd.f32 %v1360, %v1364
        %v1374 = vmax.f32 %v1366, 0.0
        %v1375 = vmax.f32 %v1367, 0.0
        %v1376 = vmax.f32 %v1368, 0.0
        %v1377 = vmax.f32 %v1369, 0.0
        %v1378 = vmax.f32 %v1370, 0.0
        %v1379 = vmax.f32 %v1371, 0.0
        %v1380 = vmax.f32 %v1372, 0.0
        %v1381 = vmax.f32 %v1373, 0.0
        %v1382 = vpack.c.bf16 %v1375, %v1374
        %v1383 = vpack.c.bf16 %v1377, %v1376
        %v1384 = vpack.c.bf16 %v1379, %v1378
        %v1385 = vpack.c.bf16 %v1381, %v1380
        %v1386 = vld [vmem:[%s15] sm:$0xf]
        %v1387 = vld [vmem:[%s15 + $0x4] sm:$0xf]
        %v1388 = vld [vmem:[%s15 + $0x8] sm:$0xf]
        %v1389 = vld [vmem:[%s15 + $0xc] sm:$0xf]
        %v1390 = vld [vmem:[%s17] sm:$0x1]
        %v1392 = vperm.slane %v1390, 0
        %v1398 = vunpack.c.l.b16 %v1386
        %v1399 = vunpack.c.l.b16 %v1387
        %v1400 = vunpack.c.l.b16 %v1388
        %v1401 = vunpack.c.l.b16 %v1389
        %v1402 = vpack.c.b16 %v1399, %v1398
        %v1403 = vpack.c.b16 %v1401, %v1400
        %vm1406 = vcmask 261120
        %v1408 = vsel %vm1406, %v1382, 0
        %v1411 = vsel %vm1406, %v1383, 0
        %v1414 = vsel %vm1406, %v1384, 0
        %v1417 = vsel %vm1406, %v1385, 0
        %1419 = vmatpush.bf16.msra.mxu0 0
        %1420 = vmatpush.bf16.msra.mxu0 0
        %1421 = vmatpush.bf16.msra.mxu0 0
        %1422 = vmatpush.bf16.msra.mxu0 0
        %1423 = vmatpush.bf16.msra.mxu0 0
        %1424 = vmatpush.bf16.msra.mxu0 0
        %1425 = vmatpush.bf16.msra.mxu0 %v1403
        %1426 = vmatpush.bf16.msra.mxu0 %v1402
        %1427 = vmatmul.bf16.gmra.mxu0 %v1408
        %v1428 = vpop.f32.mrf.mxu0
        %v1429 = vadd.f32 %v1392, %v1428
        %v1430 = vpop.f32.mrf.mxu0
        %v1431 = vadd.f32 %v1392, %v1430
        %1432 = vmatmul.bf16.gmra.mxu0 %v1411
        %v1433 = vpop.f32.mrf.mxu0
        %v1434 = vadd.f32 %v1392, %v1433
        %v1435 = vpop.f32.mrf.mxu0
        %v1436 = vadd.f32 %v1392, %v1435
        %1437 = vmatmul.bf16.gmra.mxu0 %v1414
        %v1438 = vpop.f32.mrf.mxu0
        %v1439 = vadd.f32 %v1392, %v1438
        %v1440 = vpop.f32.mrf.mxu0
        %v1441 = vadd.f32 %v1392, %v1440
        %1442 = vmatmul.bf16.gmra.mxu0 %v1417
        %v1443 = vpop.f32.mrf.mxu0
        %v1444 = vadd.f32 %v1392, %v1443
        %v1445 = vpop.f32.mrf.mxu0
        %v1446 = vadd.f32 %v1392, %v1445
        %1447 = vdwg.mxu0
        %v1448 = vpack.c.bf16 %v1429, %v1429
        %v1449 = vpack.c.bf16 %v1431, %v1431
        %v1450 = vpack.c.bf16 %v1434, %v1434
        %v1451 = vpack.c.bf16 %v1436, %v1436
        %v1452 = vpack.c.bf16 %v1439, %v1439
        %v1453 = vpack.c.bf16 %v1441, %v1441
        %v1454 = vpack.c.bf16 %v1444, %v1444
        %v1455 = vpack.c.bf16 %v1446, %v1446
        %vm1456 = vcmask 257024
        %1457 = vst.msk [vmem:[#allocation2] sm:$0xf] %vm1456, %v1448
        %1458 = vst.msk [vmem:[#allocation2 + $0x4] sm:$0xf] %vm1456, %v1449
        %1459 = vst.msk [vmem:[#allocation2 + $0x8] sm:$0xf] %vm1456, %v1450
        %1460 = vst.msk [vmem:[#allocation2 + $0xc] sm:$0xf] %vm1456, %v1451
        %1461 = vst.msk [vmem:[#allocation2 + $0x10] sm:$0xf] %vm1456, %v1452
        %1462 = vst.msk [vmem:[#allocation2 + $0x14] sm:$0xf] %vm1456, %v1453
        %1463 = vst.msk [vmem:[#allocation2 + $0x18] sm:$0xf] %vm1456, %v1454
        %1464 = vst.msk [vmem:[#allocation2 + $0x1c] sm:$0xf] %vm1456, %v1455
        %v1465 = vld [vmem:[%s19] sm:$0xf]
        %v1466 = vld [vmem:[%s19 + $0x4] sm:$0xf]
        %v1467 = vld [vmem:[%s19 + $0x8] sm:$0xf]
        %v1468 = vld [vmem:[%s19 + $0xc] sm:$0xf]
        %v1469 = vld [vmem:[%s21] sm:$0xf]
        %v1470 = vld [vmem:[%s21 + $0x4] sm:$0xf]
        %v1471 = vld [vmem:[%s21 + $0x8] sm:$0xf]
        %v1472 = vld [vmem:[%s21 + $0xc] sm:$0xf]
        %v1473 = vld [vmem:[%s23] sm:$0x1]
        %v1475 = vperm.slane %v1473, 0
        %1477 = vst.msk [vmem:[#allocation4] sm:$0xff] %vm1406, 0.0
        %1478 = vst.msk [vmem:[#allocation5] sm:$0xff] %vm1406, 0.0
        %s1479 = scalar_lea.vmem [#allocation2], 28
        %v1480 = vld [vmem:[%s1479] sm:$0xf]
        %v1481 = vld [vmem:[#allocation4] sm:$0xff]
        %v1482 = vld [vmem:[#allocation5] sm:$0xff]
        %v1483 = vpack.c.bf16 %v1481, %v1481
        %v1488 = vunpack.c.l.b16 %v1469
        %v1489 = vunpack.c.l.b16 %v1470
        %v1490 = vunpack.c.l.b16 %v1471
        %v1491 = vunpack.c.l.b16 %v1472
        %v1492 = vpack.c.b16 %v1489, %v1488
        %v1493 = vpack.c.b16 %v1491, %v1490
        %v1497 = vsel %vm1406, %v1483, 0
        %1499 = vmatpush.bf16.msra.mxu0 0
        %1500 = vmatpush.bf16.msra.mxu0 0
        %1501 = vmatpush.bf16.msra.mxu0 0
        %1502 = vmatpush.bf16.msra.mxu0 0
        %1503 = vmatpush.bf16.msra.mxu0 0
        %1504 = vmatpush.bf16.msra.mxu0 0
        %1505 = vmatpush.bf16.msra.mxu0 %v1493
        %1506 = vmatpush.bf16.msra.mxu0 %v1492
        %1507 = vmatmul.bf16.gmra.mxu0 %v1497
        %v1508 = vpop.f32.mrf.mxu0
        %v1509 = vadd.f32 0.0, %v1508
        %v1510 = vpop.f32.mrf.mxu0
        %1511 = vdwg.mxu0
        %v1516 = vunpack.c.l.b16 %v1465
        %v1517 = vunpack.c.l.b16 %v1466
        %v1518 = vunpack.c.l.b16 %v1467
        %v1519 = vunpack.c.l.b16 %v1468
        %v1520 = vpack.c.b16 %v1517, %v1516
        %v1521 = vpack.c.b16 %v1519, %v1518
        %v1525 = vsel %vm1406, %v1480, 0
        %1527 = vmatpush.bf16.msra.mxu0 0
        %1528 = vmatpush.bf16.msra.mxu0 0
        %1529 = vmatpush.bf16.msra.mxu0 0
        %1530 = vmatpush.bf16.msra.mxu0 0
        %1531 = vmatpush.bf16.msra.mxu0 0
        %1532 = vmatpush.bf16.msra.mxu0 0
        %1533 = vmatpush.bf16.msra.mxu0 %v1521
        %1534 = vmatpush.bf16.msra.mxu0 %v1520
        %1535 = vmatmul.bf16.gmra.mxu0 %v1525
        %v1536 = vpop.f32.mrf.mxu0
        %v1537 = vadd.f32 %v1509, %v1536
        %v1538 = vpop.f32.mrf.mxu0
        %1539 = vdwg.mxu0
        %v1540 = vadd.f32 %v1537, %v1475
        %v1541 = vmul.f32 %v1540, 0.5
        %v1542 = vtanh.pop %v1541
        %v1543 = vadd.f32 %v1542, 1.0
        %v1544 = vmul.f32 %v1543, 0.5
        %v1545 = vtanh.pop %v1540
        %1547 = vrot.lane.b32.xlu0 %v1482, 32
        %v1548 = vpop.permute.xlu0 %1547
        %v1550 = vmul.f32 %v1544, %v1548
        %1552 = vrot.lane.b32.xlu0 %v1545, 64
        %v1553 = vpop.permute.xlu0 %1552
        %v1555 = vmul.f32 %v1544, %v1553
        %1557 = vrot.lane.b32.xlu0 %v1555, 32
        %v1558 = vpop.permute.xlu0 %1557
        %v1560 = vadd.f32 %v1550, %v1558
        %v1561 = vtanh.pop %v1560
        %1563 = vrot.lane.b32.xlu0 %v1561, 64
        %v1564 = vpop.permute.xlu0 %1563
        %v1566 = vmul.f32 %v1544, %v1564
        %1568 = vrot.lane.b32.xlu0 %v1566, 32
        %v1569 = vpop.permute.xlu0 %1568
        %1571 = vst.msk [vmem:[#allocation4] sm:$0xff] %vm1406, %v1569
        %1573 = vrot.lane.b32.xlu0 %v1560, 96
        %v1574 = vpop.permute.xlu0 %1573
        %1576 = vst.msk [vmem:[#allocation5] sm:$0xff] %vm1406, %v1574
        %v1577 = vpack.c.bf16 %v1566, %v1566
        %1579 = vrot.lane.b32.xlu0 %v1577, 32
        %v1580 = vpop.permute.xlu0 %1579
        %s1582 = scalar_lea.vmem [#allocation3], 28
        %1583 = vst.msk [vmem:[%s1582] sm:$0xf] %vm1456, %v1580
        %s1584 = scalar_lea.vmem [#allocation2], 24
        %v1585 = vld [vmem:[%s1584] sm:$0xf]
        %v1586 = vld [vmem:[#allocation4] sm:$0xff]
        %v1587 = vld [vmem:[#allocation5] sm:$0xff]
        %v1588 = vpack.c.bf16 %v1586, %v1586
        %v1590 = vsel %vm1406, %v1588, 0
        %1592 = vmatpush.bf16.msra.mxu0 0
        %1593 = vmatpush.bf16.msra.mxu0 0
        %1594 = vmatpush.bf16.msra.mxu0 0
        %1595 = vmatpush.bf16.msra.mxu0 0
        %1596 = vmatpush.bf16.msra.mxu0 0
        %1597 = vmatpush.bf16.msra.mxu0 0
        %1598 = vmatpush.bf16.msra.mxu0 %v1493
        %1599 = vmatpush.bf16.msra.mxu0 %v1492
        %1600 = vmatmul.bf16.gmra.mxu0 %v1590
        %v1601 = vpop.f32.mrf.mxu0
        %v1602 = vadd.f32 0.0, %v1601
        %v1603 = vpop.f32.mrf.mxu0
        %1604 = vdwg.mxu0
        %v1606 = vsel %vm1406, %v1585, 0
        %1608 = vmatpush.bf16.msra.mxu0 0
        %1609 = vmatpush.bf16.msra.mxu0 0
        %1610 = vmatpush.bf16.msra.mxu0 0
        %1611 = vmatpush.bf16.msra.mxu0 0
        %1612 = vmatpush.bf16.msra.mxu0 0
        %1613 = vmatpush.bf16.msra.mxu0 0
        %1614 = vmatpush.bf16.msra.mxu0 %v1521
        %1615 = vmatpush.bf16.msra.mxu0 %v1520
        %1616 = vmatmul.bf16.gmra.mxu0 %v1606
        %v1617 = vpop.f32.mrf.mxu0
        %v1618 = vadd.f32 %v1602, %v1617
        %v1619 = vpop.f32.mrf.mxu0
        %1620 = vdwg.mxu0
        %v1621 = vadd.f32 %v1618, %v1475
        %v1622 = vmul.f32 %v1621, 0.5
        %v1623 = vtanh.pop %v1622
        %v1624 = vadd.f32 %v1623, 1.0
        %v1625 = vmul.f32 %v1624, 0.5
        %v1626 = vtanh.pop %v1621
        %1628 = vrot.lane.b32.xlu0 %v1587, 32
        %v1629 = vpop.permute.xlu0 %1628
        %v1631 = vmul.f32 %v1625, %v1629
        %1633 = vrot.lane.b32.xlu0 %v1626, 64
        %v1634 = vpop.permute.xlu0 %1633
        %v1636 = vmul.f32 %v1625, %v1634
        %1638 = vrot.lane.b32.xlu0 %v1636, 32
        %v1639 = vpop.permute.xlu0 %1638
        %v1641 = vadd.f32 %v1631, %v1639
        %v1642 = vtanh.pop %v1641
        %1644 = vrot.lane.b32.xlu0 %v1642, 64
        %v1645 = vpop.permute.xlu0 %1644
        %v1647 = vmul.f32 %v1625, %v1645
        %1649 = vrot.lane.b32.xlu0 %v1647, 32
        %v1650 = vpop.permute.xlu0 %1649
        %1652 = vst.msk [vmem:[#allocation4] sm:$0xff] %vm1406, %v1650
        %1654 = vrot.lane.b32.xlu0 %v1641, 96
        %v1655 = vpop.permute.xlu0 %1654
        %1657 = vst.msk [vmem:[#allocation5] sm:$0xff] %vm1406, %v1655
        %v1658 = vpack.c.bf16 %v1647, %v1647
        %1660 = vrot.lane.b32.xlu0 %v1658, 32
        %v1661 = vpop.permute.xlu0 %1660
        %s1663 = scalar_lea.vmem [#allocation3], 24
        %1664 = vst.msk [vmem:[%s1663] sm:$0xf] %vm1456, %v1661
        %s1665 = scalar_lea.vmem [#allocation2], 20
        %v1666 = vld [vmem:[%s1665] sm:$0xf]
        %v1667 = vld [vmem:[#allocation4] sm:$0xff]
        %v1668 = vld [vmem:[#allocation5] sm:$0xff]
        %v1669 = vpack.c.bf16 %v1667, %v1667
        %v1671 = vsel %vm1406, %v1669, 0
        %1673 = vmatpush.bf16.msra.mxu0 0
        %1674 = vmatpush.bf16.msra.mxu0 0
        %1675 = vmatpush.bf16.msra.mxu0 0
        %1676 = vmatpush.bf16.msra.mxu0 0
        %1677 = vmatpush.bf16.msra.mxu0 0
        %1678 = vmatpush.bf16.msra.mxu0 0
        %1679 = vmatpush.bf16.msra.mxu0 %v1493
        %1680 = vmatpush.bf16.msra.mxu0 %v1492
        %1681 = vmatmul.bf16.gmra.mxu0 %v1671
        %v1682 = vpop.f32.mrf.mxu0
        %v1683 = vadd.f32 0.0, %v1682
        %v1684 = vpop.f32.mrf.mxu0
        %1685 = vdwg.mxu0
        %v1687 = vsel %vm1406, %v1666, 0
        %1689 = vmatpush.bf16.msra.mxu0 0
        %1690 = vmatpush.bf16.msra.mxu0 0
        %1691 = vmatpush.bf16.msra.mxu0 0
        %1692 = vmatpush.bf16.msra.mxu0 0
        %1693 = vmatpush.bf16.msra.mxu0 0
        %1694 = vmatpush.bf16.msra.mxu0 0
        %1695 = vmatpush.bf16.msra.mxu0 %v1521
        %1696 = vmatpush.bf16.msra.mxu0 %v1520
        %1697 = vmatmul.bf16.gmra.mxu0 %v1687
        %v1698 = vpop.f32.mrf.mxu0
        %v1699 = vadd.f32 %v1683, %v1698
        %v1700 = vpop.f32.mrf.mxu0
        %1701 = vdwg.mxu0
        %v1702 = vadd.f32 %v1699, %v1475
        %v1703 = vmul.f32 %v1702, 0.5
        %v1704 = vtanh.pop %v1703
        %v1705 = vadd.f32 %v1704, 1.0
        %v1706 = vmul.f32 %v1705, 0.5
        %v1707 = vtanh.pop %v1702
        %1709 = vrot.lane.b32.xlu0 %v1668, 32
        %v1710 = vpop.permute.xlu0 %1709
        %v1712 = vmul.f32 %v1706, %v1710
        %1714 = vrot.lane.b32.xlu0 %v1707, 64
        %v1715 = vpop.permute.xlu0 %1714
        %v1717 = vmul.f32 %v1706, %v1715
        %1719 = vrot.lane.b32.xlu0 %v1717, 32
        %v1720 = vpop.permute.xlu0 %1719
        %v1722 = vadd.f32 %v1712, %v1720
        %v1723 = vtanh.pop %v1722
        %1725 = vrot.lane.b32.xlu0 %v1723, 64
        %v1726 = vpop.permute.xlu0 %1725
        %v1728 = vmul.f32 %v1706, %v1726
        %1730 = vrot.lane.b32.xlu0 %v1728, 32
        %v1731 = vpop.permute.xlu0 %1730
        %1733 = vst.msk [vmem:[#allocation4] sm:$0xff] %vm1406, %v1731
        %1735 = vrot.lane.b32.xlu0 %v1722, 96
        %v1736 = vpop.permute.xlu0 %1735
        %1738 = vst.msk [vmem:[#allocation5] sm:$0xff] %vm1406, %v1736
        %v1739 = vpack.c.bf16 %v1728, %v1728
        %1741 = vrot.lane.b32.xlu0 %v1739, 32
        %v1742 = vpop.permute.xlu0 %1741
        %s1744 = scalar_lea.vmem [#allocation3], 20
        %1745 = vst.msk [vmem:[%s1744] sm:$0xf] %vm1456, %v1742
        %s1746 = scalar_lea.vmem [#allocation2], 16
        %v1747 = vld [vmem:[%s1746] sm:$0xf]
        %v1748 = vld [vmem:[#allocation4] sm:$0xff]
        %v1749 = vld [vmem:[#allocation5] sm:$0xff]
        %v1750 = vpack.c.bf16 %v1748, %v1748
        %v1752 = vsel %vm1406, %v1750, 0
        %1754 = vmatpush.bf16.msra.mxu0 0
        %1755 = vmatpush.bf16.msra.mxu0 0
        %1756 = vmatpush.bf16.msra.mxu0 0
        %1757 = vmatpush.bf16.msra.mxu0 0
        %1758 = vmatpush.bf16.msra.mxu0 0
        %1759 = vmatpush.bf16.msra.mxu0 0
        %1760 = vmatpush.bf16.msra.mxu0 %v1493
        %1761 = vmatpush.bf16.msra.mxu0 %v1492
        %1762 = vmatmul.bf16.gmra.mxu0 %v1752
        %v1763 = vpop.f32.mrf.mxu0
        %v1764 = vadd.f32 0.0, %v1763
        %v1765 = vpop.f32.mrf.mxu0
        %1766 = vdwg.mxu0
        %v1768 = vsel %vm1406, %v1747, 0
        %1770 = vmatpush.bf16.msra.mxu0 0
        %1771 = vmatpush.bf16.msra.mxu0 0
        %1772 = vmatpush.bf16.msra.mxu0 0
        %1773 = vmatpush.bf16.msra.mxu0 0
        %1774 = vmatpush.bf16.msra.mxu0 0
        %1775 = vmatpush.bf16.msra.mxu0 0
        %1776 = vmatpush.bf16.msra.mxu0 %v1521
        %1777 = vmatpush.bf16.msra.mxu0 %v1520
        %1778 = vmatmul.bf16.gmra.mxu0 %v1768
        %v1779 = vpop.f32.mrf.mxu0
        %v1780 = vadd.f32 %v1764, %v1779
        %v1781 = vpop.f32.mrf.mxu0
        %1782 = vdwg.mxu0
        %v1783 = vadd.f32 %v1780, %v1475
        %v1784 = vmul.f32 %v1783, 0.5
        %v1785 = vtanh.pop %v1784
        %v1786 = vadd.f32 %v1785, 1.0
        %v1787 = vmul.f32 %v1786, 0.5
        %v1788 = vtanh.pop %v1783
        %1790 = vrot.lane.b32.xlu0 %v1749, 32
        %v1791 = vpop.permute.xlu0 %1790
        %v1793 = vmul.f32 %v1787, %v1791
        %1795 = vrot.lane.b32.xlu0 %v1788, 64
        %v1796 = vpop.permute.xlu0 %1795
        %v1798 = vmul.f32 %v1787, %v1796
        %1800 = vrot.lane.b32.xlu0 %v1798, 32
        %v1801 = vpop.permute.xlu0 %1800
        %v1803 = vadd.f32 %v1793, %v1801
        %v1804 = vtanh.pop %v1803
        %1806 = vrot.lane.b32.xlu0 %v1804, 64
        %v1807 = vpop.permute.xlu0 %1806
        %v1809 = vmul.f32 %v1787, %v1807
        %1811 = vrot.lane.b32.xlu0 %v1809, 32
        %v1812 = vpop.permute.xlu0 %1811
        %1814 = vst.msk [vmem:[#allocation4] sm:$0xff] %vm1406, %v1812
        %1816 = vrot.lane.b32.xlu0 %v1803, 96
        %v1817 = vpop.permute.xlu0 %1816
        %1819 = vst.msk [vmem:[#allocation5] sm:$0xff] %vm1406, %v1817
        %v1820 = vpack.c.bf16 %v1809, %v1809
        %1822 = vrot.lane.b32.xlu0 %v1820, 32
        %v1823 = vpop.permute.xlu0 %1822
        %s1825 = scalar_lea.vmem [#allocation3], 16
        %1826 = vst.msk [vmem:[%s1825] sm:$0xf] %vm1456, %v1823
        %s1827 = scalar_lea.vmem [#allocation2], 12
        %v1828 = vld [vmem:[%s1827] sm:$0xf]
        %v1829 = vld [vmem:[#allocation4] sm:$0xff]
        %v1830 = vld [vmem:[#allocation5] sm:$0xff]
        %v1831 = vpack.c.bf16 %v1829, %v1829
        %v1833 = vsel %vm1406, %v1831, 0
        %1835 = vmatpush.bf16.msra.mxu0 0
        %1836 = vmatpush.bf16.msra.mxu0 0
        %1837 = vmatpush.bf16.msra.mxu0 0
        %1838 = vmatpush.bf16.msra.mxu0 0
        %1839 = vmatpush.bf16.msra.mxu0 0
        %1840 = vmatpush.bf16.msra.mxu0 0
        %1841 = vmatpush.bf16.msra.mxu0 %v1493
        %1842 = vmatpush.bf16.msra.mxu0 %v1492
        %1843 = vmatmul.bf16.gmra.mxu0 %v1833
        %v1844 = vpop.f32.mrf.mxu0
        %v1845 = vadd.f32 0.0, %v1844
        %v1846 = vpop.f32.mrf.mxu0
        %1847 = vdwg.mxu0
        %v1849 = vsel %vm1406, %v1828, 0
        %1851 = vmatpush.bf16.msra.mxu0 0
        %1852 = vmatpush.bf16.msra.mxu0 0
        %1853 = vmatpush.bf16.msra.mxu0 0
        %1854 = vmatpush.bf16.msra.mxu0 0
        %1855 = vmatpush.bf16.msra.mxu0 0
        %1856 = vmatpush.bf16.msra.mxu0 0
        %1857 = vmatpush.bf16.msra.mxu0 %v1521
        %1858 = vmatpush.bf16.msra.mxu0 %v1520
        %1859 = vmatmul.bf16.gmra.mxu0 %v1849
        %v1860 = vpop.f32.mrf.mxu0
        %v1861 = vadd.f32 %v1845, %v1860
        %v1862 = vpop.f32.mrf.mxu0
        %1863 = vdwg.mxu0
        %v1864 = vadd.f32 %v1861, %v1475
        %v1865 = vmul.f32 %v1864, 0.5
        %v1866 = vtanh.pop %v1865
        %v1867 = vadd.f32 %v1866, 1.0
        %v1868 = vmul.f32 %v1867, 0.5
        %v1869 = vtanh.pop %v1864
        %1871 = vrot.lane.b32.xlu0 %v1830, 32
        %v1872 = vpop.permute.xlu0 %1871
        %v1874 = vmul.f32 %v1868, %v1872
        %1876 = vrot.lane.b32.xlu0 %v1869, 64
        %v1877 = vpop.permute.xlu0 %1876
        %v1879 = vmul.f32 %v1868, %v1877
        %1881 = vrot.lane.b32.xlu0 %v1879, 32
        %v1882 = vpop.permute.xlu0 %1881
        %v1884 = vadd.f32 %v1874, %v1882
        %v1885 = vtanh.pop %v1884
        %1887 = vrot.lane.b32.xlu0 %v1885, 64
        %v1888 = vpop.permute.xlu0 %1887
        %v1890 = vmul.f32 %v1868, %v1888
        %1892 = vrot.lane.b32.xlu0 %v1890, 32
        %v1893 = vpop.permute.xlu0 %1892
        %1895 = vst.msk [vmem:[#allocation4] sm:$0xff] %vm1406, %v1893
        %1897 = vrot.lane.b32.xlu0 %v1884, 96
        %v1898 = vpop.permute.xlu0 %1897
        %1900 = vst.msk [vmem:[#allocation5] sm:$0xff] %vm1406, %v1898
        %v1901 = vpack.c.bf16 %v1890, %v1890
        %1903 = vrot.lane.b32.xlu0 %v1901, 32
        %v1904 = vpop.permute.xlu0 %1903
        %s1906 = scalar_lea.vmem [#allocation3], 12
        %1907 = vst.msk [vmem:[%s1906] sm:$0xf] %vm1456, %v1904
        %s1908 = scalar_lea.vmem [#allocation2], 8
        %v1909 = vld [vmem:[%s1908] sm:$0xf]
        %v1910 = vld [vmem:[#allocation4] sm:$0xff]
        %v1911 = vld [vmem:[#allocation5] sm:$0xff]
        %v1912 = vpack.c.bf16 %v1910, %v1910
        %v1914 = vsel %vm1406, %v1912, 0
        %1916 = vmatpush.bf16.msra.mxu0 0
        %1917 = vmatpush.bf16.msra.mxu0 0
        %1918 = vmatpush.bf16.msra.mxu0 0
        %1919 = vmatpush.bf16.msra.mxu0 0
        %1920 = vmatpush.bf16.msra.mxu0 0
        %1921 = vmatpush.bf16.msra.mxu0 0
        %1922 = vmatpush.bf16.msra.mxu0 %v1493
        %1923 = vmatpush.bf16.msra.mxu0 %v1492
        %1924 = vmatmul.bf16.gmra.mxu0 %v1914
        %v1925 = vpop.f32.mrf.mxu0
        %v1926 = vadd.f32 0.0, %v1925
        %v1927 = vpop.f32.mrf.mxu0
        %1928 = vdwg.mxu0
        %v1930 = vsel %vm1406, %v1909, 0
        %1932 = vmatpush.bf16.msra.mxu0 0
        %1933 = vmatpush.bf16.msra.mxu0 0
        %1934 = vmatpush.bf16.msra.mxu0 0
        %1935 = vmatpush.bf16.msra.mxu0 0
        %1936 = vmatpush.bf16.msra.mxu0 0
        %1937 = vmatpush.bf16.msra.mxu0 0
        %1938 = vmatpush.bf16.msra.mxu0 %v1521
        %1939 = vmatpush.bf16.msra.mxu0 %v1520
        %1940 = vmatmul.bf16.gmra.mxu0 %v1930
        %v1941 = vpop.f32.mrf.mxu0
        %v1942 = vadd.f32 %v1926, %v1941
        %v1943 = vpop.f32.mrf.mxu0
        %1944 = vdwg.mxu0
        %v1945 = vadd.f32 %v1942, %v1475
        %v1946 = vmul.f32 %v1945, 0.5
        %v1947 = vtanh.pop %v1946
        %v1948 = vadd.f32 %v1947, 1.0
        %v1949 = vmul.f32 %v1948, 0.5
        %v1950 = vtanh.pop %v1945
        %1952 = vrot.lane.b32.xlu0 %v1911, 32
        %v1953 = vpop.permute.xlu0 %1952
        %v1955 = vmul.f32 %v1949, %v1953
        %1957 = vrot.lane.b32.xlu0 %v1950, 64
        %v1958 = vpop.permute.xlu0 %1957
        %v1960 = vmul.f32 %v1949, %v1958
        %1962 = vrot.lane.b32.xlu0 %v1960, 32
        %v1963 = vpop.permute.xlu0 %1962
        %v1965 = vadd.f32 %v1955, %v1963
        %v1966 = vtanh.pop %v1965
        %1968 = vrot.lane.b32.xlu0 %v1966, 64
        %v1969 = vpop.permute.xlu0 %1968
        %v1971 = vmul.f32 %v1949, %v1969
        %1973 = vrot.lane.b32.xlu0 %v1971, 32
        %v1974 = vpop.permute.xlu0 %1973
        %1976 = vst.msk [vmem:[#allocation4] sm:$0xff] %vm1406, %v1974
        %1978 = vrot.lane.b32.xlu0 %v1965, 96
        %v1979 = vpop.permute.xlu0 %1978
        %1981 = vst.msk [vmem:[#allocation5] sm:$0xff] %vm1406, %v1979
        %v1982 = vpack.c.bf16 %v1971, %v1971
        %1984 = vrot.lane.b32.xlu0 %v1982, 32
        %v1985 = vpop.permute.xlu0 %1984
        %s1987 = scalar_lea.vmem [#allocation3], 8
        %1988 = vst.msk [vmem:[%s1987] sm:$0xf] %vm1456, %v1985
        %s1989 = scalar_lea.vmem [#allocation2], 4
        %v1990 = vld [vmem:[%s1989] sm:$0xf]
        %v1991 = vld [vmem:[#allocation4] sm:$0xff]
        %v1992 = vld [vmem:[#allocation5] sm:$0xff]
        %v1993 = vpack.c.bf16 %v1991, %v1991
        %v1995 = vsel %vm1406, %v1993, 0
        %1997 = vmatpush.bf16.msra.mxu0 0
        %1998 = vmatpush.bf16.msra.mxu0 0
        %1999 = vmatpush.bf16.msra.mxu0 0
        %2000 = vmatpush.bf16.msra.mxu0 0
        %2001 = vmatpush.bf16.msra.mxu0 0
        %2002 = vmatpush.bf16.msra.mxu0 0
        %2003 = vmatpush.bf16.msra.mxu0 %v1493
        %2004 = vmatpush.bf16.msra.mxu0 %v1492
        %2005 = vmatmul.bf16.gmra.mxu0 %v1995
        %v2006 = vpop.f32.mrf.mxu0
        %v2007 = vadd.f32 0.0, %v2006
        %v2008 = vpop.f32.mrf.mxu0
        %2009 = vdwg.mxu0
        %v2011 = vsel %vm1406, %v1990, 0
        %2013 = vmatpush.bf16.msra.mxu0 0
        %2014 = vmatpush.bf16.msra.mxu0 0
        %2015 = vmatpush.bf16.msra.mxu0 0
        %2016 = vmatpush.bf16.msra.mxu0 0
        %2017 = vmatpush.bf16.msra.mxu0 0
        %2018 = vmatpush.bf16.msra.mxu0 0
        %2019 = vmatpush.bf16.msra.mxu0 %v1521
        %2020 = vmatpush.bf16.msra.mxu0 %v1520
        %2021 = vmatmul.bf16.gmra.mxu0 %v2011
        %v2022 = vpop.f32.mrf.mxu0
        %v2023 = vadd.f32 %v2007, %v2022
        %v2024 = vpop.f32.mrf.mxu0
        %2025 = vdwg.mxu0
        %v2026 = vadd.f32 %v2023, %v1475
        %v2027 = vmul.f32 %v2026, 0.5
        %v2028 = vtanh.pop %v2027
        %v2029 = vadd.f32 %v2028, 1.0
        %v2030 = vmul.f32 %v2029, 0.5
        %v2031 = vtanh.pop %v2026
        %2033 = vrot.lane.b32.xlu0 %v1992, 32
        %v2034 = vpop.permute.xlu0 %2033
        %v2036 = vmul.f32 %v2030, %v2034
        %2038 = vrot.lane.b32.xlu0 %v2031, 64
        %v2039 = vpop.permute.xlu0 %2038
        %v2041 = vmul.f32 %v2030, %v2039
        %2043 = vrot.lane.b32.xlu0 %v2041, 32
        %v2044 = vpop.permute.xlu0 %2043
        %v2046 = vadd.f32 %v2036, %v2044
        %v2047 = vtanh.pop %v2046
        %2049 = vrot.lane.b32.xlu0 %v2047, 64
        %v2050 = vpop.permute.xlu0 %2049
        %v2052 = vmul.f32 %v2030, %v2050
        %2054 = vrot.lane.b32.xlu0 %v2052, 32
        %v2055 = vpop.permute.xlu0 %2054
        %2057 = vst.msk [vmem:[#allocation4] sm:$0xff] %vm1406, %v2055
        %2059 = vrot.lane.b32.xlu0 %v2046, 96
        %v2060 = vpop.permute.xlu0 %2059
        %2062 = vst.msk [vmem:[#allocation5] sm:$0xff] %vm1406, %v2060
        %v2063 = vpack.c.bf16 %v2052, %v2052
        %2065 = vrot.lane.b32.xlu0 %v2063, 32
        %v2066 = vpop.permute.xlu0 %2065
        %s2068 = scalar_lea.vmem [#allocation3], 4
        %2069 = vst.msk [vmem:[%s2068] sm:$0xf] %vm1456, %v2066
        %v2070 = vld [vmem:[#allocation2] sm:$0xf]
        %v2071 = vld [vmem:[#allocation4] sm:$0xff]
        %v2072 = vld [vmem:[#allocation5] sm:$0xff]
        %v2073 = vpack.c.bf16 %v2071, %v2071
        %v2075 = vsel %vm1406, %v2073, 0
        %2077 = vmatpush.bf16.msra.mxu0 0
        %2078 = vmatpush.bf16.msra.mxu0 0
        %2079 = vmatpush.bf16.msra.mxu0 0
        %2080 = vmatpush.bf16.msra.mxu0 0
        %2081 = vmatpush.bf16.msra.mxu0 0
        %2082 = vmatpush.bf16.msra.mxu0 0
        %2083 = vmatpush.bf16.msra.mxu0 %v1493
        %2084 = vmatpush.bf16.msra.mxu0 %v1492
        %2085 = vmatmul.bf16.gmra.mxu0 %v2075
        %v2086 = vpop.f32.mrf.mxu0
        %v2087 = vadd.f32 0.0, %v2086
        %v2088 = vpop.f32.mrf.mxu0
        %2089 = vdwg.mxu0
        %v2091 = vsel %vm1406, %v2070, 0
        %2093 = vmatpush.bf16.msra.mxu0 0
        %2094 = vmatpush.bf16.msra.mxu0 0
        %2095 = vmatpush.bf16.msra.mxu0 0
        %2096 = vmatpush.bf16.msra.mxu0 0
        %2097 = vmatpush.bf16.msra.mxu0 0
        %2098 = vmatpush.bf16.msra.mxu0 0
        %2099 = vmatpush.bf16.msra.mxu0 %v1521
        %2100 = vmatpush.bf16.msra.mxu0 %v1520
        %2101 = vmatmul.bf16.gmra.mxu0 %v2091
        %v2102 = vpop.f32.mrf.mxu0
        %v2103 = vadd.f32 %v2087, %v2102
        %v2104 = vpop.f32.mrf.mxu0
        %2105 = vdwg.mxu0
        %v2106 = vadd.f32 %v2103, %v1475
        %v2107 = vmul.f32 %v2106, 0.5
        %v2108 = vtanh.pop %v2107
        %v2109 = vadd.f32 %v2108, 1.0
        %v2110 = vmul.f32 %v2109, 0.5
        %v2111 = vtanh.pop %v2106
        %2113 = vrot.lane.b32.xlu0 %v2072, 32
        %v2114 = vpop.permute.xlu0 %2113
        %v2116 = vmul.f32 %v2110, %v2114
        %2118 = vrot.lane.b32.xlu0 %v2111, 64
        %v2119 = vpop.permute.xlu0 %2118
        %v2121 = vmul.f32 %v2110, %v2119
        %2123 = vrot.lane.b32.xlu0 %v2121, 32
        %v2124 = vpop.permute.xlu0 %2123
        %v2126 = vadd.f32 %v2116, %v2124
        %v2127 = vtanh.pop %v2126
        %2129 = vrot.lane.b32.xlu0 %v2127, 64
        %v2130 = vpop.permute.xlu0 %2129
        %v2132 = vmul.f32 %v2110, %v2130
        %2134 = vrot.lane.b32.xlu0 %v2132, 32
        %v2135 = vpop.permute.xlu0 %2134
        %2137 = vst.msk [vmem:[#allocation4] sm:$0xff] %vm1406, %v2135
        %2139 = vrot.lane.b32.xlu0 %v2126, 96
        %v2140 = vpop.permute.xlu0 %2139
        %2142 = vst.msk [vmem:[#allocation5] sm:$0xff] %vm1406, %v2140
        %v2143 = vpack.c.bf16 %v2132, %v2132
        %2145 = vrot.lane.b32.xlu0 %v2143, 32
        %v2146 = vpop.permute.xlu0 %2145
        %2148 = vst.msk [vmem:[#allocation3] sm:$0xf] %vm1456, %v2146
        %v2149 = vld [vmem:[#allocation4] sm:$0xff]
        %2150 = vst.msk [vmem:[%s1235] sm:$0xff] %vm1406, %v2149
        %v2151 = vld [vmem:[#allocation5] sm:$0xff]
        %2152 = vst.msk [vmem:[%s1242] sm:$0xff] %vm1406, %v2151
        %v2153 = vld [vmem:[#allocation3] sm:$0xf]
        %v2154 = vld [vmem:[#allocation3 + $0x4] sm:$0xf]
        %v2155 = vld [vmem:[#allocation3 + $0x8] sm:$0xf]
        %v2156 = vld [vmem:[#allocation3 + $0xc] sm:$0xf]
        %v2157 = vld [vmem:[#allocation3 + $0x10] sm:$0xf]
        %v2158 = vld [vmem:[#allocation3 + $0x14] sm:$0xf]
        %v2159 = vld [vmem:[#allocation3 + $0x18] sm:$0xf]
        %v2160 = vld [vmem:[#allocation3 + $0x1c] sm:$0xf]
        %v2161 = vld [vmem:[%s25] sm:$0xf]
        %v2162 = vld [vmem:[%s25 + $0x4] sm:$0xf]
        %v2163 = vld [vmem:[%s25 + $0x8] sm:$0xf]
        %v2164 = vld [vmem:[%s25 + $0xc] sm:$0xf]
        %v2165 = vld [vmem:[%s27] sm:$0x1]
        %v2167 = vperm.slane %v2165, 0
        %v2177 = vunpack.c.l.b16 %v2153
        %v2178 = vunpack.c.l.b16 %v2154
        %v2179 = vunpack.c.l.b16 %v2155
        %v2180 = vunpack.c.l.b16 %v2156
        %v2181 = vunpack.c.l.b16 %v2157
        %v2182 = vunpack.c.l.b16 %v2158
        %v2183 = vunpack.c.l.b16 %v2159
        %v2184 = vunpack.c.l.b16 %v2160
        %v2185 = vpack.c.b16 %v2178, %v2177
        %v2186 = vpack.c.b16 %v2180, %v2179
        %v2187 = vpack.c.b16 %v2182, %v2181
        %v2188 = vpack.c.b16 %v2184, %v2183
        %v2193 = vunpack.c.l.b16 %v2161
        %v2194 = vunpack.c.l.b16 %v2162
        %v2195 = vunpack.c.l.b16 %v2163
        %v2196 = vunpack.c.l.b16 %v2164
        %v2197 = vpack.c.b16 %v2194, %v2193
        %v2198 = vpack.c.b16 %v2196, %v2195
        %v2202 = vsel %vm1406, %v2185, 0
        %v2205 = vsel %vm1406, %v2186, 0
        %v2208 = vsel %vm1406, %v2187, 0
        %v2211 = vsel %vm1406, %v2188, 0
        %2213 = vmatpush.bf16.msra.mxu0 0
        %2214 = vmatpush.bf16.msra.mxu0 0
        %2215 = vmatpush.bf16.msra.mxu0 0
        %2216 = vmatpush.bf16.msra.mxu0 0
        %2217 = vmatpush.bf16.msra.mxu0 0
        %2218 = vmatpush.bf16.msra.mxu0 0
        %2219 = vmatpush.bf16.msra.mxu0 %v2198
        %2220 = vmatpush.bf16.msra.mxu0 %v2197
        %2221 = vmatmul.bf16.gmra.mxu0 %v2202
        %v2222 = vpop.f32.mrf.mxu0
        %v2223 = vadd.f32 %v2167, %v2222
        %v2224 = vpop.f32.mrf.mxu0
        %v2225 = vadd.f32 %v2167, %v2224
        %2226 = vmatmul.bf16.gmra.mxu0 %v2205
        %v2227 = vpop.f32.mrf.mxu0
        %v2228 = vadd.f32 %v2167, %v2227
        %v2229 = vpop.f32.mrf.mxu0
        %v2230 = vadd.f32 %v2167, %v2229
        %2231 = vmatmul.bf16.gmra.mxu0 %v2208
        %v2232 = vpop.f32.mrf.mxu0
        %v2233 = vadd.f32 %v2167, %v2232
        %v2234 = vpop.f32.mrf.mxu0
        %v2235 = vadd.f32 %v2167, %v2234
        %2236 = vmatmul.bf16.gmra.mxu0 %v2211
        %v2237 = vpop.f32.mrf.mxu0
        %v2238 = vadd.f32 %v2167, %v2237
        %v2239 = vpop.f32.mrf.mxu0
        %v2240 = vadd.f32 %v2167, %v2239
        %2241 = vdwg.mxu0
        %v2242 = vmax.f32 %v2223, 0.0
        %v2243 = vmax.f32 %v2225, 0.0
        %v2244 = vmax.f32 %v2228, 0.0
        %v2245 = vmax.f32 %v2230, 0.0
        %v2246 = vmax.f32 %v2233, 0.0
        %v2247 = vmax.f32 %v2235, 0.0
        %v2248 = vmax.f32 %v2238, 0.0
        %v2249 = vmax.f32 %v2240, 0.0
        %v2250 = vpack.c.bf16 %v2243, %v2242
        %v2251 = vpack.c.bf16 %v2245, %v2244
        %v2252 = vpack.c.bf16 %v2247, %v2246
        %v2253 = vpack.c.bf16 %v2249, %v2248
        %v2254 = vld [vmem:[%s29] sm:$0xf]
        %v2255 = vld [vmem:[%s29 + $0x4] sm:$0xf]
        %v2256 = vld [vmem:[%s29 + $0x8] sm:$0xf]
        %v2257 = vld [vmem:[%s29 + $0xc] sm:$0xf]
        %v2258 = vld [vmem:[%s31] sm:$0x1]
        %v2260 = vperm.slane %v2258, 0
        %v2266 = vunpack.c.l.b16 %v2254
        %v2267 = vunpack.c.l.b16 %v2255
        %v2268 = vunpack.c.l.b16 %v2256
        %v2269 = vunpack.c.l.b16 %v2257
        %v2270 = vpack.c.b16 %v2267, %v2266
        %v2271 = vpack.c.b16 %v2269, %v2268
        %v2275 = vsel %vm1406, %v2250, 0
        %v2278 = vsel %vm1406, %v2251, 0
        %v2281 = vsel %vm1406, %v2252, 0
        %v2284 = vsel %vm1406, %v2253, 0
        %2286 = vmatpush.bf16.msra.mxu0 0
        %2287 = vmatpush.bf16.msra.mxu0 0
        %2288 = vmatpush.bf16.msra.mxu0 0
        %2289 = vmatpush.bf16.msra.mxu0 0
        %2290 = vmatpush.bf16.msra.mxu0 0
        %2291 = vmatpush.bf16.msra.mxu0 0
        %2292 = vmatpush.bf16.msra.mxu0 %v2271
        %2293 = vmatpush.bf16.msra.mxu0 %v2270
        %2294 = vmatmul.bf16.gmra.mxu0 %v2275
        %v2295 = vpop.f32.mrf.mxu0
        %v2296 = vadd.f32 %v2260, %v2295
        %v2297 = vpop.f32.mrf.mxu0
        %v2298 = vadd.f32 %v2260, %v2297
        %2299 = vmatmul.bf16.gmra.mxu0 %v2278
        %v2300 = vpop.f32.mrf.mxu0
        %v2301 = vadd.f32 %v2260, %v2300
        %v2302 = vpop.f32.mrf.mxu0
        %v2303 = vadd.f32 %v2260, %v2302
        %2304 = vmatmul.bf16.gmra.mxu0 %v2281
        %v2305 = vpop.f32.mrf.mxu0
        %v2306 = vadd.f32 %v2260, %v2305
        %v2307 = vpop.f32.mrf.mxu0
        %v2308 = vadd.f32 %v2260, %v2307
        %2309 = vmatmul.bf16.gmra.mxu0 %v2284
        %v2310 = vpop.f32.mrf.mxu0
        %v2311 = vadd.f32 %v2260, %v2310
        %v2312 = vpop.f32.mrf.mxu0
        %v2313 = vadd.f32 %v2260, %v2312
        %2314 = vdwg.mxu0
        %v2315 = vsel %vm1316, %v1244, 0.0
        %2316 = vadd.xlane.f32.xlu0 %v2315
        %v2317 = vpop.xlane.xlu0 %2316
        %v2318 = vsel %vm1316, %v1245, 0.0
        %2319 = vadd.xlane.f32.xlu0 %v2318
        %v2320 = vpop.xlane.xlu0 %2319
        %v2321 = vsel %vm1316, %v1246, 0.0
        %2322 = vadd.xlane.f32.xlu0 %v2321
        %v2323 = vpop.xlane.xlu0 %2322
        %v2324 = vsel %vm1316, %v1247, 0.0
        %2325 = vadd.xlane.f32.xlu0 %v2324
        %v2326 = vpop.xlane.xlu0 %2325
        %v2327 = vsel %vm1316, %v1248, 0.0
        %2328 = vadd.xlane.f32.xlu0 %v2327
        %v2329 = vpop.xlane.xlu0 %2328
        %v2330 = vsel %vm1316, %v1249, 0.0
        %2331 = vadd.xlane.f32.xlu0 %v2330
        %v2332 = vpop.xlane.xlu0 %2331
        %v2333 = vsel %vm1316, %v1250, 0.0
        %2334 = vadd.xlane.f32.xlu0 %v2333
        %v2335 = vpop.xlane.xlu0 %2334
        %v2336 = vsel %vm1316, %v1251, 0.0
        %2337 = vadd.xlane.f32.xlu0 %v2336
        %v2338 = vpop.xlane.xlu0 %2337
        %vm2339 = vcmp.ne.f32.partialorder %v2317, 0.0
        %vm2340 = vcmp.ne.f32.partialorder %v2320, 0.0
        %vm2341 = vcmp.ne.f32.partialorder %v2323, 0.0
        %vm2342 = vcmp.ne.f32.partialorder %v2326, 0.0
        %vm2343 = vcmp.ne.f32.partialorder %v2329, 0.0
        %vm2344 = vcmp.ne.f32.partialorder %v2332, 0.0
        %vm2345 = vcmp.ne.f32.partialorder %v2335, 0.0
        %vm2346 = vcmp.ne.f32.partialorder %v2338, 0.0
        %v2347 = vsel %vm2339, 1, 0
        %v2348 = vsel %vm2340, 1, 0
        %v2349 = vsel %vm2341, 1, 0
        %v2350 = vsel %vm2342, 1, 0
        %v2351 = vsel %vm2343, 1, 0
        %v2352 = vsel %vm2344, 1, 0
        %v2353 = vsel %vm2345, 1, 0
        %v2354 = vsel %vm2346, 1, 0
        %v2355 = vcvt.s32.f32 %v2347
        %v2356 = vcvt.s32.f32 %v2348
        %v2357 = vcvt.s32.f32 %v2349
        %v2358 = vcvt.s32.f32 %v2350
        %v2359 = vcvt.s32.f32 %v2351
        %v2360 = vcvt.s32.f32 %v2352
        %v2361 = vcvt.s32.f32 %v2353
        %v2362 = vcvt.s32.f32 %v2354
        %v2363 = vmul.f32 %v2296, %v2355
        %v2364 = vmul.f32 %v2298, %v2356
        %v2365 = vmul.f32 %v2301, %v2357
        %v2366 = vmul.f32 %v2303, %v2358
        %v2367 = vmul.f32 %v2306, %v2359
        %v2368 = vmul.f32 %v2308, %v2360
        %v2369 = vmul.f32 %v2311, %v2361
        %v2370 = vmul.f32 %v2313, %v2362
        %v2371 = vld [vmem:[%s1147] sm:$0xff]
        %v2372 = vld [vmem:[%s1147 + $0x8] sm:$0xff]
        %v2373 = vld [vmem:[%s1147 + $0x10] sm:$0xff]
        %v2374 = vld [vmem:[%s1147 + $0x18] sm:$0xff]
        %v2375 = vld [vmem:[%s1147 + $0x20] sm:$0xff]
        %v2376 = vld [vmem:[%s1147 + $0x28] sm:$0xff]
        %v2377 = vld [vmem:[%s1147 + $0x30] sm:$0xff]
        %v2378 = vld [vmem:[%s1147 + $0x38] sm:$0xff]
        %v2379 = vadd.f32 %v2363, %v2371
        %v2380 = vadd.f32 %v2364, %v2372
        %v2381 = vadd.f32 %v2365, %v2373
        %v2382 = vadd.f32 %v2366, %v2374
        %v2383 = vadd.f32 %v2367, %v2375
        %v2384 = vadd.f32 %v2368, %v2376
        %v2385 = vadd.f32 %v2369, %v2377
        %v2386 = vadd.f32 %v2370, %v2378
        %vm2387 = vcmask 64512
        %v2388 = vsel %vm2387, %v2379, -inf
        %2389 = vmax.xlane.f32.xlu0 %v2388
        %v2390 = vpop.xlane.xlu0 %2389
        %v2391 = vsel %vm2387, %v2380, -inf
        %2392 = vmax.xlane.f32.xlu0 %v2391
        %v2393 = vpop.xlane.xlu0 %2392
        %v2394 = vsel %vm2387, %v2381, -inf
        %2395 = vmax.xlane.f32.xlu0 %v2394
        %v2396 = vpop.xlane.xlu0 %2395
        %v2397 = vsel %vm2387, %v2382, -inf
        %2398 = vmax.xlane.f32.xlu0 %v2397
        %v2399 = vpop.xlane.xlu0 %2398
        %v2400 = vsel %vm2387, %v2383, -inf
        %2401 = vmax.xlane.f32.xlu0 %v2400
        %v2402 = vpop.xlane.xlu0 %2401
        %v2403 = vsel %vm2387, %v2384, -inf
        %2404 = vmax.xlane.f32.xlu0 %v2403
        %v2405 = vpop.xlane.xlu0 %2404
        %v2406 = vsel %vm2387, %v2385, -inf
        %2407 = vmax.xlane.f32.xlu0 %v2406
        %v2408 = vpop.xlane.xlu0 %2407
        %v2409 = vsel %vm2387, %v2386, -inf
        %2410 = vmax.xlane.f32.xlu0 %v2409
        %v2411 = vpop.xlane.xlu0 %2410
        %v2412 = vsub.f32 %v2379, %v2390
        %v2413 = vsub.f32 %v2380, %v2393
        %v2414 = vsub.f32 %v2381, %v2396
        %v2415 = vsub.f32 %v2382, %v2399
        %v2416 = vsub.f32 %v2383, %v2402
        %v2417 = vsub.f32 %v2384, %v2405
        %v2418 = vsub.f32 %v2385, %v2408
        %v2419 = vsub.f32 %v2386, %v2411
        %v2420 = vmul.f32 %v2412, 1.442695
        %v2421 = vpow.pop %v2420
        %v2422 = vmul.f32 %v2413, 1.442695
        %v2423 = vpow.pop %v2422
        %v2424 = vmul.f32 %v2414, 1.442695
        %v2425 = vpow.pop %v2424
        %v2426 = vmul.f32 %v2415, 1.442695
        %v2427 = vpow.pop %v2426
        %v2428 = vmul.f32 %v2416, 1.442695
        %v2429 = vpow.pop %v2428
        %v2430 = vmul.f32 %v2417, 1.442695
        %v2431 = vpow.pop %v2430
        %v2432 = vmul.f32 %v2418, 1.442695
        %v2433 = vpow.pop %v2432
        %v2434 = vmul.f32 %v2419, 1.442695
        %v2435 = vpow.pop %v2434
        %v2436 = vsel %vm1270, %v2421, 0.0
        %2437 = vadd.xlane.f32.xlu0 %v2436
        %v2438 = vpop.xlane.xlu0 %2437
        %v2439 = vsel %vm1270, %v2423, 0.0
        %2440 = vadd.xlane.f32.xlu0 %v2439
        %v2441 = vpop.xlane.xlu0 %2440
        %v2442 = vsel %vm1270, %v2425, 0.0
        %2443 = vadd.xlane.f32.xlu0 %v2442
        %v2444 = vpop.xlane.xlu0 %2443
        %v2445 = vsel %vm1270, %v2427, 0.0
        %2446 = vadd.xlane.f32.xlu0 %v2445
        %v2447 = vpop.xlane.xlu0 %2446
        %v2448 = vsel %vm1270, %v2429, 0.0
        %2449 = vadd.xlane.f32.xlu0 %v2448
        %v2450 = vpop.xlane.xlu0 %2449
        %v2451 = vsel %vm1270, %v2431, 0.0
        %2452 = vadd.xlane.f32.xlu0 %v2451
        %v2453 = vpop.xlane.xlu0 %2452
        %v2454 = vsel %vm1270, %v2433, 0.0
        %2455 = vadd.xlane.f32.xlu0 %v2454
        %v2456 = vpop.xlane.xlu0 %2455
        %v2457 = vsel %vm1270, %v2435, 0.0
        %2458 = vadd.xlane.f32.xlu0 %v2457
        %v2459 = vpop.xlane.xlu0 %2458
        %2468 = vrot.lane.b32.xlu0 %v2421, 126
        %v2469 = vpop.permute.xlu0 %2468
        %2470 = vrot.lane.b32.xlu0 %v2423, 126
        %v2471 = vpop.permute.xlu0 %2470
        %2472 = vrot.lane.b32.xlu0 %v2425, 126
        %v2473 = vpop.permute.xlu0 %2472
        %2474 = vrot.lane.b32.xlu0 %v2427, 126
        %v2475 = vpop.permute.xlu0 %2474
        %2476 = vrot.lane.b32.xlu0 %v2429, 126
        %v2477 = vpop.permute.xlu0 %2476
        %2478 = vrot.lane.b32.xlu0 %v2431, 126
        %v2479 = vpop.permute.xlu0 %2478
        %2480 = vrot.lane.b32.xlu0 %v2433, 126
        %v2481 = vpop.permute.xlu0 %2480
        %2482 = vrot.lane.b32.xlu0 %v2435, 126
        %v2483 = vpop.permute.xlu0 %2482
        %v2492 = vsel %vm1270, %v2469, 0.0
        %2493 = vadd.xlane.f32.xlu0 %v2492
        %v2494 = vpop.xlane.xlu0 %2493
        %v2495 = vsel %vm1270, %v2471, 0.0
        %2496 = vadd.xlane.f32.xlu0 %v2495
        %v2497 = vpop.xlane.xlu0 %2496
        %v2498 = vsel %vm1270, %v2473, 0.0
        %2499 = vadd.xlane.f32.xlu0 %v2498
        %v2500 = vpop.xlane.xlu0 %2499
        %v2501 = vsel %vm1270, %v2475, 0.0
        %2502 = vadd.xlane.f32.xlu0 %v2501
        %v2503 = vpop.xlane.xlu0 %2502
        %v2504 = vsel %vm1270, %v2477, 0.0
        %2505 = vadd.xlane.f32.xlu0 %v2504
        %v2506 = vpop.xlane.xlu0 %2505
        %v2507 = vsel %vm1270, %v2479, 0.0
        %2508 = vadd.xlane.f32.xlu0 %v2507
        %v2509 = vpop.xlane.xlu0 %2508
        %v2510 = vsel %vm1270, %v2481, 0.0
        %2511 = vadd.xlane.f32.xlu0 %v2510
        %v2512 = vpop.xlane.xlu0 %2511
        %v2513 = vsel %vm1270, %v2483, 0.0
        %2514 = vadd.xlane.f32.xlu0 %v2513
        %v2515 = vpop.xlane.xlu0 %2514
        %2516 = vrot.lane.b32.xlu0 %v2421, 124
        %v2517 = vpop.permute.xlu0 %2516
        %2518 = vrot.lane.b32.xlu0 %v2423, 124
        %v2519 = vpop.permute.xlu0 %2518
        %2520 = vrot.lane.b32.xlu0 %v2425, 124
        %v2521 = vpop.permute.xlu0 %2520
        %2522 = vrot.lane.b32.xlu0 %v2427, 124
        %v2523 = vpop.permute.xlu0 %2522
        %2524 = vrot.lane.b32.xlu0 %v2429, 124
        %v2525 = vpop.permute.xlu0 %2524
        %2526 = vrot.lane.b32.xlu0 %v2431, 124
        %v2527 = vpop.permute.xlu0 %2526
        %2528 = vrot.lane.b32.xlu0 %v2433, 124
        %v2529 = vpop.permute.xlu0 %2528
        %2530 = vrot.lane.b32.xlu0 %v2435, 124
        %v2531 = vpop.permute.xlu0 %2530
        %v2540 = vsel %vm1270, %v2517, 0.0
        %2541 = vadd.xlane.f32.xlu0 %v2540
        %v2542 = vpop.xlane.xlu0 %2541
        %v2543 = vsel %vm1270, %v2519, 0.0
        %2544 = vadd.xlane.f32.xlu0 %v2543
        %v2545 = vpop.xlane.xlu0 %2544
        %v2546 = vsel %vm1270, %v2521, 0.0
        %2547 = vadd.xlane.f32.xlu0 %v2546
        %v2548 = vpop.xlane.xlu0 %2547
        %v2549 = vsel %vm1270, %v2523, 0.0
        %2550 = vadd.xlane.f32.xlu0 %v2549
        %v2551 = vpop.xlane.xlu0 %2550
        %v2552 = vsel %vm1270, %v2525, 0.0
        %2553 = vadd.xlane.f32.xlu0 %v2552
        %v2554 = vpop.xlane.xlu0 %2553
        %v2555 = vsel %vm1270, %v2527, 0.0
        %2556 = vadd.xlane.f32.xlu0 %v2555
        %v2557 = vpop.xlane.xlu0 %2556
        %v2558 = vsel %vm1270, %v2529, 0.0
        %2559 = vadd.xlane.f32.xlu0 %v2558
        %v2560 = vpop.xlane.xlu0 %2559
        %v2561 = vsel %vm1270, %v2531, 0.0
        %2562 = vadd.xlane.f32.xlu0 %v2561
        %v2563 = vpop.xlane.xlu0 %2562
        %2564 = vrot.lane.b32.xlu0 %v2421, 122
        %v2565 = vpop.permute.xlu0 %2564
        %2566 = vrot.lane.b32.xlu0 %v2423, 122
        %v2567 = vpop.permute.xlu0 %2566
        %2568 = vrot.lane.b32.xlu0 %v2425, 122
        %v2569 = vpop.permute.xlu0 %2568
        %2570 = vrot.lane.b32.xlu0 %v2427, 122
        %v2571 = vpop.permute.xlu0 %2570
        %2572 = vrot.lane.b32.xlu0 %v2429, 122
        %v2573 = vpop.permute.xlu0 %2572
        %2574 = vrot.lane.b32.xlu0 %v2431, 122
        %v2575 = vpop.permute.xlu0 %2574
        %2576 = vrot.lane.b32.xlu0 %v2433, 122
        %v2577 = vpop.permute.xlu0 %2576
        %2578 = vrot.lane.b32.xlu0 %v2435, 122
        %v2579 = vpop.permute.xlu0 %2578
        %v2588 = vsel %vm1270, %v2565, 0.0
        %2589 = vadd.xlane.f32.xlu0 %v2588
        %v2590 = vpop.xlane.xlu0 %2589
        %v2591 = vsel %vm1270, %v2567, 0.0
        %2592 = vadd.xlane.f32.xlu0 %v2591
        %v2593 = vpop.xlane.xlu0 %2592
        %v2594 = vsel %vm1270, %v2569, 0.0
        %2595 = vadd.xlane.f32.xlu0 %v2594
        %v2596 = vpop.xlane.xlu0 %2595
        %v2597 = vsel %vm1270, %v2571, 0.0
        %2598 = vadd.xlane.f32.xlu0 %v2597
        %v2599 = vpop.xlane.xlu0 %2598
        %v2600 = vsel %vm1270, %v2573, 0.0
        %2601 = vadd.xlane.f32.xlu0 %v2600
        %v2602 = vpop.xlane.xlu0 %2601
        %v2603 = vsel %vm1270, %v2575, 0.0
        %2604 = vadd.xlane.f32.xlu0 %v2603
        %v2605 = vpop.xlane.xlu0 %2604
        %v2606 = vsel %vm1270, %v2577, 0.0
        %2607 = vadd.xlane.f32.xlu0 %v2606
        %v2608 = vpop.xlane.xlu0 %2607
        %v2609 = vsel %vm1270, %v2579, 0.0
        %2610 = vadd.xlane.f32.xlu0 %v2609
        %v2611 = vpop.xlane.xlu0 %2610
        %v2612 = vsel %vm1270, %v2438, %v2494
        %v2613 = vsel %vm1270, %v2441, %v2497
        %v2614 = vsel %vm1270, %v2444, %v2500
        %v2615 = vsel %vm1270, %v2447, %v2503
        %v2616 = vsel %vm1270, %v2450, %v2506
        %v2617 = vsel %vm1270, %v2453, %v2509
        %v2618 = vsel %vm1270, %v2456, %v2512
        %v2619 = vsel %vm1270, %v2459, %v2515
        %v2620 = vsel %vm1316, %v2612, %v2542
        %v2621 = vsel %vm1316, %v2613, %v2545
        %v2622 = vsel %vm1316, %v2614, %v2548
        %v2623 = vsel %vm1316, %v2615, %v2551
        %v2624 = vsel %vm1316, %v2616, %v2554
        %v2625 = vsel %vm1316, %v2617, %v2557
        %v2626 = vsel %vm1316, %v2618, %v2560
        %v2627 = vsel %vm1316, %v2619, %v2563
        %vm2628 = vcmask 48128
        %v2629 = vsel %vm2628, %v2620, %v2590
        %v2630 = vsel %vm2628, %v2621, %v2593
        %v2631 = vsel %vm2628, %v2622, %v2596
        %v2632 = vsel %vm2628, %v2623, %v2599
        %v2633 = vsel %vm2628, %v2624, %v2602
        %v2634 = vsel %vm2628, %v2625, %v2605
        %v2635 = vsel %vm2628, %v2626, %v2608
        %v2636 = vsel %vm2628, %v2627, %v2611
        %v2637 = vrcp.pop %v2629
        %v2638 = vmul.f32 %v2629, %v2637
        %v2639 = vsub.f32 1.0, %v2638
        %v2640 = vmul.f32 %v2637, %v2639
        %v2641 = vadd.f32 %v2637, %v2640
        %vm2642 = vweird.f32 %v2629
        %vm2643 = vweird.f32 %v2637
        %vm2644 = vmor %vm2642, %vm2643
        %v2645 = vsel %vm2644, %v2637, %v2641
        %v2646 = vand.u32 2147483647, %v2629
        %vm2647 = vcmp.eq.f32.partialorder %v2646, 8.507059e+37
        %v2648 = vand.u32 %v2629, 2147483648
        %v2649 = vor.u32 1.1754944e-38, %v2648
        %v2650 = vsel %vm2647, %v2649, %v2645
        %v2651 = vmul.f32 %v2421, %v2650
        %v2652 = vrcp.pop %v2630
        %v2653 = vmul.f32 %v2630, %v2652
        %v2654 = vsub.f32 1.0, %v2653
        %v2655 = vmul.f32 %v2652, %v2654
        %v2656 = vadd.f32 %v2652, %v2655
        %vm2657 = vweird.f32 %v2630
        %vm2658 = vweird.f32 %v2652
        %vm2659 = vmor %vm2657, %vm2658
        %v2660 = vsel %vm2659, %v2652, %v2656
        %v2661 = vand.u32 2147483647, %v2630
        %vm2662 = vcmp.eq.f32.partialorder %v2661, 8.507059e+37
        %v2663 = vand.u32 %v2630, 2147483648
        %v2664 = vor.u32 1.1754944e-38, %v2663
        %v2665 = vsel %vm2662, %v2664, %v2660
        %v2666 = vmul.f32 %v2423, %v2665
        %v2667 = vrcp.pop %v2631
        %v2668 = vmul.f32 %v2631, %v2667
        %v2669 = vsub.f32 1.0, %v2668
        %v2670 = vmul.f32 %v2667, %v2669
        %v2671 = vadd.f32 %v2667, %v2670
        %vm2672 = vweird.f32 %v2631
        %vm2673 = vweird.f32 %v2667
        %vm2674 = vmor %vm2672, %vm2673
        %v2675 = vsel %vm2674, %v2667, %v2671
        %v2676 = vand.u32 2147483647, %v2631
        %vm2677 = vcmp.eq.f32.partialorder %v2676, 8.507059e+37
        %v2678 = vand.u32 %v2631, 2147483648
        %v2679 = vor.u32 1.1754944e-38, %v2678
        %v2680 = vsel %vm2677, %v2679, %v2675
        %v2681 = vmul.f32 %v2425, %v2680
        %v2682 = vrcp.pop %v2632
        %v2683 = vmul.f32 %v2632, %v2682
        %v2684 = vsub.f32 1.0, %v2683
        %v2685 = vmul.f32 %v2682, %v2684
        %v2686 = vadd.f32 %v2682, %v2685
        %vm2687 = vweird.f32 %v2632
        %vm2688 = vweird.f32 %v2682
        %vm2689 = vmor %vm2687, %vm2688
        %v2690 = vsel %vm2689, %v2682, %v2686
        %v2691 = vand.u32 2147483647, %v2632
        %vm2692 = vcmp.eq.f32.partialorder %v2691, 8.507059e+37
        %v2693 = vand.u32 %v2632, 2147483648
        %v2694 = vor.u32 1.1754944e-38, %v2693
        %v2695 = vsel %vm2692, %v2694, %v2690
        %v2696 = vmul.f32 %v2427, %v2695
        %v2697 = vrcp.pop %v2633
        %v2698 = vmul.f32 %v2633, %v2697
        %v2699 = vsub.f32 1.0, %v2698
        %v2700 = vmul.f32 %v2697, %v2699
        %v2701 = vadd.f32 %v2697, %v2700
        %vm2702 = vweird.f32 %v2633
        %vm2703 = vweird.f32 %v2697
        %vm2704 = vmor %vm2702, %vm2703
        %v2705 = vsel %vm2704, %v2697, %v2701
        %v2706 = vand.u32 2147483647, %v2633
        %vm2707 = vcmp.eq.f32.partialorder %v2706, 8.507059e+37
        %v2708 = vand.u32 %v2633, 2147483648
        %v2709 = vor.u32 1.1754944e-38, %v2708
        %v2710 = vsel %vm2707, %v2709, %v2705
        %v2711 = vmul.f32 %v2429, %v2710
        %v2712 = vrcp.pop %v2634
        %v2713 = vmul.f32 %v2634, %v2712
        %v2714 = vsub.f32 1.0, %v2713
        %v2715 = vmul.f32 %v2712, %v2714
        %v2716 = vadd.f32 %v2712, %v2715
        %vm2717 = vweird.f32 %v2634
        %vm2718 = vweird.f32 %v2712
        %vm2719 = vmor %vm2717, %vm2718
        %v2720 = vsel %vm2719, %v2712, %v2716
        %v2721 = vand.u32 2147483647, %v2634
        %vm2722 = vcmp.eq.f32.partialorder %v2721, 8.507059e+37
        %v2723 = vand.u32 %v2634, 2147483648
        %v2724 = vor.u32 1.1754944e-38, %v2723
        %v2725 = vsel %vm2722, %v2724, %v2720
        %v2726 = vmul.f32 %v2431, %v2725
        %v2727 = vrcp.pop %v2635
        %v2728 = vmul.f32 %v2635, %v2727
        %v2729 = vsub.f32 1.0, %v2728
        %v2730 = vmul.f32 %v2727, %v2729
        %v2731 = vadd.f32 %v2727, %v2730
        %vm2732 = vweird.f32 %v2635
        %vm2733 = vweird.f32 %v2727
        %vm2734 = vmor %vm2732, %vm2733
        %v2735 = vsel %vm2734, %v2727, %v2731
        %v2736 = vand.u32 2147483647, %v2635
        %vm2737 = vcmp.eq.f32.partialorder %v2736, 8.507059e+37
        %v2738 = vand.u32 %v2635, 2147483648
        %v2739 = vor.u32 1.1754944e-38, %v2738
        %v2740 = vsel %vm2737, %v2739, %v2735
        %v2741 = vmul.f32 %v2433, %v2740
        %v2742 = vrcp.pop %v2636
        %v2743 = vmul.f32 %v2636, %v2742
        %v2744 = vsub.f32 1.0, %v2743
        %v2745 = vmul.f32 %v2742, %v2744
        %v2746 = vadd.f32 %v2742, %v2745
        %vm2747 = vweird.f32 %v2636
        %vm2748 = vweird.f32 %v2742
        %vm2749 = vmor %vm2747, %vm2748
        %v2750 = vsel %vm2749, %v2742, %v2746
        %v2751 = vand.u32 2147483647, %v2636
        %vm2752 = vcmp.eq.f32.partialorder %v2751, 8.507059e+37
        %v2753 = vand.u32 %v2636, 2147483648
        %v2754 = vor.u32 1.1754944e-38, %v2753
        %v2755 = vsel %vm2752, %v2754, %v2750
        %v2756 = vmul.f32 %v2435, %v2755
        %2757 = vst.msk [vmem:[#allocation6] sm:$0xff] %vm2387, %v2651
        %2758 = vst.msk [vmem:[#allocation6 + $0x8] sm:$0xff] %vm2387, %v2666
        %2759 = vst.msk [vmem:[#allocation6 + $0x10] sm:$0xff] %vm2387, %v2681
        %2760 = vst.msk [vmem:[#allocation6 + $0x18] sm:$0xff] %vm2387, %v2696
        %2761 = vst.msk [vmem:[#allocation6 + $0x20] sm:$0xff] %vm2387, %v2711
        %2762 = vst.msk [vmem:[#allocation6 + $0x28] sm:$0xff] %vm2387, %v2726
        %2763 = vst.msk [vmem:[#allocation6 + $0x30] sm:$0xff] %vm2387, %v2741
        %2764 = vst.msk [vmem:[#allocation6 + $0x38] sm:$0xff] %vm2387, %v2756
        %v2765 = vld [vmem:[%s33] sm:$0x3]
        %v2766 = vld [vmem:[%s35] sm:$0x1]
        %v2768 = vsel %vm1283, %v2766, 0
        %2770 = vmatpush.bf16.msra.mxu0 0
        %2771 = vmatpush.bf16.msra.mxu0 0
        %2772 = vmatpush.bf16.msra.mxu0 0
        %2773 = vmatpush.bf16.msra.mxu0 0
        %2774 = vmatpush.bf16.msra.mxu0 0
        %2775 = vmatpush.bf16.msra.mxu0 0
        %2776 = vmatpush.bf16.msra.mxu0 0
        %2777 = vmatpush.bf16.msra.mxu0 %v2768
        %2778 = vmatmul.bf16.gmra.mxu0 %v1272
        %v2779 = vpop.f32.mrf.mxu0
        %v2780 = vadd.f32 0.0, %v2779
        %v2781 = vpop.f32.mrf.mxu0
        %v2782 = vadd.f32 0.0, %v2781
        %2783 = vmatmul.bf16.gmra.mxu0 %v1275
        %v2784 = vpop.f32.mrf.mxu0
        %v2785 = vadd.f32 0.0, %v2784
        %v2786 = vpop.f32.mrf.mxu0
        %v2787 = vadd.f32 0.0, %v2786
        %2788 = vmatmul.bf16.gmra.mxu0 %v1278
        %v2789 = vpop.f32.mrf.mxu0
        %v2790 = vadd.f32 0.0, %v2789
        %v2791 = vpop.f32.mrf.mxu0
        %v2792 = vadd.f32 0.0, %v2791
        %2793 = vmatmul.bf16.gmra.mxu0 %v1281
        %v2794 = vpop.f32.mrf.mxu0
        %v2795 = vadd.f32 0.0, %v2794
        %v2796 = vpop.f32.mrf.mxu0
        %v2797 = vadd.f32 0.0, %v2796
        %2798 = vdwg.mxu0
        %v2800 = vsel %vm1329, %v2765, 0
        %2802 = vmatpush.bf16.msra.mxu0 0
        %2803 = vmatpush.bf16.msra.mxu0 0
        %2804 = vmatpush.bf16.msra.mxu0 0
        %2805 = vmatpush.bf16.msra.mxu0 0
        %2806 = vmatpush.bf16.msra.mxu0 0
        %2807 = vmatpush.bf16.msra.mxu0 0
        %2808 = vmatpush.bf16.msra.mxu0 0
        %2809 = vmatpush.bf16.msra.mxu0 %v2800
        %2810 = vmatmul.bf16.gmra.mxu0 %v1318
        %v2811 = vpop.f32.mrf.mxu0
        %v2812 = vadd.f32 %v2780, %v2811
        %v2813 = vpop.f32.mrf.mxu0
        %v2814 = vadd.f32 %v2782, %v2813
        %2815 = vmatmul.bf16.gmra.mxu0 %v1321
        %v2816 = vpop.f32.mrf.mxu0
        %v2817 = vadd.f32 %v2785, %v2816
        %v2818 = vpop.f32.mrf.mxu0
        %v2819 = vadd.f32 %v2787, %v2818
        %2820 = vmatmul.bf16.gmra.mxu0 %v1324
        %v2821 = vpop.f32.mrf.mxu0
        %v2822 = vadd.f32 %v2790, %v2821
        %v2823 = vpop.f32.mrf.mxu0
        %v2824 = vadd.f32 %v2792, %v2823
        %2825 = vmatmul.bf16.gmra.mxu0 %v1327
        %v2826 = vpop.f32.mrf.mxu0
        %v2827 = vadd.f32 %v2795, %v2826
        %v2828 = vpop.f32.mrf.mxu0
        %v2829 = vadd.f32 %v2797, %v2828
        %2830 = vdwg.mxu0
        %v2831 = vld [vmem:[%s37] sm:$0x1]
        %v2833 = vperm.slane %v2831, 0
        %v2835 = vadd.f32 %v2812, %v2833
        %v2836 = vadd.f32 %v2814, %v2833
        %v2837 = vadd.f32 %v2817, %v2833
        %v2838 = vadd.f32 %v2819, %v2833
        %v2839 = vadd.f32 %v2822, %v2833
        %v2840 = vadd.f32 %v2824, %v2833
        %v2841 = vadd.f32 %v2827, %v2833
        %v2842 = vadd.f32 %v2829, %v2833
        %v2843 = vmax.f32 %v2835, 0.0
        %v2844 = vmax.f32 %v2836, 0.0
        %v2845 = vmax.f32 %v2837, 0.0
        %v2846 = vmax.f32 %v2838, 0.0
        %v2847 = vmax.f32 %v2839, 0.0
        %v2848 = vmax.f32 %v2840, 0.0
        %v2849 = vmax.f32 %v2841, 0.0
        %v2850 = vmax.f32 %v2842, 0.0
        %v2851 = vpack.c.bf16 %v2844, %v2843
        %v2852 = vpack.c.bf16 %v2846, %v2845
        %v2853 = vpack.c.bf16 %v2848, %v2847
        %v2854 = vpack.c.bf16 %v2850, %v2849
        %v2855 = vld [vmem:[%s39] sm:$0xf]
        %v2856 = vld [vmem:[%s39 + $0x4] sm:$0xf]
        %v2857 = vld [vmem:[%s39 + $0x8] sm:$0xf]
        %v2858 = vld [vmem:[%s39 + $0xc] sm:$0xf]
        %v2859 = vld [vmem:[%s41] sm:$0x1]
        %v2861 = vperm.slane %v2859, 0
        %v2867 = vunpack.c.l.b16 %v2855
        %v2868 = vunpack.c.l.b16 %v2856
        %v2869 = vunpack.c.l.b16 %v2857
        %v2870 = vunpack.c.l.b16 %v2858
        %v2871 = vpack.c.b16 %v2868, %v2867
        %v2872 = vpack.c.b16 %v2870, %v2869
        %v2876 = vsel %vm1406, %v2851, 0
        %v2879 = vsel %vm1406, %v2852, 0
        %v2882 = vsel %vm1406, %v2853, 0
        %v2885 = vsel %vm1406, %v2854, 0
        %2887 = vmatpush.bf16.msra.mxu0 0
        %2888 = vmatpush.bf16.msra.mxu0 0
        %2889 = vmatpush.bf16.msra.mxu0 0
        %2890 = vmatpush.bf16.msra.mxu0 0
        %2891 = vmatpush.bf16.msra.mxu0 0
        %2892 = vmatpush.bf16.msra.mxu0 0
        %2893 = vmatpush.bf16.msra.mxu0 %v2872
        %2894 = vmatpush.bf16.msra.mxu0 %v2871
        %2895 = vmatmul.bf16.gmra.mxu0 %v2876
        %v2896 = vpop.f32.mrf.mxu0
        %v2897 = vadd.f32 %v2861, %v2896
        %v2898 = vpop.f32.mrf.mxu0
        %v2899 = vadd.f32 %v2861, %v2898
        %2900 = vmatmul.bf16.gmra.mxu0 %v2879
        %v2901 = vpop.f32.mrf.mxu0
        %v2902 = vadd.f32 %v2861, %v2901
        %v2903 = vpop.f32.mrf.mxu0
        %v2904 = vadd.f32 %v2861, %v2903
        %2905 = vmatmul.bf16.gmra.mxu0 %v2882
        %v2906 = vpop.f32.mrf.mxu0
        %v2907 = vadd.f32 %v2861, %v2906
        %v2908 = vpop.f32.mrf.mxu0
        %v2909 = vadd.f32 %v2861, %v2908
        %2910 = vmatmul.bf16.gmra.mxu0 %v2885
        %v2911 = vpop.f32.mrf.mxu0
        %v2912 = vadd.f32 %v2861, %v2911
        %v2913 = vpop.f32.mrf.mxu0
        %v2914 = vadd.f32 %v2861, %v2913
        %2915 = vdwg.mxu0
        %v2916 = vpack.c.bf16 %v2666, %v2651
        %v2917 = vpack.c.bf16 %v2696, %v2681
        %v2918 = vpack.c.bf16 %v2726, %v2711
        %v2919 = vpack.c.bf16 %v2756, %v2741
        %v2920 = vld [vmem:[%s43] sm:$0xf]
        %v2921 = vpack.c.bf16 %v2899, %v2897
        %v2922 = vpack.c.bf16 %v2904, %v2902
        %v2923 = vpack.c.bf16 %v2909, %v2907
        %v2924 = vpack.c.bf16 %v2914, %v2912
        %v2925 = vld [vmem:[%s45] sm:$0xf]
        %v2926 = vld [vmem:[%s45 + $0x4] sm:$0xf]
        %v2927 = vld [vmem:[%s45 + $0x8] sm:$0xf]
        %v2928 = vld [vmem:[%s45 + $0xc] sm:$0xf]
        %v2933 = vunpack.c.l.b16 %v2925
        %v2934 = vunpack.c.l.b16 %v2926
        %v2935 = vunpack.c.l.b16 %v2927
        %v2936 = vunpack.c.l.b16 %v2928
        %v2937 = vpack.c.b16 %v2934, %v2933
        %v2938 = vpack.c.b16 %v2936, %v2935
        %v2942 = vsel %vm1406, %v2921, 0
        %v2945 = vsel %vm1406, %v2922, 0
        %v2948 = vsel %vm1406, %v2923, 0
        %v2951 = vsel %vm1406, %v2924, 0
        %2953 = vmatpush.bf16.msra.mxu0 0
        %2954 = vmatpush.bf16.msra.mxu0 0
        %2955 = vmatpush.bf16.msra.mxu0 0
        %2956 = vmatpush.bf16.msra.mxu0 0
        %2957 = vmatpush.bf16.msra.mxu0 0
        %2958 = vmatpush.bf16.msra.mxu0 0
        %2959 = vmatpush.bf16.msra.mxu0 %v2938
        %2960 = vmatpush.bf16.msra.mxu0 %v2937
        %2961 = vmatmul.bf16.gmra.mxu0 %v2942
        %v2962 = vpop.f32.mrf.mxu0
        %v2963 = vadd.f32 0.0, %v2962
        %v2964 = vpop.f32.mrf.mxu0
        %v2965 = vadd.f32 0.0, %v2964
        %2966 = vmatmul.bf16.gmra.mxu0 %v2945
        %v2967 = vpop.f32.mrf.mxu0
        %v2968 = vadd.f32 0.0, %v2967
        %v2969 = vpop.f32.mrf.mxu0
        %v2970 = vadd.f32 0.0, %v2969
        %2971 = vmatmul.bf16.gmra.mxu0 %v2948
        %v2972 = vpop.f32.mrf.mxu0
        %v2973 = vadd.f32 0.0, %v2972
        %v2974 = vpop.f32.mrf.mxu0
        %v2975 = vadd.f32 0.0, %v2974
        %2976 = vmatmul.bf16.gmra.mxu0 %v2951
        %v2977 = vpop.f32.mrf.mxu0
        %v2978 = vadd.f32 0.0, %v2977
        %v2979 = vpop.f32.mrf.mxu0
        %v2980 = vadd.f32 0.0, %v2979
        %2981 = vdwg.mxu0
        %v2983 = vsel %vm2387, %v2916, 0
        %v2986 = vsel %vm2387, %v2917, 0
        %v2989 = vsel %vm2387, %v2918, 0
        %v2992 = vsel %vm2387, %v2919, 0
        %vm2994 = vcmask 1043456
        %v2996 = vsel %vm2994, %v2920, 0
        %2998 = vmatpush.bf16.msra.mxu0 0
        %2999 = vmatpush.bf16.msra.mxu0 0
        %3000 = vmatpush.bf16.msra.mxu0 0
        %3001 = vmatpush.bf16.msra.mxu0 0
        %3002 = vmatpush.bf16.msra.mxu0 0
        %3003 = vmatpush.bf16.msra.mxu0 0
        %3004 = vmatpush.bf16.msra.mxu0 0
        %3005 = vmatpush.bf16.msra.mxu0 %v2996
        %3006 = vmatmul.bf16.gmra.mxu0 %v2983
        %v3007 = vpop.f32.mrf.mxu0
        %v3008 = vadd.f32 %v2963, %v3007
        %v3009 = vpop.f32.mrf.mxu0
        %v3010 = vadd.f32 %v2965, %v3009
        %3011 = vmatmul.bf16.gmra.mxu0 %v2986
        %v3012 = vpop.f32.mrf.mxu0
        %v3013 = vadd.f32 %v2968, %v3012
        %v3014 = vpop.f32.mrf.mxu0
        %v3015 = vadd.f32 %v2970, %v3014
        %3016 = vmatmul.bf16.gmra.mxu0 %v2989
        %v3017 = vpop.f32.mrf.mxu0
        %v3018 = vadd.f32 %v2973, %v3017
        %v3019 = vpop.f32.mrf.mxu0
        %v3020 = vadd.f32 %v2975, %v3019
        %3021 = vmatmul.bf16.gmra.mxu0 %v2992
        %v3022 = vpop.f32.mrf.mxu0
        %v3023 = vadd.f32 %v2978, %v3022
        %v3024 = vpop.f32.mrf.mxu0
        %v3025 = vadd.f32 %v2980, %v3024
        %3026 = vdwg.mxu0
        %v3027 = vld [vmem:[%s47] sm:$0x1]
        %v3029 = vperm.slane %v3027, 0
        %v3031 = vadd.f32 %v3008, %v3029
        %v3032 = vadd.f32 %v3010, %v3029
        %v3033 = vadd.f32 %v3013, %v3029
        %v3034 = vadd.f32 %v3015, %v3029
        %v3035 = vadd.f32 %v3018, %v3029
        %v3036 = vadd.f32 %v3020, %v3029
        %v3037 = vadd.f32 %v3023, %v3029
        %v3038 = vadd.f32 %v3025, %v3029
        %v3039 = vmax.f32 %v3031, 0.0
        %v3040 = vmax.f32 %v3032, 0.0
        %v3041 = vmax.f32 %v3033, 0.0
        %v3042 = vmax.f32 %v3034, 0.0
        %v3043 = vmax.f32 %v3035, 0.0
        %v3044 = vmax.f32 %v3036, 0.0
        %v3045 = vmax.f32 %v3037, 0.0
        %v3046 = vmax.f32 %v3038, 0.0
        %v3047 = vld [vmem:[%s49] sm:$0x1]
        %v3049 = vperm.slane %v3047, 0
        %v3051 = vmul.f32 %v3039, %v3049
        %v3052 = vmul.f32 %v3040, %v3049
        %v3053 = vmul.f32 %v3041, %v3049
        %v3054 = vmul.f32 %v3042, %v3049
        %v3055 = vmul.f32 %v3043, %v3049
        %v3056 = vmul.f32 %v3044, %v3049
        %v3057 = vmul.f32 %v3045, %v3049
        %v3058 = vmul.f32 %v3046, %v3049
        %v3059 = vsel %vm1406, %v3051, 0.0
        %3060 = vadd.xlane.f32.xlu0 %v3059
        %v3061 = vpop.xlane.xlu0 %3060
        %v3062 = vsel %vm1406, %v3052, 0.0
        %3063 = vadd.xlane.f32.xlu0 %v3062
        %v3064 = vpop.xlane.xlu0 %3063
        %v3065 = vsel %vm1406, %v3053, 0.0
        %3066 = vadd.xlane.f32.xlu0 %v3065
        %v3067 = vpop.xlane.xlu0 %3066
        %v3068 = vsel %vm1406, %v3054, 0.0
        %3069 = vadd.xlane.f32.xlu0 %v3068
        %v3070 = vpop.xlane.xlu0 %3069
        %v3071 = vsel %vm1406, %v3055, 0.0
        %3072 = vadd.xlane.f32.xlu0 %v3071
        %v3073 = vpop.xlane.xlu0 %3072
        %v3074 = vsel %vm1406, %v3056, 0.0
        %3075 = vadd.xlane.f32.xlu0 %v3074
        %v3076 = vpop.xlane.xlu0 %3075
        %v3077 = vsel %vm1406, %v3057, 0.0
        %3078 = vadd.xlane.f32.xlu0 %v3077
        %v3079 = vpop.xlane.xlu0 %3078
        %v3080 = vsel %vm1406, %v3058, 0.0
        %3081 = vadd.xlane.f32.xlu0 %v3080
        %v3082 = vpop.xlane.xlu0 %3081
        %v3083 = vld [vmem:[#allocation10] sm:$0x1]
        %v3085 = vperm.slane %v3083, 0
        %v3087 = vadd.f32 %v3061, %v3085
        %v3088 = vadd.f32 %v3064, %v3085
        %v3089 = vadd.f32 %v3067, %v3085
        %v3090 = vadd.f32 %v3070, %v3085
        %v3091 = vadd.f32 %v3073, %v3085
        %v3092 = vadd.f32 %v3076, %v3085
        %v3093 = vadd.f32 %v3079, %v3085
        %v3094 = vadd.f32 %v3082, %v3085
        %s3095 = smul.u32 %s95, 8
        %s3096 = smul.u32 %s3095, 128
        %s3097 = sld [smem:[#allocation9 + %s3096]]
        %s3098 = smul.u32 %s3097, 8
        %s3099 = scalar_lea.vmem [#allocation6], %s3098
        %v3100 = vld [vmem:[%s3099] sm:$0x1]
        %vm3101 = vcmask 57344
        %3102 = vst.msk [vmem:[#allocation7] sm:$0x1] %vm3101, %v3100
        %s3103 = sadd.s32 %s3095, 1
        %s3104 = smul.u32 %s3103, 128
        %s3105 = sld [smem:[#allocation9 + %s3104]]
        %s3106 = smul.u32 %s3105, 8
        %s3107 = sadd.s32 %s3106, 1
        %s3108 = scalar_lea.vmem [#allocation6], %s3107
        %v3109 = vld [vmem:[%s3108] sm:$0x1]
        %s3110 = sadd.s32 0, 1
        %s3111 = scalar_lea.vmem [#allocation7], %s3110
        %3112 = vst.msk [vmem:[%s3111] sm:$0x1] %vm3101, %v3109
        %s3113 = sadd.s32 %s3095, 2
        %s3114 = smul.u32 %s3113, 128
        %s3115 = sld [smem:[#allocation9 + %s3114]]
        %s3116 = smul.u32 %s3115, 8
        %s3117 = sadd.s32 %s3116, 2
        %s3118 = scalar_lea.vmem [#allocation6], %s3117
        %v3119 = vld [vmem:[%s3118] sm:$0x1]
        %s3120 = sadd.s32 0, 2
        %s3121 = scalar_lea.vmem [#allocation7], %s3120
        %3122 = vst.msk [vmem:[%s3121] sm:$0x1] %vm3101, %v3119
        %s3123 = sadd.s32 %s3095, 3
        %s3124 = smul.u32 %s3123, 128
        %s3125 = sld [smem:[#allocation9 + %s3124]]
        %s3126 = smul.u32 %s3125, 8
        %s3127 = sadd.s32 %s3126, 3
        %s3128 = scalar_lea.vmem [#allocation6], %s3127
        %v3129 = vld [vmem:[%s3128] sm:$0x1]
        %s3130 = sadd.s32 0, 3
        %s3131 = scalar_lea.vmem [#allocation7], %s3130
        %3132 = vst.msk [vmem:[%s3131] sm:$0x1] %vm3101, %v3129
        %s3133 = sadd.s32 %s3095, 4
        %s3134 = smul.u32 %s3133, 128
        %s3135 = sld [smem:[#allocation9 + %s3134]]
        %s3136 = smul.u32 %s3135, 8
        %s3137 = sadd.s32 %s3136, 4
        %s3138 = scalar_lea.vmem [#allocation6], %s3137
        %v3139 = vld [vmem:[%s3138] sm:$0x1]
        %s3140 = sadd.s32 0, 4
        %s3141 = scalar_lea.vmem [#allocation7], %s3140
        %3142 = vst.msk [vmem:[%s3141] sm:$0x1] %vm3101, %v3139
        %s3143 = sadd.s32 %s3095, 5
        %s3144 = smul.u32 %s3143, 128
        %s3145 = sld [smem:[#allocation9 + %s3144]]
        %s3146 = smul.u32 %s3145, 8
        %s3147 = sadd.s32 %s3146, 5
        %s3148 = scalar_lea.vmem [#allocation6], %s3147
        %v3149 = vld [vmem:[%s3148] sm:$0x1]
        %s3150 = sadd.s32 0, 5
        %s3151 = scalar_lea.vmem [#allocation7], %s3150
        %3152 = vst.msk [vmem:[%s3151] sm:$0x1] %vm3101, %v3149
        %s3153 = sadd.s32 %s3095, 6
        %s3154 = smul.u32 %s3153, 128
        %s3155 = sld [smem:[#allocation9 + %s3154]]
        %s3156 = smul.u32 %s3155, 8
        %s3157 = sadd.s32 %s3156, 6
        %s3158 = scalar_lea.vmem [#allocation6], %s3157
        %v3159 = vld [vmem:[%s3158] sm:$0x1]
        %s3160 = sadd.s32 0, 6
        %s3161 = scalar_lea.vmem [#allocation7], %s3160
        %3162 = vst.msk [vmem:[%s3161] sm:$0x1] %vm3101, %v3159
        %s3163 = sadd.s32 %s3095, 7
        %s3164 = smul.u32 %s3163, 128
        %s3165 = sld [smem:[#allocation9 + %s3164]]
        %s3166 = smul.u32 %s3165, 8
        %s3167 = sadd.s32 %s3166, 7
        %s3168 = scalar_lea.vmem [#allocation6], %s3167
        %v3169 = vld [vmem:[%s3168] sm:$0x1]
        %s3170 = sadd.s32 0, 7
        %s3171 = scalar_lea.vmem [#allocation7], %s3170
        %3172 = vst.msk [vmem:[%s3171] sm:$0x1] %vm3101, %v3169
        %s3173 = sadd.s32 %s3096, 1
        %s3174 = sld [smem:[#allocation9 + %s3173]]
        %s3175 = smul.u32 %s3174, 8
        %s3176 = scalar_lea.vmem [#allocation6], %s3175
        %v3177 = vld [vmem:[%s3176] sm:$0x1]
        %s3178 = scalar_lea.vmem [#allocation7], 8
        %3179 = vst.msk [vmem:[%s3178] sm:$0x1] %vm3101, %v3177
        %s3180 = sadd.s32 %s3104, 1
        %s3181 = sld [smem:[#allocation9 + %s3180]]
        %s3182 = smul.u32 %s3181, 8
        %s3183 = sadd.s32 %s3182, 1
        %s3184 = scalar_lea.vmem [#allocation6], %s3183
        %v3185 = vld [vmem:[%s3184] sm:$0x1]
        %s3186 = sadd.s32 8, 1
        %s3187 = scalar_lea.vmem [#allocation7], %s3186
        %3188 = vst.msk [vmem:[%s3187] sm:$0x1] %vm3101, %v3185
        %s3189 = sadd.s32 %s3114, 1
        %s3190 = sld [smem:[#allocation9 + %s3189]]
        %s3191 = smul.u32 %s3190, 8
        %s3192 = sadd.s32 %s3191, 2
        %s3193 = scalar_lea.vmem [#allocation6], %s3192
        %v3194 = vld [vmem:[%s3193] sm:$0x1]
        %s3195 = sadd.s32 8, 2
        %s3196 = scalar_lea.vmem [#allocation7], %s3195
        %3197 = vst.msk [vmem:[%s3196] sm:$0x1] %vm3101, %v3194
        %s3198 = sadd.s32 %s3124, 1
        %s3199 = sld [smem:[#allocation9 + %s3198]]
        %s3200 = smul.u32 %s3199, 8
        %s3201 = sadd.s32 %s3200, 3
        %s3202 = scalar_lea.vmem [#allocation6], %s3201
        %v3203 = vld [vmem:[%s3202] sm:$0x1]
        %s3204 = sadd.s32 8, 3
        %s3205 = scalar_lea.vmem [#allocation7], %s3204
        %3206 = vst.msk [vmem:[%s3205] sm:$0x1] %vm3101, %v3203
        %s3207 = sadd.s32 %s3134, 1
        %s3208 = sld [smem:[#allocation9 + %s3207]]
        %s3209 = smul.u32 %s3208, 8
        %s3210 = sadd.s32 %s3209, 4
        %s3211 = scalar_lea.vmem [#allocation6], %s3210
        %v3212 = vld [vmem:[%s3211] sm:$0x1]
        %s3213 = sadd.s32 8, 4
        %s3214 = scalar_lea.vmem [#allocation7], %s3213
        %3215 = vst.msk [vmem:[%s3214] sm:$0x1] %vm3101, %v3212
        %s3216 = sadd.s32 %s3144, 1
        %s3217 = sld [smem:[#allocation9 + %s3216]]
        %s3218 = smul.u32 %s3217, 8
        %s3219 = sadd.s32 %s3218, 5
        %s3220 = scalar_lea.vmem [#allocation6], %s3219
        %v3221 = vld [vmem:[%s3220] sm:$0x1]
        %s3222 = sadd.s32 8, 5
        %s3223 = scalar_lea.vmem [#allocation7], %s3222
        %3224 = vst.msk [vmem:[%s3223] sm:$0x1] %vm3101, %v3221
        %s3225 = sadd.s32 %s3154, 1
        %s3226 = sld [smem:[#allocation9 + %s3225]]
        %s3227 = smul.u32 %s3226, 8
        %s3228 = sadd.s32 %s3227, 6
        %s3229 = scalar_lea.vmem [#allocation6], %s3228
        %v3230 = vld [vmem:[%s3229] sm:$0x1]
        %s3231 = sadd.s32 8, 6
        %s3232 = scalar_lea.vmem [#allocation7], %s3231
        %3233 = vst.msk [vmem:[%s3232] sm:$0x1] %vm3101, %v3230
        %s3234 = sadd.s32 %s3164, 1
        %s3235 = sld [smem:[#allocation9 + %s3234]]
        %s3236 = smul.u32 %s3235, 8
        %s3237 = sadd.s32 %s3236, 7
        %s3238 = scalar_lea.vmem [#allocation6], %s3237
        %v3239 = vld [vmem:[%s3238] sm:$0x1]
        %s3240 = sadd.s32 8, 7
        %s3241 = scalar_lea.vmem [#allocation7], %s3240
        %3242 = vst.msk [vmem:[%s3241] sm:$0x1] %vm3101, %v3239
        %s3243 = sadd.s32 %s3096, 2
        %s3244 = sld [smem:[#allocation9 + %s3243]]
        %s3245 = smul.u32 %s3244, 8
        %s3246 = scalar_lea.vmem [#allocation6], %s3245
        %v3247 = vld [vmem:[%s3246] sm:$0x1]
        %s3248 = scalar_lea.vmem [#allocation7], 16
        %3249 = vst.msk [vmem:[%s3248] sm:$0x1] %vm3101, %v3247
        %s3250 = sadd.s32 %s3104, 2
        %s3251 = sld [smem:[#allocation9 + %s3250]]
        %s3252 = smul.u32 %s3251, 8
        %s3253 = sadd.s32 %s3252, 1
        %s3254 = scalar_lea.vmem [#allocation6], %s3253
        %v3255 = vld [vmem:[%s3254] sm:$0x1]
        %s3256 = sadd.s32 16, 1
        %s3257 = scalar_lea.vmem [#allocation7], %s3256
        %3258 = vst.msk [vmem:[%s3257] sm:$0x1] %vm3101, %v3255
        %s3259 = sadd.s32 %s3114, 2
        %s3260 = sld [smem:[#allocation9 + %s3259]]
        %s3261 = smul.u32 %s3260, 8
        %s3262 = sadd.s32 %s3261, 2
        %s3263 = scalar_lea.vmem [#allocation6], %s3262
        %v3264 = vld [vmem:[%s3263] sm:$0x1]
        %s3265 = sadd.s32 16, 2
        %s3266 = scalar_lea.vmem [#allocation7], %s3265
        %3267 = vst.msk [vmem:[%s3266] sm:$0x1] %vm3101, %v3264
        %s3268 = sadd.s32 %s3124, 2
        %s3269 = sld [smem:[#allocation9 + %s3268]]
        %s3270 = smul.u32 %s3269, 8
        %s3271 = sadd.s32 %s3270, 3
        %s3272 = scalar_lea.vmem [#allocation6], %s3271
        %v3273 = vld [vmem:[%s3272] sm:$0x1]
        %s3274 = sadd.s32 16, 3
        %s3275 = scalar_lea.vmem [#allocation7], %s3274
        %3276 = vst.msk [vmem:[%s3275] sm:$0x1] %vm3101, %v3273
        %s3277 = sadd.s32 %s3134, 2
        %s3278 = sld [smem:[#allocation9 + %s3277]]
        %s3279 = smul.u32 %s3278, 8
        %s3280 = sadd.s32 %s3279, 4
        %s3281 = scalar_lea.vmem [#allocation6], %s3280
        %v3282 = vld [vmem:[%s3281] sm:$0x1]
        %s3283 = sadd.s32 16, 4
        %s3284 = scalar_lea.vmem [#allocation7], %s3283
        %3285 = vst.msk [vmem:[%s3284] sm:$0x1] %vm3101, %v3282
        %s3286 = sadd.s32 %s3144, 2
        %s3287 = sld [smem:[#allocation9 + %s3286]]
        %s3288 = smul.u32 %s3287, 8
        %s3289 = sadd.s32 %s3288, 5
        %s3290 = scalar_lea.vmem [#allocation6], %s3289
        %v3291 = vld [vmem:[%s3290] sm:$0x1]
        %s3292 = sadd.s32 16, 5
        %s3293 = scalar_lea.vmem [#allocation7], %s3292
        %3294 = vst.msk [vmem:[%s3293] sm:$0x1] %vm3101, %v3291
        %s3295 = sadd.s32 %s3154, 2
        %s3296 = sld [smem:[#allocation9 + %s3295]]
        %s3297 = smul.u32 %s3296, 8
        %s3298 = sadd.s32 %s3297, 6
        %s3299 = scalar_lea.vmem [#allocation6], %s3298
        %v3300 = vld [vmem:[%s3299] sm:$0x1]
        %s3301 = sadd.s32 16, 6
        %s3302 = scalar_lea.vmem [#allocation7], %s3301
        %3303 = vst.msk [vmem:[%s3302] sm:$0x1] %vm3101, %v3300
        %s3304 = sadd.s32 %s3164, 2
        %s3305 = sld [smem:[#allocation9 + %s3304]]
        %s3306 = smul.u32 %s3305, 8
        %s3307 = sadd.s32 %s3306, 7
        %s3308 = scalar_lea.vmem [#allocation6], %s3307
        %v3309 = vld [vmem:[%s3308] sm:$0x1]
        %s3310 = sadd.s32 16, 7
        %s3311 = scalar_lea.vmem [#allocation7], %s3310
        %3312 = vst.msk [vmem:[%s3311] sm:$0x1] %vm3101, %v3309
        %s3313 = sadd.s32 %s3096, 3
        %s3314 = sld [smem:[#allocation9 + %s3313]]
        %s3315 = smul.u32 %s3314, 8
        %s3316 = scalar_lea.vmem [#allocation6], %s3315
        %v3317 = vld [vmem:[%s3316] sm:$0x1]
        %s3318 = scalar_lea.vmem [#allocation7], 24
        %3319 = vst.msk [vmem:[%s3318] sm:$0x1] %vm3101, %v3317
        %s3320 = sadd.s32 %s3104, 3
        %s3321 = sld [smem:[#allocation9 + %s3320]]
        %s3322 = smul.u32 %s3321, 8
        %s3323 = sadd.s32 %s3322, 1
        %s3324 = scalar_lea.vmem [#allocation6], %s3323
        %v3325 = vld [vmem:[%s3324] sm:$0x1]
        %s3326 = sadd.s32 24, 1
        %s3327 = scalar_lea.vmem [#allocation7], %s3326
        %3328 = vst.msk [vmem:[%s3327] sm:$0x1] %vm3101, %v3325
        %s3329 = sadd.s32 %s3114, 3
        %s3330 = sld [smem:[#allocation9 + %s3329]]
        %s3331 = smul.u32 %s3330, 8
        %s3332 = sadd.s32 %s3331, 2
        %s3333 = scalar_lea.vmem [#allocation6], %s3332
        %v3334 = vld [vmem:[%s3333] sm:$0x1]
        %s3335 = sadd.s32 24, 2
        %s3336 = scalar_lea.vmem [#allocation7], %s3335
        %3337 = vst.msk [vmem:[%s3336] sm:$0x1] %vm3101, %v3334
        %s3338 = sadd.s32 %s3124, 3
        %s3339 = sld [smem:[#allocation9 + %s3338]]
        %s3340 = smul.u32 %s3339, 8
        %s3341 = sadd.s32 %s3340, 3
        %s3342 = scalar_lea.vmem [#allocation6], %s3341
        %v3343 = vld [vmem:[%s3342] sm:$0x1]
        %s3344 = sadd.s32 24, 3
        %s3345 = scalar_lea.vmem [#allocation7], %s3344
        %3346 = vst.msk [vmem:[%s3345] sm:$0x1] %vm3101, %v3343
        %s3347 = sadd.s32 %s3134, 3
        %s3348 = sld [smem:[#allocation9 + %s3347]]
        %s3349 = smul.u32 %s3348, 8
        %s3350 = sadd.s32 %s3349, 4
        %s3351 = scalar_lea.vmem [#allocation6], %s3350
        %v3352 = vld [vmem:[%s3351] sm:$0x1]
        %s3353 = sadd.s32 24, 4
        %s3354 = scalar_lea.vmem [#allocation7], %s3353
        %3355 = vst.msk [vmem:[%s3354] sm:$0x1] %vm3101, %v3352
        %s3356 = sadd.s32 %s3144, 3
        %s3357 = sld [smem:[#allocation9 + %s3356]]
        %s3358 = smul.u32 %s3357, 8
        %s3359 = sadd.s32 %s3358, 5
        %s3360 = scalar_lea.vmem [#allocation6], %s3359
        %v3361 = vld [vmem:[%s3360] sm:$0x1]
        %s3362 = sadd.s32 24, 5
        %s3363 = scalar_lea.vmem [#allocation7], %s3362
        %3364 = vst.msk [vmem:[%s3363] sm:$0x1] %vm3101, %v3361
        %s3365 = sadd.s32 %s3154, 3
        %s3366 = sld [smem:[#allocation9 + %s3365]]
        %s3367 = smul.u32 %s3366, 8
        %s3368 = sadd.s32 %s3367, 6
        %s3369 = scalar_lea.vmem [#allocation6], %s3368
        %v3370 = vld [vmem:[%s3369] sm:$0x1]
        %s3371 = sadd.s32 24, 6
        %s3372 = scalar_lea.vmem [#allocation7], %s3371
        %3373 = vst.msk [vmem:[%s3372] sm:$0x1] %vm3101, %v3370
        %s3374 = sadd.s32 %s3164, 3
        %s3375 = sld [smem:[#allocation9 + %s3374]]
        %s3376 = smul.u32 %s3375, 8
        %s3377 = sadd.s32 %s3376, 7
        %s3378 = scalar_lea.vmem [#allocation6], %s3377
        %v3379 = vld [vmem:[%s3378] sm:$0x1]
        %s3380 = sadd.s32 24, 7
        %s3381 = scalar_lea.vmem [#allocation7], %s3380
        %3382 = vst.msk [vmem:[%s3381] sm:$0x1] %vm3101, %v3379
        %s3383 = sadd.s32 %s3096, 4
        %s3384 = sld [smem:[#allocation9 + %s3383]]
        %s3385 = smul.u32 %s3384, 8
        %s3386 = scalar_lea.vmem [#allocation6], %s3385
        %v3387 = vld [vmem:[%s3386] sm:$0x1]
        %s3388 = scalar_lea.vmem [#allocation7], 32
        %3389 = vst.msk [vmem:[%s3388] sm:$0x1] %vm3101, %v3387
        %s3390 = sadd.s32 %s3104, 4
        %s3391 = sld [smem:[#allocation9 + %s3390]]
        %s3392 = smul.u32 %s3391, 8
        %s3393 = sadd.s32 %s3392, 1
        %s3394 = scalar_lea.vmem [#allocation6], %s3393
        %v3395 = vld [vmem:[%s3394] sm:$0x1]
        %s3396 = sadd.s32 32, 1
        %s3397 = scalar_lea.vmem [#allocation7], %s3396
        %3398 = vst.msk [vmem:[%s3397] sm:$0x1] %vm3101, %v3395
        %s3399 = sadd.s32 %s3114, 4
        %s3400 = sld [smem:[#allocation9 + %s3399]]
        %s3401 = smul.u32 %s3400, 8
        %s3402 = sadd.s32 %s3401, 2
        %s3403 = scalar_lea.vmem [#allocation6], %s3402
        %v3404 = vld [vmem:[%s3403] sm:$0x1]
        %s3405 = sadd.s32 32, 2
        %s3406 = scalar_lea.vmem [#allocation7], %s3405
        %3407 = vst.msk [vmem:[%s3406] sm:$0x1] %vm3101, %v3404
        %s3408 = sadd.s32 %s3124, 4
        %s3409 = sld [smem:[#allocation9 + %s3408]]
        %s3410 = smul.u32 %s3409, 8
        %s3411 = sadd.s32 %s3410, 3
        %s3412 = scalar_lea.vmem [#allocation6], %s3411
        %v3413 = vld [vmem:[%s3412] sm:$0x1]
        %s3414 = sadd.s32 32, 3
        %s3415 = scalar_lea.vmem [#allocation7], %s3414
        %3416 = vst.msk [vmem:[%s3415] sm:$0x1] %vm3101, %v3413
        %s3417 = sadd.s32 %s3134, 4
        %s3418 = sld [smem:[#allocation9 + %s3417]]
        %s3419 = smul.u32 %s3418, 8
        %s3420 = sadd.s32 %s3419, 4
        %s3421 = scalar_lea.vmem [#allocation6], %s3420
        %v3422 = vld [vmem:[%s3421] sm:$0x1]
        %s3423 = sadd.s32 32, 4
        %s3424 = scalar_lea.vmem [#allocation7], %s3423
        %3425 = vst.msk [vmem:[%s3424] sm:$0x1] %vm3101, %v3422
        %s3426 = sadd.s32 %s3144, 4
        %s3427 = sld [smem:[#allocation9 + %s3426]]
        %s3428 = smul.u32 %s3427, 8
        %s3429 = sadd.s32 %s3428, 5
        %s3430 = scalar_lea.vmem [#allocation6], %s3429
        %v3431 = vld [vmem:[%s3430] sm:$0x1]
        %s3432 = sadd.s32 32, 5
        %s3433 = scalar_lea.vmem [#allocation7], %s3432
        %3434 = vst.msk [vmem:[%s3433] sm:$0x1] %vm3101, %v3431
        %s3435 = sadd.s32 %s3154, 4
        %s3436 = sld [smem:[#allocation9 + %s3435]]
        %s3437 = smul.u32 %s3436, 8
        %s3438 = sadd.s32 %s3437, 6
        %s3439 = scalar_lea.vmem [#allocation6], %s3438
        %v3440 = vld [vmem:[%s3439] sm:$0x1]
        %s3441 = sadd.s32 32, 6
        %s3442 = scalar_lea.vmem [#allocation7], %s3441
        %3443 = vst.msk [vmem:[%s3442] sm:$0x1] %vm3101, %v3440
        %s3444 = sadd.s32 %s3164, 4
        %s3445 = sld [smem:[#allocation9 + %s3444]]
        %s3446 = smul.u32 %s3445, 8
        %s3447 = sadd.s32 %s3446, 7
        %s3448 = scalar_lea.vmem [#allocation6], %s3447
        %v3449 = vld [vmem:[%s3448] sm:$0x1]
        %s3450 = sadd.s32 32, 7
        %s3451 = scalar_lea.vmem [#allocation7], %s3450
        %3452 = vst.msk [vmem:[%s3451] sm:$0x1] %vm3101, %v3449
        %s3453 = sadd.s32 %s3096, 5
        %s3454 = sld [smem:[#allocation9 + %s3453]]
        %s3455 = smul.u32 %s3454, 8
        %s3456 = scalar_lea.vmem [#allocation6], %s3455
        %v3457 = vld [vmem:[%s3456] sm:$0x1]
        %s3458 = scalar_lea.vmem [#allocation7], 40
        %3459 = vst.msk [vmem:[%s3458] sm:$0x1] %vm3101, %v3457
        %s3460 = sadd.s32 %s3104, 5
        %s3461 = sld [smem:[#allocation9 + %s3460]]
        %s3462 = smul.u32 %s3461, 8
        %s3463 = sadd.s32 %s3462, 1
        %s3464 = scalar_lea.vmem [#allocation6], %s3463
        %v3465 = vld [vmem:[%s3464] sm:$0x1]
        %s3466 = sadd.s32 40, 1
        %s3467 = scalar_lea.vmem [#allocation7], %s3466
        %3468 = vst.msk [vmem:[%s3467] sm:$0x1] %vm3101, %v3465
        %s3469 = sadd.s32 %s3114, 5
        %s3470 = sld [smem:[#allocation9 + %s3469]]
        %s3471 = smul.u32 %s3470, 8
        %s3472 = sadd.s32 %s3471, 2
        %s3473 = scalar_lea.vmem [#allocation6], %s3472
        %v3474 = vld [vmem:[%s3473] sm:$0x1]
        %s3475 = sadd.s32 40, 2
        %s3476 = scalar_lea.vmem [#allocation7], %s3475
        %3477 = vst.msk [vmem:[%s3476] sm:$0x1] %vm3101, %v3474
        %s3478 = sadd.s32 %s3124, 5
        %s3479 = sld [smem:[#allocation9 + %s3478]]
        %s3480 = smul.u32 %s3479, 8
        %s3481 = sadd.s32 %s3480, 3
        %s3482 = scalar_lea.vmem [#allocation6], %s3481
        %v3483 = vld [vmem:[%s3482] sm:$0x1]
        %s3484 = sadd.s32 40, 3
        %s3485 = scalar_lea.vmem [#allocation7], %s3484
        %3486 = vst.msk [vmem:[%s3485] sm:$0x1] %vm3101, %v3483
        %s3487 = sadd.s32 %s3134, 5
        %s3488 = sld [smem:[#allocation9 + %s3487]]
        %s3489 = smul.u32 %s3488, 8
        %s3490 = sadd.s32 %s3489, 4
        %s3491 = scalar_lea.vmem [#allocation6], %s3490
        %v3492 = vld [vmem:[%s3491] sm:$0x1]
        %s3493 = sadd.s32 40, 4
        %s3494 = scalar_lea.vmem [#allocation7], %s3493
        %3495 = vst.msk [vmem:[%s3494] sm:$0x1] %vm3101, %v3492
        %s3496 = sadd.s32 %s3144, 5
        %s3497 = sld [smem:[#allocation9 + %s3496]]
        %s3498 = smul.u32 %s3497, 8
        %s3499 = sadd.s32 %s3498, 5
        %s3500 = scalar_lea.vmem [#allocation6], %s3499
        %v3501 = vld [vmem:[%s3500] sm:$0x1]
        %s3502 = sadd.s32 40, 5
        %s3503 = scalar_lea.vmem [#allocation7], %s3502
        %3504 = vst.msk [vmem:[%s3503] sm:$0x1] %vm3101, %v3501
        %s3505 = sadd.s32 %s3154, 5
        %s3506 = sld [smem:[#allocation9 + %s3505]]
        %s3507 = smul.u32 %s3506, 8
        %s3508 = sadd.s32 %s3507, 6
        %s3509 = scalar_lea.vmem [#allocation6], %s3508
        %v3510 = vld [vmem:[%s3509] sm:$0x1]
        %s3511 = sadd.s32 40, 6
        %s3512 = scalar_lea.vmem [#allocation7], %s3511
        %3513 = vst.msk [vmem:[%s3512] sm:$0x1] %vm3101, %v3510
        %s3514 = sadd.s32 %s3164, 5
        %s3515 = sld [smem:[#allocation9 + %s3514]]
        %s3516 = smul.u32 %s3515, 8
        %s3517 = sadd.s32 %s3516, 7
        %s3518 = scalar_lea.vmem [#allocation6], %s3517
        %v3519 = vld [vmem:[%s3518] sm:$0x1]
        %s3520 = sadd.s32 40, 7
        %s3521 = scalar_lea.vmem [#allocation7], %s3520
        %3522 = vst.msk [vmem:[%s3521] sm:$0x1] %vm3101, %v3519
        %s3523 = sadd.s32 %s3096, 6
        %s3524 = sld [smem:[#allocation9 + %s3523]]
        %s3525 = smul.u32 %s3524, 8
        %s3526 = scalar_lea.vmem [#allocation6], %s3525
        %v3527 = vld [vmem:[%s3526] sm:$0x1]
        %s3528 = scalar_lea.vmem [#allocation7], 48
        %3529 = vst.msk [vmem:[%s3528] sm:$0x1] %vm3101, %v3527
        %s3530 = sadd.s32 %s3104, 6
        %s3531 = sld [smem:[#allocation9 + %s3530]]
        %s3532 = smul.u32 %s3531, 8
        %s3533 = sadd.s32 %s3532, 1
        %s3534 = scalar_lea.vmem [#allocation6], %s3533
        %v3535 = vld [vmem:[%s3534] sm:$0x1]
        %s3536 = sadd.s32 48, 1
        %s3537 = scalar_lea.vmem [#allocation7], %s3536
        %3538 = vst.msk [vmem:[%s3537] sm:$0x1] %vm3101, %v3535
        %s3539 = sadd.s32 %s3114, 6
        %s3540 = sld [smem:[#allocation9 + %s3539]]
        %s3541 = smul.u32 %s3540, 8
        %s3542 = sadd.s32 %s3541, 2
        %s3543 = scalar_lea.vmem [#allocation6], %s3542
        %v3544 = vld [vmem:[%s3543] sm:$0x1]
        %s3545 = sadd.s32 48, 2
        %s3546 = scalar_lea.vmem [#allocation7], %s3545
        %3547 = vst.msk [vmem:[%s3546] sm:$0x1] %vm3101, %v3544
        %s3548 = sadd.s32 %s3124, 6
        %s3549 = sld [smem:[#allocation9 + %s3548]]
        %s3550 = smul.u32 %s3549, 8
        %s3551 = sadd.s32 %s3550, 3
        %s3552 = scalar_lea.vmem [#allocation6], %s3551
        %v3553 = vld [vmem:[%s3552] sm:$0x1]
        %s3554 = sadd.s32 48, 3
        %s3555 = scalar_lea.vmem [#allocation7], %s3554
        %3556 = vst.msk [vmem:[%s3555] sm:$0x1] %vm3101, %v3553
        %s3557 = sadd.s32 %s3134, 6
        %s3558 = sld [smem:[#allocation9 + %s3557]]
        %s3559 = smul.u32 %s3558, 8
        %s3560 = sadd.s32 %s3559, 4
        %s3561 = scalar_lea.vmem [#allocation6], %s3560
        %v3562 = vld [vmem:[%s3561] sm:$0x1]
        %s3563 = sadd.s32 48, 4
        %s3564 = scalar_lea.vmem [#allocation7], %s3563
        %3565 = vst.msk [vmem:[%s3564] sm:$0x1] %vm3101, %v3562
        %s3566 = sadd.s32 %s3144, 6
        %s3567 = sld [smem:[#allocation9 + %s3566]]
        %s3568 = smul.u32 %s3567, 8
        %s3569 = sadd.s32 %s3568, 5
        %s3570 = scalar_lea.vmem [#allocation6], %s3569
        %v3571 = vld [vmem:[%s3570] sm:$0x1]
        %s3572 = sadd.s32 48, 5
        %s3573 = scalar_lea.vmem [#allocation7], %s3572
        %3574 = vst.msk [vmem:[%s3573] sm:$0x1] %vm3101, %v3571
        %s3575 = sadd.s32 %s3154, 6
        %s3576 = sld [smem:[#allocation9 + %s3575]]
        %s3577 = smul.u32 %s3576, 8
        %s3578 = sadd.s32 %s3577, 6
        %s3579 = scalar_lea.vmem [#allocation6], %s3578
        %v3580 = vld [vmem:[%s3579] sm:$0x1]
        %s3581 = sadd.s32 48, 6
        %s3582 = scalar_lea.vmem [#allocation7], %s3581
        %3583 = vst.msk [vmem:[%s3582] sm:$0x1] %vm3101, %v3580
        %s3584 = sadd.s32 %s3164, 6
        %s3585 = sld [smem:[#allocation9 + %s3584]]
        %s3586 = smul.u32 %s3585, 8
        %s3587 = sadd.s32 %s3586, 7
        %s3588 = scalar_lea.vmem [#allocation6], %s3587
        %v3589 = vld [vmem:[%s3588] sm:$0x1]
        %s3590 = sadd.s32 48, 7
        %s3591 = scalar_lea.vmem [#allocation7], %s3590
        %3592 = vst.msk [vmem:[%s3591] sm:$0x1] %vm3101, %v3589
        %s3593 = sadd.s32 %s3096, 7
        %s3594 = sld [smem:[#allocation9 + %s3593]]
        %s3595 = smul.u32 %s3594, 8
        %s3596 = scalar_lea.vmem [#allocation6], %s3595
        %v3597 = vld [vmem:[%s3596] sm:$0x1]
        %s3598 = scalar_lea.vmem [#allocation7], 56
        %3599 = vst.msk [vmem:[%s3598] sm:$0x1] %vm3101, %v3597
        %s3600 = sadd.s32 %s3104, 7
        %s3601 = sld [smem:[#allocation9 + %s3600]]
        %s3602 = smul.u32 %s3601, 8
        %s3603 = sadd.s32 %s3602, 1
        %s3604 = scalar_lea.vmem [#allocation6], %s3603
        %v3605 = vld [vmem:[%s3604] sm:$0x1]
        %s3606 = sadd.s32 56, 1
        %s3607 = scalar_lea.vmem [#allocation7], %s3606
        %3608 = vst.msk [vmem:[%s3607] sm:$0x1] %vm3101, %v3605
        %s3609 = sadd.s32 %s3114, 7
        %s3610 = sld [smem:[#allocation9 + %s3609]]
        %s3611 = smul.u32 %s3610, 8
        %s3612 = sadd.s32 %s3611, 2
        %s3613 = scalar_lea.vmem [#allocation6], %s3612
        %v3614 = vld [vmem:[%s3613] sm:$0x1]
        %s3615 = sadd.s32 56, 2
        %s3616 = scalar_lea.vmem [#allocation7], %s3615
        %3617 = vst.msk [vmem:[%s3616] sm:$0x1] %vm3101, %v3614
        %s3618 = sadd.s32 %s3124, 7
        %s3619 = sld [smem:[#allocation9 + %s3618]]
        %s3620 = smul.u32 %s3619, 8
        %s3621 = sadd.s32 %s3620, 3
        %s3622 = scalar_lea.vmem [#allocation6], %s3621
        %v3623 = vld [vmem:[%s3622] sm:$0x1]
        %s3624 = sadd.s32 56, 3
        %s3625 = scalar_lea.vmem [#allocation7], %s3624
        %3626 = vst.msk [vmem:[%s3625] sm:$0x1] %vm3101, %v3623
        %s3627 = sadd.s32 %s3134, 7
        %s3628 = sld [smem:[#allocation9 + %s3627]]
        %s3629 = smul.u32 %s3628, 8
        %s3630 = sadd.s32 %s3629, 4
        %s3631 = scalar_lea.vmem [#allocation6], %s3630
        %v3632 = vld [vmem:[%s3631] sm:$0x1]
        %s3633 = sadd.s32 56, 4
        %s3634 = scalar_lea.vmem [#allocation7], %s3633
        %3635 = vst.msk [vmem:[%s3634] sm:$0x1] %vm3101, %v3632
        %s3636 = sadd.s32 %s3144, 7
        %s3637 = sld [smem:[#allocation9 + %s3636]]
        %s3638 = smul.u32 %s3637, 8
        %s3639 = sadd.s32 %s3638, 5
        %s3640 = scalar_lea.vmem [#allocation6], %s3639
        %v3641 = vld [vmem:[%s3640] sm:$0x1]
        %s3642 = sadd.s32 56, 5
        %s3643 = scalar_lea.vmem [#allocation7], %s3642
        %3644 = vst.msk [vmem:[%s3643] sm:$0x1] %vm3101, %v3641
        %s3645 = sadd.s32 %s3154, 7
        %s3646 = sld [smem:[#allocation9 + %s3645]]
        %s3647 = smul.u32 %s3646, 8
        %s3648 = sadd.s32 %s3647, 6
        %s3649 = scalar_lea.vmem [#allocation6], %s3648
        %v3650 = vld [vmem:[%s3649] sm:$0x1]
        %s3651 = sadd.s32 56, 6
        %s3652 = scalar_lea.vmem [#allocation7], %s3651
        %3653 = vst.msk [vmem:[%s3652] sm:$0x1] %vm3101, %v3650
        %s3654 = sadd.s32 %s3164, 7
        %s3655 = sld [smem:[#allocation9 + %s3654]]
        %s3656 = smul.u32 %s3655, 8
        %s3657 = sadd.s32 %s3656, 7
        %s3658 = scalar_lea.vmem [#allocation6], %s3657
        %v3659 = vld [vmem:[%s3658] sm:$0x1]
        %s3660 = sadd.s32 56, 7
        %s3661 = scalar_lea.vmem [#allocation7], %s3660
        %3662 = vst.msk [vmem:[%s3661] sm:$0x1] %vm3101, %v3659
        %v3663 = vld [vmem:[#allocation7] sm:$0xff]
        %v3664 = vld [vmem:[#allocation7 + $0x8] sm:$0xff]
        %v3665 = vld [vmem:[#allocation7 + $0x10] sm:$0xff]
        %v3666 = vld [vmem:[#allocation7 + $0x18] sm:$0xff]
        %v3667 = vld [vmem:[#allocation7 + $0x20] sm:$0xff]
        %v3668 = vld [vmem:[#allocation7 + $0x28] sm:$0xff]
        %v3669 = vld [vmem:[#allocation7 + $0x30] sm:$0xff]
        %v3670 = vld [vmem:[#allocation7 + $0x38] sm:$0xff]
        %v3671 = vpack.c.bf16 %v3664, %v3663
        %v3672 = vpack.c.bf16 %v3666, %v3665
        %v3673 = vpack.c.bf16 %v3668, %v3667
        %v3674 = vpack.c.bf16 %v3670, %v3669
        %v3675 = vld [vmem:[%s53] sm:$0x3]
        %v3676 = vld [vmem:[%s55] sm:$0xf]
        %v3678 = vsel %vm2387, %v3671, 0
        %v3681 = vsel %vm2387, %v3672, 0
        %v3684 = vsel %vm2387, %v3673, 0
        %v3687 = vsel %vm2387, %v3674, 0
        %v3690 = vsel %vm2994, %v3676, 0
        %3692 = vmatpush.bf16.msra.mxu0 0
        %3693 = vmatpush.bf16.msra.mxu0 0
        %3694 = vmatpush.bf16.msra.mxu0 0
        %3695 = vmatpush.bf16.msra.mxu0 0
        %3696 = vmatpush.bf16.msra.mxu0 0
        %3697 = vmatpush.bf16.msra.mxu0 0
        %3698 = vmatpush.bf16.msra.mxu0 0
        %3699 = vmatpush.bf16.msra.mxu0 %v3690
        %3700 = vmatmul.bf16.gmra.mxu0 %v3678
        %v3701 = vpop.f32.mrf.mxu0
        %v3702 = vadd.f32 0.0, %v3701
        %v3703 = vpop.f32.mrf.mxu0
        %v3704 = vadd.f32 0.0, %v3703
        %3705 = vmatmul.bf16.gmra.mxu0 %v3681
        %v3706 = vpop.f32.mrf.mxu0
        %v3707 = vadd.f32 0.0, %v3706
        %v3708 = vpop.f32.mrf.mxu0
        %v3709 = vadd.f32 0.0, %v3708
        %3710 = vmatmul.bf16.gmra.mxu0 %v3684
        %v3711 = vpop.f32.mrf.mxu0
        %v3712 = vadd.f32 0.0, %v3711
        %v3713 = vpop.f32.mrf.mxu0
        %v3714 = vadd.f32 0.0, %v3713
        %3715 = vmatmul.bf16.gmra.mxu0 %v3687
        %v3716 = vpop.f32.mrf.mxu0
        %v3717 = vadd.f32 0.0, %v3716
        %v3718 = vpop.f32.mrf.mxu0
        %v3719 = vadd.f32 0.0, %v3718
        %3720 = vdwg.mxu0
        %v3722 = vsel %vm1329, %v3675, 0
        %3724 = vmatpush.bf16.msra.mxu0 0
        %3725 = vmatpush.bf16.msra.mxu0 0
        %3726 = vmatpush.bf16.msra.mxu0 0
        %3727 = vmatpush.bf16.msra.mxu0 0
        %3728 = vmatpush.bf16.msra.mxu0 0
        %3729 = vmatpush.bf16.msra.mxu0 0
        %3730 = vmatpush.bf16.msra.mxu0 0
        %3731 = vmatpush.bf16.msra.mxu0 %v3722
        %3732 = vmatmul.bf16.gmra.mxu0 %v1318
        %v3733 = vpop.f32.mrf.mxu0
        %v3734 = vadd.f32 %v3702, %v3733
        %v3735 = vpop.f32.mrf.mxu0
        %v3736 = vadd.f32 %v3704, %v3735
        %3737 = vmatmul.bf16.gmra.mxu0 %v1321
        %v3738 = vpop.f32.mrf.mxu0
        %v3739 = vadd.f32 %v3707, %v3738
        %v3740 = vpop.f32.mrf.mxu0
        %v3741 = vadd.f32 %v3709, %v3740
        %3742 = vmatmul.bf16.gmra.mxu0 %v1324
        %v3743 = vpop.f32.mrf.mxu0
        %v3744 = vadd.f32 %v3712, %v3743
        %v3745 = vpop.f32.mrf.mxu0
        %v3746 = vadd.f32 %v3714, %v3745
        %3747 = vmatmul.bf16.gmra.mxu0 %v1327
        %v3748 = vpop.f32.mrf.mxu0
        %v3749 = vadd.f32 %v3717, %v3748
        %v3750 = vpop.f32.mrf.mxu0
        %v3751 = vadd.f32 %v3719, %v3750
        %3752 = vdwg.mxu0
        %v3753 = vld [vmem:[%s57] sm:$0x1]
        %v3755 = vperm.slane %v3753, 0
        %v3757 = vadd.f32 %v3734, %v3755
        %v3758 = vadd.f32 %v3736, %v3755
        %v3759 = vadd.f32 %v3739, %v3755
        %v3760 = vadd.f32 %v3741, %v3755
        %v3761 = vadd.f32 %v3744, %v3755
        %v3762 = vadd.f32 %v3746, %v3755
        %v3763 = vadd.f32 %v3749, %v3755
        %v3764 = vadd.f32 %v3751, %v3755
        %v3765 = vmax.f32 %v3757, 0.0
        %v3766 = vmax.f32 %v3758, 0.0
        %v3767 = vmax.f32 %v3759, 0.0
        %v3768 = vmax.f32 %v3760, 0.0
        %v3769 = vmax.f32 %v3761, 0.0
        %v3770 = vmax.f32 %v3762, 0.0
        %v3771 = vmax.f32 %v3763, 0.0
        %v3772 = vmax.f32 %v3764, 0.0
        %v3773 = vpack.c.bf16 %v3766, %v3765
        %v3774 = vpack.c.bf16 %v3768, %v3767
        %v3775 = vpack.c.bf16 %v3770, %v3769
        %v3776 = vpack.c.bf16 %v3772, %v3771
        %v3777 = vld [vmem:[%s59] sm:$0xf]
        %v3778 = vld [vmem:[%s59 + $0x4] sm:$0xf]
        %v3779 = vld [vmem:[%s59 + $0x8] sm:$0xf]
        %v3780 = vld [vmem:[%s59 + $0xc] sm:$0xf]
        %v3781 = vld [vmem:[%s61] sm:$0x1]
        %v3783 = vperm.slane %v3781, 0
        %v3789 = vunpack.c.l.b16 %v3777
        %v3790 = vunpack.c.l.b16 %v3778
        %v3791 = vunpack.c.l.b16 %v3779
        %v3792 = vunpack.c.l.b16 %v3780
        %v3793 = vpack.c.b16 %v3790, %v3789
        %v3794 = vpack.c.b16 %v3792, %v3791
        %v3798 = vsel %vm1406, %v3773, 0
        %v3801 = vsel %vm1406, %v3774, 0
        %v3804 = vsel %vm1406, %v3775, 0
        %v3807 = vsel %vm1406, %v3776, 0
        %3809 = vmatpush.bf16.msra.mxu0 0
        %3810 = vmatpush.bf16.msra.mxu0 0
        %3811 = vmatpush.bf16.msra.mxu0 0
        %3812 = vmatpush.bf16.msra.mxu0 0
        %3813 = vmatpush.bf16.msra.mxu0 0
        %3814 = vmatpush.bf16.msra.mxu0 0
        %3815 = vmatpush.bf16.msra.mxu0 %v3794
        %3816 = vmatpush.bf16.msra.mxu0 %v3793
        %3817 = vmatmul.bf16.gmra.mxu0 %v3798
        %v3818 = vpop.f32.mrf.mxu0
        %v3819 = vadd.f32 %v3783, %v3818
        %v3820 = vpop.f32.mrf.mxu0
        %v3821 = vadd.f32 %v3783, %v3820
        %3822 = vmatmul.bf16.gmra.mxu0 %v3801
        %v3823 = vpop.f32.mrf.mxu0
        %v3824 = vadd.f32 %v3783, %v3823
        %v3825 = vpop.f32.mrf.mxu0
        %v3826 = vadd.f32 %v3783, %v3825
        %3827 = vmatmul.bf16.gmra.mxu0 %v3804
        %v3828 = vpop.f32.mrf.mxu0
        %v3829 = vadd.f32 %v3783, %v3828
        %v3830 = vpop.f32.mrf.mxu0
        %v3831 = vadd.f32 %v3783, %v3830
        %3832 = vmatmul.bf16.gmra.mxu0 %v3807
        %v3833 = vpop.f32.mrf.mxu0
        %v3834 = vadd.f32 %v3783, %v3833
        %v3835 = vpop.f32.mrf.mxu0
        %v3836 = vadd.f32 %v3783, %v3835
        %3837 = vdwg.mxu0
        %3846 = vrot.lane.b32.xlu0 %v3087, 8
        %v3847 = vpop.permute.xlu0 %3846
        %3848 = vrot.lane.b32.xlu0 %v3088, 8
        %v3849 = vpop.permute.xlu0 %3848
        %3850 = vrot.lane.b32.xlu0 %v3089, 8
        %v3851 = vpop.permute.xlu0 %3850
        %3852 = vrot.lane.b32.xlu0 %v3090, 8
        %v3853 = vpop.permute.xlu0 %3852
        %3854 = vrot.lane.b32.xlu0 %v3091, 8
        %v3855 = vpop.permute.xlu0 %3854
        %3856 = vrot.lane.b32.xlu0 %v3092, 8
        %v3857 = vpop.permute.xlu0 %3856
        %3858 = vrot.lane.b32.xlu0 %v3093, 8
        %v3859 = vpop.permute.xlu0 %3858
        %3860 = vrot.lane.b32.xlu0 %v3094, 8
        %v3861 = vpop.permute.xlu0 %3860
        %3878 = vrot.lane.b32.xlu0 %v3819, 9
        %v3879 = vpop.permute.xlu0 %3878
        %3880 = vrot.lane.b32.xlu0 %v3821, 9
        %v3881 = vpop.permute.xlu0 %3880
        %3882 = vrot.lane.b32.xlu0 %v3824, 9
        %v3883 = vpop.permute.xlu0 %3882
        %3884 = vrot.lane.b32.xlu0 %v3826, 9
        %v3885 = vpop.permute.xlu0 %3884
        %3886 = vrot.lane.b32.xlu0 %v3829, 9
        %v3887 = vpop.permute.xlu0 %3886
        %3888 = vrot.lane.b32.xlu0 %v3831, 9
        %v3889 = vpop.permute.xlu0 %3888
        %3890 = vrot.lane.b32.xlu0 %v3834, 9
        %v3891 = vpop.permute.xlu0 %3890
        %3892 = vrot.lane.b32.xlu0 %v3836, 9
        %v3893 = vpop.permute.xlu0 %3892
        %v3902 = vsel %vm2387, %v2651, %v3847
        %v3903 = vsel %vm2387, %v2666, %v3849
        %v3904 = vsel %vm2387, %v2681, %v3851
        %v3905 = vsel %vm2387, %v2696, %v3853
        %v3906 = vsel %vm2387, %v2711, %v3855
        %v3907 = vsel %vm2387, %v2726, %v3857
        %v3908 = vsel %vm2387, %v2741, %v3859
        %v3909 = vsel %vm2387, %v2756, %v3861
        %vm3910 = vcmask 72704
        %v3911 = vsel %vm3910, %v3902, %v3879
        %v3912 = vsel %vm3910, %v3903, %v3881
        %v3913 = vsel %vm3910, %v3904, %v3883
        %v3914 = vsel %vm3910, %v3905, %v3885
        %v3915 = vsel %vm3910, %v3906, %v3887
        %v3916 = vsel %vm3910, %v3907, %v3889
        %v3917 = vsel %vm3910, %v3908, %v3891
        %v3918 = vsel %vm3910, %v3909, %v3893
        %vm3919 = vcmask 89088
        %v3920 = vsel %vm3919, %v3911, 0.0
        %v3921 = vsel %vm3919, %v3912, 0.0
        %v3922 = vsel %vm3919, %v3913, 0.0
        %v3923 = vsel %vm3919, %v3914, 0.0
        %v3924 = vsel %vm3919, %v3915, 0.0
        %v3925 = vsel %vm3919, %v3916, 0.0
        %v3926 = vsel %vm3919, %v3917, 0.0
        %v3927 = vsel %vm3919, %v3918, 0.0
        %3928 = vst [vmem:[%s1228] sm:$0xff] %v3920
        %3929 = vst [vmem:[%s1228 + $0x8] sm:$0xff] %v3921
        %3930 = vst [vmem:[%s1228 + $0x10] sm:$0xff] %v3922
        %3931 = vst [vmem:[%s1228 + $0x18] sm:$0xff] %v3923
        %3932 = vst [vmem:[%s1228 + $0x20] sm:$0xff] %v3924
        %3933 = vst [vmem:[%s1228 + $0x28] sm:$0xff] %v3925
        %3934 = vst [vmem:[%s1228 + $0x30] sm:$0xff] %v3926
        %3935 = vst [vmem:[%s1228 + $0x38] sm:$0xff] %v3927
        %s3936 = sand.u32 %s748, 1
        %s3937 = sand.u32 %s748, 1
        %s3938 = smul.addr %s3937, 64
        %s3939 = scalar_lea.vmem [#allocation14], %s3938
        %s3940 = sand.u32 %s774, 1
        %s3941 = scalar_lea.sflag [#allocation16], %s3940
        %s3942 = sand.u32 %s774, 1
        %s3943 = smul.addr %s3942, 8
        %s3944 = scalar_lea.vmem [#allocation15], %s3943
        %s3945 = sand.u32 %s800, 1
        %s3946 = scalar_lea.sflag [#allocation18], %s3945
        %s3947 = sand.u32 %s800, 1
        %s3948 = smul.addr %s3947, 8
        %s3949 = scalar_lea.vmem [#allocation17], %s3948
        // Predicated region
        $region255: #{cluster_model_forward.1} parent=241 // pred_check
          %p3950 = pneg %p758
        $region256: #{cluster_model_forward.1} parent=241 // pred_check_branch
          %3952 = sbr.rel (%p3950) target = $region258
        $region257: #{cluster_model_forward.1} parent=241 // pred_region
          %s3953 = smul.addr %s95, 8
          %s3954 = scalar_lea.vmem %s63, %s3953
          // Predicated region
          $region259: #{cluster_model_forward.1} parent=257 // pred_check
            _
          $region260: #{cluster_model_forward.1} parent=257 // pred_check_branch
            %3956 = sbr.rel (0) target = $region262
          $region261: #{cluster_model_forward.1} parent=257 // pred_region
            // Predicated region
            $region263: #{cluster_model_forward.1} parent=261 // pred_check
              _
            $region264: #{cluster_model_forward.1} parent=261 // pred_check_branch
              %3958 = sbr.rel (0) target = $region266
            $region265: #{cluster_model_forward.1} parent=261 // pred_region
              // Predicated region
              $region278: #{cluster_model_forward.1} parent=265 // pred_check
                _
              $region279: #{cluster_model_forward.1} parent=265 // pred_check_branch
                %3988 = sbr.rel (0) target = $region281
              $region280: #{cluster_model_forward.1} parent=265 // pred_region
                loop: start=0, step=1, limit=1
                $region282: #{cluster_model_forward.1} parent=280 // loop_pre_header
                  _
                $region283: #{cluster_model_forward.1} parent=280 // loop_header
                  %s3990 = sphi 0, %s3994
                  %p3991 = scmp.ge.s32.totalorder %s3990, 1
                  %s3995 = sphi %s3939, %s3939
                  %s3996 = sphi %s3954, %s3954
                $region284: #{cluster_model_forward.1} parent=280 // loop_header_branch
                  %3993 = sbr.rel (%p3991) target = $region288
                $region285: #{cluster_model_forward.1} parent=280 // loop_body
                  %v3997 = vld [vmem:[%s3995] sm:$0xff]
                  %3998 = vst [vmem:[%s3996] sm:$0xff] %v3997
                  %v3999 = vld [vmem:[%s3995 + $0x8] sm:$0xff]
                  %4000 = vst [vmem:[%s3996 + $0x10] sm:$0xff] %v3999
                  %v4001 = vld [vmem:[%s3995 + $0x10] sm:$0xff]
                  %4002 = vst [vmem:[%s3996 + $0x20] sm:$0xff] %v4001
                  %v4003 = vld [vmem:[%s3995 + $0x18] sm:$0xff]
                  %4004 = vst [vmem:[%s3996 + $0x30] sm:$0xff] %v4003
                  %v4005 = vld [vmem:[%s3995 + $0x20] sm:$0xff]
                  %4006 = vst [vmem:[%s3996 + $0x40] sm:$0xff] %v4005
                  %v4007 = vld [vmem:[%s3995 + $0x28] sm:$0xff]
                  %4008 = vst [vmem:[%s3996 + $0x50] sm:$0xff] %v4007
                  %v4009 = vld [vmem:[%s3995 + $0x30] sm:$0xff]
                  %4010 = vst [vmem:[%s3996 + $0x60] sm:$0xff] %v4009
                  %v4011 = vld [vmem:[%s3995 + $0x38] sm:$0xff]
                  %4012 = vst [vmem:[%s3996 + $0x70] sm:$0xff] %v4011
                $region286: #{cluster_model_forward.1} parent=280 // loop_footer
                  %s3994 = sadd.s32 1, %s3990
                $region287: #{cluster_model_forward.1} parent=280 // loop_footer_branch
                  %3989 = sbr.rel target = $region283
                $region288: #{cluster_model_forward.1} parent=280 // loop_exit
                  _
              $region281: #{cluster_model_forward.1} parent=265 // pred_fallthru
                _
              // Predicated region
              $region289: #{cluster_model_forward.1} parent=265 // pred_check
                _
              $region290: #{cluster_model_forward.1} parent=265 // pred_check_branch
                %4014 = sbr.rel target = $region292
              $region291: #{cluster_model_forward.1} parent=265 // pred_region
                _
              $region292: #{cluster_model_forward.1} parent=265 // pred_fallthru
                _
            $region266: #{cluster_model_forward.1} parent=261 // pred_fallthru
              _
            // Predicated region
            $region267: #{cluster_model_forward.1} parent=261 // pred_check
              _
            $region268: #{cluster_model_forward.1} parent=261 // pred_check_branch
              %3960 = sbr.rel target = $region270
            $region269: #{cluster_model_forward.1} parent=261 // pred_region
              %s3962 = ssub.s32 256, 1
              loop: start=0, step=1, limit=1
              $region271: #{cluster_model_forward.1} parent=269 // loop_pre_header
                _
              $region272: #{cluster_model_forward.1} parent=269 // loop_header
                %s3964 = sphi 0, %s3968
                %p3965 = scmp.ge.s32.totalorder %s3964, 1
                %s3969 = sphi %s3939, %s3939
                %s3970 = sphi %s3954, %s3954
              $region273: #{cluster_model_forward.1} parent=269 // loop_header_branch
                %3967 = sbr.rel (%p3965) target = $region277
              $region274: #{cluster_model_forward.1} parent=269 // loop_body
                %v3971 = vld [vmem:[%s3969] sm:%s3962]
                %3972 = vst [vmem:[%s3970] sm:%s3962] %v3971
                %v3973 = vld [vmem:[%s3969 + $0x8] sm:%s3962]
                %3974 = vst [vmem:[%s3970 + $0x10] sm:%s3962] %v3973
                %v3975 = vld [vmem:[%s3969 + $0x10] sm:%s3962]
                %3976 = vst [vmem:[%s3970 + $0x20] sm:%s3962] %v3975
                %v3977 = vld [vmem:[%s3969 + $0x18] sm:%s3962]
                %3978 = vst [vmem:[%s3970 + $0x30] sm:%s3962] %v3977
                %v3979 = vld [vmem:[%s3969 + $0x20] sm:%s3962]
                %3980 = vst [vmem:[%s3970 + $0x40] sm:%s3962] %v3979
                %v3981 = vld [vmem:[%s3969 + $0x28] sm:%s3962]
                %3982 = vst [vmem:[%s3970 + $0x50] sm:%s3962] %v3981
                %v3983 = vld [vmem:[%s3969 + $0x30] sm:%s3962]
                %3984 = vst [vmem:[%s3970 + $0x60] sm:%s3962] %v3983
                %v3985 = vld [vmem:[%s3969 + $0x38] sm:%s3962]
                %3986 = vst [vmem:[%s3970 + $0x70] sm:%s3962] %v3985
              $region275: #{cluster_model_forward.1} parent=269 // loop_footer
                %s3968 = sadd.s32 1, %s3964
              $region276: #{cluster_model_forward.1} parent=269 // loop_footer_branch
                %3963 = sbr.rel target = $region272
              $region277: #{cluster_model_forward.1} parent=269 // loop_exit
                _
            $region270: #{cluster_model_forward.1} parent=261 // pred_fallthru
              _
          $region262: #{cluster_model_forward.1} parent=257 // pred_fallthru
            _
          %4015 = vnop
        $region258: #{cluster_model_forward.1} parent=241 // pred_fallthru
          _
        // Predicated region
        $region293: #{cluster_model_forward.1} parent=241 // pred_check
          %p4016 = pneg %p784
        $region294: #{cluster_model_forward.1} parent=241 // pred_check_branch
          %4018 = sbr.rel (%p4016) target = $region296
        $region295: #{cluster_model_forward.1} parent=241 // pred_region
          %4020 = vsyncadd %s3941, 0
          %s4021 = smul.addr %s95, 8
          %s4022 = scalar_lea.hbm %s65, %s4021
          %s4024 = sshll.u32 %s3944, 4
          %s4025 = int_to_ptr.vmem [resolvable:$true] %s4024
          %s4026 = sshll.u32 %s4022, 4
          %s4027 = int_to_ptr.hbm [resolvable:$true] %s4026
          %4029 = dma.vmem_to_hbm [thread:$0]  %s4025, 128, %s4027, %s3941
        $region296: #{cluster_model_forward.1} parent=241 // pred_fallthru
          _
        // Predicated region
        $region297: #{cluster_model_forward.1} parent=241 // pred_check
          %p4030 = pneg %p810
        $region298: #{cluster_model_forward.1} parent=241 // pred_check_branch
          %4032 = sbr.rel (%p4030) target = $region300
        $region299: #{cluster_model_forward.1} parent=241 // pred_region
          %4034 = vsyncadd %s3946, 0
          %s4035 = smul.addr %s95, 8
          %s4036 = scalar_lea.hbm %s67, %s4035
          %s4038 = sshll.u32 %s3949, 4
          %s4039 = int_to_ptr.vmem [resolvable:$true] %s4038
          %s4040 = sshll.u32 %s4036, 4
          %s4041 = int_to_ptr.hbm [resolvable:$true] %s4040
          %4043 = dma.vmem_to_hbm [thread:$0]  %s4039, 128, %s4041, %s3946
        $region300: #{cluster_model_forward.1} parent=241 // pred_fallthru
          _
      $region242: #{cluster_model_forward.1} parent=5 // pred_fallthru
        _
      %p4044 = scmp.le.s32.totalorder 2, %s90
      // Predicated region
      $region301: #{cluster_model_forward.1} parent=5 // pred_check
        %p4045 = pneg %p4044
      $region302: #{cluster_model_forward.1} parent=5 // pred_check_branch
        %4047 = sbr.rel (%p4045) target = $region304
      $region303: #{cluster_model_forward.1} parent=5 // pred_region
        %s4048 = ssub.s32 %s90, 2
        // Predicated region
        $region305: #{cluster_model_forward.1} parent=303 // pred_check
          %p4049 = pneg %p764
        $region306: #{cluster_model_forward.1} parent=303 // pred_check_branch
          %4051 = sbr.rel (%p4049) target = $region308
        $region307: #{cluster_model_forward.1} parent=303 // pred_region
          %s4052 = sand.u32 %s749, 1
          %s4053 = sand.u32 %s749, 1
          %s4054 = smul.addr %s4053, 64
          %s4055 = scalar_lea.vmem [#allocation14], %s4054
        $region308: #{cluster_model_forward.1} parent=303 // pred_fallthru
          _
        // Predicated region
        $region309: #{cluster_model_forward.1} parent=303 // pred_check
          %p4056 = pneg %p790
        $region310: #{cluster_model_forward.1} parent=303 // pred_check_branch
          %4058 = sbr.rel (%p4056) target = $region312
        $region311: #{cluster_model_forward.1} parent=303 // pred_region
          %s4059 = sand.u32 %s775, 1
          %s4060 = scalar_lea.sflag [#allocation16], %s4059
          %s4061 = sand.u32 %s775, 1
          %s4062 = smul.addr %s4061, 8
          %s4063 = scalar_lea.vmem [#allocation15], %s4062
          %4065 = dma.done %s4060, 128
        $region312: #{cluster_model_forward.1} parent=303 // pred_fallthru
          _
        // Predicated region
        $region313: #{cluster_model_forward.1} parent=303 // pred_check
          %p4066 = pneg %p816
        $region314: #{cluster_model_forward.1} parent=303 // pred_check_branch
          %4068 = sbr.rel (%p4066) target = $region316
        $region315: #{cluster_model_forward.1} parent=303 // pred_region
          %s4069 = sand.u32 %s801, 1
          %s4070 = scalar_lea.sflag [#allocation18], %s4069
          %s4071 = sand.u32 %s801, 1
          %s4072 = smul.addr %s4071, 8
          %s4073 = scalar_lea.vmem [#allocation17], %s4072
          %4075 = dma.done %s4070, 128
        $region316: #{cluster_model_forward.1} parent=303 // pred_fallthru
          _
      $region304: #{cluster_model_forward.1} parent=5 // pred_fallthru
        _
    $region6: #{cluster_model_forward.1} parent=1 // loop_footer
      %s94 = sadd.s32 1, %s90
    $region7: #{cluster_model_forward.1} parent=1 // loop_footer_branch
      %89 = sbr.rel target = $region3
    $region8: #{cluster_model_forward.1} parent=1 // loop_exit
      _
    %4076 = vsyncpa [#allocation16], 1
    %s4077 = scalar_lea.sflag [#allocation16], 1
    %4078 = vsyncpa %s4077, 1
    %4079 = vsyncpa [#allocation18], 1
    %s4080 = scalar_lea.sflag [#allocation18], 1
    %4081 = vsyncpa %s4080, 1

</llo_original>
